<compile_context>
chip_gen: v7x
topology: tpu7x:2x2x1
jax: 0.10.0
libtpu: 0.0.40
codegen_flags: <defaults>
</compile_context>

<pallas_src>
import functools

import jax
import jax.numpy as jnp
import numpy as np
from jax.experimental import pallas as pl
from jax.experimental.pallas import tpu as pltpu


# ----------------------------------------------------------------------------
# Pallas kernel: one whole-K matmul fused with per-channel affine + activation
# ----------------------------------------------------------------------------
def _mm_affine_act_kernel(a_ref, w_ref, s_ref, b_ref, o_ref, *, act):
    # a_ref: (TM, K) bf16, w_ref: (K, N) bf16, s_ref/b_ref: (1, N) f32.
    y = jnp.dot(a_ref[...], w_ref[...], preferred_element_type=jnp.float32)
    y = y * s_ref[...] + b_ref[...]            # f32 epilogue (v5e-safe)
    if act == "relu":
        y = jnp.maximum(y, 0.0)
    elif act == "tanh":
        y = jnp.tanh(y)                        # lands on the EUP slot
    o_ref[...] = y.astype(o_ref.dtype)


def _round_up(x, m):
    return (x + m - 1) // m * m


def fused_matmul_affine_act(a, w, scale, bias, act):
    """out = act((a @ w) * scale + bias) in a single-pass Pallas TPU kernel.

    a: (M, K), w: (K, N), scale/bias: (N,).  K and N are passed un-padded as a
    single block (K <= 576, N <= 64 here); only M is tiled/padded.
    """
    M, K = a.shape
    _, N = w.shape

    if M >= 1024:
        TM = 512
    elif M >= 512:
        TM = 256                  # keeps >= 2 grid steps -> both v7x TCs usable
    else:
        TM = _round_up(M, 16)
    Mp = _round_up(M, TM)

    a_b = a.astype(jnp.bfloat16)
    if Mp != M:
        a_b = jnp.pad(a_b, ((0, Mp - M), (0, 0)))
    w_b = w.astype(jnp.bfloat16)
    s2 = scale.astype(jnp.float32).reshape(1, N)
    b2 = bias.astype(jnp.float32).reshape(1, N)

    out = pl.pallas_call(
        functools.partial(_mm_affine_act_kernel, act=act),
        out_shape=jax.ShapeDtypeStruct((Mp, N), jnp.float32),
        grid_spec=pltpu.PrefetchScalarGridSpec(
            num_scalar_prefetch=0,
            grid=(Mp // TM,),
            in_specs=[
                pl.BlockSpec((TM, K), lambda i: (i, 0)),   # patches tile
                pl.BlockSpec((K, N), lambda i: (0, 0)),    # full weight
                pl.BlockSpec((1, N), lambda i: (0, 0)),    # scale
                pl.BlockSpec((1, N), lambda i: (0, 0)),    # bias
            ],
            out_specs=pl.BlockSpec((TM, N), lambda i: (i, 0)),
        ),
        compiler_params=pltpu.CompilerParams(
            dimension_semantics=("parallel",)),
    )(a_b, w_b, s2, b2)
    return out[:M] if Mp != M else out


# ----------------------------------------------------------------------------
# Plain-JAX glue: im2col (bf16, no K pad), closed-form 2x bilinear upsample
# ----------------------------------------------------------------------------
def im2col(x, ksize, stride, pad):
    """x: (N,H,W,C) -> bf16 patch matrix (N*Ho*Wo, ksize*ksize*C)."""
    n, h, w, c = x.shape
    xp = jnp.pad(x.astype(jnp.bfloat16),
                 ((0, 0), (pad, pad), (pad, pad), (0, 0)))
    ho = (h + 2 * pad - ksize) // stride + 1
    wo = (w + 2 * pad - ksize) // stride + 1
    cols = []
    for dy in range(ksize):
        for dx in range(ksize):
            cols.append(xp[:, dy:dy + stride * ho:stride,
                           dx:dx + stride * wo:stride, :])
    patches = jnp.stack(cols, axis=3)                 # (n, ho, wo, k*k, c)
    return patches.reshape(n * ho * wo, ksize * ksize * c), (n, ho, wo)


def conv_bn_act(x, W, b_conv, bn, act, stride=1, pad=1):
    """Conv2d (+ folded BatchNorm) + activation via the fused Pallas kernel."""
    kh, kw, cin, cout = W.shape
    patches, (n, ho, wo) = im2col(x, kh, stride, pad)
    w_mat = W.reshape(kh * kw * cin, cout)
    if bn is not None:
        gamma, beta, mean, var = bn
        s = gamma / jnp.sqrt(var + 1e-5)
        scale = s
        bias = s * (b_conv - mean) + beta
    else:
        scale = jnp.ones((cout,), jnp.float32)
        bias = b_conv
    out = fused_matmul_affine_act(patches, w_mat, scale, bias, act)
    return out.reshape(n, ho, wo, cout)


def upsample2x_bilinear(x):
    """nn.Upsample(scale_factor=2, mode='bilinear', align_corners=False), NHWC.

    Closed form for scale 2: out[2m] = .25*x[m-1] + .75*x[m],
    out[2m+1] = .75*x[m] + .25*x[m+1], with edge clamping -- no gathers.
    """
    n, h, w, c = x.shape
    # rows
    xm = jnp.concatenate([x[:, :1], x[:, :-1]], axis=1)
    xp = jnp.concatenate([x[:, 1:], x[:, -1:]], axis=1)
    even = 0.25 * xm + 0.75 * x
    odd = 0.75 * x + 0.25 * xp
    y = jnp.stack([even, odd], axis=2).reshape(n, 2 * h, w, c)
    # cols
    ym = jnp.concatenate([y[:, :, :1], y[:, :, :-1]], axis=2)
    yp = jnp.concatenate([y[:, :, 1:], y[:, :, -1:]], axis=2)
    even = 0.25 * ym + 0.75 * y
    odd = 0.75 * y + 0.25 * yp
    return jnp.stack([even, odd], axis=3).reshape(n, 2 * h, 2 * w, c)


def conv_transpose2d_tanh(x, Wt, b):
    """ConvTranspose2d(kernel=4, stride=2, padding=1) + Tanh, as 4 sub-pixel
    2x2 convolutions folded into ONE GEMM (no zero-inserted buffer).

    Wt: (4, 4, Cin, Cout) in true conv-transpose layout, i.e. per spatial dim
        out[2*i - 1 + k] += x[i] * Wt[k].
    A PyTorch ConvTranspose2d weight (Cin, Cout, 4, 4) maps to this layout via
    w.permute(2, 3, 0, 1); no spatial flip is needed.
    """
    n, h, w, cin = x.shape
    cout = Wt.shape[-1]
    # Output phase (py, px) in {0,1}^2 reads taps (dy, dx) of the 3x3
    # neighbourhood of the 1-padded input with dy in {py, py+1},
    # dx in {px, px+1}, weighted by Wt[3 + py - 2*dy, 3 + px - 2*dx].
    w_big = jnp.zeros((3, 3, cin, 2, 2, cout), Wt.dtype)
    for py in (0, 1):
        for px in (0, 1):
            for dy in (py, py + 1):
                for dx in (px, px + 1):
                    w_big = w_big.at[dy, dx, :, py, px, :].set(
                        Wt[3 + py - 2 * dy, 3 + px - 2 * dx])
    w_mat = w_big.reshape(9 * cin, 4 * cout)
    bias = jnp.tile(b, 4)                       # same bias for every phase
    scale = jnp.ones((4 * cout,), jnp.float32)

    patches, _ = im2col(x, 3, 1, 1)             # (n*h*w, 9*cin)
    out = fused_matmul_affine_act(patches, w_mat, scale, bias, "tanh")
    out = out.reshape(n, h, w, 2, 2, cout)      # (..., py, px, cout)
    out = out.transpose(0, 1, 3, 2, 4, 5).reshape(n, 2 * h, 2 * w, cout)
    return out


# ----------------------------------------------------------------------------
# Deterministic parameter init (shapes follow the PyTorch module)
# ----------------------------------------------------------------------------
def _init_conv(key, k, cin, cout):
    k1, k2 = jax.random.split(key)
    W = jax.random.normal(k1, (k, k, cin, cout), jnp.float32) / np.sqrt(k * k * cin)
    b = 0.01 * jax.random.normal(k2, (cout,), jnp.float32)
    return W, b


def _init_bn(key, c):
    k1, k2, k3, k4 = jax.random.split(key, 4)
    gamma = 1.0 + 0.1 * jax.random.normal(k1, (c,), jnp.float32)
    beta = 0.1 * jax.random.normal(k2, (c,), jnp.float32)
    mean = 0.1 * jax.random.normal(k3, (c,), jnp.float32)
    var = 1.0 + 0.1 * jax.random.uniform(k4, (c,), jnp.float32)
    return gamma, beta, mean, var


def init_params(key, nFilters=8, nBottleneck=64):
    nF = nFilters
    layer_defs = {
        "d1a": (3, 1, nF), "d1b": (3, nF, nF),
        "d2a": (3, nF, 2 * nF), "d2b": (3, 2 * nF, 2 * nF),
        "d3a": (3, 2 * nF, 4 * nF), "d3b": (3, 4 * nF, 4 * nF),
        "d4a": (3, 4 * nF, 8 * nF), "d4b": (3, 8 * nF, 8 * nF),
        "d5":  (3, 8 * nF, nBottleneck),
        "up1": (3, nBottleneck, 4 * nF),
        "up2": (3, 8 * nF, 2 * nF),
        "up3": (3, 4 * nF, nF),
        "up4": (4, 2 * nF, 1),       # ConvTranspose2d(2*nF, 1, 4, 2, 1)
    }
    params = {}
    for name, (k, cin, cout) in layer_defs.items():
        key, kc, kb = jax.random.split(key, 3)
        W, b = _init_conv(kc, k, cin, cout)
        bn = _init_bn(kb, cout) if name != "up4" else None
        params[name] = {"W": W, "b": b, "bn": bn}
    return params


# ----------------------------------------------------------------------------
# Forward pass (mirrors ModelConvUnet.forward)
# ----------------------------------------------------------------------------
def model_conv_unet_forward(params, x_nchw, context_size=32, predictor_size=16):
    x = jnp.transpose(x_nchw, (0, 2, 3, 1))            # NCHW -> NHWC

    def block_down(t, p, stride):
        return conv_bn_act(t, p["W"], p["b"], p["bn"], "relu", stride=stride, pad=1)

    def block_up(t, p):
        return conv_bn_act(upsample2x_bilinear(t), p["W"], p["b"], p["bn"],
                           "relu", stride=1, pad=1)

    x1 = block_down(block_down(x, params["d1a"], 1), params["d1b"], 2)
    x2 = block_down(block_down(x1, params["d2a"], 1), params["d2b"], 2)
    x3 = block_down(block_down(x2, params["d3a"], 1), params["d3b"], 2)
    x4 = block_down(block_down(x3, params["d4a"], 1), params["d4b"], 2)
    x5 = block_down(x4, params["d5"], 1)
    features = x5

    u = block_up(x5, params["up1"])
    u = block_up(jnp.concatenate([u, x3], axis=-1), params["up2"])
    u = block_up(jnp.concatenate([u, x2], axis=-1), params["up3"])
    rec = conv_transpose2d_tanh(jnp.concatenate([u, x1], axis=-1),
                                params["up4"]["W"], params["up4"]["b"])

    off = (context_size - predictor_size) // 2
    crop = rec[:, off:off + predictor_size, off:off + predictor_size, :]

    to_nchw = lambda t: jnp.transpose(t, (0, 3, 1, 2))
    return to_nchw(crop), to_nchw(rec), to_nchw(features)


# ----------------------------------------------------------------------------
if __name__ == "__main__":
    key = jax.random.PRNGKey(0)
    kx, kp = jax.random.split(key)

    # Small shapes consistent with the module: NCHW, 1 input channel,
    # 32x32 spatial (divisible by 16 so the 4 stride-2 downsamples are exact).
    x = jax.random.normal(kx, (2, 1, 32, 32), jnp.float32)
    params = init_params(kp, nFilters=8, nBottleneck=64)

    fwd = jax.jit(functools.partial(model_conv_unet_forward,
                                    context_size=32, predictor_size=16))
    crop, rec, feats = fwd(params, x)
    jax.block_until_ready((crop, rec, feats))

    assert crop.shape == (2, 1, 16, 16), crop.shape
    assert rec.shape == (2, 1, 32, 32), rec.shape
    assert feats.shape == (2, 64, 2, 2), feats.shape
    print("KERNEL_OK")
</pallas_src>

<mosaic_0001>
module attributes {stable_mosaic.version = 11 : i64} {
  func.func @_mm_affine_act_kernel(%arg0: i32, %arg1: memref<512x9xbf16, #tpu.memory_space<vmem>>, %arg2: memref<9x8xbf16, #tpu.memory_space<vmem>>, %arg3: memref<1x8xf32, #tpu.memory_space<vmem>>, %arg4: memref<1x8xf32, #tpu.memory_space<vmem>>, %arg5: memref<512x8xf32, #tpu.memory_space<vmem>>) attributes {dimension_semantics = [#tpu.dimension_semantics<parallel>], iteration_bounds = array<i64: 4>, scalar_prefetch = 0 : i64, scratch_operands = 0 : i64, tpu.core_type = #tpu.core_type<tc>, window_params = [{transform_indices = @transform_0, window_bounds = array<i64: 512, 9>}, {pipeline_mode = #tpu.pipeline_mode<synchronous>, transform_indices = @transform_1, window_bounds = array<i64: 9, 8>}, {pipeline_mode = #tpu.pipeline_mode<synchronous>, transform_indices = @transform_2, window_bounds = array<i64: 1, 8>}, {pipeline_mode = #tpu.pipeline_mode<synchronous>, transform_indices = @transform_3, window_bounds = array<i64: 1, 8>}, {transform_indices = @transform_4, window_bounds = array<i64: 512, 8>}]} {
    %c0 = arith.constant 0 : index
    %c0_0 = arith.constant 0 : index
    %0 = vector.load %arg1[%c0, %c0_0] : memref<512x9xbf16, #tpu.memory_space<vmem>>, vector<512x9xbf16>
    %c0_1 = arith.constant 0 : index
    %c0_2 = arith.constant 0 : index
    %1 = vector.load %arg2[%c0_1, %c0_2] : memref<9x8xbf16, #tpu.memory_space<vmem>>, vector<9x8xbf16>
    %cst = arith.constant dense<0.000000e+00> : vector<512x8xf32>
    %2 = tpu.matmul %0, %1, %cst {dimension_numbers = #tpu.dot_dimension_numbers<[1], [0], [0], [1], [0, 0, 1, 1], [], []>} : vector<512x9xbf16>, vector<9x8xbf16>, vector<512x8xf32> -> vector<512x8xf32>
    %c0_3 = arith.constant 0 : index
    %c0_4 = arith.constant 0 : index
    %3 = vector.load %arg3[%c0_3, %c0_4] : memref<1x8xf32, #tpu.memory_space<vmem>>, vector<1x8xf32>
    %4 = vector.broadcast %3 : vector<1x8xf32> to vector<512x8xf32>
    %5 = arith.mulf %2, %4 : vector<512x8xf32>
    %c0_5 = arith.constant 0 : index
    %c0_6 = arith.constant 0 : index
    %6 = vector.load %arg4[%c0_5, %c0_6] : memref<1x8xf32, #tpu.memory_space<vmem>>, vector<1x8xf32>
    %7 = vector.broadcast %6 : vector<1x8xf32> to vector<512x8xf32>
    %8 = arith.addf %5, %7 : vector<512x8xf32>
    %cst_7 = arith.constant 0.000000e+00 : f32
    %9 = vector.broadcast %cst_7 : f32 to vector<512x8xf32>
    %10 = arith.maximumf %8, %9 : vector<512x8xf32>
    %c0_8 = arith.constant 0 : index
    %c0_9 = arith.constant 0 : index
    %11 = vector.load %arg5[%c0_8, %c0_9] : memref<512x8xf32, #tpu.memory_space<vmem>>, vector<512x8xf32>
    tpu.vector_store %arg5[%c0_8, %c0_9], %10 {strides = array<i32>} : memref<512x8xf32, #tpu.memory_space<vmem>>, vector<512x8xf32>,
    return
  }
  func.func @transform_0(%arg0: i32) -> (i32, i32) {
    %c0_i32 = arith.constant 0 : i32
    %c0_i32_0 = arith.constant 0 : i32
    return %arg0, %c0_i32 : i32, i32
  }
  func.func @transform_1(%arg0: i32) -> (i32, i32) {
    %c0_i32 = arith.constant 0 : i32
    %c0_i32_0 = arith.constant 0 : i32
    %c0_i32_1 = arith.constant 0 : i32
    return %c0_i32, %c0_i32_0 : i32, i32
  }
  func.func @transform_2(%arg0: i32) -> (i32, i32) {
    %c0_i32 = arith.constant 0 : i32
    %c0_i32_0 = arith.constant 0 : i32
    %c0_i32_1 = arith.constant 0 : i32
    return %c0_i32, %c0_i32_0 : i32, i32
  }
  func.func @transform_3(%arg0: i32) -> (i32, i32) {
    %c0_i32 = arith.constant 0 : i32
    %c0_i32_0 = arith.constant 0 : i32
    %c0_i32_1 = arith.constant 0 : i32
    return %c0_i32, %c0_i32_0 : i32, i32
  }
  func.func @transform_4(%arg0: i32) -> (i32, i32) {
    %c0_i32 = arith.constant 0 : i32
    %c0_i32_0 = arith.constant 0 : i32
    return %arg0, %c0_i32 : i32, i32
  }
}

module attributes {stable_mosaic.version = 11 : i64} {
  func.func @_mm_affine_act_kernel(%arg0: i32, %arg1: memref<256x72xbf16, #tpu.memory_space<vmem>>, %arg2: memref<72x8xbf16, #tpu.memory_space<vmem>>, %arg3: memref<1x8xf32, #tpu.memory_space<vmem>>, %arg4: memref<1x8xf32, #tpu.memory_space<vmem>>, %arg5: memref<256x8xf32, #tpu.memory_space<vmem>>) attributes {dimension_semantics = [#tpu.dimension_semantics<parallel>], iteration_bounds = array<i64: 2>, scalar_prefetch = 0 : i64, scratch_operands = 0 : i64, tpu.core_type = #tpu.core_type<tc>, window_params = [{transform_indices = @transform_0, window_bounds = array<i64: 256, 72>}, {pipeline_mode = #tpu.pipeline_mode<synchronous>, transform_indices = @transform_1, window_bounds = array<i64: 72, 8>}, {pipeline_mode = #tpu.pipeline_mode<synchronous>, transform_indices = @transform_2, window_bounds = array<i64: 1, 8>}, {pipeline_mode = #tpu.pipeline_mode<synchronous>, transform_indices = @transform_3, window_bounds = array<i64: 1, 8>}, {transform_indices = @transform_4, window_bounds = array<i64: 256, 8>}]} {
    %c0 = arith.constant 0 : index
    %c0_0 = arith.constant 0 : index
    %0 = vector.load %arg1[%c0, %c0_0] : memref<256x72xbf16, #tpu.memory_space<vmem>>, vector<256x72xbf16>
    %c0_1 = arith.constant 0 : index
    %c0_2 = arith.constant 0 : index
    %1 = vector.load %arg2[%c0_1, %c0_2] : memref<72x8xbf16, #tpu.memory_space<vmem>>, vector<72x8xbf16>
    %cst = arith.constant dense<0.000000e+00> : vector<256x8xf32>
    %2 = tpu.matmul %0, %1, %cst {dimension_numbers = #tpu.dot_dimension_numbers<[1], [0], [0], [1], [0, 0, 1, 1], [], []>} : vector<256x72xbf16>, vector<72x8xbf16>, vector<256x8xf32> -> vector<256x8xf32>
    %c0_3 = arith.constant 0 : index
    %c0_4 = arith.constant 0 : index
    %3 = vector.load %arg3[%c0_3, %c0_4] : memref<1x8xf32, #tpu.memory_space<vmem>>, vector<1x8xf32>
    %4 = vector.broadcast %3 : vector<1x8xf32> to vector<256x8xf32>
    %5 = arith.mulf %2, %4 : vector<256x8xf32>
    %c0_5 = arith.constant 0 : index
    %c0_6 = arith.constant 0 : index
    %6 = vector.load %arg4[%c0_5, %c0_6] : memref<1x8xf32, #tpu.memory_space<vmem>>, vector<1x8xf32>
    %7 = vector.broadcast %6 : vector<1x8xf32> to vector<256x8xf32>
    %8 = arith.addf %5, %7 : vector<256x8xf32>
    %cst_7 = arith.constant 0.000000e+00 : f32
    %9 = vector.broadcast %cst_7 : f32 to vector<256x8xf32>
    %10 = arith.maximumf %8, %9 : vector<256x8xf32>
    %c0_8 = arith.constant 0 : index
    %c0_9 = arith.constant 0 : index
    %11 = vector.load %arg5[%c0_8, %c0_9] : memref<256x8xf32, #tpu.memory_space<vmem>>, vector<256x8xf32>
    tpu.vector_store %arg5[%c0_8, %c0_9], %10 {strides = array<i32>} : memref<256x8xf32, #tpu.memory_space<vmem>>, vector<256x8xf32>,
    return
  }
  func.func @transform_0(%arg0: i32) -> (i32, i32) {
    %c0_i32 = arith.constant 0 : i32
    %c0_i32_0 = arith.constant 0 : i32
    return %arg0, %c0_i32 : i32, i32
  }
  func.func @transform_1(%arg0: i32) -> (i32, i32) {
    %c0_i32 = arith.constant 0 : i32
    %c0_i32_0 = arith.constant 0 : i32
    %c0_i32_1 = arith.constant 0 : i32
    return %c0_i32, %c0_i32_0 : i32, i32
  }
  func.func @transform_2(%arg0: i32) -> (i32, i32) {
    %c0_i32 = arith.constant 0 : i32
    %c0_i32_0 = arith.constant 0 : i32
    %c0_i32_1 = arith.constant 0 : i32
    return %c0_i32, %c0_i32_0 : i32, i32
  }
  func.func @transform_3(%arg0: i32) -> (i32, i32) {
    %c0_i32 = arith.constant 0 : i32
    %c0_i32_0 = arith.constant 0 : i32
    %c0_i32_1 = arith.constant 0 : i32
    return %c0_i32, %c0_i32_0 : i32, i32
  }
  func.func @transform_4(%arg0: i32) -> (i32, i32) {
    %c0_i32 = arith.constant 0 : i32
    %c0_i32_0 = arith.constant 0 : i32
    return %arg0, %c0_i32 : i32, i32
  }
}

module attributes {stable_mosaic.version = 11 : i64} {
  func.func @_mm_affine_act_kernel(%arg0: i32, %arg1: memref<256x72xbf16, #tpu.memory_space<vmem>>, %arg2: memref<72x16xbf16, #tpu.memory_space<vmem>>, %arg3: memref<1x16xf32, #tpu.memory_space<vmem>>, %arg4: memref<1x16xf32, #tpu.memory_space<vmem>>, %arg5: memref<256x16xf32, #tpu.memory_space<vmem>>) attributes {dimension_semantics = [#tpu.dimension_semantics<parallel>], iteration_bounds = array<i64: 2>, scalar_prefetch = 0 : i64, scratch_operands = 0 : i64, tpu.core_type = #tpu.core_type<tc>, window_params = [{transform_indices = @transform_0, window_bounds = array<i64: 256, 72>}, {pipeline_mode = #tpu.pipeline_mode<synchronous>, transform_indices = @transform_1, window_bounds = array<i64: 72, 16>}, {pipeline_mode = #tpu.pipeline_mode<synchronous>, transform_indices = @transform_2, window_bounds = array<i64: 1, 16>}, {pipeline_mode = #tpu.pipeline_mode<synchronous>, transform_indices = @transform_3, window_bounds = array<i64: 1, 16>}, {transform_indices = @transform_4, window_bounds = array<i64: 256, 16>}]} {
    %c0 = arith.constant 0 : index
    %c0_0 = arith.constant 0 : index
    %0 = vector.load %arg1[%c0, %c0_0] : memref<256x72xbf16, #tpu.memory_space<vmem>>, vector<256x72xbf16>
    %c0_1 = arith.constant 0 : index
    %c0_2 = arith.constant 0 : index
    %1 = vector.load %arg2[%c0_1, %c0_2] : memref<72x16xbf16, #tpu.memory_space<vmem>>, vector<72x16xbf16>
    %cst = arith.constant dense<0.000000e+00> : vector<256x16xf32>
    %2 = tpu.matmul %0, %1, %cst {dimension_numbers = #tpu.dot_dimension_numbers<[1], [0], [0], [1], [0, 0, 1, 1], [], []>} : vector<256x72xbf16>, vector<72x16xbf16>, vector<256x16xf32> -> vector<256x16xf32>
    %c0_3 = arith.constant 0 : index
    %c0_4 = arith.constant 0 : index
    %3 = vector.load %arg3[%c0_3, %c0_4] : memref<1x16xf32, #tpu.memory_space<vmem>>, vector<1x16xf32>
    %4 = vector.broadcast %3 : vector<1x16xf32> to vector<256x16xf32>
    %5 = arith.mulf %2, %4 : vector<256x16xf32>
    %c0_5 = arith.constant 0 : index
    %c0_6 = arith.constant 0 : index
    %6 = vector.load %arg4[%c0_5, %c0_6] : memref<1x16xf32, #tpu.memory_space<vmem>>, vector<1x16xf32>
    %7 = vector.broadcast %6 : vector<1x16xf32> to vector<256x16xf32>
    %8 = arith.addf %5, %7 : vector<256x16xf32>
    %cst_7 = arith.constant 0.000000e+00 : f32
    %9 = vector.broadcast %cst_7 : f32 to vector<256x16xf32>
    %10 = arith.maximumf %8, %9 : vector<256x16xf32>
    %c0_8 = arith.constant 0 : index
    %c0_9 = arith.constant 0 : index
    %11 = vector.load %arg5[%c0_8, %c0_9] : memref<256x16xf32, #tpu.memory_space<vmem>>, vector<256x16xf32>
    tpu.vector_store %arg5[%c0_8, %c0_9], %10 {strides = array<i32>} : memref<256x16xf32, #tpu.memory_space<vmem>>, vector<256x16xf32>,
    return
  }
  func.func @transform_0(%arg0: i32) -> (i32, i32) {
    %c0_i32 = arith.constant 0 : i32
    %c0_i32_0 = arith.constant 0 : i32
    return %arg0, %c0_i32 : i32, i32
  }
  func.func @transform_1(%arg0: i32) -> (i32, i32) {
    %c0_i32 = arith.constant 0 : i32
    %c0_i32_0 = arith.constant 0 : i32
    %c0_i32_1 = arith.constant 0 : i32
    return %c0_i32, %c0_i32_0 : i32, i32
  }
  func.func @transform_2(%arg0: i32) -> (i32, i32) {
    %c0_i32 = arith.constant 0 : i32
    %c0_i32_0 = arith.constant 0 : i32
    %c0_i32_1 = arith.constant 0 : i32
    return %c0_i32, %c0_i32_0 : i32, i32
  }
  func.func @transform_3(%arg0: i32) -> (i32, i32) {
    %c0_i32 = arith.constant 0 : i32
    %c0_i32_0 = arith.constant 0 : i32
    %c0_i32_1 = arith.constant 0 : i32
    return %c0_i32, %c0_i32_0 : i32, i32
  }
  func.func @transform_4(%arg0: i32) -> (i32, i32) {
    %c0_i32 = arith.constant 0 : i32
    %c0_i32_0 = arith.constant 0 : i32
    return %arg0, %c0_i32 : i32, i32
  }
}

module attributes {stable_mosaic.version = 11 : i64} {
  func.func @_mm_affine_act_kernel(%arg0: i32, %arg1: memref<128x144xbf16, #tpu.memory_space<vmem>>, %arg2: memref<144x16xbf16, #tpu.memory_space<vmem>>, %arg3: memref<1x16xf32, #tpu.memory_space<vmem>>, %arg4: memref<1x16xf32, #tpu.memory_space<vmem>>, %arg5: memref<128x16xf32, #tpu.memory_space<vmem>>) attributes {dimension_semantics = [#tpu.dimension_semantics<parallel>], iteration_bounds = array<i64: 1>, scalar_prefetch = 0 : i64, scratch_operands = 0 : i64, tpu.core_type = #tpu.core_type<tc>, window_params = [{transform_indices = @transform_0, window_bounds = array<i64: 128, 144>}, {pipeline_mode = #tpu.pipeline_mode<synchronous>, transform_indices = @transform_1, window_bounds = array<i64: 144, 16>}, {pipeline_mode = #tpu.pipeline_mode<synchronous>, transform_indices = @transform_2, window_bounds = array<i64: 1, 16>}, {pipeline_mode = #tpu.pipeline_mode<synchronous>, transform_indices = @transform_3, window_bounds = array<i64: 1, 16>}, {transform_indices = @transform_4, window_bounds = array<i64: 128, 16>}]} {
    %c0 = arith.constant 0 : index
    %c0_0 = arith.constant 0 : index
    %0 = vector.load %arg1[%c0, %c0_0] : memref<128x144xbf16, #tpu.memory_space<vmem>>, vector<128x144xbf16>
    %c0_1 = arith.constant 0 : index
    %c0_2 = arith.constant 0 : index
    %1 = vector.load %arg2[%c0_1, %c0_2] : memref<144x16xbf16, #tpu.memory_space<vmem>>, vector<144x16xbf16>
    %cst = arith.constant dense<0.000000e+00> : vector<128x16xf32>
    %2 = tpu.matmul %0, %1, %cst {dimension_numbers = #tpu.dot_dimension_numbers<[1], [0], [0], [1], [0, 0, 1, 1], [], []>} : vector<128x144xbf16>, vector<144x16xbf16>, vector<128x16xf32> -> vector<128x16xf32>
    %c0_3 = arith.constant 0 : index
    %c0_4 = arith.constant 0 : index
    %3 = vector.load %arg3[%c0_3, %c0_4] : memref<1x16xf32, #tpu.memory_space<vmem>>, vector<1x16xf32>
    %4 = vector.broadcast %3 : vector<1x16xf32> to vector<128x16xf32>
    %5 = arith.mulf %2, %4 : vector<128x16xf32>
    %c0_5 = arith.constant 0 : index
    %c0_6 = arith.constant 0 : index
    %6 = vector.load %arg4[%c0_5, %c0_6] : memref<1x16xf32, #tpu.memory_space<vmem>>, vector<1x16xf32>
    %7 = vector.broadcast %6 : vector<1x16xf32> to vector<128x16xf32>
    %8 = arith.addf %5, %7 : vector<128x16xf32>
    %cst_7 = arith.constant 0.000000e+00 : f32
    %9 = vector.broadcast %cst_7 : f32 to vector<128x16xf32>
    %10 = arith.maximumf %8, %9 : vector<128x16xf32>
    %c0_8 = arith.constant 0 : index
    %c0_9 = arith.constant 0 : index
    %11 = vector.load %arg5[%c0_8, %c0_9] : memref<128x16xf32, #tpu.memory_space<vmem>>, vector<128x16xf32>
    tpu.vector_store %arg5[%c0_8, %c0_9], %10 {strides = array<i32>} : memref<128x16xf32, #tpu.memory_space<vmem>>, vector<128x16xf32>,
    return
  }
  func.func @transform_0(%arg0: i32) -> (i32, i32) {
    %c0_i32 = arith.constant 0 : i32
    %c0_i32_0 = arith.constant 0 : i32
    return %arg0, %c0_i32 : i32, i32
  }
  func.func @transform_1(%arg0: i32) -> (i32, i32) {
    %c0_i32 = arith.constant 0 : i32
    %c0_i32_0 = arith.constant 0 : i32
    %c0_i32_1 = arith.constant 0 : i32
    return %c0_i32, %c0_i32_0 : i32, i32
  }
  func.func @transform_2(%arg0: i32) -> (i32, i32) {
    %c0_i32 = arith.constant 0 : i32
    %c0_i32_0 = arith.constant 0 : i32
    %c0_i32_1 = arith.constant 0 : i32
    return %c0_i32, %c0_i32_0 : i32, i32
  }
  func.func @transform_3(%arg0: i32) -> (i32, i32) {
    %c0_i32 = arith.constant 0 : i32
    %c0_i32_0 = arith.constant 0 : i32
    %c0_i32_1 = arith.constant 0 : i32
    return %c0_i32, %c0_i32_0 : i32, i32
  }
  func.func @transform_4(%arg0: i32) -> (i32, i32) {
    %c0_i32 = arith.constant 0 : i32
    %c0_i32_0 = arith.constant 0 : i32
    return %arg0, %c0_i32 : i32, i32
  }
}

module attributes {stable_mosaic.version = 11 : i64} {
  func.func @_mm_affine_act_kernel(%arg0: i32, %arg1: memref<128x144xbf16, #tpu.memory_space<vmem>>, %arg2: memref<144x32xbf16, #tpu.memory_space<vmem>>, %arg3: memref<1x32xf32, #tpu.memory_space<vmem>>, %arg4: memref<1x32xf32, #tpu.memory_space<vmem>>, %arg5: memref<128x32xf32, #tpu.memory_space<vmem>>) attributes {dimension_semantics = [#tpu.dimension_semantics<parallel>], iteration_bounds = array<i64: 1>, scalar_prefetch = 0 : i64, scratch_operands = 0 : i64, tpu.core_type = #tpu.core_type<tc>, window_params = [{transform_indices = @transform_0, window_bounds = array<i64: 128, 144>}, {pipeline_mode = #tpu.pipeline_mode<synchronous>, transform_indices = @transform_1, window_bounds = array<i64: 144, 32>}, {pipeline_mode = #tpu.pipeline_mode<synchronous>, transform_indices = @transform_2, window_bounds = array<i64: 1, 32>}, {pipeline_mode = #tpu.pipeline_mode<synchronous>, transform_indices = @transform_3, window_bounds = array<i64: 1, 32>}, {transform_indices = @transform_4, window_bounds = array<i64: 128, 32>}]} {
    %c0 = arith.constant 0 : index
    %c0_0 = arith.constant 0 : index
    %0 = vector.load %arg1[%c0, %c0_0] : memref<128x144xbf16, #tpu.memory_space<vmem>>, vector<128x144xbf16>
    %c0_1 = arith.constant 0 : index
    %c0_2 = arith.constant 0 : index
    %1 = vector.load %arg2[%c0_1, %c0_2] : memref<144x32xbf16, #tpu.memory_space<vmem>>, vector<144x32xbf16>
    %cst = arith.constant dense<0.000000e+00> : vector<128x32xf32>
    %2 = tpu.matmul %0, %1, %cst {dimension_numbers = #tpu.dot_dimension_numbers<[1], [0], [0], [1], [0, 0, 1, 1], [], []>} : vector<128x144xbf16>, vector<144x32xbf16>, vector<128x32xf32> -> vector<128x32xf32>
    %c0_3 = arith.constant 0 : index
    %c0_4 = arith.constant 0 : index
    %3 = vector.load %arg3[%c0_3, %c0_4] : memref<1x32xf32, #tpu.memory_space<vmem>>, vector<1x32xf32>
    %4 = vector.broadcast %3 : vector<1x32xf32> to vector<128x32xf32>
    %5 = arith.mulf %2, %4 : vector<128x32xf32>
    %c0_5 = arith.constant 0 : index
    %c0_6 = arith.constant 0 : index
    %6 = vector.load %arg4[%c0_5, %c0_6] : memref<1x32xf32, #tpu.memory_space<vmem>>, vector<1x32xf32>
    %7 = vector.broadcast %6 : vector<1x32xf32> to vector<128x32xf32>
    %8 = arith.addf %5, %7 : vector<128x32xf32>
    %cst_7 = arith.constant 0.000000e+00 : f32
    %9 = vector.broadcast %cst_7 : f32 to vector<128x32xf32>
    %10 = arith.maximumf %8, %9 : vector<128x32xf32>
    %c0_8 = arith.constant 0 : index
    %c0_9 = arith.constant 0 : index
    %11 = vector.load %arg5[%c0_8, %c0_9] : memref<128x32xf32, #tpu.memory_space<vmem>>, vector<128x32xf32>
    tpu.vector_store %arg5[%c0_8, %c0_9], %10 {strides = array<i32>} : memref<128x32xf32, #tpu.memory_space<vmem>>, vector<128x32xf32>,
    return
  }
  func.func @transform_0(%arg0: i32) -> (i32, i32) {
    %c0_i32 = arith.constant 0 : i32
    %c0_i32_0 = arith.constant 0 : i32
    return %arg0, %c0_i32 : i32, i32
  }
  func.func @transform_1(%arg0: i32) -> (i32, i32) {
    %c0_i32 = arith.constant 0 : i32
    %c0_i32_0 = arith.constant 0 : i32
    %c0_i32_1 = arith.constant 0 : i32
    return %c0_i32, %c0_i32_0 : i32, i32
  }
  func.func @transform_2(%arg0: i32) -> (i32, i32) {
    %c0_i32 = arith.constant 0 : i32
    %c0_i32_0 = arith.constant 0 : i32
    %c0_i32_1 = arith.constant 0 : i32
    return %c0_i32, %c0_i32_0 : i32, i32
  }
  func.func @transform_3(%arg0: i32) -> (i32, i32) {
    %c0_i32 = arith.constant 0 : i32
    %c0_i32_0 = arith.constant 0 : i32
    %c0_i32_1 = arith.constant 0 : i32
    return %c0_i32, %c0_i32_0 : i32, i32
  }
  func.func @transform_4(%arg0: i32) -> (i32, i32) {
    %c0_i32 = arith.constant 0 : i32
    %c0_i32_0 = arith.constant 0 : i32
    return %arg0, %c0_i32 : i32, i32
  }
}

module attributes {stable_mosaic.version = 11 : i64} {
  func.func @_mm_affine_act_kernel(%arg0: i32, %arg1: memref<32x288xbf16, #tpu.memory_space<vmem>>, %arg2: memref<288x32xbf16, #tpu.memory_space<vmem>>, %arg3: memref<1x32xf32, #tpu.memory_space<vmem>>, %arg4: memref<1x32xf32, #tpu.memory_space<vmem>>, %arg5: memref<32x32xf32, #tpu.memory_space<vmem>>) attributes {dimension_semantics = [#tpu.dimension_semantics<parallel>], iteration_bounds = array<i64: 1>, scalar_prefetch = 0 : i64, scratch_operands = 0 : i64, tpu.core_type = #tpu.core_type<tc>, window_params = [{transform_indices = @transform_0, window_bounds = array<i64: 32, 288>}, {pipeline_mode = #tpu.pipeline_mode<synchronous>, transform_indices = @transform_1, window_bounds = array<i64: 288, 32>}, {pipeline_mode = #tpu.pipeline_mode<synchronous>, transform_indices = @transform_2, window_bounds = array<i64: 1, 32>}, {pipeline_mode = #tpu.pipeline_mode<synchronous>, transform_indices = @transform_3, window_bounds = array<i64: 1, 32>}, {transform_indices = @transform_4, window_bounds = array<i64: 32, 32>}]} {
    %c0 = arith.constant 0 : index
    %c0_0 = arith.constant 0 : index
    %0 = vector.load %arg1[%c0, %c0_0] : memref<32x288xbf16, #tpu.memory_space<vmem>>, vector<32x288xbf16>
    %c0_1 = arith.constant 0 : index
    %c0_2 = arith.constant 0 : index
    %1 = vector.load %arg2[%c0_1, %c0_2] : memref<288x32xbf16, #tpu.memory_space<vmem>>, vector<288x32xbf16>
    %cst = arith.constant dense<0.000000e+00> : vector<32x32xf32>
    %2 = tpu.matmul %0, %1, %cst {dimension_numbers = #tpu.dot_dimension_numbers<[1], [0], [0], [1], [0, 0, 1, 1], [], []>} : vector<32x288xbf16>, vector<288x32xbf16>, vector<32x32xf32> -> vector<32x32xf32>
    %c0_3 = arith.constant 0 : index
    %c0_4 = arith.constant 0 : index
    %3 = vector.load %arg3[%c0_3, %c0_4] : memref<1x32xf32, #tpu.memory_space<vmem>>, vector<1x32xf32>
    %4 = vector.broadcast %3 : vector<1x32xf32> to vector<32x32xf32>
    %5 = arith.mulf %2, %4 : vector<32x32xf32>
    %c0_5 = arith.constant 0 : index
    %c0_6 = arith.constant 0 : index
    %6 = vector.load %arg4[%c0_5, %c0_6] : memref<1x32xf32, #tpu.memory_space<vmem>>, vector<1x32xf32>
    %7 = vector.broadcast %6 : vector<1x32xf32> to vector<32x32xf32>
    %8 = arith.addf %5, %7 : vector<32x32xf32>
    %cst_7 = arith.constant 0.000000e+00 : f32
    %9 = vector.broadcast %cst_7 : f32 to vector<32x32xf32>
    %10 = arith.maximumf %8, %9 : vector<32x32xf32>
    %c0_8 = arith.constant 0 : index
    %c0_9 = arith.constant 0 : index
    %11 = vector.load %arg5[%c0_8, %c0_9] : memref<32x32xf32, #tpu.memory_space<vmem>>, vector<32x32xf32>
    tpu.vector_store %arg5[%c0_8, %c0_9], %10 {strides = array<i32>} : memref<32x32xf32, #tpu.memory_space<vmem>>, vector<32x32xf32>,
    return
  }
  func.func @transform_0(%arg0: i32) -> (i32, i32) {
    %c0_i32 = arith.constant 0 : i32
    %c0_i32_0 = arith.constant 0 : i32
    return %arg0, %c0_i32 : i32, i32
  }
  func.func @transform_1(%arg0: i32) -> (i32, i32) {
    %c0_i32 = arith.constant 0 : i32
    %c0_i32_0 = arith.constant 0 : i32
    %c0_i32_1 = arith.constant 0 : i32
    return %c0_i32, %c0_i32_0 : i32, i32
  }
  func.func @transform_2(%arg0: i32) -> (i32, i32) {
    %c0_i32 = arith.constant 0 : i32
    %c0_i32_0 = arith.constant 0 : i32
    %c0_i32_1 = arith.constant 0 : i32
    return %c0_i32, %c0_i32_0 : i32, i32
  }
  func.func @transform_3(%arg0: i32) -> (i32, i32) {
    %c0_i32 = arith.constant 0 : i32
    %c0_i32_0 = arith.constant 0 : i32
    %c0_i32_1 = arith.constant 0 : i32
    return %c0_i32, %c0_i32_0 : i32, i32
  }
  func.func @transform_4(%arg0: i32) -> (i32, i32) {
    %c0_i32 = arith.constant 0 : i32
    %c0_i32_0 = arith.constant 0 : i32
    return %arg0, %c0_i32 : i32, i32
  }
}

module attributes {stable_mosaic.version = 11 : i64} {
  func.func @_mm_affine_act_kernel(%arg0: i32, %arg1: memref<32x288xbf16, #tpu.memory_space<vmem>>, %arg2: memref<288x64xbf16, #tpu.memory_space<vmem>>, %arg3: memref<1x64xf32, #tpu.memory_space<vmem>>, %arg4: memref<1x64xf32, #tpu.memory_space<vmem>>, %arg5: memref<32x64xf32, #tpu.memory_space<vmem>>) attributes {dimension_semantics = [#tpu.dimension_semantics<parallel>], iteration_bounds = array<i64: 1>, scalar_prefetch = 0 : i64, scratch_operands = 0 : i64, tpu.core_type = #tpu.core_type<tc>, window_params = [{transform_indices = @transform_0, window_bounds = array<i64: 32, 288>}, {pipeline_mode = #tpu.pipeline_mode<synchronous>, transform_indices = @transform_1, window_bounds = array<i64: 288, 64>}, {pipeline_mode = #tpu.pipeline_mode<synchronous>, transform_indices = @transform_2, window_bounds = array<i64: 1, 64>}, {pipeline_mode = #tpu.pipeline_mode<synchronous>, transform_indices = @transform_3, window_bounds = array<i64: 1, 64>}, {transform_indices = @transform_4, window_bounds = array<i64: 32, 64>}]} {
    %c0 = arith.constant 0 : index
    %c0_0 = arith.constant 0 : index
    %0 = vector.load %arg1[%c0, %c0_0] : memref<32x288xbf16, #tpu.memory_space<vmem>>, vector<32x288xbf16>
    %c0_1 = arith.constant 0 : index
    %c0_2 = arith.constant 0 : index
    %1 = vector.load %arg2[%c0_1, %c0_2] : memref<288x64xbf16, #tpu.memory_space<vmem>>, vector<288x64xbf16>
    %cst = arith.constant dense<0.000000e+00> : vector<32x64xf32>
    %2 = tpu.matmul %0, %1, %cst {dimension_numbers = #tpu.dot_dimension_numbers<[1], [0], [0], [1], [0, 0, 1, 1], [], []>} : vector<32x288xbf16>, vector<288x64xbf16>, vector<32x64xf32> -> vector<32x64xf32>
    %c0_3 = arith.constant 0 : index
    %c0_4 = arith.constant 0 : index
    %3 = vector.load %arg3[%c0_3, %c0_4] : memref<1x64xf32, #tpu.memory_space<vmem>>, vector<1x64xf32>
    %4 = vector.broadcast %3 : vector<1x64xf32> to vector<32x64xf32>
    %5 = arith.mulf %2, %4 : vector<32x64xf32>
    %c0_5 = arith.constant 0 : index
    %c0_6 = arith.constant 0 : index
    %6 = vector.load %arg4[%c0_5, %c0_6] : memref<1x64xf32, #tpu.memory_space<vmem>>, vector<1x64xf32>
    %7 = vector.broadcast %6 : vector<1x64xf32> to vector<32x64xf32>
    %8 = arith.addf %5, %7 : vector<32x64xf32>
    %cst_7 = arith.constant 0.000000e+00 : f32
    %9 = vector.broadcast %cst_7 : f32 to vector<32x64xf32>
    %10 = arith.maximumf %8, %9 : vector<32x64xf32>
    %c0_8 = arith.constant 0 : index
    %c0_9 = arith.constant 0 : index
    %11 = vector.load %arg5[%c0_8, %c0_9] : memref<32x64xf32, #tpu.memory_space<vmem>>, vector<32x64xf32>
    tpu.vector_store %arg5[%c0_8, %c0_9], %10 {strides = array<i32>} : memref<32x64xf32, #tpu.memory_space<vmem>>, vector<32x64xf32>,
    return
  }
  func.func @transform_0(%arg0: i32) -> (i32, i32) {
    %c0_i32 = arith.constant 0 : i32
    %c0_i32_0 = arith.constant 0 : i32
    return %arg0, %c0_i32 : i32, i32
  }
  func.func @transform_1(%arg0: i32) -> (i32, i32) {
    %c0_i32 = arith.constant 0 : i32
    %c0_i32_0 = arith.constant 0 : i32
    %c0_i32_1 = arith.constant 0 : i32
    return %c0_i32, %c0_i32_0 : i32, i32
  }
  func.func @transform_2(%arg0: i32) -> (i32, i32) {
    %c0_i32 = arith.constant 0 : i32
    %c0_i32_0 = arith.constant 0 : i32
    %c0_i32_1 = arith.constant 0 : i32
    return %c0_i32, %c0_i32_0 : i32, i32
  }
  func.func @transform_3(%arg0: i32) -> (i32, i32) {
    %c0_i32 = arith.constant 0 : i32
    %c0_i32_0 = arith.constant 0 : i32
    %c0_i32_1 = arith.constant 0 : i32
    return %c0_i32, %c0_i32_0 : i32, i32
  }
  func.func @transform_4(%arg0: i32) -> (i32, i32) {
    %c0_i32 = arith.constant 0 : i32
    %c0_i32_0 = arith.constant 0 : i32
    return %arg0, %c0_i32 : i32, i32
  }
}

module attributes {stable_mosaic.version = 11 : i64} {
  func.func @_mm_affine_act_kernel(%arg0: i32, %arg1: memref<16x576xbf16, #tpu.memory_space<vmem>>, %arg2: memref<576x64xbf16, #tpu.memory_space<vmem>>, %arg3: memref<1x64xf32, #tpu.memory_space<vmem>>, %arg4: memref<1x64xf32, #tpu.memory_space<vmem>>, %arg5: memref<16x64xf32, #tpu.memory_space<vmem>>) attributes {dimension_semantics = [#tpu.dimension_semantics<parallel>], iteration_bounds = array<i64: 1>, scalar_prefetch = 0 : i64, scratch_operands = 0 : i64, tpu.core_type = #tpu.core_type<tc>, window_params = [{transform_indices = @transform_0, window_bounds = array<i64: 16, 576>}, {pipeline_mode = #tpu.pipeline_mode<synchronous>, transform_indices = @transform_1, window_bounds = array<i64: 576, 64>}, {pipeline_mode = #tpu.pipeline_mode<synchronous>, transform_indices = @transform_2, window_bounds = array<i64: 1, 64>}, {pipeline_mode = #tpu.pipeline_mode<synchronous>, transform_indices = @transform_3, window_bounds = array<i64: 1, 64>}, {transform_indices = @transform_4, window_bounds = array<i64: 16, 64>}]} {
    %c0 = arith.constant 0 : index
    %c0_0 = arith.constant 0 : index
    %0 = vector.load %arg1[%c0, %c0_0] : memref<16x576xbf16, #tpu.memory_space<vmem>>, vector<16x576xbf16>
    %c0_1 = arith.constant 0 : index
    %c0_2 = arith.constant 0 : index
    %1 = vector.load %arg2[%c0_1, %c0_2] : memref<576x64xbf16, #tpu.memory_space<vmem>>, vector<576x64xbf16>
    %cst = arith.constant dense<0.000000e+00> : vector<16x64xf32>
    %2 = tpu.matmul %0, %1, %cst {dimension_numbers = #tpu.dot_dimension_numbers<[1], [0], [0], [1], [0, 0, 1, 1], [], []>} : vector<16x576xbf16>, vector<576x64xbf16>, vector<16x64xf32> -> vector<16x64xf32>
    %c0_3 = arith.constant 0 : index
    %c0_4 = arith.constant 0 : index
    %3 = vector.load %arg3[%c0_3, %c0_4] : memref<1x64xf32, #tpu.memory_space<vmem>>, vector<1x64xf32>
    %4 = vector.broadcast %3 : vector<1x64xf32> to vector<16x64xf32>
    %5 = arith.mulf %2, %4 : vector<16x64xf32>
    %c0_5 = arith.constant 0 : index
    %c0_6 = arith.constant 0 : index
    %6 = vector.load %arg4[%c0_5, %c0_6] : memref<1x64xf32, #tpu.memory_space<vmem>>, vector<1x64xf32>
    %7 = vector.broadcast %6 : vector<1x64xf32> to vector<16x64xf32>
    %8 = arith.addf %5, %7 : vector<16x64xf32>
    %cst_7 = arith.constant 0.000000e+00 : f32
    %9 = vector.broadcast %cst_7 : f32 to vector<16x64xf32>
    %10 = arith.maximumf %8, %9 : vector<16x64xf32>
    %c0_8 = arith.constant 0 : index
    %c0_9 = arith.constant 0 : index
    %11 = vector.load %arg5[%c0_8, %c0_9] : memref<16x64xf32, #tpu.memory_space<vmem>>, vector<16x64xf32>
    tpu.vector_store %arg5[%c0_8, %c0_9], %10 {strides = array<i32>} : memref<16x64xf32, #tpu.memory_space<vmem>>, vector<16x64xf32>,
    return
  }
  func.func @transform_0(%arg0: i32) -> (i32, i32) {
    %c0_i32 = arith.constant 0 : i32
    %c0_i32_0 = arith.constant 0 : i32
    return %arg0, %c0_i32 : i32, i32
  }
  func.func @transform_1(%arg0: i32) -> (i32, i32) {
    %c0_i32 = arith.constant 0 : i32
    %c0_i32_0 = arith.constant 0 : i32
    %c0_i32_1 = arith.constant 0 : i32
    return %c0_i32, %c0_i32_0 : i32, i32
  }
  func.func @transform_2(%arg0: i32) -> (i32, i32) {
    %c0_i32 = arith.constant 0 : i32
    %c0_i32_0 = arith.constant 0 : i32
    %c0_i32_1 = arith.constant 0 : i32
    return %c0_i32, %c0_i32_0 : i32, i32
  }
  func.func @transform_3(%arg0: i32) -> (i32, i32) {
    %c0_i32 = arith.constant 0 : i32
    %c0_i32_0 = arith.constant 0 : i32
    %c0_i32_1 = arith.constant 0 : i32
    return %c0_i32, %c0_i32_0 : i32, i32
  }
  func.func @transform_4(%arg0: i32) -> (i32, i32) {
    %c0_i32 = arith.constant 0 : i32
    %c0_i32_0 = arith.constant 0 : i32
    return %arg0, %c0_i32 : i32, i32
  }
}

module attributes {stable_mosaic.version = 11 : i64} {
  func.func @_mm_affine_act_kernel(%arg0: i32, %arg1: memref<32x576xbf16, #tpu.memory_space<vmem>>, %arg2: memref<576x32xbf16, #tpu.memory_space<vmem>>, %arg3: memref<1x32xf32, #tpu.memory_space<vmem>>, %arg4: memref<1x32xf32, #tpu.memory_space<vmem>>, %arg5: memref<32x32xf32, #tpu.memory_space<vmem>>) attributes {dimension_semantics = [#tpu.dimension_semantics<parallel>], iteration_bounds = array<i64: 1>, scalar_prefetch = 0 : i64, scratch_operands = 0 : i64, tpu.core_type = #tpu.core_type<tc>, window_params = [{transform_indices = @transform_0, window_bounds = array<i64: 32, 576>}, {pipeline_mode = #tpu.pipeline_mode<synchronous>, transform_indices = @transform_1, window_bounds = array<i64: 576, 32>}, {pipeline_mode = #tpu.pipeline_mode<synchronous>, transform_indices = @transform_2, window_bounds = array<i64: 1, 32>}, {pipeline_mode = #tpu.pipeline_mode<synchronous>, transform_indices = @transform_3, window_bounds = array<i64: 1, 32>}, {transform_indices = @transform_4, window_bounds = array<i64: 32, 32>}]} {
    %c0 = arith.constant 0 : index
    %c0_0 = arith.constant 0 : index
    %0 = vector.load %arg1[%c0, %c0_0] : memref<32x576xbf16, #tpu.memory_space<vmem>>, vector<32x576xbf16>
    %c0_1 = arith.constant 0 : index
    %c0_2 = arith.constant 0 : index
    %1 = vector.load %arg2[%c0_1, %c0_2] : memref<576x32xbf16, #tpu.memory_space<vmem>>, vector<576x32xbf16>
    %cst = arith.constant dense<0.000000e+00> : vector<32x32xf32>
    %2 = tpu.matmul %0, %1, %cst {dimension_numbers = #tpu.dot_dimension_numbers<[1], [0], [0], [1], [0, 0, 1, 1], [], []>} : vector<32x576xbf16>, vector<576x32xbf16>, vector<32x32xf32> -> vector<32x32xf32>
    %c0_3 = arith.constant 0 : index
    %c0_4 = arith.constant 0 : index
    %3 = vector.load %arg3[%c0_3, %c0_4] : memref<1x32xf32, #tpu.memory_space<vmem>>, vector<1x32xf32>
    %4 = vector.broadcast %3 : vector<1x32xf32> to vector<32x32xf32>
    %5 = arith.mulf %2, %4 : vector<32x32xf32>
    %c0_5 = arith.constant 0 : index
    %c0_6 = arith.constant 0 : index
    %6 = vector.load %arg4[%c0_5, %c0_6] : memref<1x32xf32, #tpu.memory_space<vmem>>, vector<1x32xf32>
    %7 = vector.broadcast %6 : vector<1x32xf32> to vector<32x32xf32>
    %8 = arith.addf %5, %7 : vector<32x32xf32>
    %cst_7 = arith.constant 0.000000e+00 : f32
    %9 = vector.broadcast %cst_7 : f32 to vector<32x32xf32>
    %10 = arith.maximumf %8, %9 : vector<32x32xf32>
    %c0_8 = arith.constant 0 : index
    %c0_9 = arith.constant 0 : index
    %11 = vector.load %arg5[%c0_8, %c0_9] : memref<32x32xf32, #tpu.memory_space<vmem>>, vector<32x32xf32>
    tpu.vector_store %arg5[%c0_8, %c0_9], %10 {strides = array<i32>} : memref<32x32xf32, #tpu.memory_space<vmem>>, vector<32x32xf32>,
    return
  }
  func.func @transform_0(%arg0: i32) -> (i32, i32) {
    %c0_i32 = arith.constant 0 : i32
    %c0_i32_0 = arith.constant 0 : i32
    return %arg0, %c0_i32 : i32, i32
  }
  func.func @transform_1(%arg0: i32) -> (i32, i32) {
    %c0_i32 = arith.constant 0 : i32
    %c0_i32_0 = arith.constant 0 : i32
    %c0_i32_1 = arith.constant 0 : i32
    return %c0_i32, %c0_i32_0 : i32, i32
  }
  func.func @transform_2(%arg0: i32) -> (i32, i32) {
    %c0_i32 = arith.constant 0 : i32
    %c0_i32_0 = arith.constant 0 : i32
    %c0_i32_1 = arith.constant 0 : i32
    return %c0_i32, %c0_i32_0 : i32, i32
  }
  func.func @transform_3(%arg0: i32) -> (i32, i32) {
    %c0_i32 = arith.constant 0 : i32
    %c0_i32_0 = arith.constant 0 : i32
    %c0_i32_1 = arith.constant 0 : i32
    return %c0_i32, %c0_i32_0 : i32, i32
  }
  func.func @transform_4(%arg0: i32) -> (i32, i32) {
    %c0_i32 = arith.constant 0 : i32
    %c0_i32_0 = arith.constant 0 : i32
    return %arg0, %c0_i32 : i32, i32
  }
}

module attributes {stable_mosaic.version = 11 : i64} {
  func.func @_mm_affine_act_kernel(%arg0: i32, %arg1: memref<128x576xbf16, #tpu.memory_space<vmem>>, %arg2: memref<576x16xbf16, #tpu.memory_space<vmem>>, %arg3: memref<1x16xf32, #tpu.memory_space<vmem>>, %arg4: memref<1x16xf32, #tpu.memory_space<vmem>>, %arg5: memref<128x16xf32, #tpu.memory_space<vmem>>) attributes {dimension_semantics = [#tpu.dimension_semantics<parallel>], iteration_bounds = array<i64: 1>, scalar_prefetch = 0 : i64, scratch_operands = 0 : i64, tpu.core_type = #tpu.core_type<tc>, window_params = [{transform_indices = @transform_0, window_bounds = array<i64: 128, 576>}, {pipeline_mode = #tpu.pipeline_mode<synchronous>, transform_indices = @transform_1, window_bounds = array<i64: 576, 16>}, {pipeline_mode = #tpu.pipeline_mode<synchronous>, transform_indices = @transform_2, window_bounds = array<i64: 1, 16>}, {pipeline_mode = #tpu.pipeline_mode<synchronous>, transform_indices = @transform_3, window_bounds = array<i64: 1, 16>}, {transform_indices = @transform_4, window_bounds = array<i64: 128, 16>}]} {
    %c0 = arith.constant 0 : index
    %c0_0 = arith.constant 0 : index
    %0 = vector.load %arg1[%c0, %c0_0] : memref<128x576xbf16, #tpu.memory_space<vmem>>, vector<128x576xbf16>
    %c0_1 = arith.constant 0 : index
    %c0_2 = arith.constant 0 : index
    %1 = vector.load %arg2[%c0_1, %c0_2] : memref<576x16xbf16, #tpu.memory_space<vmem>>, vector<576x16xbf16>
    %cst = arith.constant dense<0.000000e+00> : vector<128x16xf32>
    %2 = tpu.matmul %0, %1, %cst {dimension_numbers = #tpu.dot_dimension_numbers<[1], [0], [0], [1], [0, 0, 1, 1], [], []>} : vector<128x576xbf16>, vector<576x16xbf16>, vector<128x16xf32> -> vector<128x16xf32>
    %c0_3 = arith.constant 0 : index
    %c0_4 = arith.constant 0 : index
    %3 = vector.load %arg3[%c0_3, %c0_4] : memref<1x16xf32, #tpu.memory_space<vmem>>, vector<1x16xf32>
    %4 = vector.broadcast %3 : vector<1x16xf32> to vector<128x16xf32>
    %5 = arith.mulf %2, %4 : vector<128x16xf32>
    %c0_5 = arith.constant 0 : index
    %c0_6 = arith.constant 0 : index
    %6 = vector.load %arg4[%c0_5, %c0_6] : memref<1x16xf32, #tpu.memory_space<vmem>>, vector<1x16xf32>
    %7 = vector.broadcast %6 : vector<1x16xf32> to vector<128x16xf32>
    %8 = arith.addf %5, %7 : vector<128x16xf32>
    %cst_7 = arith.constant 0.000000e+00 : f32
    %9 = vector.broadcast %cst_7 : f32 to vector<128x16xf32>
    %10 = arith.maximumf %8, %9 : vector<128x16xf32>
    %c0_8 = arith.constant 0 : index
    %c0_9 = arith.constant 0 : index
    %11 = vector.load %arg5[%c0_8, %c0_9] : memref<128x16xf32, #tpu.memory_space<vmem>>, vector<128x16xf32>
    tpu.vector_store %arg5[%c0_8, %c0_9], %10 {strides = array<i32>} : memref<128x16xf32, #tpu.memory_space<vmem>>, vector<128x16xf32>,
    return
  }
  func.func @transform_0(%arg0: i32) -> (i32, i32) {
    %c0_i32 = arith.constant 0 : i32
    %c0_i32_0 = arith.constant 0 : i32
    return %arg0, %c0_i32 : i32, i32
  }
  func.func @transform_1(%arg0: i32) -> (i32, i32) {
    %c0_i32 = arith.constant 0 : i32
    %c0_i32_0 = arith.constant 0 : i32
    %c0_i32_1 = arith.constant 0 : i32
    return %c0_i32, %c0_i32_0 : i32, i32
  }
  func.func @transform_2(%arg0: i32) -> (i32, i32) {
    %c0_i32 = arith.constant 0 : i32
    %c0_i32_0 = arith.constant 0 : i32
    %c0_i32_1 = arith.constant 0 : i32
    return %c0_i32, %c0_i32_0 : i32, i32
  }
  func.func @transform_3(%arg0: i32) -> (i32, i32) {
    %c0_i32 = arith.constant 0 : i32
    %c0_i32_0 = arith.constant 0 : i32
    %c0_i32_1 = arith.constant 0 : i32
    return %c0_i32, %c0_i32_0 : i32, i32
  }
  func.func @transform_4(%arg0: i32) -> (i32, i32) {
    %c0_i32 = arith.constant 0 : i32
    %c0_i32_0 = arith.constant 0 : i32
    return %arg0, %c0_i32 : i32, i32
  }
}

module attributes {stable_mosaic.version = 11 : i64} {
  func.func @_mm_affine_act_kernel(%arg0: i32, %arg1: memref<256x288xbf16, #tpu.memory_space<vmem>>, %arg2: memref<288x8xbf16, #tpu.memory_space<vmem>>, %arg3: memref<1x8xf32, #tpu.memory_space<vmem>>, %arg4: memref<1x8xf32, #tpu.memory_space<vmem>>, %arg5: memref<256x8xf32, #tpu.memory_space<vmem>>) attributes {dimension_semantics = [#tpu.dimension_semantics<parallel>], iteration_bounds = array<i64: 2>, scalar_prefetch = 0 : i64, scratch_operands = 0 : i64, tpu.core_type = #tpu.core_type<tc>, window_params = [{transform_indices = @transform_0, window_bounds = array<i64: 256, 288>}, {pipeline_mode = #tpu.pipeline_mode<synchronous>, transform_indices = @transform_1, window_bounds = array<i64: 288, 8>}, {pipeline_mode = #tpu.pipeline_mode<synchronous>, transform_indices = @transform_2, window_bounds = array<i64: 1, 8>}, {pipeline_mode = #tpu.pipeline_mode<synchronous>, transform_indices = @transform_3, window_bounds = array<i64: 1, 8>}, {transform_indices = @transform_4, window_bounds = array<i64: 256, 8>}]} {
    %c0 = arith.constant 0 : index
    %c0_0 = arith.constant 0 : index
    %0 = vector.load %arg1[%c0, %c0_0] : memref<256x288xbf16, #tpu.memory_space<vmem>>, vector<256x288xbf16>
    %c0_1 = arith.constant 0 : index
    %c0_2 = arith.constant 0 : index
    %1 = vector.load %arg2[%c0_1, %c0_2] : memref<288x8xbf16, #tpu.memory_space<vmem>>, vector<288x8xbf16>
    %cst = arith.constant dense<0.000000e+00> : vector<256x8xf32>
    %2 = tpu.matmul %0, %1, %cst {dimension_numbers = #tpu.dot_dimension_numbers<[1], [0], [0], [1], [0, 0, 1, 1], [], []>} : vector<256x288xbf16>, vector<288x8xbf16>, vector<256x8xf32> -> vector<256x8xf32>
    %c0_3 = arith.constant 0 : index
    %c0_4 = arith.constant 0 : index
    %3 = vector.load %arg3[%c0_3, %c0_4] : memref<1x8xf32, #tpu.memory_space<vmem>>, vector<1x8xf32>
    %4 = vector.broadcast %3 : vector<1x8xf32> to vector<256x8xf32>
    %5 = arith.mulf %2, %4 : vector<256x8xf32>
    %c0_5 = arith.constant 0 : index
    %c0_6 = arith.constant 0 : index
    %6 = vector.load %arg4[%c0_5, %c0_6] : memref<1x8xf32, #tpu.memory_space<vmem>>, vector<1x8xf32>
    %7 = vector.broadcast %6 : vector<1x8xf32> to vector<256x8xf32>
    %8 = arith.addf %5, %7 : vector<256x8xf32>
    %cst_7 = arith.constant 0.000000e+00 : f32
    %9 = vector.broadcast %cst_7 : f32 to vector<256x8xf32>
    %10 = arith.maximumf %8, %9 : vector<256x8xf32>
    %c0_8 = arith.constant 0 : index
    %c0_9 = arith.constant 0 : index
    %11 = vector.load %arg5[%c0_8, %c0_9] : memref<256x8xf32, #tpu.memory_space<vmem>>, vector<256x8xf32>
    tpu.vector_store %arg5[%c0_8, %c0_9], %10 {strides = array<i32>} : memref<256x8xf32, #tpu.memory_space<vmem>>, vector<256x8xf32>,
    return
  }
  func.func @transform_0(%arg0: i32) -> (i32, i32) {
    %c0_i32 = arith.constant 0 : i32
    %c0_i32_0 = arith.constant 0 : i32
    return %arg0, %c0_i32 : i32, i32
  }
  func.func @transform_1(%arg0: i32) -> (i32, i32) {
    %c0_i32 = arith.constant 0 : i32
    %c0_i32_0 = arith.constant 0 : i32
    %c0_i32_1 = arith.constant 0 : i32
    return %c0_i32, %c0_i32_0 : i32, i32
  }
  func.func @transform_2(%arg0: i32) -> (i32, i32) {
    %c0_i32 = arith.constant 0 : i32
    %c0_i32_0 = arith.constant 0 : i32
    %c0_i32_1 = arith.constant 0 : i32
    return %c0_i32, %c0_i32_0 : i32, i32
  }
  func.func @transform_3(%arg0: i32) -> (i32, i32) {
    %c0_i32 = arith.constant 0 : i32
    %c0_i32_0 = arith.constant 0 : i32
    %c0_i32_1 = arith.constant 0 : i32
    return %c0_i32, %c0_i32_0 : i32, i32
  }
  func.func @transform_4(%arg0: i32) -> (i32, i32) {
    %c0_i32 = arith.constant 0 : i32
    %c0_i32_0 = arith.constant 0 : i32
    return %arg0, %c0_i32 : i32, i32
  }
}

module attributes {stable_mosaic.version = 11 : i64} {
  func.func @_mm_affine_act_kernel(%arg0: i32, %arg1: memref<256x144xbf16, #tpu.memory_space<vmem>>, %arg2: memref<144x4xbf16, #tpu.memory_space<vmem>>, %arg3: memref<1x4xf32, #tpu.memory_space<vmem>>, %arg4: memref<1x4xf32, #tpu.memory_space<vmem>>, %arg5: memref<256x4xf32, #tpu.memory_space<vmem>>) attributes {dimension_semantics = [#tpu.dimension_semantics<parallel>], iteration_bounds = array<i64: 2>, scalar_prefetch = 0 : i64, scratch_operands = 0 : i64, tpu.core_type = #tpu.core_type<tc>, window_params = [{transform_indices = @transform_0, window_bounds = array<i64: 256, 144>}, {pipeline_mode = #tpu.pipeline_mode<synchronous>, transform_indices = @transform_1, window_bounds = array<i64: 144, 4>}, {pipeline_mode = #tpu.pipeline_mode<synchronous>, transform_indices = @transform_2, window_bounds = array<i64: 1, 4>}, {pipeline_mode = #tpu.pipeline_mode<synchronous>, transform_indices = @transform_3, window_bounds = array<i64: 1, 4>}, {transform_indices = @transform_4, window_bounds = array<i64: 256, 4>}]} {
    %c0 = arith.constant 0 : index
    %c0_0 = arith.constant 0 : index
    %0 = vector.load %arg1[%c0, %c0_0] : memref<256x144xbf16, #tpu.memory_space<vmem>>, vector<256x144xbf16>
    %c0_1 = arith.constant 0 : index
    %c0_2 = arith.constant 0 : index
    %1 = vector.load %arg2[%c0_1, %c0_2] : memref<144x4xbf16, #tpu.memory_space<vmem>>, vector<144x4xbf16>
    %cst = arith.constant dense<0.000000e+00> : vector<256x4xf32>
    %2 = tpu.matmul %0, %1, %cst {dimension_numbers = #tpu.dot_dimension_numbers<[1], [0], [0], [1], [0, 0, 1, 1], [], []>} : vector<256x144xbf16>, vector<144x4xbf16>, vector<256x4xf32> -> vector<256x4xf32>
    %c0_3 = arith.constant 0 : index
    %c0_4 = arith.constant 0 : index
    %3 = vector.load %arg3[%c0_3, %c0_4] : memref<1x4xf32, #tpu.memory_space<vmem>>, vector<1x4xf32>
    %4 = vector.broadcast %3 : vector<1x4xf32> to vector<256x4xf32>
    %5 = arith.mulf %2, %4 : vector<256x4xf32>
    %c0_5 = arith.constant 0 : index
    %c0_6 = arith.constant 0 : index
    %6 = vector.load %arg4[%c0_5, %c0_6] : memref<1x4xf32, #tpu.memory_space<vmem>>, vector<1x4xf32>
    %7 = vector.broadcast %6 : vector<1x4xf32> to vector<256x4xf32>
    %8 = arith.addf %5, %7 : vector<256x4xf32>
    %9 = math.tanh %8 : vector<256x4xf32>
    %c0_7 = arith.constant 0 : index
    %c0_8 = arith.constant 0 : index
    %10 = vector.load %arg5[%c0_7, %c0_8] : memref<256x4xf32, #tpu.memory_space<vmem>>, vector<256x4xf32>
    tpu.vector_store %arg5[%c0_7, %c0_8], %9 {strides = array<i32>} : memref<256x4xf32, #tpu.memory_space<vmem>>, vector<256x4xf32>,
    return
  }
  func.func @transform_0(%arg0: i32) -> (i32, i32) {
    %c0_i32 = arith.constant 0 : i32
    %c0_i32_0 = arith.constant 0 : i32
    return %arg0, %c0_i32 : i32, i32
  }
  func.func @transform_1(%arg0: i32) -> (i32, i32) {
    %c0_i32 = arith.constant 0 : i32
    %c0_i32_0 = arith.constant 0 : i32
    %c0_i32_1 = arith.constant 0 : i32
    return %c0_i32, %c0_i32_0 : i32, i32
  }
  func.func @transform_2(%arg0: i32) -> (i32, i32) {
    %c0_i32 = arith.constant 0 : i32
    %c0_i32_0 = arith.constant 0 : i32
    %c0_i32_1 = arith.constant 0 : i32
    return %c0_i32, %c0_i32_0 : i32, i32
  }
  func.func @transform_3(%arg0: i32) -> (i32, i32) {
    %c0_i32 = arith.constant 0 : i32
    %c0_i32_0 = arith.constant 0 : i32
    %c0_i32_1 = arith.constant 0 : i32
    return %c0_i32, %c0_i32_0 : i32, i32
  }
  func.func @transform_4(%arg0: i32) -> (i32, i32) {
    %c0_i32 = arith.constant 0 : i32
    %c0_i32_0 = arith.constant 0 : i32
    return %arg0, %c0_i32 : i32, i32
  }
}

</mosaic_0001>

<llo_original>
// kernel: model_conv_unet_forward.13
$region0: #{model_conv_unet_forward.13}
  #allocation0 [shape = 'u32[]', space=smem, size = 0x4, offset = 0x4, fixed_abs, tag = 'smem constant byte address 0x4 - core index']
  #allocation1 [shape = 'u32[144,128]{1,0:T(1,128)}', space=vmem, size = 0x12000, scoped, tag = 'internal scratch']
  %s0 = inlined_call_operand.vmem [shape: bf16[2048,9], index: 0, kind: input, shape index: {}]
  %s1 = inlined_call_operand.vmem [shape: bf16[9,8], index: 1, kind: input, shape index: {}]
  %s2 = inlined_call_operand.vmem [shape: f32[1,8], index: 2, kind: input, shape index: {}]
  %s3 = inlined_call_operand.vmem [shape: f32[1,8], index: 3, kind: input, shape index: {}]
  %s4 = inlined_call_operand.vmem [shape: f32[2048,8], index: 4, kind: output, shape index: {}]
  %s5 = sld [smem:[#allocation0]]
  $region49: #{model_conv_unet_forward.13} parent=0
    _
  %s7 = ssub.s32 1, %s5
  %s8 = scalar_select 0, %s7, %s5
  loop: start=0, step=1, limit=6
  $region2: #{model_conv_unet_forward.13} parent=0 // loop_pre_header
    _
  $region3: #{model_conv_unet_forward.13} parent=0 // loop_header
    %s10 = sphi 0, %s14
    %p11 = scmp.ge.s32.totalorder %s10, 6
    %s20 = sphi 0, %s22
    %s23 = sphi 0, %s20
    %s24 = sphi 0, %s23
    %s40 = sphi 0, %s24
    %s44 = sphi 0, %s44
    %s46 = sphi 0, %s44
    %s47 = sphi 0, %s46
    %s61 = sphi 0, %s47
    %s65 = sphi 0, %s65
    %s67 = sphi 0, %s65
    %s68 = sphi 0, %s67
    %s82 = sphi 0, %s68
    %s86 = sphi 0, %s86
    %s88 = sphi 0, %s86
    %s89 = sphi 0, %s88
    %s103 = sphi 0, %s89
    %s109 = sphi 0, %s111
    %s112 = sphi 0, %s109
    %s113 = sphi 0, %s112
    %s129 = sphi 0, %s113
  $region4: #{model_conv_unet_forward.13} parent=0 // loop_header_branch
    %13 = sbr.rel (%p11) target = $region8
  $region5: #{model_conv_unet_forward.13} parent=0 // loop_body
    %s15 = ssub.s32 %s10, 1
    %s16 = ssub.s32 %s10, 2
    %s17 = sadd.s32 %s10, 1
    %s18 = ssub.s32 %s10, %s17
    %p19 = scmp.eq.s32.totalorder %s18, 0
    %s21 = sadd.s32 %s20, 1
    %s22 = scalar_select %p19, %s20, %s21
    %p25 = pneg %p19
    %p26 = scmp.eq.s32.totalorder %s10, 3
    %p27 = por %p25, %p26
    %p28 = scmp.ne.s32.totalorder %s20, %s23
    %p29 = scmp.eq.s32.totalorder %s10, 0
    %p30 = por %p28, %p29
    %p31 = scmp.ne.s32.totalorder %s20, %s23
    %p32 = scmp.eq.s32.totalorder %s15, 3
    %p33 = por %p31, %p32
    %p34 = scmp.ne.s32.totalorder %s23, %s24
    %p35 = scmp.eq.s32.totalorder %s15, 0
    %p36 = por %p34, %p35
    %p37 = scmp.ne.s32.totalorder %s23, %s24
    %p38 = scmp.eq.s32.totalorder %s16, 3
    %p39 = por %p37, %p38
    %p41 = scmp.ne.s32.totalorder %s24, %s40
    %p42 = scmp.eq.s32.totalorder %s16, 0
    %p43 = por %p41, %p42
    %s45 = sadd.s32 %s44, 1
    %p48 = scmp.eq.s32.totalorder %s10, 3
    %p49 = scmp.ne.s32.totalorder %s44, %s46
    %p50 = scmp.eq.s32.totalorder %s10, 0
    %p51 = por %p49, %p50
    %p52 = scmp.ne.s32.totalorder %s44, %s46
    %p53 = scmp.eq.s32.totalorder %s15, 3
    %p54 = por %p52, %p53
    %p55 = scmp.ne.s32.totalorder %s46, %s47
    %p56 = scmp.eq.s32.totalorder %s15, 0
    %p57 = por %p55, %p56
    %p58 = scmp.ne.s32.totalorder %s46, %s47
    %p59 = scmp.eq.s32.totalorder %s16, 3
    %p60 = por %p58, %p59
    %p62 = scmp.ne.s32.totalorder %s47, %s61
    %p63 = scmp.eq.s32.totalorder %s16, 0
    %p64 = por %p62, %p63
    %s66 = sadd.s32 %s65, 1
    %p69 = scmp.eq.s32.totalorder %s10, 3
    %p70 = scmp.ne.s32.totalorder %s65, %s67
    %p71 = scmp.eq.s32.totalorder %s10, 0
    %p72 = por %p70, %p71
    %p73 = scmp.ne.s32.totalorder %s65, %s67
    %p74 = scmp.eq.s32.totalorder %s15, 3
    %p75 = por %p73, %p74
    %p76 = scmp.ne.s32.totalorder %s67, %s68
    %p77 = scmp.eq.s32.totalorder %s15, 0
    %p78 = por %p76, %p77
    %p79 = scmp.ne.s32.totalorder %s67, %s68
    %p80 = scmp.eq.s32.totalorder %s16, 3
    %p81 = por %p79, %p80
    %p83 = scmp.ne.s32.totalorder %s68, %s82
    %p84 = scmp.eq.s32.totalorder %s16, 0
    %p85 = por %p83, %p84
    %s87 = sadd.s32 %s86, 1
    %p90 = scmp.eq.s32.totalorder %s10, 3
    %p91 = scmp.ne.s32.totalorder %s86, %s88
    %p92 = scmp.eq.s32.totalorder %s10, 0
    %p93 = por %p91, %p92
    %p94 = scmp.ne.s32.totalorder %s86, %s88
    %p95 = scmp.eq.s32.totalorder %s15, 3
    %p96 = por %p94, %p95
    %p97 = scmp.ne.s32.totalorder %s88, %s89
    %p98 = scmp.eq.s32.totalorder %s15, 0
    %p99 = por %p97, %p98
    %p100 = scmp.ne.s32.totalorder %s88, %s89
    %p101 = scmp.eq.s32.totalorder %s16, 3
    %p102 = por %p100, %p101
    %p104 = scmp.ne.s32.totalorder %s89, %s103
    %p105 = scmp.eq.s32.totalorder %s16, 0
    %p106 = por %p104, %p105
    %s107 = ssub.s32 %s10, %s17
    %p108 = scmp.eq.s32.totalorder %s107, 0
    %s110 = sadd.s32 %s109, 1
    %s111 = scalar_select %p108, %s109, %s110
    %p114 = pneg %p108
    %p115 = scmp.eq.s32.totalorder %s10, 3
    %p116 = por %p114, %p115
    %p117 = scmp.ne.s32.totalorder %s109, %s112
    %p118 = scmp.eq.s32.totalorder %s10, 0
    %p119 = por %p117, %p118
    %p120 = scmp.ne.s32.totalorder %s109, %s112
    %p121 = scmp.eq.s32.totalorder %s15, 3
    %p122 = por %p120, %p121
    %p123 = scmp.ne.s32.totalorder %s112, %s113
    %p124 = scmp.eq.s32.totalorder %s15, 0
    %p125 = por %p123, %p124
    %p126 = scmp.ne.s32.totalorder %s112, %s113
    %p127 = scmp.eq.s32.totalorder %s16, 3
    %p128 = por %p126, %p127
    %p130 = scmp.ne.s32.totalorder %s113, %s129
    %p131 = scmp.eq.s32.totalorder %s16, 0
    %p132 = por %p130, %p131
    %p133 = scmp.le.s32.totalorder 1, %s10
    %p134 = scmp.lt.s32.totalorder %s10, 5
    %p135 = pnand %p133, %p134
    %p136 = pneg %p135
    // Predicated region
    $region9: #{model_conv_unet_forward.13} parent=5 // pred_check
      _
    $region10: #{model_conv_unet_forward.13} parent=5 // pred_check_branch
      %138 = sbr.rel (%p135) target = $region12
    $region11: #{model_conv_unet_forward.13} parent=5 // pred_region
      %s139 = ssub.s32 %s10, 1
      // Predicated region
      $region13: #{model_conv_unet_forward.13} parent=11 // pred_check
        %p140 = pneg %p57
      $region14: #{model_conv_unet_forward.13} parent=11 // pred_check_branch
        %142 = sbr.rel (%p140) target = $region16
      $region15: #{model_conv_unet_forward.13} parent=11 // pred_region
        _
      $region16: #{model_conv_unet_forward.13} parent=11 // pred_fallthru
        _
      // Predicated region
      $region17: #{model_conv_unet_forward.13} parent=11 // pred_check
        %p143 = pneg %p78
      $region18: #{model_conv_unet_forward.13} parent=11 // pred_check_branch
        %145 = sbr.rel (%p143) target = $region20
      $region19: #{model_conv_unet_forward.13} parent=11 // pred_region
        _
      $region20: #{model_conv_unet_forward.13} parent=11 // pred_fallthru
        _
      // Predicated region
      $region21: #{model_conv_unet_forward.13} parent=11 // pred_check
        %p146 = pneg %p99
      $region22: #{model_conv_unet_forward.13} parent=11 // pred_check_branch
        %148 = sbr.rel (%p146) target = $region24
      $region23: #{model_conv_unet_forward.13} parent=11 // pred_region
        _
      $region24: #{model_conv_unet_forward.13} parent=11 // pred_fallthru
        _
    $region12: #{model_conv_unet_forward.13} parent=5 // pred_fallthru
      _
    %p149 = scmp.lt.s32.totalorder %s10, 4
    // Predicated region
    $region25: #{model_conv_unet_forward.13} parent=5 // pred_check
      %p150 = pneg %p149
    $region26: #{model_conv_unet_forward.13} parent=5 // pred_check_branch
      %152 = sbr.rel (%p150) target = $region28
    $region27: #{model_conv_unet_forward.13} parent=5 // pred_region
      // Predicated region
      $region29: #{model_conv_unet_forward.13} parent=27 // pred_check
        %p153 = pneg %p30
      $region30: #{model_conv_unet_forward.13} parent=27 // pred_check_branch
        %155 = sbr.rel (%p153) target = $region32
      $region31: #{model_conv_unet_forward.13} parent=27 // pred_region
        %s156 = smul.u32 64, %s10
        %p157 = scmp.lt.s32.totalorder %s156, 255
        %s158 = scalar_select %p157, %s156, 255
        %s159 = smul.addr %s158, 4
        %s160 = scalar_lea.vmem %s0, %s159
        %s161 = smul.u32 64, %s10
      $region32: #{model_conv_unet_forward.13} parent=27 // pred_fallthru
        _
    $region28: #{model_conv_unet_forward.13} parent=5 // pred_fallthru
      _
    %p162 = scmp.le.s32.totalorder 1, %s10
    %p163 = scmp.lt.s32.totalorder %s10, 5
    %p164 = pnand %p162, %p163
    %p165 = pneg %p164
    // Predicated region
    $region33: #{model_conv_unet_forward.13} parent=5 // pred_check
      _
    $region34: #{model_conv_unet_forward.13} parent=5 // pred_check_branch
      %167 = sbr.rel (%p164) target = $region36
    $region35: #{model_conv_unet_forward.13} parent=5 // pred_region
      %s168 = ssub.s32 %s10, 1
      %s169 = smul.u32 64, %s15
      %p170 = scmp.lt.s32.totalorder %s169, 255
      %s171 = scalar_select %p170, %s169, 255
      %s172 = smul.addr %s171, 4
      %s173 = scalar_lea.vmem %s0, %s172
      %p174 = pneg %p36
      %p175 = pneg %p33
      %p176 = pneg %p57
      %p177 = pneg %p54
      %p178 = pneg %p78
      %p179 = pneg %p75
      %p180 = pneg %p99
      %p181 = pneg %p96
      %p182 = pneg %p125
      %p183 = pneg %p122
      %s184 = smul.u32 64, %s15
      %p185 = scmp.lt.s32.totalorder %s184, 255
      %s186 = scalar_select %p185, %s184, 255
      %s187 = smul.addr %s186, 8
      %s188 = scalar_lea.vmem %s4, %s187
      %s189 = smul.u32 64, %s15
      %p190 = scmp.lt.s32.totalorder %s189, 255
      %s191 = scalar_select %p190, %s189, 255
      %s192 = smul.addr %s191, 4
      %s193 = scalar_lea.vmem %s0, %s192
      %s194 = smul.u32 64, %s15
      %s195 = smul.u32 64, %s15
      %p196 = scmp.lt.s32.totalorder %s195, 255
      %s197 = scalar_select %p196, %s195, 255
      %s198 = smul.addr %s197, 8
      %s199 = scalar_lea.vmem %s4, %s198
      %s200 = smul.u32 64, %s15
      %v202 = vld [vmem:[%s193] sm:$0xf]
      %v203 = vld [vmem:[%s193 + $0x4] sm:$0xf]
      %v204 = vld [vmem:[%s193 + $0x8] sm:$0xf]
      %v205 = vld [vmem:[%s193 + $0xc] sm:$0xf]
      %v206 = vld [vmem:[%s193 + $0x10] sm:$0xf]
      %v207 = vld [vmem:[%s193 + $0x14] sm:$0xf]
      %v208 = vld [vmem:[%s193 + $0x18] sm:$0xf]
      %v209 = vld [vmem:[%s193 + $0x1c] sm:$0xf]
      %v210 = vld [vmem:[%s193 + $0x20] sm:$0xf]
      %v211 = vld [vmem:[%s193 + $0x24] sm:$0xf]
      %v212 = vld [vmem:[%s193 + $0x28] sm:$0xf]
      %v213 = vld [vmem:[%s193 + $0x2c] sm:$0xf]
      %v214 = vld [vmem:[%s193 + $0x30] sm:$0xf]
      %v215 = vld [vmem:[%s193 + $0x34] sm:$0xf]
      %v216 = vld [vmem:[%s193 + $0x38] sm:$0xf]
      %v217 = vld [vmem:[%s193 + $0x3c] sm:$0xf]
      %v218 = vld [vmem:[%s193 + $0x40] sm:$0xf]
      %v219 = vld [vmem:[%s193 + $0x44] sm:$0xf]
      %v220 = vld [vmem:[%s193 + $0x48] sm:$0xf]
      %v221 = vld [vmem:[%s193 + $0x4c] sm:$0xf]
      %v222 = vld [vmem:[%s193 + $0x50] sm:$0xf]
      %v223 = vld [vmem:[%s193 + $0x54] sm:$0xf]
      %v224 = vld [vmem:[%s193 + $0x58] sm:$0xf]
      %v225 = vld [vmem:[%s193 + $0x5c] sm:$0xf]
      %v226 = vld [vmem:[%s193 + $0x60] sm:$0xf]
      %v227 = vld [vmem:[%s193 + $0x64] sm:$0xf]
      %v228 = vld [vmem:[%s193 + $0x68] sm:$0xf]
      %v229 = vld [vmem:[%s193 + $0x6c] sm:$0xf]
      %v230 = vld [vmem:[%s193 + $0x70] sm:$0xf]
      %v231 = vld [vmem:[%s193 + $0x74] sm:$0xf]
      %v232 = vld [vmem:[%s193 + $0x78] sm:$0xf]
      %v233 = vld [vmem:[%s193 + $0x7c] sm:$0xf]
      %v234 = vld [vmem:[%s193 + $0x80] sm:$0xf]
      %v235 = vld [vmem:[%s193 + $0x84] sm:$0xf]
      %v236 = vld [vmem:[%s193 + $0x88] sm:$0xf]
      %v237 = vld [vmem:[%s193 + $0x8c] sm:$0xf]
      %v238 = vld [vmem:[%s193 + $0x90] sm:$0xf]
      %v239 = vld [vmem:[%s193 + $0x94] sm:$0xf]
      %v240 = vld [vmem:[%s193 + $0x98] sm:$0xf]
      %v241 = vld [vmem:[%s193 + $0x9c] sm:$0xf]
      %v242 = vld [vmem:[%s193 + $0xa0] sm:$0xf]
      %v243 = vld [vmem:[%s193 + $0xa4] sm:$0xf]
      %v244 = vld [vmem:[%s193 + $0xa8] sm:$0xf]
      %v245 = vld [vmem:[%s193 + $0xac] sm:$0xf]
      %v246 = vld [vmem:[%s193 + $0xb0] sm:$0xf]
      %v247 = vld [vmem:[%s193 + $0xb4] sm:$0xf]
      %v248 = vld [vmem:[%s193 + $0xb8] sm:$0xf]
      %v249 = vld [vmem:[%s193 + $0xbc] sm:$0xf]
      %v250 = vld [vmem:[%s193 + $0xc0] sm:$0xf]
      %v251 = vld [vmem:[%s193 + $0xc4] sm:$0xf]
      %v252 = vld [vmem:[%s193 + $0xc8] sm:$0xf]
      %v253 = vld [vmem:[%s193 + $0xcc] sm:$0xf]
      %v254 = vld [vmem:[%s193 + $0xd0] sm:$0xf]
      %v255 = vld [vmem:[%s193 + $0xd4] sm:$0xf]
      %v256 = vld [vmem:[%s193 + $0xd8] sm:$0xf]
      %v257 = vld [vmem:[%s193 + $0xdc] sm:$0xf]
      %v258 = vld [vmem:[%s193 + $0xe0] sm:$0xf]
      %v259 = vld [vmem:[%s193 + $0xe4] sm:$0xf]
      %v260 = vld [vmem:[%s193 + $0xe8] sm:$0xf]
      %v261 = vld [vmem:[%s193 + $0xec] sm:$0xf]
      %v262 = vld [vmem:[%s193 + $0xf0] sm:$0xf]
      %v263 = vld [vmem:[%s193 + $0xf4] sm:$0xf]
      %v264 = vld [vmem:[%s193 + $0xf8] sm:$0xf]
      %v265 = vld [vmem:[%s193 + $0xfc] sm:$0xf]
      %v266 = vld [vmem:[%s1] sm:$0xf]
      %v267 = vld [vmem:[%s1 + $0x4] sm:$0x1]
      %v332 = vunpack.c.l.b16 %v202
      %v333 = vunpack.c.l.b16 %v203
      %v334 = vunpack.c.l.b16 %v204
      %v335 = vunpack.c.l.b16 %v205
      %v336 = vunpack.c.l.b16 %v206
      %v337 = vunpack.c.l.b16 %v207
      %v338 = vunpack.c.l.b16 %v208
      %v339 = vunpack.c.l.b16 %v209
      %v340 = vunpack.c.l.b16 %v210
      %v341 = vunpack.c.l.b16 %v211
      %v342 = vunpack.c.l.b16 %v212
      %v343 = vunpack.c.l.b16 %v213
      %v344 = vunpack.c.l.b16 %v214
      %v345 = vunpack.c.l.b16 %v215
      %v346 = vunpack.c.l.b16 %v216
      %v347 = vunpack.c.l.b16 %v217
      %v348 = vunpack.c.l.b16 %v218
      %v349 = vunpack.c.l.b16 %v219
      %v350 = vunpack.c.l.b16 %v220
      %v351 = vunpack.c.l.b16 %v221
      %v352 = vunpack.c.l.b16 %v222
      %v353 = vunpack.c.l.b16 %v223
      %v354 = vunpack.c.l.b16 %v224
      %v355 = vunpack.c.l.b16 %v225
      %v356 = vunpack.c.l.b16 %v226
      %v357 = vunpack.c.l.b16 %v227
      %v358 = vunpack.c.l.b16 %v228
      %v359 = vunpack.c.l.b16 %v229
      %v360 = vunpack.c.l.b16 %v230
      %v361 = vunpack.c.l.b16 %v231
      %v362 = vunpack.c.l.b16 %v232
      %v363 = vunpack.c.l.b16 %v233
      %v364 = vunpack.c.l.b16 %v234
      %v365 = vunpack.c.l.b16 %v235
      %v366 = vunpack.c.l.b16 %v236
      %v367 = vunpack.c.l.b16 %v237
      %v368 = vunpack.c.l.b16 %v238
      %v369 = vunpack.c.l.b16 %v239
      %v370 = vunpack.c.l.b16 %v240
      %v371 = vunpack.c.l.b16 %v241
      %v372 = vunpack.c.l.b16 %v242
      %v373 = vunpack.c.l.b16 %v243
      %v374 = vunpack.c.l.b16 %v244
      %v375 = vunpack.c.l.b16 %v245
      %v376 = vunpack.c.l.b16 %v246
      %v377 = vunpack.c.l.b16 %v247
      %v378 = vunpack.c.l.b16 %v248
      %v379 = vunpack.c.l.b16 %v249
      %v380 = vunpack.c.l.b16 %v250
      %v381 = vunpack.c.l.b16 %v251
      %v382 = vunpack.c.l.b16 %v252
      %v383 = vunpack.c.l.b16 %v253
      %v384 = vunpack.c.l.b16 %v254
      %v385 = vunpack.c.l.b16 %v255
      %v386 = vunpack.c.l.b16 %v256
      %v387 = vunpack.c.l.b16 %v257
      %v388 = vunpack.c.l.b16 %v258
      %v389 = vunpack.c.l.b16 %v259
      %v390 = vunpack.c.l.b16 %v260
      %v391 = vunpack.c.l.b16 %v261
      %v392 = vunpack.c.l.b16 %v262
      %v393 = vunpack.c.l.b16 %v263
      %v394 = vunpack.c.l.b16 %v264
      %v395 = vunpack.c.l.b16 %v265
      %v396 = vpack.c.b16 %v333, %v332
      %v397 = vpack.c.b16 %v335, %v334
      %v398 = vpack.c.b16 %v337, %v336
      %v399 = vpack.c.b16 %v339, %v338
      %v400 = vpack.c.b16 %v341, %v340
      %v401 = vpack.c.b16 %v343, %v342
      %v402 = vpack.c.b16 %v345, %v344
      %v403 = vpack.c.b16 %v347, %v346
      %v404 = vpack.c.b16 %v349, %v348
      %v405 = vpack.c.b16 %v351, %v350
      %v406 = vpack.c.b16 %v353, %v352
      %v407 = vpack.c.b16 %v355, %v354
      %v408 = vpack.c.b16 %v357, %v356
      %v409 = vpack.c.b16 %v359, %v358
      %v410 = vpack.c.b16 %v361, %v360
      %v411 = vpack.c.b16 %v363, %v362
      %v412 = vpack.c.b16 %v365, %v364
      %v413 = vpack.c.b16 %v367, %v366
      %v414 = vpack.c.b16 %v369, %v368
      %v415 = vpack.c.b16 %v371, %v370
      %v416 = vpack.c.b16 %v373, %v372
      %v417 = vpack.c.b16 %v375, %v374
      %v418 = vpack.c.b16 %v377, %v376
      %v419 = vpack.c.b16 %v379, %v378
      %v420 = vpack.c.b16 %v381, %v380
      %v421 = vpack.c.b16 %v383, %v382
      %v422 = vpack.c.b16 %v385, %v384
      %v423 = vpack.c.b16 %v387, %v386
      %v424 = vpack.c.b16 %v389, %v388
      %v425 = vpack.c.b16 %v391, %v390
      %v426 = vpack.c.b16 %v393, %v392
      %v427 = vpack.c.b16 %v395, %v394
      %v430 = vunpack.c.l.b16 %v266
      %v431 = vunpack.c.l.b16 %v267
      %v432 = vpack.c.b16 %v431, %v430
      %vm433 = vcmask 72704
      %v435 = vsel %vm433, %v396, 0
      %v438 = vsel %vm433, %v397, 0
      %v441 = vsel %vm433, %v398, 0
      %v444 = vsel %vm433, %v399, 0
      %v447 = vsel %vm433, %v400, 0
      %v450 = vsel %vm433, %v401, 0
      %v453 = vsel %vm433, %v402, 0
      %v456 = vsel %vm433, %v403, 0
      %v459 = vsel %vm433, %v404, 0
      %v462 = vsel %vm433, %v405, 0
      %v465 = vsel %vm433, %v406, 0
      %v468 = vsel %vm433, %v407, 0
      %v471 = vsel %vm433, %v408, 0
      %v474 = vsel %vm433, %v409, 0
      %v477 = vsel %vm433, %v410, 0
      %v480 = vsel %vm433, %v411, 0
      %v483 = vsel %vm433, %v412, 0
      %v486 = vsel %vm433, %v413, 0
      %v489 = vsel %vm433, %v414, 0
      %v492 = vsel %vm433, %v415, 0
      %v495 = vsel %vm433, %v416, 0
      %v498 = vsel %vm433, %v417, 0
      %v501 = vsel %vm433, %v418, 0
      %v504 = vsel %vm433, %v419, 0
      %v507 = vsel %vm433, %v420, 0
      %v510 = vsel %vm433, %v421, 0
      %v513 = vsel %vm433, %v422, 0
      %v516 = vsel %vm433, %v423, 0
      %v519 = vsel %vm433, %v424, 0
      %v522 = vsel %vm433, %v425, 0
      %v525 = vsel %vm433, %v426, 0
      %v528 = vsel %vm433, %v427, 0
      %vm530 = vcmask 1043456
      %vm531 = vcmask 1044480
      %v532 = vsel %vm530, 4294967295, 65535
      %v533 = vsel %vm531, %v532, 0
      %v535 = vand.u32 %v432, %v533
      %537 = vmatprep.subr.bf16.mxu0 0
      %538 = vmatpush1.bf16.msra.mxu0 %v535
      %539 = vmatprep.subr.bf16.mxu0 0
      %540 = vmatpush1.bf16.msra.mxu0 0
      %541 = vmatprep.subr.bf16.mxu0 0
      %542 = vmatpush1.bf16.msra.mxu0 0
      %543 = vmatprep.subr.bf16.mxu0 0
      %544 = vmatpush1.bf16.msra.mxu0 0
      %545 = vmatprep.subr.bf16.mxu0 0
      %546 = vmatpush1.bf16.msra.mxu0 0
      %547 = vmatprep.subr.bf16.mxu0 0
      %548 = vmatpush1.bf16.msra.mxu0 0
      %549 = vmatprep.subr.bf16.mxu0 0
      %550 = vmatpush1.bf16.msra.mxu0 0
      %551 = vmatprep.subr.bf16.mxu0 0
      %552 = vmatpush1.bf16.msra.mxu0 0
      %553 = vmatprep.subr.bf16.mxu0 0
      %554 = vmatpush1.bf16.msra.mxu0 0
      %555 = vmatprep.subr.bf16.mxu0 0
      %556 = vmatpush1.bf16.msra.mxu0 0
      %557 = vmatprep.subr.bf16.mxu0 0
      %558 = vmatpush1.bf16.msra.mxu0 0
      %559 = vmatprep.subr.bf16.mxu0 0
      %560 = vmatpush1.bf16.msra.mxu0 0
      %561 = vmatprep.subr.bf16.mxu0 0
      %562 = vmatpush1.bf16.msra.mxu0 0
      %563 = vmatprep.subr.bf16.mxu0 0
      %564 = vmatpush1.bf16.msra.mxu0 0
      %565 = vmatprep.subr.bf16.mxu0 0
      %566 = vmatpush1.bf16.msra.mxu0 0
      %567 = vmatprep.subr.bf16.mxu0 0
      %568 = vmatpush1.bf16.msra.mxu0 0
      %569 = vmatprep.mubr.bf16.mxu0 0
      %570 = vmatmul.mubr.bf16.gmra.mrb[0].mxu0 %v435
      %v571 = vpop.f32.mrb[0].mxu0
      %v572 = vadd.f32 0.0, %v571
      %v573 = vpop.f32.mrb[0].mxu0
      %v574 = vpop.f32.mrb[0].mxu0
      %v575 = vadd.f32 0.0, %v574
      %v576 = vpop.f32.mrb[0].mxu0
      %577 = vmatprep.mubr.bf16.mxu0 0
      %578 = vmatmul.mubr.bf16.gmra.mrb[0].mxu0 %v438
      %v579 = vpop.f32.mrb[0].mxu0
      %v580 = vadd.f32 0.0, %v579
      %v581 = vpop.f32.mrb[0].mxu0
      %v582 = vpop.f32.mrb[0].mxu0
      %v583 = vadd.f32 0.0, %v582
      %v584 = vpop.f32.mrb[0].mxu0
      %585 = vmatprep.mubr.bf16.mxu0 0
      %586 = vmatmul.mubr.bf16.gmra.mrb[0].mxu0 %v441
      %v587 = vpop.f32.mrb[0].mxu0
      %v588 = vadd.f32 0.0, %v587
      %v589 = vpop.f32.mrb[0].mxu0
      %v590 = vpop.f32.mrb[0].mxu0
      %v591 = vadd.f32 0.0, %v590
      %v592 = vpop.f32.mrb[0].mxu0
      %593 = vmatprep.mubr.bf16.mxu0 0
      %594 = vmatmul.mubr.bf16.gmra.mrb[0].mxu0 %v444
      %v595 = vpop.f32.mrb[0].mxu0
      %v596 = vadd.f32 0.0, %v595
      %v597 = vpop.f32.mrb[0].mxu0
      %v598 = vpop.f32.mrb[0].mxu0
      %v599 = vadd.f32 0.0, %v598
      %v600 = vpop.f32.mrb[0].mxu0
      %601 = vmatprep.mubr.bf16.mxu0 0
      %602 = vmatmul.mubr.bf16.gmra.mrb[0].mxu0 %v447
      %v603 = vpop.f32.mrb[0].mxu0
      %v604 = vadd.f32 0.0, %v603
      %v605 = vpop.f32.mrb[0].mxu0
      %v606 = vpop.f32.mrb[0].mxu0
      %v607 = vadd.f32 0.0, %v606
      %v608 = vpop.f32.mrb[0].mxu0
      %609 = vmatprep.mubr.bf16.mxu0 0
      %610 = vmatmul.mubr.bf16.gmra.mrb[0].mxu0 %v450
      %v611 = vpop.f32.mrb[0].mxu0
      %v612 = vadd.f32 0.0, %v611
      %v613 = vpop.f32.mrb[0].mxu0
      %v614 = vpop.f32.mrb[0].mxu0
      %v615 = vadd.f32 0.0, %v614
      %v616 = vpop.f32.mrb[0].mxu0
      %617 = vmatprep.mubr.bf16.mxu0 0
      %618 = vmatmul.mubr.bf16.gmra.mrb[0].mxu0 %v453
      %v619 = vpop.f32.mrb[0].mxu0
      %v620 = vadd.f32 0.0, %v619
      %v621 = vpop.f32.mrb[0].mxu0
      %v622 = vpop.f32.mrb[0].mxu0
      %v623 = vadd.f32 0.0, %v622
      %v624 = vpop.f32.mrb[0].mxu0
      %625 = vmatprep.mubr.bf16.mxu0 0
      %626 = vmatmul.mubr.bf16.gmra.mrb[0].mxu0 %v456
      %v627 = vpop.f32.mrb[0].mxu0
      %v628 = vadd.f32 0.0, %v627
      %v629 = vpop.f32.mrb[0].mxu0
      %v630 = vpop.f32.mrb[0].mxu0
      %v631 = vadd.f32 0.0, %v630
      %v632 = vpop.f32.mrb[0].mxu0
      %633 = vmatprep.mubr.bf16.mxu0 0
      %634 = vmatmul.mubr.bf16.gmra.mrb[0].mxu0 %v459
      %v635 = vpop.f32.mrb[0].mxu0
      %v636 = vadd.f32 0.0, %v635
      %v637 = vpop.f32.mrb[0].mxu0
      %v638 = vpop.f32.mrb[0].mxu0
      %v639 = vadd.f32 0.0, %v638
      %v640 = vpop.f32.mrb[0].mxu0
      %641 = vmatprep.mubr.bf16.mxu0 0
      %642 = vmatmul.mubr.bf16.gmra.mrb[0].mxu0 %v462
      %v643 = vpop.f32.mrb[0].mxu0
      %v644 = vadd.f32 0.0, %v643
      %v645 = vpop.f32.mrb[0].mxu0
      %v646 = vpop.f32.mrb[0].mxu0
      %v647 = vadd.f32 0.0, %v646
      %v648 = vpop.f32.mrb[0].mxu0
      %649 = vmatprep.mubr.bf16.mxu0 0
      %650 = vmatmul.mubr.bf16.gmra.mrb[0].mxu0 %v465
      %v651 = vpop.f32.mrb[0].mxu0
      %v652 = vadd.f32 0.0, %v651
      %v653 = vpop.f32.mrb[0].mxu0
      %v654 = vpop.f32.mrb[0].mxu0
      %v655 = vadd.f32 0.0, %v654
      %v656 = vpop.f32.mrb[0].mxu0
      %657 = vmatprep.mubr.bf16.mxu0 0
      %658 = vmatmul.mubr.bf16.gmra.mrb[0].mxu0 %v468
      %v659 = vpop.f32.mrb[0].mxu0
      %v660 = vadd.f32 0.0, %v659
      %v661 = vpop.f32.mrb[0].mxu0
      %v662 = vpop.f32.mrb[0].mxu0
      %v663 = vadd.f32 0.0, %v662
      %v664 = vpop.f32.mrb[0].mxu0
      %665 = vmatprep.mubr.bf16.mxu0 0
      %666 = vmatmul.mubr.bf16.gmra.mrb[0].mxu0 %v471
      %v667 = vpop.f32.mrb[0].mxu0
      %v668 = vadd.f32 0.0, %v667
      %v669 = vpop.f32.mrb[0].mxu0
      %v670 = vpop.f32.mrb[0].mxu0
      %v671 = vadd.f32 0.0, %v670
      %v672 = vpop.f32.mrb[0].mxu0
      %673 = vmatprep.mubr.bf16.mxu0 0
      %674 = vmatmul.mubr.bf16.gmra.mrb[0].mxu0 %v474
      %v675 = vpop.f32.mrb[0].mxu0
      %v676 = vadd.f32 0.0, %v675
      %v677 = vpop.f32.mrb[0].mxu0
      %v678 = vpop.f32.mrb[0].mxu0
      %v679 = vadd.f32 0.0, %v678
      %v680 = vpop.f32.mrb[0].mxu0
      %681 = vmatprep.mubr.bf16.mxu0 0
      %682 = vmatmul.mubr.bf16.gmra.mrb[0].mxu0 %v477
      %v683 = vpop.f32.mrb[0].mxu0
      %v684 = vadd.f32 0.0, %v683
      %v685 = vpop.f32.mrb[0].mxu0
      %v686 = vpop.f32.mrb[0].mxu0
      %v687 = vadd.f32 0.0, %v686
      %v688 = vpop.f32.mrb[0].mxu0
      %689 = vmatprep.mubr.bf16.mxu0 0
      %690 = vmatmul.mubr.bf16.gmra.mrb[0].mxu0 %v480
      %v691 = vpop.f32.mrb[0].mxu0
      %v692 = vadd.f32 0.0, %v691
      %v693 = vpop.f32.mrb[0].mxu0
      %v694 = vpop.f32.mrb[0].mxu0
      %v695 = vadd.f32 0.0, %v694
      %v696 = vpop.f32.mrb[0].mxu0
      %697 = vmatprep.mubr.bf16.mxu0 0
      %698 = vmatmul.mubr.bf16.gmra.mrb[0].mxu0 %v483
      %v699 = vpop.f32.mrb[0].mxu0
      %v700 = vadd.f32 0.0, %v699
      %v701 = vpop.f32.mrb[0].mxu0
      %v702 = vpop.f32.mrb[0].mxu0
      %v703 = vadd.f32 0.0, %v702
      %v704 = vpop.f32.mrb[0].mxu0
      %705 = vmatprep.mubr.bf16.mxu0 0
      %706 = vmatmul.mubr.bf16.gmra.mrb[0].mxu0 %v486
      %v707 = vpop.f32.mrb[0].mxu0
      %v708 = vadd.f32 0.0, %v707
      %v709 = vpop.f32.mrb[0].mxu0
      %v710 = vpop.f32.mrb[0].mxu0
      %v711 = vadd.f32 0.0, %v710
      %v712 = vpop.f32.mrb[0].mxu0
      %713 = vmatprep.mubr.bf16.mxu0 0
      %714 = vmatmul.mubr.bf16.gmra.mrb[0].mxu0 %v489
      %v715 = vpop.f32.mrb[0].mxu0
      %v716 = vadd.f32 0.0, %v715
      %v717 = vpop.f32.mrb[0].mxu0
      %v718 = vpop.f32.mrb[0].mxu0
      %v719 = vadd.f32 0.0, %v718
      %v720 = vpop.f32.mrb[0].mxu0
      %721 = vmatprep.mubr.bf16.mxu0 0
      %722 = vmatmul.mubr.bf16.gmra.mrb[0].mxu0 %v492
      %v723 = vpop.f32.mrb[0].mxu0
      %v724 = vadd.f32 0.0, %v723
      %v725 = vpop.f32.mrb[0].mxu0
      %v726 = vpop.f32.mrb[0].mxu0
      %v727 = vadd.f32 0.0, %v726
      %v728 = vpop.f32.mrb[0].mxu0
      %729 = vmatprep.mubr.bf16.mxu0 0
      %730 = vmatmul.mubr.bf16.gmra.mrb[0].mxu0 %v495
      %v731 = vpop.f32.mrb[0].mxu0
      %v732 = vadd.f32 0.0, %v731
      %v733 = vpop.f32.mrb[0].mxu0
      %v734 = vpop.f32.mrb[0].mxu0
      %v735 = vadd.f32 0.0, %v734
      %v736 = vpop.f32.mrb[0].mxu0
      %737 = vmatprep.mubr.bf16.mxu0 0
      %738 = vmatmul.mubr.bf16.gmra.mrb[0].mxu0 %v498
      %v739 = vpop.f32.mrb[0].mxu0
      %v740 = vadd.f32 0.0, %v739
      %v741 = vpop.f32.mrb[0].mxu0
      %v742 = vpop.f32.mrb[0].mxu0
      %v743 = vadd.f32 0.0, %v742
      %v744 = vpop.f32.mrb[0].mxu0
      %745 = vmatprep.mubr.bf16.mxu0 0
      %746 = vmatmul.mubr.bf16.gmra.mrb[0].mxu0 %v501
      %v747 = vpop.f32.mrb[0].mxu0
      %v748 = vadd.f32 0.0, %v747
      %v749 = vpop.f32.mrb[0].mxu0
      %v750 = vpop.f32.mrb[0].mxu0
      %v751 = vadd.f32 0.0, %v750
      %v752 = vpop.f32.mrb[0].mxu0
      %753 = vmatprep.mubr.bf16.mxu0 0
      %754 = vmatmul.mubr.bf16.gmra.mrb[0].mxu0 %v504
      %v755 = vpop.f32.mrb[0].mxu0
      %v756 = vadd.f32 0.0, %v755
      %v757 = vpop.f32.mrb[0].mxu0
      %v758 = vpop.f32.mrb[0].mxu0
      %v759 = vadd.f32 0.0, %v758
      %v760 = vpop.f32.mrb[0].mxu0
      %761 = vmatprep.mubr.bf16.mxu0 0
      %762 = vmatmul.mubr.bf16.gmra.mrb[0].mxu0 %v507
      %v763 = vpop.f32.mrb[0].mxu0
      %v764 = vadd.f32 0.0, %v763
      %v765 = vpop.f32.mrb[0].mxu0
      %v766 = vpop.f32.mrb[0].mxu0
      %v767 = vadd.f32 0.0, %v766
      %v768 = vpop.f32.mrb[0].mxu0
      %769 = vmatprep.mubr.bf16.mxu0 0
      %770 = vmatmul.mubr.bf16.gmra.mrb[0].mxu0 %v510
      %v771 = vpop.f32.mrb[0].mxu0
      %v772 = vadd.f32 0.0, %v771
      %v773 = vpop.f32.mrb[0].mxu0
      %v774 = vpop.f32.mrb[0].mxu0
      %v775 = vadd.f32 0.0, %v774
      %v776 = vpop.f32.mrb[0].mxu0
      %777 = vmatprep.mubr.bf16.mxu0 0
      %778 = vmatmul.mubr.bf16.gmra.mrb[0].mxu0 %v513
      %v779 = vpop.f32.mrb[0].mxu0
      %v780 = vadd.f32 0.0, %v779
      %v781 = vpop.f32.mrb[0].mxu0
      %v782 = vpop.f32.mrb[0].mxu0
      %v783 = vadd.f32 0.0, %v782
      %v784 = vpop.f32.mrb[0].mxu0
      %785 = vmatprep.mubr.bf16.mxu0 0
      %786 = vmatmul.mubr.bf16.gmra.mrb[0].mxu0 %v516
      %v787 = vpop.f32.mrb[0].mxu0
      %v788 = vadd.f32 0.0, %v787
      %v789 = vpop.f32.mrb[0].mxu0
      %v790 = vpop.f32.mrb[0].mxu0
      %v791 = vadd.f32 0.0, %v790
      %v792 = vpop.f32.mrb[0].mxu0
      %793 = vmatprep.mubr.bf16.mxu0 0
      %794 = vmatmul.mubr.bf16.gmra.mrb[0].mxu0 %v519
      %v795 = vpop.f32.mrb[0].mxu0
      %v796 = vadd.f32 0.0, %v795
      %v797 = vpop.f32.mrb[0].mxu0
      %v798 = vpop.f32.mrb[0].mxu0
      %v799 = vadd.f32 0.0, %v798
      %v800 = vpop.f32.mrb[0].mxu0
      %801 = vmatprep.mubr.bf16.mxu0 0
      %802 = vmatmul.mubr.bf16.gmra.mrb[0].mxu0 %v522
      %v803 = vpop.f32.mrb[0].mxu0
      %v804 = vadd.f32 0.0, %v803
      %v805 = vpop.f32.mrb[0].mxu0
      %v806 = vpop.f32.mrb[0].mxu0
      %v807 = vadd.f32 0.0, %v806
      %v808 = vpop.f32.mrb[0].mxu0
      %809 = vmatprep.mubr.bf16.mxu0 0
      %810 = vmatmul.mubr.bf16.gmra.mrb[0].mxu0 %v525
      %v811 = vpop.f32.mrb[0].mxu0
      %v812 = vadd.f32 0.0, %v811
      %v813 = vpop.f32.mrb[0].mxu0
      %v814 = vpop.f32.mrb[0].mxu0
      %v815 = vadd.f32 0.0, %v814
      %v816 = vpop.f32.mrb[0].mxu0
      %817 = vmatprep.mubr.bf16.mxu0 0
      %818 = vmatmul.mubr.bf16.gmra.mrb[0].mxu0 %v528
      %v819 = vpop.f32.mrb[0].mxu0
      %v820 = vadd.f32 0.0, %v819
      %v821 = vpop.f32.mrb[0].mxu0
      %v822 = vpop.f32.mrb[0].mxu0
      %v823 = vadd.f32 0.0, %v822
      %v824 = vpop.f32.mrb[0].mxu0
      %825 = vdwg.mxu0
      %v826 = vld [vmem:[%s2] sm:$0x1]
      %v828 = vlaneseq
      %v829 = vshrl.u32 %v828, 7
      %v830 = vsub.s32 0, %v829
      %v831 = vrot.slane %v826, %v830
      %v833 = vmul.f32 %v572, %v831
      %v834 = vmul.f32 %v575, %v831
      %v835 = vmul.f32 %v580, %v831
      %v836 = vmul.f32 %v583, %v831
      %v837 = vmul.f32 %v588, %v831
      %v838 = vmul.f32 %v591, %v831
      %v839 = vmul.f32 %v596, %v831
      %v840 = vmul.f32 %v599, %v831
      %v841 = vmul.f32 %v604, %v831
      %v842 = vmul.f32 %v607, %v831
      %v843 = vmul.f32 %v612, %v831
      %v844 = vmul.f32 %v615, %v831
      %v845 = vmul.f32 %v620, %v831
      %v846 = vmul.f32 %v623, %v831
      %v847 = vmul.f32 %v628, %v831
      %v848 = vmul.f32 %v631, %v831
      %v849 = vmul.f32 %v636, %v831
      %v850 = vmul.f32 %v639, %v831
      %v851 = vmul.f32 %v644, %v831
      %v852 = vmul.f32 %v647, %v831
      %v853 = vmul.f32 %v652, %v831
      %v854 = vmul.f32 %v655, %v831
      %v855 = vmul.f32 %v660, %v831
      %v856 = vmul.f32 %v663, %v831
      %v857 = vmul.f32 %v668, %v831
      %v858 = vmul.f32 %v671, %v831
      %v859 = vmul.f32 %v676, %v831
      %v860 = vmul.f32 %v679, %v831
      %v861 = vmul.f32 %v684, %v831
      %v862 = vmul.f32 %v687, %v831
      %v863 = vmul.f32 %v692, %v831
      %v864 = vmul.f32 %v695, %v831
      %v865 = vmul.f32 %v700, %v831
      %v866 = vmul.f32 %v703, %v831
      %v867 = vmul.f32 %v708, %v831
      %v868 = vmul.f32 %v711, %v831
      %v869 = vmul.f32 %v716, %v831
      %v870 = vmul.f32 %v719, %v831
      %v871 = vmul.f32 %v724, %v831
      %v872 = vmul.f32 %v727, %v831
      %v873 = vmul.f32 %v732, %v831
      %v874 = vmul.f32 %v735, %v831
      %v875 = vmul.f32 %v740, %v831
      %v876 = vmul.f32 %v743, %v831
      %v877 = vmul.f32 %v748, %v831
      %v878 = vmul.f32 %v751, %v831
      %v879 = vmul.f32 %v756, %v831
      %v880 = vmul.f32 %v759, %v831
      %v881 = vmul.f32 %v764, %v831
      %v882 = vmul.f32 %v767, %v831
      %v883 = vmul.f32 %v772, %v831
      %v884 = vmul.f32 %v775, %v831
      %v885 = vmul.f32 %v780, %v831
      %v886 = vmul.f32 %v783, %v831
      %v887 = vmul.f32 %v788, %v831
      %v888 = vmul.f32 %v791, %v831
      %v889 = vmul.f32 %v796, %v831
      %v890 = vmul.f32 %v799, %v831
      %v891 = vmul.f32 %v804, %v831
      %v892 = vmul.f32 %v807, %v831
      %v893 = vmul.f32 %v812, %v831
      %v894 = vmul.f32 %v815, %v831
      %v895 = vmul.f32 %v820, %v831
      %v896 = vmul.f32 %v823, %v831
      %v897 = vld [vmem:[%s3] sm:$0x1]
      %v899 = vlaneseq
      %v900 = vshrl.u32 %v899, 7
      %v901 = vsub.s32 0, %v900
      %v902 = vrot.slane %v897, %v901
      %v904 = vadd.f32 %v833, %v902
      %v905 = vadd.f32 %v834, %v902
      %v906 = vadd.f32 %v835, %v902
      %v907 = vadd.f32 %v836, %v902
      %v908 = vadd.f32 %v837, %v902
      %v909 = vadd.f32 %v838, %v902
      %v910 = vadd.f32 %v839, %v902
      %v911 = vadd.f32 %v840, %v902
      %v912 = vadd.f32 %v841, %v902
      %v913 = vadd.f32 %v842, %v902
      %v914 = vadd.f32 %v843, %v902
      %v915 = vadd.f32 %v844, %v902
      %v916 = vadd.f32 %v845, %v902
      %v917 = vadd.f32 %v846, %v902
      %v918 = vadd.f32 %v847, %v902
      %v919 = vadd.f32 %v848, %v902
      %v920 = vadd.f32 %v849, %v902
      %v921 = vadd.f32 %v850, %v902
      %v922 = vadd.f32 %v851, %v902
      %v923 = vadd.f32 %v852, %v902
      %v924 = vadd.f32 %v853, %v902
      %v925 = vadd.f32 %v854, %v902
      %v926 = vadd.f32 %v855, %v902
      %v927 = vadd.f32 %v856, %v902
      %v928 = vadd.f32 %v857, %v902
      %v929 = vadd.f32 %v858, %v902
      %v930 = vadd.f32 %v859, %v902
      %v931 = vadd.f32 %v860, %v902
      %v932 = vadd.f32 %v861, %v902
      %v933 = vadd.f32 %v862, %v902
      %v934 = vadd.f32 %v863, %v902
      %v935 = vadd.f32 %v864, %v902
      %v936 = vadd.f32 %v865, %v902
      %v937 = vadd.f32 %v866, %v902
      %v938 = vadd.f32 %v867, %v902
      %v939 = vadd.f32 %v868, %v902
      %v940 = vadd.f32 %v869, %v902
      %v941 = vadd.f32 %v870, %v902
      %v942 = vadd.f32 %v871, %v902
      %v943 = vadd.f32 %v872, %v902
      %v944 = vadd.f32 %v873, %v902
      %v945 = vadd.f32 %v874, %v902
      %v946 = vadd.f32 %v875, %v902
      %v947 = vadd.f32 %v876, %v902
      %v948 = vadd.f32 %v877, %v902
      %v949 = vadd.f32 %v878, %v902
      %v950 = vadd.f32 %v879, %v902
      %v951 = vadd.f32 %v880, %v902
      %v952 = vadd.f32 %v881, %v902
      %v953 = vadd.f32 %v882, %v902
      %v954 = vadd.f32 %v883, %v902
      %v955 = vadd.f32 %v884, %v902
      %v956 = vadd.f32 %v885, %v902
      %v957 = vadd.f32 %v886, %v902
      %v958 = vadd.f32 %v887, %v902
      %v959 = vadd.f32 %v888, %v902
      %v960 = vadd.f32 %v889, %v902
      %v961 = vadd.f32 %v890, %v902
      %v962 = vadd.f32 %v891, %v902
      %v963 = vadd.f32 %v892, %v902
      %v964 = vadd.f32 %v893, %v902
      %v965 = vadd.f32 %v894, %v902
      %v966 = vadd.f32 %v895, %v902
      %v967 = vadd.f32 %v896, %v902
      %v968 = vmax.f32 %v904, 0.0
      %v969 = vmax.f32 %v905, 0.0
      %v970 = vmax.f32 %v906, 0.0
      %v971 = vmax.f32 %v907, 0.0
      %v972 = vmax.f32 %v908, 0.0
      %v973 = vmax.f32 %v909, 0.0
      %v974 = vmax.f32 %v910, 0.0
      %v975 = vmax.f32 %v911, 0.0
      %v976 = vmax.f32 %v912, 0.0
      %v977 = vmax.f32 %v913, 0.0
      %v978 = vmax.f32 %v914, 0.0
      %v979 = vmax.f32 %v915, 0.0
      %v980 = vmax.f32 %v916, 0.0
      %v981 = vmax.f32 %v917, 0.0
      %v982 = vmax.f32 %v918, 0.0
      %v983 = vmax.f32 %v919, 0.0
      %v984 = vmax.f32 %v920, 0.0
      %v985 = vmax.f32 %v921, 0.0
      %v986 = vmax.f32 %v922, 0.0
      %v987 = vmax.f32 %v923, 0.0
      %v988 = vmax.f32 %v924, 0.0
      %v989 = vmax.f32 %v925, 0.0
      %v990 = vmax.f32 %v926, 0.0
      %v991 = vmax.f32 %v927, 0.0
      %v992 = vmax.f32 %v928, 0.0
      %v993 = vmax.f32 %v929, 0.0
      %v994 = vmax.f32 %v930, 0.0
      %v995 = vmax.f32 %v931, 0.0
      %v996 = vmax.f32 %v932, 0.0
      %v997 = vmax.f32 %v933, 0.0
      %v998 = vmax.f32 %v934, 0.0
      %v999 = vmax.f32 %v935, 0.0
      %v1000 = vmax.f32 %v936, 0.0
      %v1001 = vmax.f32 %v937, 0.0
      %v1002 = vmax.f32 %v938, 0.0
      %v1003 = vmax.f32 %v939, 0.0
      %v1004 = vmax.f32 %v940, 0.0
      %v1005 = vmax.f32 %v941, 0.0
      %v1006 = vmax.f32 %v942, 0.0
      %v1007 = vmax.f32 %v943, 0.0
      %v1008 = vmax.f32 %v944, 0.0
      %v1009 = vmax.f32 %v945, 0.0
      %v1010 = vmax.f32 %v946, 0.0
      %v1011 = vmax.f32 %v947, 0.0
      %v1012 = vmax.f32 %v948, 0.0
      %v1013 = vmax.f32 %v949, 0.0
      %v1014 = vmax.f32 %v950, 0.0
      %v1015 = vmax.f32 %v951, 0.0
      %v1016 = vmax.f32 %v952, 0.0
      %v1017 = vmax.f32 %v953, 0.0
      %v1018 = vmax.f32 %v954, 0.0
      %v1019 = vmax.f32 %v955, 0.0
      %v1020 = vmax.f32 %v956, 0.0
      %v1021 = vmax.f32 %v957, 0.0
      %v1022 = vmax.f32 %v958, 0.0
      %v1023 = vmax.f32 %v959, 0.0
      %v1024 = vmax.f32 %v960, 0.0
      %v1025 = vmax.f32 %v961, 0.0
      %v1026 = vmax.f32 %v962, 0.0
      %v1027 = vmax.f32 %v963, 0.0
      %v1028 = vmax.f32 %v964, 0.0
      %v1029 = vmax.f32 %v965, 0.0
      %v1030 = vmax.f32 %v966, 0.0
      %v1031 = vmax.f32 %v967, 0.0
      %vm1032 = vcmask 64512
      %1033 = vst.msk [vmem:[%s199] sm:$0xff] %vm1032, %v968
      %1034 = vst.msk [vmem:[%s199 + $0x8] sm:$0xff] %vm1032, %v969
      %1035 = vst.msk [vmem:[%s199 + $0x10] sm:$0xff] %vm1032, %v970
      %1036 = vst.msk [vmem:[%s199 + $0x18] sm:$0xff] %vm1032, %v971
      %1037 = vst.msk [vmem:[%s199 + $0x20] sm:$0xff] %vm1032, %v972
      %1038 = vst.msk [vmem:[%s199 + $0x28] sm:$0xff] %vm1032, %v973
      %1039 = vst.msk [vmem:[%s199 + $0x30] sm:$0xff] %vm1032, %v974
      %1040 = vst.msk [vmem:[%s199 + $0x38] sm:$0xff] %vm1032, %v975
      %1041 = vst.msk [vmem:[%s199 + $0x40] sm:$0xff] %vm1032, %v976
      %1042 = vst.msk [vmem:[%s199 + $0x48] sm:$0xff] %vm1032, %v977
      %1043 = vst.msk [vmem:[%s199 + $0x50] sm:$0xff] %vm1032, %v978
      %1044 = vst.msk [vmem:[%s199 + $0x58] sm:$0xff] %vm1032, %v979
      %1045 = vst.msk [vmem:[%s199 + $0x60] sm:$0xff] %vm1032, %v980
      %1046 = vst.msk [vmem:[%s199 + $0x68] sm:$0xff] %vm1032, %v981
      %1047 = vst.msk [vmem:[%s199 + $0x70] sm:$0xff] %vm1032, %v982
      %1048 = vst.msk [vmem:[%s199 + $0x78] sm:$0xff] %vm1032, %v983
      %1049 = vst.msk [vmem:[%s199 + $0x80] sm:$0xff] %vm1032, %v984
      %1050 = vst.msk [vmem:[%s199 + $0x88] sm:$0xff] %vm1032, %v985
      %1051 = vst.msk [vmem:[%s199 + $0x90] sm:$0xff] %vm1032, %v986
      %1052 = vst.msk [vmem:[%s199 + $0x98] sm:$0xff] %vm1032, %v987
      %1053 = vst.msk [vmem:[%s199 + $0xa0] sm:$0xff] %vm1032, %v988
      %1054 = vst.msk [vmem:[%s199 + $0xa8] sm:$0xff] %vm1032, %v989
      %1055 = vst.msk [vmem:[%s199 + $0xb0] sm:$0xff] %vm1032, %v990
      %1056 = vst.msk [vmem:[%s199 + $0xb8] sm:$0xff] %vm1032, %v991
      %1057 = vst.msk [vmem:[%s199 + $0xc0] sm:$0xff] %vm1032, %v992
      %1058 = vst.msk [vmem:[%s199 + $0xc8] sm:$0xff] %vm1032, %v993
      %1059 = vst.msk [vmem:[%s199 + $0xd0] sm:$0xff] %vm1032, %v994
      %1060 = vst.msk [vmem:[%s199 + $0xd8] sm:$0xff] %vm1032, %v995
      %1061 = vst.msk [vmem:[%s199 + $0xe0] sm:$0xff] %vm1032, %v996
      %1062 = vst.msk [vmem:[%s199 + $0xe8] sm:$0xff] %vm1032, %v997
      %1063 = vst.msk [vmem:[%s199 + $0xf0] sm:$0xff] %vm1032, %v998
      %1064 = vst.msk [vmem:[%s199 + $0xf8] sm:$0xff] %vm1032, %v999
      %1065 = vst.msk [vmem:[%s199 + $0x100] sm:$0xff] %vm1032, %v1000
      %1066 = vst.msk [vmem:[%s199 + $0x108] sm:$0xff] %vm1032, %v1001
      %1067 = vst.msk [vmem:[%s199 + $0x110] sm:$0xff] %vm1032, %v1002
      %1068 = vst.msk [vmem:[%s199 + $0x118] sm:$0xff] %vm1032, %v1003
      %1069 = vst.msk [vmem:[%s199 + $0x120] sm:$0xff] %vm1032, %v1004
      %1070 = vst.msk [vmem:[%s199 + $0x128] sm:$0xff] %vm1032, %v1005
      %1071 = vst.msk [vmem:[%s199 + $0x130] sm:$0xff] %vm1032, %v1006
      %1072 = vst.msk [vmem:[%s199 + $0x138] sm:$0xff] %vm1032, %v1007
      %1073 = vst.msk [vmem:[%s199 + $0x140] sm:$0xff] %vm1032, %v1008
      %1074 = vst.msk [vmem:[%s199 + $0x148] sm:$0xff] %vm1032, %v1009
      %1075 = vst.msk [vmem:[%s199 + $0x150] sm:$0xff] %vm1032, %v1010
      %1076 = vst.msk [vmem:[%s199 + $0x158] sm:$0xff] %vm1032, %v1011
      %1077 = vst.msk [vmem:[%s199 + $0x160] sm:$0xff] %vm1032, %v1012
      %1078 = vst.msk [vmem:[%s199 + $0x168] sm:$0xff] %vm1032, %v1013
      %1079 = vst.msk [vmem:[%s199 + $0x170] sm:$0xff] %vm1032, %v1014
      %1080 = vst.msk [vmem:[%s199 + $0x178] sm:$0xff] %vm1032, %v1015
      %1081 = vst.msk [vmem:[%s199 + $0x180] sm:$0xff] %vm1032, %v1016
      %1082 = vst.msk [vmem:[%s199 + $0x188] sm:$0xff] %vm1032, %v1017
      %1083 = vst.msk [vmem:[%s199 + $0x190] sm:$0xff] %vm1032, %v1018
      %1084 = vst.msk [vmem:[%s199 + $0x198] sm:$0xff] %vm1032, %v1019
      %1085 = vst.msk [vmem:[%s199 + $0x1a0] sm:$0xff] %vm1032, %v1020
      %1086 = vst.msk [vmem:[%s199 + $0x1a8] sm:$0xff] %vm1032, %v1021
      %1087 = vst.msk [vmem:[%s199 + $0x1b0] sm:$0xff] %vm1032, %v1022
      %1088 = vst.msk [vmem:[%s199 + $0x1b8] sm:$0xff] %vm1032, %v1023
      %1089 = vst.msk [vmem:[%s199 + $0x1c0] sm:$0xff] %vm1032, %v1024
      %1090 = vst.msk [vmem:[%s199 + $0x1c8] sm:$0xff] %vm1032, %v1025
      %1091 = vst.msk [vmem:[%s199 + $0x1d0] sm:$0xff] %vm1032, %v1026
      %1092 = vst.msk [vmem:[%s199 + $0x1d8] sm:$0xff] %vm1032, %v1027
      %1093 = vst.msk [vmem:[%s199 + $0x1e0] sm:$0xff] %vm1032, %v1028
      %1094 = vst.msk [vmem:[%s199 + $0x1e8] sm:$0xff] %vm1032, %v1029
      %1095 = vst.msk [vmem:[%s199 + $0x1f0] sm:$0xff] %vm1032, %v1030
      %1096 = vst.msk [vmem:[%s199 + $0x1f8] sm:$0xff] %vm1032, %v1031
      %s1097 = smul.u32 64, %s15
      %p1098 = scmp.lt.s32.totalorder %s1097, 255
      %s1099 = scalar_select %p1098, %s1097, 255
      %s1100 = smul.addr %s1099, 8
      %s1101 = scalar_lea.vmem %s4, %s1100
      // Predicated region
      $region37: #{model_conv_unet_forward.13} parent=35 // pred_check
        %p1102 = pneg %p122
      $region38: #{model_conv_unet_forward.13} parent=35 // pred_check_branch
        %1104 = sbr.rel (%p1102) target = $region40
      $region39: #{model_conv_unet_forward.13} parent=35 // pred_region
        %s1105 = smul.u32 64, %s15
      $region40: #{model_conv_unet_forward.13} parent=35 // pred_fallthru
        _
    $region36: #{model_conv_unet_forward.13} parent=5 // pred_fallthru
      _
    %p1106 = scmp.le.s32.totalorder 2, %s10
    // Predicated region
    $region41: #{model_conv_unet_forward.13} parent=5 // pred_check
      %p1107 = pneg %p1106
    $region42: #{model_conv_unet_forward.13} parent=5 // pred_check_branch
      %1109 = sbr.rel (%p1107) target = $region44
    $region43: #{model_conv_unet_forward.13} parent=5 // pred_region
      %s1110 = ssub.s32 %s10, 2
      // Predicated region
      $region45: #{model_conv_unet_forward.13} parent=43 // pred_check
        %p1111 = pneg %p128
      $region46: #{model_conv_unet_forward.13} parent=43 // pred_check_branch
        %1113 = sbr.rel (%p1111) target = $region48
      $region47: #{model_conv_unet_forward.13} parent=43 // pred_region
        %s1114 = smul.u32 64, %s16
        %p1115 = scmp.lt.s32.totalorder %s1114, 255
        %s1116 = scalar_select %p1115, %s1114, 255
        %s1117 = smul.addr %s1116, 8
        %s1118 = scalar_lea.vmem %s4, %s1117
      $region48: #{model_conv_unet_forward.13} parent=43 // pred_fallthru
        _
    $region44: #{model_conv_unet_forward.13} parent=5 // pred_fallthru
      _
  $region6: #{model_conv_unet_forward.13} parent=0 // loop_footer
    %s14 = sadd.s32 1, %s10
  $region7: #{model_conv_unet_forward.13} parent=0 // loop_footer_branch
    %9 = sbr.rel target = $region3
  $region8: #{model_conv_unet_forward.13} parent=0 // loop_exit
    _

// kernel: model_conv_unet_forward.14
$region0: #{model_conv_unet_forward.14}
  #allocation0 [shape = 'u32[]', space=smem, size = 0x4, offset = 0x4, fixed_abs, tag = 'smem constant byte address 0x4 - core index']
  #allocation1 [shape = 'u32[144,128]{1,0:T(1,128)}', space=vmem, size = 0x12000, scoped, tag = 'internal scratch']
  %s0 = inlined_call_operand.vmem [shape: bf16[512,72], index: 0, kind: input, shape index: {}]
  %s1 = inlined_call_operand.vmem [shape: bf16[72,8], index: 1, kind: input, shape index: {}]
  %s2 = inlined_call_operand.vmem [shape: f32[1,8], index: 2, kind: input, shape index: {}]
  %s3 = inlined_call_operand.vmem [shape: f32[1,8], index: 3, kind: input, shape index: {}]
  %s4 = inlined_call_operand.vmem [shape: f32[512,8], index: 4, kind: output, shape index: {}]
  %s5 = sld [smem:[#allocation0]]
  $region49: #{model_conv_unet_forward.14} parent=0
    _
  %s7 = ssub.s32 1, %s5
  %s8 = scalar_select 0, %s7, %s5
  loop: start=0, step=1, limit=4
  $region2: #{model_conv_unet_forward.14} parent=0 // loop_pre_header
    _
  $region3: #{model_conv_unet_forward.14} parent=0 // loop_header
    %s10 = sphi 0, %s14
    %p11 = scmp.ge.s32.totalorder %s10, 4
    %s20 = sphi 0, %s22
    %s23 = sphi 0, %s20
    %s24 = sphi 0, %s23
    %s40 = sphi 0, %s24
    %s44 = sphi 0, %s44
    %s46 = sphi 0, %s44
    %s47 = sphi 0, %s46
    %s61 = sphi 0, %s47
    %s65 = sphi 0, %s65
    %s67 = sphi 0, %s65
    %s68 = sphi 0, %s67
    %s82 = sphi 0, %s68
    %s86 = sphi 0, %s86
    %s88 = sphi 0, %s86
    %s89 = sphi 0, %s88
    %s103 = sphi 0, %s89
    %s109 = sphi 0, %s111
    %s112 = sphi 0, %s109
    %s113 = sphi 0, %s112
    %s129 = sphi 0, %s113
  $region4: #{model_conv_unet_forward.14} parent=0 // loop_header_branch
    %13 = sbr.rel (%p11) target = $region8
  $region5: #{model_conv_unet_forward.14} parent=0 // loop_body
    %s15 = ssub.s32 %s10, 1
    %s16 = ssub.s32 %s10, 2
    %s17 = sadd.s32 %s10, 1
    %s18 = ssub.s32 %s10, %s17
    %p19 = scmp.eq.s32.totalorder %s18, 0
    %s21 = sadd.s32 %s20, 1
    %s22 = scalar_select %p19, %s20, %s21
    %p25 = pneg %p19
    %p26 = scmp.eq.s32.totalorder %s10, 1
    %p27 = por %p25, %p26
    %p28 = scmp.ne.s32.totalorder %s20, %s23
    %p29 = scmp.eq.s32.totalorder %s10, 0
    %p30 = por %p28, %p29
    %p31 = scmp.ne.s32.totalorder %s20, %s23
    %p32 = scmp.eq.s32.totalorder %s15, 1
    %p33 = por %p31, %p32
    %p34 = scmp.ne.s32.totalorder %s23, %s24
    %p35 = scmp.eq.s32.totalorder %s15, 0
    %p36 = por %p34, %p35
    %p37 = scmp.ne.s32.totalorder %s23, %s24
    %p38 = scmp.eq.s32.totalorder %s16, 1
    %p39 = por %p37, %p38
    %p41 = scmp.ne.s32.totalorder %s24, %s40
    %p42 = scmp.eq.s32.totalorder %s16, 0
    %p43 = por %p41, %p42
    %s45 = sadd.s32 %s44, 1
    %p48 = scmp.eq.s32.totalorder %s10, 1
    %p49 = scmp.ne.s32.totalorder %s44, %s46
    %p50 = scmp.eq.s32.totalorder %s10, 0
    %p51 = por %p49, %p50
    %p52 = scmp.ne.s32.totalorder %s44, %s46
    %p53 = scmp.eq.s32.totalorder %s15, 1
    %p54 = por %p52, %p53
    %p55 = scmp.ne.s32.totalorder %s46, %s47
    %p56 = scmp.eq.s32.totalorder %s15, 0
    %p57 = por %p55, %p56
    %p58 = scmp.ne.s32.totalorder %s46, %s47
    %p59 = scmp.eq.s32.totalorder %s16, 1
    %p60 = por %p58, %p59
    %p62 = scmp.ne.s32.totalorder %s47, %s61
    %p63 = scmp.eq.s32.totalorder %s16, 0
    %p64 = por %p62, %p63
    %s66 = sadd.s32 %s65, 1
    %p69 = scmp.eq.s32.totalorder %s10, 1
    %p70 = scmp.ne.s32.totalorder %s65, %s67
    %p71 = scmp.eq.s32.totalorder %s10, 0
    %p72 = por %p70, %p71
    %p73 = scmp.ne.s32.totalorder %s65, %s67
    %p74 = scmp.eq.s32.totalorder %s15, 1
    %p75 = por %p73, %p74
    %p76 = scmp.ne.s32.totalorder %s67, %s68
    %p77 = scmp.eq.s32.totalorder %s15, 0
    %p78 = por %p76, %p77
    %p79 = scmp.ne.s32.totalorder %s67, %s68
    %p80 = scmp.eq.s32.totalorder %s16, 1
    %p81 = por %p79, %p80
    %p83 = scmp.ne.s32.totalorder %s68, %s82
    %p84 = scmp.eq.s32.totalorder %s16, 0
    %p85 = por %p83, %p84
    %s87 = sadd.s32 %s86, 1
    %p90 = scmp.eq.s32.totalorder %s10, 1
    %p91 = scmp.ne.s32.totalorder %s86, %s88
    %p92 = scmp.eq.s32.totalorder %s10, 0
    %p93 = por %p91, %p92
    %p94 = scmp.ne.s32.totalorder %s86, %s88
    %p95 = scmp.eq.s32.totalorder %s15, 1
    %p96 = por %p94, %p95
    %p97 = scmp.ne.s32.totalorder %s88, %s89
    %p98 = scmp.eq.s32.totalorder %s15, 0
    %p99 = por %p97, %p98
    %p100 = scmp.ne.s32.totalorder %s88, %s89
    %p101 = scmp.eq.s32.totalorder %s16, 1
    %p102 = por %p100, %p101
    %p104 = scmp.ne.s32.totalorder %s89, %s103
    %p105 = scmp.eq.s32.totalorder %s16, 0
    %p106 = por %p104, %p105
    %s107 = ssub.s32 %s10, %s17
    %p108 = scmp.eq.s32.totalorder %s107, 0
    %s110 = sadd.s32 %s109, 1
    %s111 = scalar_select %p108, %s109, %s110
    %p114 = pneg %p108
    %p115 = scmp.eq.s32.totalorder %s10, 1
    %p116 = por %p114, %p115
    %p117 = scmp.ne.s32.totalorder %s109, %s112
    %p118 = scmp.eq.s32.totalorder %s10, 0
    %p119 = por %p117, %p118
    %p120 = scmp.ne.s32.totalorder %s109, %s112
    %p121 = scmp.eq.s32.totalorder %s15, 1
    %p122 = por %p120, %p121
    %p123 = scmp.ne.s32.totalorder %s112, %s113
    %p124 = scmp.eq.s32.totalorder %s15, 0
    %p125 = por %p123, %p124
    %p126 = scmp.ne.s32.totalorder %s112, %s113
    %p127 = scmp.eq.s32.totalorder %s16, 1
    %p128 = por %p126, %p127
    %p130 = scmp.ne.s32.totalorder %s113, %s129
    %p131 = scmp.eq.s32.totalorder %s16, 0
    %p132 = por %p130, %p131
    %p133 = scmp.le.s32.totalorder 1, %s10
    %p134 = scmp.lt.s32.totalorder %s10, 3
    %p135 = pnand %p133, %p134
    %p136 = pneg %p135
    // Predicated region
    $region9: #{model_conv_unet_forward.14} parent=5 // pred_check
      _
    $region10: #{model_conv_unet_forward.14} parent=5 // pred_check_branch
      %138 = sbr.rel (%p135) target = $region12
    $region11: #{model_conv_unet_forward.14} parent=5 // pred_region
      %s139 = ssub.s32 %s10, 1
      // Predicated region
      $region13: #{model_conv_unet_forward.14} parent=11 // pred_check
        %p140 = pneg %p57
      $region14: #{model_conv_unet_forward.14} parent=11 // pred_check_branch
        %142 = sbr.rel (%p140) target = $region16
      $region15: #{model_conv_unet_forward.14} parent=11 // pred_region
        _
      $region16: #{model_conv_unet_forward.14} parent=11 // pred_fallthru
        _
      // Predicated region
      $region17: #{model_conv_unet_forward.14} parent=11 // pred_check
        %p143 = pneg %p78
      $region18: #{model_conv_unet_forward.14} parent=11 // pred_check_branch
        %145 = sbr.rel (%p143) target = $region20
      $region19: #{model_conv_unet_forward.14} parent=11 // pred_region
        _
      $region20: #{model_conv_unet_forward.14} parent=11 // pred_fallthru
        _
      // Predicated region
      $region21: #{model_conv_unet_forward.14} parent=11 // pred_check
        %p146 = pneg %p99
      $region22: #{model_conv_unet_forward.14} parent=11 // pred_check_branch
        %148 = sbr.rel (%p146) target = $region24
      $region23: #{model_conv_unet_forward.14} parent=11 // pred_region
        _
      $region24: #{model_conv_unet_forward.14} parent=11 // pred_fallthru
        _
    $region12: #{model_conv_unet_forward.14} parent=5 // pred_fallthru
      _
    %p149 = scmp.lt.s32.totalorder %s10, 2
    // Predicated region
    $region25: #{model_conv_unet_forward.14} parent=5 // pred_check
      %p150 = pneg %p149
    $region26: #{model_conv_unet_forward.14} parent=5 // pred_check_branch
      %152 = sbr.rel (%p150) target = $region28
    $region27: #{model_conv_unet_forward.14} parent=5 // pred_region
      // Predicated region
      $region29: #{model_conv_unet_forward.14} parent=27 // pred_check
        %p153 = pneg %p30
      $region30: #{model_conv_unet_forward.14} parent=27 // pred_check_branch
        %155 = sbr.rel (%p153) target = $region32
      $region31: #{model_conv_unet_forward.14} parent=27 // pred_region
        %s156 = smul.u32 32, %s10
        %p157 = scmp.lt.s32.totalorder %s156, 63
        %s158 = scalar_select %p157, %s156, 63
        %s159 = smul.addr %s158, 4
        %s160 = scalar_lea.vmem %s0, %s159
        %s161 = smul.u32 32, %s10
      $region32: #{model_conv_unet_forward.14} parent=27 // pred_fallthru
        _
    $region28: #{model_conv_unet_forward.14} parent=5 // pred_fallthru
      _
    %p162 = scmp.le.s32.totalorder 1, %s10
    %p163 = scmp.lt.s32.totalorder %s10, 3
    %p164 = pnand %p162, %p163
    %p165 = pneg %p164
    // Predicated region
    $region33: #{model_conv_unet_forward.14} parent=5 // pred_check
      _
    $region34: #{model_conv_unet_forward.14} parent=5 // pred_check_branch
      %167 = sbr.rel (%p164) target = $region36
    $region35: #{model_conv_unet_forward.14} parent=5 // pred_region
      %s168 = ssub.s32 %s10, 1
      %s169 = smul.u32 32, %s15
      %p170 = scmp.lt.s32.totalorder %s169, 63
      %s171 = scalar_select %p170, %s169, 63
      %s172 = smul.addr %s171, 4
      %s173 = scalar_lea.vmem %s0, %s172
      %p174 = pneg %p36
      %p175 = pneg %p33
      %p176 = pneg %p57
      %p177 = pneg %p54
      %p178 = pneg %p78
      %p179 = pneg %p75
      %p180 = pneg %p99
      %p181 = pneg %p96
      %p182 = pneg %p125
      %p183 = pneg %p122
      %s184 = smul.u32 32, %s15
      %p185 = scmp.lt.s32.totalorder %s184, 63
      %s186 = scalar_select %p185, %s184, 63
      %s187 = smul.addr %s186, 8
      %s188 = scalar_lea.vmem %s4, %s187
      %s189 = smul.u32 32, %s15
      %p190 = scmp.lt.s32.totalorder %s189, 63
      %s191 = scalar_select %p190, %s189, 63
      %s192 = smul.addr %s191, 4
      %s193 = scalar_lea.vmem %s0, %s192
      %s194 = smul.u32 32, %s15
      %s195 = smul.u32 32, %s15
      %p196 = scmp.lt.s32.totalorder %s195, 63
      %s197 = scalar_select %p196, %s195, 63
      %s198 = smul.addr %s197, 8
      %s199 = scalar_lea.vmem %s4, %s198
      %s200 = smul.u32 32, %s15
      %v202 = vld [vmem:[%s193] sm:$0xf]
      %v203 = vld [vmem:[%s193 + $0x4] sm:$0xf]
      %v204 = vld [vmem:[%s193 + $0x8] sm:$0xf]
      %v205 = vld [vmem:[%s193 + $0xc] sm:$0xf]
      %v206 = vld [vmem:[%s193 + $0x10] sm:$0xf]
      %v207 = vld [vmem:[%s193 + $0x14] sm:$0xf]
      %v208 = vld [vmem:[%s193 + $0x18] sm:$0xf]
      %v209 = vld [vmem:[%s193 + $0x1c] sm:$0xf]
      %v210 = vld [vmem:[%s193 + $0x20] sm:$0xf]
      %v211 = vld [vmem:[%s193 + $0x24] sm:$0xf]
      %v212 = vld [vmem:[%s193 + $0x28] sm:$0xf]
      %v213 = vld [vmem:[%s193 + $0x2c] sm:$0xf]
      %v214 = vld [vmem:[%s193 + $0x30] sm:$0xf]
      %v215 = vld [vmem:[%s193 + $0x34] sm:$0xf]
      %v216 = vld [vmem:[%s193 + $0x38] sm:$0xf]
      %v217 = vld [vmem:[%s193 + $0x3c] sm:$0xf]
      %v218 = vld [vmem:[%s193 + $0x40] sm:$0xf]
      %v219 = vld [vmem:[%s193 + $0x44] sm:$0xf]
      %v220 = vld [vmem:[%s193 + $0x48] sm:$0xf]
      %v221 = vld [vmem:[%s193 + $0x4c] sm:$0xf]
      %v222 = vld [vmem:[%s193 + $0x50] sm:$0xf]
      %v223 = vld [vmem:[%s193 + $0x54] sm:$0xf]
      %v224 = vld [vmem:[%s193 + $0x58] sm:$0xf]
      %v225 = vld [vmem:[%s193 + $0x5c] sm:$0xf]
      %v226 = vld [vmem:[%s193 + $0x60] sm:$0xf]
      %v227 = vld [vmem:[%s193 + $0x64] sm:$0xf]
      %v228 = vld [vmem:[%s193 + $0x68] sm:$0xf]
      %v229 = vld [vmem:[%s193 + $0x6c] sm:$0xf]
      %v230 = vld [vmem:[%s193 + $0x70] sm:$0xf]
      %v231 = vld [vmem:[%s193 + $0x74] sm:$0xf]
      %v232 = vld [vmem:[%s193 + $0x78] sm:$0xf]
      %v233 = vld [vmem:[%s193 + $0x7c] sm:$0xf]
      %v234 = vld [vmem:[%s1] sm:$0xf]
      %v235 = vld [vmem:[%s1 + $0x4] sm:$0xf]
      %v236 = vld [vmem:[%s1 + $0x8] sm:$0xf]
      %v237 = vld [vmem:[%s1 + $0xc] sm:$0xf]
      %v238 = vld [vmem:[%s1 + $0x10] sm:$0xf]
      %v239 = vld [vmem:[%s1 + $0x14] sm:$0xf]
      %v240 = vld [vmem:[%s1 + $0x18] sm:$0xf]
      %v241 = vld [vmem:[%s1 + $0x1c] sm:$0xf]
      %v242 = vld [vmem:[%s1 + $0x20] sm:$0xf]
      %v275 = vunpack.c.l.b16 %v202
      %v276 = vunpack.c.l.b16 %v203
      %v277 = vunpack.c.l.b16 %v204
      %v278 = vunpack.c.l.b16 %v205
      %v279 = vunpack.c.l.b16 %v206
      %v280 = vunpack.c.l.b16 %v207
      %v281 = vunpack.c.l.b16 %v208
      %v282 = vunpack.c.l.b16 %v209
      %v283 = vunpack.c.l.b16 %v210
      %v284 = vunpack.c.l.b16 %v211
      %v285 = vunpack.c.l.b16 %v212
      %v286 = vunpack.c.l.b16 %v213
      %v287 = vunpack.c.l.b16 %v214
      %v288 = vunpack.c.l.b16 %v215
      %v289 = vunpack.c.l.b16 %v216
      %v290 = vunpack.c.l.b16 %v217
      %v291 = vunpack.c.l.b16 %v218
      %v292 = vunpack.c.l.b16 %v219
      %v293 = vunpack.c.l.b16 %v220
      %v294 = vunpack.c.l.b16 %v221
      %v295 = vunpack.c.l.b16 %v222
      %v296 = vunpack.c.l.b16 %v223
      %v297 = vunpack.c.l.b16 %v224
      %v298 = vunpack.c.l.b16 %v225
      %v299 = vunpack.c.l.b16 %v226
      %v300 = vunpack.c.l.b16 %v227
      %v301 = vunpack.c.l.b16 %v228
      %v302 = vunpack.c.l.b16 %v229
      %v303 = vunpack.c.l.b16 %v230
      %v304 = vunpack.c.l.b16 %v231
      %v305 = vunpack.c.l.b16 %v232
      %v306 = vunpack.c.l.b16 %v233
      %v307 = vpack.c.b16 %v276, %v275
      %v308 = vpack.c.b16 %v278, %v277
      %v309 = vpack.c.b16 %v280, %v279
      %v310 = vpack.c.b16 %v282, %v281
      %v311 = vpack.c.b16 %v284, %v283
      %v312 = vpack.c.b16 %v286, %v285
      %v313 = vpack.c.b16 %v288, %v287
      %v314 = vpack.c.b16 %v290, %v289
      %v315 = vpack.c.b16 %v292, %v291
      %v316 = vpack.c.b16 %v294, %v293
      %v317 = vpack.c.b16 %v296, %v295
      %v318 = vpack.c.b16 %v298, %v297
      %v319 = vpack.c.b16 %v300, %v299
      %v320 = vpack.c.b16 %v302, %v301
      %v321 = vpack.c.b16 %v304, %v303
      %v322 = vpack.c.b16 %v306, %v305
      %v332 = vunpack.c.l.b16 %v234
      %v333 = vunpack.c.l.b16 %v235
      %v334 = vunpack.c.l.b16 %v236
      %v335 = vunpack.c.l.b16 %v237
      %v336 = vunpack.c.l.b16 %v238
      %v337 = vunpack.c.l.b16 %v239
      %v338 = vunpack.c.l.b16 %v240
      %v339 = vunpack.c.l.b16 %v241
      %v340 = vunpack.c.l.b16 %v242
      %v341 = vpack.c.b16 %v333, %v332
      %v342 = vpack.c.b16 %v335, %v334
      %v343 = vpack.c.b16 %v337, %v336
      %v344 = vpack.c.b16 %v339, %v338
      %v345 = vpack.c.b16 %v340, %v340
      %vm350 = vcmask 588800
      %v352 = vsel %vm350, %v307, 0
      %v355 = vsel %vm350, %v308, 0
      %v358 = vsel %vm350, %v309, 0
      %v361 = vsel %vm350, %v310, 0
      %v364 = vsel %vm350, %v311, 0
      %v367 = vsel %vm350, %v312, 0
      %v370 = vsel %vm350, %v313, 0
      %v373 = vsel %vm350, %v314, 0
      %v376 = vsel %vm350, %v315, 0
      %v379 = vsel %vm350, %v316, 0
      %v382 = vsel %vm350, %v317, 0
      %v385 = vsel %vm350, %v318, 0
      %v388 = vsel %vm350, %v319, 0
      %v391 = vsel %vm350, %v320, 0
      %v394 = vsel %vm350, %v321, 0
      %v397 = vsel %vm350, %v322, 0
      %vm399 = vcmask 1043456
      %v401 = vsel %vm399, %v345, 0
      %403 = vmatprep.subr.bf16.mxu0 0
      %404 = vmatpush1.bf16.msra.mxu0 %v341
      %405 = vmatprep.subr.bf16.mxu0 0
      %406 = vmatpush1.bf16.msra.mxu0 %v342
      %407 = vmatprep.subr.bf16.mxu0 0
      %408 = vmatpush1.bf16.msra.mxu0 %v343
      %409 = vmatprep.subr.bf16.mxu0 0
      %410 = vmatpush1.bf16.msra.mxu0 %v344
      %411 = vmatprep.subr.bf16.mxu0 0
      %412 = vmatpush1.bf16.msra.mxu0 %v401
      %413 = vmatprep.subr.bf16.mxu0 0
      %414 = vmatpush1.bf16.msra.mxu0 0
      %415 = vmatprep.subr.bf16.mxu0 0
      %416 = vmatpush1.bf16.msra.mxu0 0
      %417 = vmatprep.subr.bf16.mxu0 0
      %418 = vmatpush1.bf16.msra.mxu0 0
      %419 = vmatprep.subr.bf16.mxu0 0
      %420 = vmatpush1.bf16.msra.mxu0 0
      %421 = vmatprep.subr.bf16.mxu0 0
      %422 = vmatpush1.bf16.msra.mxu0 0
      %423 = vmatprep.subr.bf16.mxu0 0
      %424 = vmatpush1.bf16.msra.mxu0 0
      %425 = vmatprep.subr.bf16.mxu0 0
      %426 = vmatpush1.bf16.msra.mxu0 0
      %427 = vmatprep.subr.bf16.mxu0 0
      %428 = vmatpush1.bf16.msra.mxu0 0
      %429 = vmatprep.subr.bf16.mxu0 0
      %430 = vmatpush1.bf16.msra.mxu0 0
      %431 = vmatprep.subr.bf16.mxu0 0
      %432 = vmatpush1.bf16.msra.mxu0 0
      %433 = vmatprep.subr.bf16.mxu0 0
      %434 = vmatpush1.bf16.msra.mxu0 0
      %435 = vmatprep.mubr.bf16.mxu0 0
      %436 = vmatmul.mubr.bf16.gmra.mrb[0].mxu0 %v352
      %v437 = vpop.f32.mrb[0].mxu0
      %v438 = vadd.f32 0.0, %v437
      %v439 = vpop.f32.mrb[0].mxu0
      %v440 = vpop.f32.mrb[0].mxu0
      %v441 = vadd.f32 0.0, %v440
      %v442 = vpop.f32.mrb[0].mxu0
      %443 = vmatprep.mubr.bf16.mxu0 0
      %444 = vmatmul.mubr.bf16.gmra.mrb[0].mxu0 %v355
      %v445 = vpop.f32.mrb[0].mxu0
      %v446 = vadd.f32 0.0, %v445
      %v447 = vpop.f32.mrb[0].mxu0
      %v448 = vpop.f32.mrb[0].mxu0
      %v449 = vadd.f32 0.0, %v448
      %v450 = vpop.f32.mrb[0].mxu0
      %451 = vmatprep.mubr.bf16.mxu0 0
      %452 = vmatmul.mubr.bf16.gmra.mrb[0].mxu0 %v358
      %v453 = vpop.f32.mrb[0].mxu0
      %v454 = vadd.f32 0.0, %v453
      %v455 = vpop.f32.mrb[0].mxu0
      %v456 = vpop.f32.mrb[0].mxu0
      %v457 = vadd.f32 0.0, %v456
      %v458 = vpop.f32.mrb[0].mxu0
      %459 = vmatprep.mubr.bf16.mxu0 0
      %460 = vmatmul.mubr.bf16.gmra.mrb[0].mxu0 %v361
      %v461 = vpop.f32.mrb[0].mxu0
      %v462 = vadd.f32 0.0, %v461
      %v463 = vpop.f32.mrb[0].mxu0
      %v464 = vpop.f32.mrb[0].mxu0
      %v465 = vadd.f32 0.0, %v464
      %v466 = vpop.f32.mrb[0].mxu0
      %467 = vmatprep.mubr.bf16.mxu0 0
      %468 = vmatmul.mubr.bf16.gmra.mrb[0].mxu0 %v364
      %v469 = vpop.f32.mrb[0].mxu0
      %v470 = vadd.f32 0.0, %v469
      %v471 = vpop.f32.mrb[0].mxu0
      %v472 = vpop.f32.mrb[0].mxu0
      %v473 = vadd.f32 0.0, %v472
      %v474 = vpop.f32.mrb[0].mxu0
      %475 = vmatprep.mubr.bf16.mxu0 0
      %476 = vmatmul.mubr.bf16.gmra.mrb[0].mxu0 %v367
      %v477 = vpop.f32.mrb[0].mxu0
      %v478 = vadd.f32 0.0, %v477
      %v479 = vpop.f32.mrb[0].mxu0
      %v480 = vpop.f32.mrb[0].mxu0
      %v481 = vadd.f32 0.0, %v480
      %v482 = vpop.f32.mrb[0].mxu0
      %483 = vmatprep.mubr.bf16.mxu0 0
      %484 = vmatmul.mubr.bf16.gmra.mrb[0].mxu0 %v370
      %v485 = vpop.f32.mrb[0].mxu0
      %v486 = vadd.f32 0.0, %v485
      %v487 = vpop.f32.mrb[0].mxu0
      %v488 = vpop.f32.mrb[0].mxu0
      %v489 = vadd.f32 0.0, %v488
      %v490 = vpop.f32.mrb[0].mxu0
      %491 = vmatprep.mubr.bf16.mxu0 0
      %492 = vmatmul.mubr.bf16.gmra.mrb[0].mxu0 %v373
      %v493 = vpop.f32.mrb[0].mxu0
      %v494 = vadd.f32 0.0, %v493
      %v495 = vpop.f32.mrb[0].mxu0
      %v496 = vpop.f32.mrb[0].mxu0
      %v497 = vadd.f32 0.0, %v496
      %v498 = vpop.f32.mrb[0].mxu0
      %499 = vmatprep.mubr.bf16.mxu0 0
      %500 = vmatmul.mubr.bf16.gmra.mrb[0].mxu0 %v376
      %v501 = vpop.f32.mrb[0].mxu0
      %v502 = vadd.f32 0.0, %v501
      %v503 = vpop.f32.mrb[0].mxu0
      %v504 = vpop.f32.mrb[0].mxu0
      %v505 = vadd.f32 0.0, %v504
      %v506 = vpop.f32.mrb[0].mxu0
      %507 = vmatprep.mubr.bf16.mxu0 0
      %508 = vmatmul.mubr.bf16.gmra.mrb[0].mxu0 %v379
      %v509 = vpop.f32.mrb[0].mxu0
      %v510 = vadd.f32 0.0, %v509
      %v511 = vpop.f32.mrb[0].mxu0
      %v512 = vpop.f32.mrb[0].mxu0
      %v513 = vadd.f32 0.0, %v512
      %v514 = vpop.f32.mrb[0].mxu0
      %515 = vmatprep.mubr.bf16.mxu0 0
      %516 = vmatmul.mubr.bf16.gmra.mrb[0].mxu0 %v382
      %v517 = vpop.f32.mrb[0].mxu0
      %v518 = vadd.f32 0.0, %v517
      %v519 = vpop.f32.mrb[0].mxu0
      %v520 = vpop.f32.mrb[0].mxu0
      %v521 = vadd.f32 0.0, %v520
      %v522 = vpop.f32.mrb[0].mxu0
      %523 = vmatprep.mubr.bf16.mxu0 0
      %524 = vmatmul.mubr.bf16.gmra.mrb[0].mxu0 %v385
      %v525 = vpop.f32.mrb[0].mxu0
      %v526 = vadd.f32 0.0, %v525
      %v527 = vpop.f32.mrb[0].mxu0
      %v528 = vpop.f32.mrb[0].mxu0
      %v529 = vadd.f32 0.0, %v528
      %v530 = vpop.f32.mrb[0].mxu0
      %531 = vmatprep.mubr.bf16.mxu0 0
      %532 = vmatmul.mubr.bf16.gmra.mrb[0].mxu0 %v388
      %v533 = vpop.f32.mrb[0].mxu0
      %v534 = vadd.f32 0.0, %v533
      %v535 = vpop.f32.mrb[0].mxu0
      %v536 = vpop.f32.mrb[0].mxu0
      %v537 = vadd.f32 0.0, %v536
      %v538 = vpop.f32.mrb[0].mxu0
      %539 = vmatprep.mubr.bf16.mxu0 0
      %540 = vmatmul.mubr.bf16.gmra.mrb[0].mxu0 %v391
      %v541 = vpop.f32.mrb[0].mxu0
      %v542 = vadd.f32 0.0, %v541
      %v543 = vpop.f32.mrb[0].mxu0
      %v544 = vpop.f32.mrb[0].mxu0
      %v545 = vadd.f32 0.0, %v544
      %v546 = vpop.f32.mrb[0].mxu0
      %547 = vmatprep.mubr.bf16.mxu0 0
      %548 = vmatmul.mubr.bf16.gmra.mrb[0].mxu0 %v394
      %v549 = vpop.f32.mrb[0].mxu0
      %v550 = vadd.f32 0.0, %v549
      %v551 = vpop.f32.mrb[0].mxu0
      %v552 = vpop.f32.mrb[0].mxu0
      %v553 = vadd.f32 0.0, %v552
      %v554 = vpop.f32.mrb[0].mxu0
      %555 = vmatprep.mubr.bf16.mxu0 0
      %556 = vmatmul.mubr.bf16.gmra.mrb[0].mxu0 %v397
      %v557 = vpop.f32.mrb[0].mxu0
      %v558 = vadd.f32 0.0, %v557
      %v559 = vpop.f32.mrb[0].mxu0
      %v560 = vpop.f32.mrb[0].mxu0
      %v561 = vadd.f32 0.0, %v560
      %v562 = vpop.f32.mrb[0].mxu0
      %563 = vdwg.mxu0
      %v564 = vld [vmem:[%s2] sm:$0x1]
      %v566 = vlaneseq
      %v567 = vshrl.u32 %v566, 7
      %v568 = vsub.s32 0, %v567
      %v569 = vrot.slane %v564, %v568
      %v571 = vmul.f32 %v438, %v569
      %v572 = vmul.f32 %v441, %v569
      %v573 = vmul.f32 %v446, %v569
      %v574 = vmul.f32 %v449, %v569
      %v575 = vmul.f32 %v454, %v569
      %v576 = vmul.f32 %v457, %v569
      %v577 = vmul.f32 %v462, %v569
      %v578 = vmul.f32 %v465, %v569
      %v579 = vmul.f32 %v470, %v569
      %v580 = vmul.f32 %v473, %v569
      %v581 = vmul.f32 %v478, %v569
      %v582 = vmul.f32 %v481, %v569
      %v583 = vmul.f32 %v486, %v569
      %v584 = vmul.f32 %v489, %v569
      %v585 = vmul.f32 %v494, %v569
      %v586 = vmul.f32 %v497, %v569
      %v587 = vmul.f32 %v502, %v569
      %v588 = vmul.f32 %v505, %v569
      %v589 = vmul.f32 %v510, %v569
      %v590 = vmul.f32 %v513, %v569
      %v591 = vmul.f32 %v518, %v569
      %v592 = vmul.f32 %v521, %v569
      %v593 = vmul.f32 %v526, %v569
      %v594 = vmul.f32 %v529, %v569
      %v595 = vmul.f32 %v534, %v569
      %v596 = vmul.f32 %v537, %v569
      %v597 = vmul.f32 %v542, %v569
      %v598 = vmul.f32 %v545, %v569
      %v599 = vmul.f32 %v550, %v569
      %v600 = vmul.f32 %v553, %v569
      %v601 = vmul.f32 %v558, %v569
      %v602 = vmul.f32 %v561, %v569
      %v603 = vld [vmem:[%s3] sm:$0x1]
      %v605 = vlaneseq
      %v606 = vshrl.u32 %v605, 7
      %v607 = vsub.s32 0, %v606
      %v608 = vrot.slane %v603, %v607
      %v610 = vadd.f32 %v571, %v608
      %v611 = vadd.f32 %v572, %v608
      %v612 = vadd.f32 %v573, %v608
      %v613 = vadd.f32 %v574, %v608
      %v614 = vadd.f32 %v575, %v608
      %v615 = vadd.f32 %v576, %v608
      %v616 = vadd.f32 %v577, %v608
      %v617 = vadd.f32 %v578, %v608
      %v618 = vadd.f32 %v579, %v608
      %v619 = vadd.f32 %v580, %v608
      %v620 = vadd.f32 %v581, %v608
      %v621 = vadd.f32 %v582, %v608
      %v622 = vadd.f32 %v583, %v608
      %v623 = vadd.f32 %v584, %v608
      %v624 = vadd.f32 %v585, %v608
      %v625 = vadd.f32 %v586, %v608
      %v626 = vadd.f32 %v587, %v608
      %v627 = vadd.f32 %v588, %v608
      %v628 = vadd.f32 %v589, %v608
      %v629 = vadd.f32 %v590, %v608
      %v630 = vadd.f32 %v591, %v608
      %v631 = vadd.f32 %v592, %v608
      %v632 = vadd.f32 %v593, %v608
      %v633 = vadd.f32 %v594, %v608
      %v634 = vadd.f32 %v595, %v608
      %v635 = vadd.f32 %v596, %v608
      %v636 = vadd.f32 %v597, %v608
      %v637 = vadd.f32 %v598, %v608
      %v638 = vadd.f32 %v599, %v608
      %v639 = vadd.f32 %v600, %v608
      %v640 = vadd.f32 %v601, %v608
      %v641 = vadd.f32 %v602, %v608
      %v642 = vmax.f32 %v610, 0.0
      %v643 = vmax.f32 %v611, 0.0
      %v644 = vmax.f32 %v612, 0.0
      %v645 = vmax.f32 %v613, 0.0
      %v646 = vmax.f32 %v614, 0.0
      %v647 = vmax.f32 %v615, 0.0
      %v648 = vmax.f32 %v616, 0.0
      %v649 = vmax.f32 %v617, 0.0
      %v650 = vmax.f32 %v618, 0.0
      %v651 = vmax.f32 %v619, 0.0
      %v652 = vmax.f32 %v620, 0.0
      %v653 = vmax.f32 %v621, 0.0
      %v654 = vmax.f32 %v622, 0.0
      %v655 = vmax.f32 %v623, 0.0
      %v656 = vmax.f32 %v624, 0.0
      %v657 = vmax.f32 %v625, 0.0
      %v658 = vmax.f32 %v626, 0.0
      %v659 = vmax.f32 %v627, 0.0
      %v660 = vmax.f32 %v628, 0.0
      %v661 = vmax.f32 %v629, 0.0
      %v662 = vmax.f32 %v630, 0.0
      %v663 = vmax.f32 %v631, 0.0
      %v664 = vmax.f32 %v632, 0.0
      %v665 = vmax.f32 %v633, 0.0
      %v666 = vmax.f32 %v634, 0.0
      %v667 = vmax.f32 %v635, 0.0
      %v668 = vmax.f32 %v636, 0.0
      %v669 = vmax.f32 %v637, 0.0
      %v670 = vmax.f32 %v638, 0.0
      %v671 = vmax.f32 %v639, 0.0
      %v672 = vmax.f32 %v640, 0.0
      %v673 = vmax.f32 %v641, 0.0
      %vm674 = vcmask 64512
      %675 = vst.msk [vmem:[%s199] sm:$0xff] %vm674, %v642
      %676 = vst.msk [vmem:[%s199 + $0x8] sm:$0xff] %vm674, %v643
      %677 = vst.msk [vmem:[%s199 + $0x10] sm:$0xff] %vm674, %v644
      %678 = vst.msk [vmem:[%s199 + $0x18] sm:$0xff] %vm674, %v645
      %679 = vst.msk [vmem:[%s199 + $0x20] sm:$0xff] %vm674, %v646
      %680 = vst.msk [vmem:[%s199 + $0x28] sm:$0xff] %vm674, %v647
      %681 = vst.msk [vmem:[%s199 + $0x30] sm:$0xff] %vm674, %v648
      %682 = vst.msk [vmem:[%s199 + $0x38] sm:$0xff] %vm674, %v649
      %683 = vst.msk [vmem:[%s199 + $0x40] sm:$0xff] %vm674, %v650
      %684 = vst.msk [vmem:[%s199 + $0x48] sm:$0xff] %vm674, %v651
      %685 = vst.msk [vmem:[%s199 + $0x50] sm:$0xff] %vm674, %v652
      %686 = vst.msk [vmem:[%s199 + $0x58] sm:$0xff] %vm674, %v653
      %687 = vst.msk [vmem:[%s199 + $0x60] sm:$0xff] %vm674, %v654
      %688 = vst.msk [vmem:[%s199 + $0x68] sm:$0xff] %vm674, %v655
      %689 = vst.msk [vmem:[%s199 + $0x70] sm:$0xff] %vm674, %v656
      %690 = vst.msk [vmem:[%s199 + $0x78] sm:$0xff] %vm674, %v657
      %691 = vst.msk [vmem:[%s199 + $0x80] sm:$0xff] %vm674, %v658
      %692 = vst.msk [vmem:[%s199 + $0x88] sm:$0xff] %vm674, %v659
      %693 = vst.msk [vmem:[%s199 + $0x90] sm:$0xff] %vm674, %v660
      %694 = vst.msk [vmem:[%s199 + $0x98] sm:$0xff] %vm674, %v661
      %695 = vst.msk [vmem:[%s199 + $0xa0] sm:$0xff] %vm674, %v662
      %696 = vst.msk [vmem:[%s199 + $0xa8] sm:$0xff] %vm674, %v663
      %697 = vst.msk [vmem:[%s199 + $0xb0] sm:$0xff] %vm674, %v664
      %698 = vst.msk [vmem:[%s199 + $0xb8] sm:$0xff] %vm674, %v665
      %699 = vst.msk [vmem:[%s199 + $0xc0] sm:$0xff] %vm674, %v666
      %700 = vst.msk [vmem:[%s199 + $0xc8] sm:$0xff] %vm674, %v667
      %701 = vst.msk [vmem:[%s199 + $0xd0] sm:$0xff] %vm674, %v668
      %702 = vst.msk [vmem:[%s199 + $0xd8] sm:$0xff] %vm674, %v669
      %703 = vst.msk [vmem:[%s199 + $0xe0] sm:$0xff] %vm674, %v670
      %704 = vst.msk [vmem:[%s199 + $0xe8] sm:$0xff] %vm674, %v671
      %705 = vst.msk [vmem:[%s199 + $0xf0] sm:$0xff] %vm674, %v672
      %706 = vst.msk [vmem:[%s199 + $0xf8] sm:$0xff] %vm674, %v673
      %s707 = smul.u32 32, %s15
      %p708 = scmp.lt.s32.totalorder %s707, 63
      %s709 = scalar_select %p708, %s707, 63
      %s710 = smul.addr %s709, 8
      %s711 = scalar_lea.vmem %s4, %s710
      // Predicated region
      $region37: #{model_conv_unet_forward.14} parent=35 // pred_check
        %p712 = pneg %p122
      $region38: #{model_conv_unet_forward.14} parent=35 // pred_check_branch
        %714 = sbr.rel (%p712) target = $region40
      $region39: #{model_conv_unet_forward.14} parent=35 // pred_region
        %s715 = smul.u32 32, %s15
      $region40: #{model_conv_unet_forward.14} parent=35 // pred_fallthru
        _
    $region36: #{model_conv_unet_forward.14} parent=5 // pred_fallthru
      _
    %p716 = scmp.le.s32.totalorder 2, %s10
    // Predicated region
    $region41: #{model_conv_unet_forward.14} parent=5 // pred_check
      %p717 = pneg %p716
    $region42: #{model_conv_unet_forward.14} parent=5 // pred_check_branch
      %719 = sbr.rel (%p717) target = $region44
    $region43: #{model_conv_unet_forward.14} parent=5 // pred_region
      %s720 = ssub.s32 %s10, 2
      // Predicated region
      $region45: #{model_conv_unet_forward.14} parent=43 // pred_check
        %p721 = pneg %p128
      $region46: #{model_conv_unet_forward.14} parent=43 // pred_check_branch
        %723 = sbr.rel (%p721) target = $region48
      $region47: #{model_conv_unet_forward.14} parent=43 // pred_region
        %s724 = smul.u32 32, %s16
        %p725 = scmp.lt.s32.totalorder %s724, 63
        %s726 = scalar_select %p725, %s724, 63
        %s727 = smul.addr %s726, 8
        %s728 = scalar_lea.vmem %s4, %s727
      $region48: #{model_conv_unet_forward.14} parent=43 // pred_fallthru
        _
    $region44: #{model_conv_unet_forward.14} parent=5 // pred_fallthru
      _
  $region6: #{model_conv_unet_forward.14} parent=0 // loop_footer
    %s14 = sadd.s32 1, %s10
  $region7: #{model_conv_unet_forward.14} parent=0 // loop_footer_branch
    %9 = sbr.rel target = $region3
  $region8: #{model_conv_unet_forward.14} parent=0 // loop_exit
    _

// kernel: model_conv_unet_forward.15
$region0: #{model_conv_unet_forward.15}
  #allocation0 [shape = 'u32[]', space=smem, size = 0x4, offset = 0x4, fixed_abs, tag = 'smem constant byte address 0x4 - core index']
  #allocation1 [shape = 'u32[144,128]{1,0:T(1,128)}', space=vmem, size = 0x12000, scoped, tag = 'internal scratch']
  %s0 = inlined_call_operand.vmem [shape: bf16[512,72], index: 0, kind: input, shape index: {}]
  %s1 = inlined_call_operand.vmem [shape: bf16[72,16], index: 1, kind: input, shape index: {}]
  %s2 = inlined_call_operand.vmem [shape: f32[1,16], index: 2, kind: input, shape index: {}]
  %s3 = inlined_call_operand.vmem [shape: f32[1,16], index: 3, kind: input, shape index: {}]
  %s4 = inlined_call_operand.vmem [shape: f32[512,16], index: 4, kind: output, shape index: {}]
  %s5 = sld [smem:[#allocation0]]
  $region49: #{model_conv_unet_forward.15} parent=0
    _
  %s7 = ssub.s32 1, %s5
  %s8 = scalar_select 0, %s7, %s5
  loop: start=0, step=1, limit=4
  $region2: #{model_conv_unet_forward.15} parent=0 // loop_pre_header
    _
  $region3: #{model_conv_unet_forward.15} parent=0 // loop_header
    %s10 = sphi 0, %s14
    %p11 = scmp.ge.s32.totalorder %s10, 4
    %s20 = sphi 0, %s22
    %s23 = sphi 0, %s20
    %s24 = sphi 0, %s23
    %s40 = sphi 0, %s24
    %s44 = sphi 0, %s44
    %s46 = sphi 0, %s44
    %s47 = sphi 0, %s46
    %s61 = sphi 0, %s47
    %s65 = sphi 0, %s65
    %s67 = sphi 0, %s65
    %s68 = sphi 0, %s67
    %s82 = sphi 0, %s68
    %s86 = sphi 0, %s86
    %s88 = sphi 0, %s86
    %s89 = sphi 0, %s88
    %s103 = sphi 0, %s89
    %s109 = sphi 0, %s111
    %s112 = sphi 0, %s109
    %s113 = sphi 0, %s112
    %s129 = sphi 0, %s113
  $region4: #{model_conv_unet_forward.15} parent=0 // loop_header_branch
    %13 = sbr.rel (%p11) target = $region8
  $region5: #{model_conv_unet_forward.15} parent=0 // loop_body
    %s15 = ssub.s32 %s10, 1
    %s16 = ssub.s32 %s10, 2
    %s17 = sadd.s32 %s10, 1
    %s18 = ssub.s32 %s10, %s17
    %p19 = scmp.eq.s32.totalorder %s18, 0
    %s21 = sadd.s32 %s20, 1
    %s22 = scalar_select %p19, %s20, %s21
    %p25 = pneg %p19
    %p26 = scmp.eq.s32.totalorder %s10, 1
    %p27 = por %p25, %p26
    %p28 = scmp.ne.s32.totalorder %s20, %s23
    %p29 = scmp.eq.s32.totalorder %s10, 0
    %p30 = por %p28, %p29
    %p31 = scmp.ne.s32.totalorder %s20, %s23
    %p32 = scmp.eq.s32.totalorder %s15, 1
    %p33 = por %p31, %p32
    %p34 = scmp.ne.s32.totalorder %s23, %s24
    %p35 = scmp.eq.s32.totalorder %s15, 0
    %p36 = por %p34, %p35
    %p37 = scmp.ne.s32.totalorder %s23, %s24
    %p38 = scmp.eq.s32.totalorder %s16, 1
    %p39 = por %p37, %p38
    %p41 = scmp.ne.s32.totalorder %s24, %s40
    %p42 = scmp.eq.s32.totalorder %s16, 0
    %p43 = por %p41, %p42
    %s45 = sadd.s32 %s44, 1
    %p48 = scmp.eq.s32.totalorder %s10, 1
    %p49 = scmp.ne.s32.totalorder %s44, %s46
    %p50 = scmp.eq.s32.totalorder %s10, 0
    %p51 = por %p49, %p50
    %p52 = scmp.ne.s32.totalorder %s44, %s46
    %p53 = scmp.eq.s32.totalorder %s15, 1
    %p54 = por %p52, %p53
    %p55 = scmp.ne.s32.totalorder %s46, %s47
    %p56 = scmp.eq.s32.totalorder %s15, 0
    %p57 = por %p55, %p56
    %p58 = scmp.ne.s32.totalorder %s46, %s47
    %p59 = scmp.eq.s32.totalorder %s16, 1
    %p60 = por %p58, %p59
    %p62 = scmp.ne.s32.totalorder %s47, %s61
    %p63 = scmp.eq.s32.totalorder %s16, 0
    %p64 = por %p62, %p63
    %s66 = sadd.s32 %s65, 1
    %p69 = scmp.eq.s32.totalorder %s10, 1
    %p70 = scmp.ne.s32.totalorder %s65, %s67
    %p71 = scmp.eq.s32.totalorder %s10, 0
    %p72 = por %p70, %p71
    %p73 = scmp.ne.s32.totalorder %s65, %s67
    %p74 = scmp.eq.s32.totalorder %s15, 1
    %p75 = por %p73, %p74
    %p76 = scmp.ne.s32.totalorder %s67, %s68
    %p77 = scmp.eq.s32.totalorder %s15, 0
    %p78 = por %p76, %p77
    %p79 = scmp.ne.s32.totalorder %s67, %s68
    %p80 = scmp.eq.s32.totalorder %s16, 1
    %p81 = por %p79, %p80
    %p83 = scmp.ne.s32.totalorder %s68, %s82
    %p84 = scmp.eq.s32.totalorder %s16, 0
    %p85 = por %p83, %p84
    %s87 = sadd.s32 %s86, 1
    %p90 = scmp.eq.s32.totalorder %s10, 1
    %p91 = scmp.ne.s32.totalorder %s86, %s88
    %p92 = scmp.eq.s32.totalorder %s10, 0
    %p93 = por %p91, %p92
    %p94 = scmp.ne.s32.totalorder %s86, %s88
    %p95 = scmp.eq.s32.totalorder %s15, 1
    %p96 = por %p94, %p95
    %p97 = scmp.ne.s32.totalorder %s88, %s89
    %p98 = scmp.eq.s32.totalorder %s15, 0
    %p99 = por %p97, %p98
    %p100 = scmp.ne.s32.totalorder %s88, %s89
    %p101 = scmp.eq.s32.totalorder %s16, 1
    %p102 = por %p100, %p101
    %p104 = scmp.ne.s32.totalorder %s89, %s103
    %p105 = scmp.eq.s32.totalorder %s16, 0
    %p106 = por %p104, %p105
    %s107 = ssub.s32 %s10, %s17
    %p108 = scmp.eq.s32.totalorder %s107, 0
    %s110 = sadd.s32 %s109, 1
    %s111 = scalar_select %p108, %s109, %s110
    %p114 = pneg %p108
    %p115 = scmp.eq.s32.totalorder %s10, 1
    %p116 = por %p114, %p115
    %p117 = scmp.ne.s32.totalorder %s109, %s112
    %p118 = scmp.eq.s32.totalorder %s10, 0
    %p119 = por %p117, %p118
    %p120 = scmp.ne.s32.totalorder %s109, %s112
    %p121 = scmp.eq.s32.totalorder %s15, 1
    %p122 = por %p120, %p121
    %p123 = scmp.ne.s32.totalorder %s112, %s113
    %p124 = scmp.eq.s32.totalorder %s15, 0
    %p125 = por %p123, %p124
    %p126 = scmp.ne.s32.totalorder %s112, %s113
    %p127 = scmp.eq.s32.totalorder %s16, 1
    %p128 = por %p126, %p127
    %p130 = scmp.ne.s32.totalorder %s113, %s129
    %p131 = scmp.eq.s32.totalorder %s16, 0
    %p132 = por %p130, %p131
    %p133 = scmp.le.s32.totalorder 1, %s10
    %p134 = scmp.lt.s32.totalorder %s10, 3
    %p135 = pnand %p133, %p134
    %p136 = pneg %p135
    // Predicated region
    $region9: #{model_conv_unet_forward.15} parent=5 // pred_check
      _
    $region10: #{model_conv_unet_forward.15} parent=5 // pred_check_branch
      %138 = sbr.rel (%p135) target = $region12
    $region11: #{model_conv_unet_forward.15} parent=5 // pred_region
      %s139 = ssub.s32 %s10, 1
      // Predicated region
      $region13: #{model_conv_unet_forward.15} parent=11 // pred_check
        %p140 = pneg %p57
      $region14: #{model_conv_unet_forward.15} parent=11 // pred_check_branch
        %142 = sbr.rel (%p140) target = $region16
      $region15: #{model_conv_unet_forward.15} parent=11 // pred_region
        _
      $region16: #{model_conv_unet_forward.15} parent=11 // pred_fallthru
        _
      // Predicated region
      $region17: #{model_conv_unet_forward.15} parent=11 // pred_check
        %p143 = pneg %p78
      $region18: #{model_conv_unet_forward.15} parent=11 // pred_check_branch
        %145 = sbr.rel (%p143) target = $region20
      $region19: #{model_conv_unet_forward.15} parent=11 // pred_region
        _
      $region20: #{model_conv_unet_forward.15} parent=11 // pred_fallthru
        _
      // Predicated region
      $region21: #{model_conv_unet_forward.15} parent=11 // pred_check
        %p146 = pneg %p99
      $region22: #{model_conv_unet_forward.15} parent=11 // pred_check_branch
        %148 = sbr.rel (%p146) target = $region24
      $region23: #{model_conv_unet_forward.15} parent=11 // pred_region
        _
      $region24: #{model_conv_unet_forward.15} parent=11 // pred_fallthru
        _
    $region12: #{model_conv_unet_forward.15} parent=5 // pred_fallthru
      _
    %p149 = scmp.lt.s32.totalorder %s10, 2
    // Predicated region
    $region25: #{model_conv_unet_forward.15} parent=5 // pred_check
      %p150 = pneg %p149
    $region26: #{model_conv_unet_forward.15} parent=5 // pred_check_branch
      %152 = sbr.rel (%p150) target = $region28
    $region27: #{model_conv_unet_forward.15} parent=5 // pred_region
      // Predicated region
      $region29: #{model_conv_unet_forward.15} parent=27 // pred_check
        %p153 = pneg %p30
      $region30: #{model_conv_unet_forward.15} parent=27 // pred_check_branch
        %155 = sbr.rel (%p153) target = $region32
      $region31: #{model_conv_unet_forward.15} parent=27 // pred_region
        %s156 = smul.u32 32, %s10
        %p157 = scmp.lt.s32.totalorder %s156, 63
        %s158 = scalar_select %p157, %s156, 63
        %s159 = smul.addr %s158, 4
        %s160 = scalar_lea.vmem %s0, %s159
        %s161 = smul.u32 32, %s10
      $region32: #{model_conv_unet_forward.15} parent=27 // pred_fallthru
        _
    $region28: #{model_conv_unet_forward.15} parent=5 // pred_fallthru
      _
    %p162 = scmp.le.s32.totalorder 1, %s10
    %p163 = scmp.lt.s32.totalorder %s10, 3
    %p164 = pnand %p162, %p163
    %p165 = pneg %p164
    // Predicated region
    $region33: #{model_conv_unet_forward.15} parent=5 // pred_check
      _
    $region34: #{model_conv_unet_forward.15} parent=5 // pred_check_branch
      %167 = sbr.rel (%p164) target = $region36
    $region35: #{model_conv_unet_forward.15} parent=5 // pred_region
      %s168 = ssub.s32 %s10, 1
      %s169 = smul.u32 32, %s15
      %p170 = scmp.lt.s32.totalorder %s169, 63
      %s171 = scalar_select %p170, %s169, 63
      %s172 = smul.addr %s171, 4
      %s173 = scalar_lea.vmem %s0, %s172
      %p174 = pneg %p36
      %p175 = pneg %p33
      %p176 = pneg %p57
      %p177 = pneg %p54
      %p178 = pneg %p78
      %p179 = pneg %p75
      %p180 = pneg %p99
      %p181 = pneg %p96
      %p182 = pneg %p125
      %p183 = pneg %p122
      %s184 = smul.u32 32, %s15
      %p185 = scmp.lt.s32.totalorder %s184, 63
      %s186 = scalar_select %p185, %s184, 63
      %s187 = smul.addr %s186, 8
      %s188 = scalar_lea.vmem %s4, %s187
      %s189 = smul.u32 32, %s15
      %p190 = scmp.lt.s32.totalorder %s189, 63
      %s191 = scalar_select %p190, %s189, 63
      %s192 = smul.addr %s191, 4
      %s193 = scalar_lea.vmem %s0, %s192
      %s194 = smul.u32 32, %s15
      %s195 = smul.u32 32, %s15
      %p196 = scmp.lt.s32.totalorder %s195, 63
      %s197 = scalar_select %p196, %s195, 63
      %s198 = smul.addr %s197, 8
      %s199 = scalar_lea.vmem %s4, %s198
      %s200 = smul.u32 32, %s15
      %v202 = vld [vmem:[%s193] sm:$0xf]
      %v203 = vld [vmem:[%s193 + $0x4] sm:$0xf]
      %v204 = vld [vmem:[%s193 + $0x8] sm:$0xf]
      %v205 = vld [vmem:[%s193 + $0xc] sm:$0xf]
      %v206 = vld [vmem:[%s193 + $0x10] sm:$0xf]
      %v207 = vld [vmem:[%s193 + $0x14] sm:$0xf]
      %v208 = vld [vmem:[%s193 + $0x18] sm:$0xf]
      %v209 = vld [vmem:[%s193 + $0x1c] sm:$0xf]
      %v210 = vld [vmem:[%s193 + $0x20] sm:$0xf]
      %v211 = vld [vmem:[%s193 + $0x24] sm:$0xf]
      %v212 = vld [vmem:[%s193 + $0x28] sm:$0xf]
      %v213 = vld [vmem:[%s193 + $0x2c] sm:$0xf]
      %v214 = vld [vmem:[%s193 + $0x30] sm:$0xf]
      %v215 = vld [vmem:[%s193 + $0x34] sm:$0xf]
      %v216 = vld [vmem:[%s193 + $0x38] sm:$0xf]
      %v217 = vld [vmem:[%s193 + $0x3c] sm:$0xf]
      %v218 = vld [vmem:[%s193 + $0x40] sm:$0xf]
      %v219 = vld [vmem:[%s193 + $0x44] sm:$0xf]
      %v220 = vld [vmem:[%s193 + $0x48] sm:$0xf]
      %v221 = vld [vmem:[%s193 + $0x4c] sm:$0xf]
      %v222 = vld [vmem:[%s193 + $0x50] sm:$0xf]
      %v223 = vld [vmem:[%s193 + $0x54] sm:$0xf]
      %v224 = vld [vmem:[%s193 + $0x58] sm:$0xf]
      %v225 = vld [vmem:[%s193 + $0x5c] sm:$0xf]
      %v226 = vld [vmem:[%s193 + $0x60] sm:$0xf]
      %v227 = vld [vmem:[%s193 + $0x64] sm:$0xf]
      %v228 = vld [vmem:[%s193 + $0x68] sm:$0xf]
      %v229 = vld [vmem:[%s193 + $0x6c] sm:$0xf]
      %v230 = vld [vmem:[%s193 + $0x70] sm:$0xf]
      %v231 = vld [vmem:[%s193 + $0x74] sm:$0xf]
      %v232 = vld [vmem:[%s193 + $0x78] sm:$0xf]
      %v233 = vld [vmem:[%s193 + $0x7c] sm:$0xf]
      %v234 = vld [vmem:[%s1] sm:$0xf]
      %v235 = vld [vmem:[%s1 + $0x4] sm:$0xf]
      %v236 = vld [vmem:[%s1 + $0x8] sm:$0xf]
      %v237 = vld [vmem:[%s1 + $0xc] sm:$0xf]
      %v238 = vld [vmem:[%s1 + $0x10] sm:$0xf]
      %v239 = vld [vmem:[%s1 + $0x14] sm:$0xf]
      %v240 = vld [vmem:[%s1 + $0x18] sm:$0xf]
      %v241 = vld [vmem:[%s1 + $0x1c] sm:$0xf]
      %v242 = vld [vmem:[%s1 + $0x20] sm:$0xf]
      %v275 = vunpack.c.l.b16 %v202
      %v276 = vunpack.c.l.b16 %v203
      %v277 = vunpack.c.l.b16 %v204
      %v278 = vunpack.c.l.b16 %v205
      %v279 = vunpack.c.l.b16 %v206
      %v280 = vunpack.c.l.b16 %v207
      %v281 = vunpack.c.l.b16 %v208
      %v282 = vunpack.c.l.b16 %v209
      %v283 = vunpack.c.l.b16 %v210
      %v284 = vunpack.c.l.b16 %v211
      %v285 = vunpack.c.l.b16 %v212
      %v286 = vunpack.c.l.b16 %v213
      %v287 = vunpack.c.l.b16 %v214
      %v288 = vunpack.c.l.b16 %v215
      %v289 = vunpack.c.l.b16 %v216
      %v290 = vunpack.c.l.b16 %v217
      %v291 = vunpack.c.l.b16 %v218
      %v292 = vunpack.c.l.b16 %v219
      %v293 = vunpack.c.l.b16 %v220
      %v294 = vunpack.c.l.b16 %v221
      %v295 = vunpack.c.l.b16 %v222
      %v296 = vunpack.c.l.b16 %v223
      %v297 = vunpack.c.l.b16 %v224
      %v298 = vunpack.c.l.b16 %v225
      %v299 = vunpack.c.l.b16 %v226
      %v300 = vunpack.c.l.b16 %v227
      %v301 = vunpack.c.l.b16 %v228
      %v302 = vunpack.c.l.b16 %v229
      %v303 = vunpack.c.l.b16 %v230
      %v304 = vunpack.c.l.b16 %v231
      %v305 = vunpack.c.l.b16 %v232
      %v306 = vunpack.c.l.b16 %v233
      %v307 = vpack.c.b16 %v276, %v275
      %v308 = vpack.c.b16 %v278, %v277
      %v309 = vpack.c.b16 %v280, %v279
      %v310 = vpack.c.b16 %v282, %v281
      %v311 = vpack.c.b16 %v284, %v283
      %v312 = vpack.c.b16 %v286, %v285
      %v313 = vpack.c.b16 %v288, %v287
      %v314 = vpack.c.b16 %v290, %v289
      %v315 = vpack.c.b16 %v292, %v291
      %v316 = vpack.c.b16 %v294, %v293
      %v317 = vpack.c.b16 %v296, %v295
      %v318 = vpack.c.b16 %v298, %v297
      %v319 = vpack.c.b16 %v300, %v299
      %v320 = vpack.c.b16 %v302, %v301
      %v321 = vpack.c.b16 %v304, %v303
      %v322 = vpack.c.b16 %v306, %v305
      %v332 = vunpack.c.l.b16 %v234
      %v333 = vunpack.c.l.b16 %v235
      %v334 = vunpack.c.l.b16 %v236
      %v335 = vunpack.c.l.b16 %v237
      %v336 = vunpack.c.l.b16 %v238
      %v337 = vunpack.c.l.b16 %v239
      %v338 = vunpack.c.l.b16 %v240
      %v339 = vunpack.c.l.b16 %v241
      %v340 = vunpack.c.l.b16 %v242
      %v341 = vpack.c.b16 %v333, %v332
      %v342 = vpack.c.b16 %v335, %v334
      %v343 = vpack.c.b16 %v337, %v336
      %v344 = vpack.c.b16 %v339, %v338
      %v345 = vpack.c.b16 %v340, %v340
      %vm350 = vcmask 588800
      %v352 = vsel %vm350, %v307, 0
      %v355 = vsel %vm350, %v308, 0
      %v358 = vsel %vm350, %v309, 0
      %v361 = vsel %vm350, %v310, 0
      %v364 = vsel %vm350, %v311, 0
      %v367 = vsel %vm350, %v312, 0
      %v370 = vsel %vm350, %v313, 0
      %v373 = vsel %vm350, %v314, 0
      %v376 = vsel %vm350, %v315, 0
      %v379 = vsel %vm350, %v316, 0
      %v382 = vsel %vm350, %v317, 0
      %v385 = vsel %vm350, %v318, 0
      %v388 = vsel %vm350, %v319, 0
      %v391 = vsel %vm350, %v320, 0
      %v394 = vsel %vm350, %v321, 0
      %v397 = vsel %vm350, %v322, 0
      %vm399 = vcmask 1043456
      %v401 = vsel %vm399, %v345, 0
      %403 = vmatprep.subr.bf16.mxu0 0
      %404 = vmatpush1.bf16.msra.mxu0 %v341
      %405 = vmatprep.subr.bf16.mxu0 0
      %406 = vmatpush1.bf16.msra.mxu0 %v342
      %407 = vmatprep.subr.bf16.mxu0 0
      %408 = vmatpush1.bf16.msra.mxu0 %v343
      %409 = vmatprep.subr.bf16.mxu0 0
      %410 = vmatpush1.bf16.msra.mxu0 %v344
      %411 = vmatprep.subr.bf16.mxu0 0
      %412 = vmatpush1.bf16.msra.mxu0 %v401
      %413 = vmatprep.subr.bf16.mxu0 0
      %414 = vmatpush1.bf16.msra.mxu0 0
      %415 = vmatprep.subr.bf16.mxu0 0
      %416 = vmatpush1.bf16.msra.mxu0 0
      %417 = vmatprep.subr.bf16.mxu0 0
      %418 = vmatpush1.bf16.msra.mxu0 0
      %419 = vmatprep.subr.bf16.mxu0 0
      %420 = vmatpush1.bf16.msra.mxu0 0
      %421 = vmatprep.subr.bf16.mxu0 0
      %422 = vmatpush1.bf16.msra.mxu0 0
      %423 = vmatprep.subr.bf16.mxu0 0
      %424 = vmatpush1.bf16.msra.mxu0 0
      %425 = vmatprep.subr.bf16.mxu0 0
      %426 = vmatpush1.bf16.msra.mxu0 0
      %427 = vmatprep.subr.bf16.mxu0 0
      %428 = vmatpush1.bf16.msra.mxu0 0
      %429 = vmatprep.subr.bf16.mxu0 0
      %430 = vmatpush1.bf16.msra.mxu0 0
      %431 = vmatprep.subr.bf16.mxu0 0
      %432 = vmatpush1.bf16.msra.mxu0 0
      %433 = vmatprep.subr.bf16.mxu0 0
      %434 = vmatpush1.bf16.msra.mxu0 0
      %435 = vmatprep.mubr.bf16.mxu0 0
      %436 = vmatmul.mubr.bf16.gmra.mrb[0].mxu0 %v352
      %v437 = vpop.f32.mrb[0].mxu0
      %v438 = vadd.f32 0.0, %v437
      %v439 = vpop.f32.mrb[0].mxu0
      %v440 = vpop.f32.mrb[0].mxu0
      %v441 = vadd.f32 0.0, %v440
      %v442 = vpop.f32.mrb[0].mxu0
      %443 = vmatprep.mubr.bf16.mxu0 0
      %444 = vmatmul.mubr.bf16.gmra.mrb[0].mxu0 %v355
      %v445 = vpop.f32.mrb[0].mxu0
      %v446 = vadd.f32 0.0, %v445
      %v447 = vpop.f32.mrb[0].mxu0
      %v448 = vpop.f32.mrb[0].mxu0
      %v449 = vadd.f32 0.0, %v448
      %v450 = vpop.f32.mrb[0].mxu0
      %451 = vmatprep.mubr.bf16.mxu0 0
      %452 = vmatmul.mubr.bf16.gmra.mrb[0].mxu0 %v358
      %v453 = vpop.f32.mrb[0].mxu0
      %v454 = vadd.f32 0.0, %v453
      %v455 = vpop.f32.mrb[0].mxu0
      %v456 = vpop.f32.mrb[0].mxu0
      %v457 = vadd.f32 0.0, %v456
      %v458 = vpop.f32.mrb[0].mxu0
      %459 = vmatprep.mubr.bf16.mxu0 0
      %460 = vmatmul.mubr.bf16.gmra.mrb[0].mxu0 %v361
      %v461 = vpop.f32.mrb[0].mxu0
      %v462 = vadd.f32 0.0, %v461
      %v463 = vpop.f32.mrb[0].mxu0
      %v464 = vpop.f32.mrb[0].mxu0
      %v465 = vadd.f32 0.0, %v464
      %v466 = vpop.f32.mrb[0].mxu0
      %467 = vmatprep.mubr.bf16.mxu0 0
      %468 = vmatmul.mubr.bf16.gmra.mrb[0].mxu0 %v364
      %v469 = vpop.f32.mrb[0].mxu0
      %v470 = vadd.f32 0.0, %v469
      %v471 = vpop.f32.mrb[0].mxu0
      %v472 = vpop.f32.mrb[0].mxu0
      %v473 = vadd.f32 0.0, %v472
      %v474 = vpop.f32.mrb[0].mxu0
      %475 = vmatprep.mubr.bf16.mxu0 0
      %476 = vmatmul.mubr.bf16.gmra.mrb[0].mxu0 %v367
      %v477 = vpop.f32.mrb[0].mxu0
      %v478 = vadd.f32 0.0, %v477
      %v479 = vpop.f32.mrb[0].mxu0
      %v480 = vpop.f32.mrb[0].mxu0
      %v481 = vadd.f32 0.0, %v480
      %v482 = vpop.f32.mrb[0].mxu0
      %483 = vmatprep.mubr.bf16.mxu0 0
      %484 = vmatmul.mubr.bf16.gmra.mrb[0].mxu0 %v370
      %v485 = vpop.f32.mrb[0].mxu0
      %v486 = vadd.f32 0.0, %v485
      %v487 = vpop.f32.mrb[0].mxu0
      %v488 = vpop.f32.mrb[0].mxu0
      %v489 = vadd.f32 0.0, %v488
      %v490 = vpop.f32.mrb[0].mxu0
      %491 = vmatprep.mubr.bf16.mxu0 0
      %492 = vmatmul.mubr.bf16.gmra.mrb[0].mxu0 %v373
      %v493 = vpop.f32.mrb[0].mxu0
      %v494 = vadd.f32 0.0, %v493
      %v495 = vpop.f32.mrb[0].mxu0
      %v496 = vpop.f32.mrb[0].mxu0
      %v497 = vadd.f32 0.0, %v496
      %v498 = vpop.f32.mrb[0].mxu0
      %499 = vmatprep.mubr.bf16.mxu0 0
      %500 = vmatmul.mubr.bf16.gmra.mrb[0].mxu0 %v376
      %v501 = vpop.f32.mrb[0].mxu0
      %v502 = vadd.f32 0.0, %v501
      %v503 = vpop.f32.mrb[0].mxu0
      %v504 = vpop.f32.mrb[0].mxu0
      %v505 = vadd.f32 0.0, %v504
      %v506 = vpop.f32.mrb[0].mxu0
      %507 = vmatprep.mubr.bf16.mxu0 0
      %508 = vmatmul.mubr.bf16.gmra.mrb[0].mxu0 %v379
      %v509 = vpop.f32.mrb[0].mxu0
      %v510 = vadd.f32 0.0, %v509
      %v511 = vpop.f32.mrb[0].mxu0
      %v512 = vpop.f32.mrb[0].mxu0
      %v513 = vadd.f32 0.0, %v512
      %v514 = vpop.f32.mrb[0].mxu0
      %515 = vmatprep.mubr.bf16.mxu0 0
      %516 = vmatmul.mubr.bf16.gmra.mrb[0].mxu0 %v382
      %v517 = vpop.f32.mrb[0].mxu0
      %v518 = vadd.f32 0.0, %v517
      %v519 = vpop.f32.mrb[0].mxu0
      %v520 = vpop.f32.mrb[0].mxu0
      %v521 = vadd.f32 0.0, %v520
      %v522 = vpop.f32.mrb[0].mxu0
      %523 = vmatprep.mubr.bf16.mxu0 0
      %524 = vmatmul.mubr.bf16.gmra.mrb[0].mxu0 %v385
      %v525 = vpop.f32.mrb[0].mxu0
      %v526 = vadd.f32 0.0, %v525
      %v527 = vpop.f32.mrb[0].mxu0
      %v528 = vpop.f32.mrb[0].mxu0
      %v529 = vadd.f32 0.0, %v528
      %v530 = vpop.f32.mrb[0].mxu0
      %531 = vmatprep.mubr.bf16.mxu0 0
      %532 = vmatmul.mubr.bf16.gmra.mrb[0].mxu0 %v388
      %v533 = vpop.f32.mrb[0].mxu0
      %v534 = vadd.f32 0.0, %v533
      %v535 = vpop.f32.mrb[0].mxu0
      %v536 = vpop.f32.mrb[0].mxu0
      %v537 = vadd.f32 0.0, %v536
      %v538 = vpop.f32.mrb[0].mxu0
      %539 = vmatprep.mubr.bf16.mxu0 0
      %540 = vmatmul.mubr.bf16.gmra.mrb[0].mxu0 %v391
      %v541 = vpop.f32.mrb[0].mxu0
      %v542 = vadd.f32 0.0, %v541
      %v543 = vpop.f32.mrb[0].mxu0
      %v544 = vpop.f32.mrb[0].mxu0
      %v545 = vadd.f32 0.0, %v544
      %v546 = vpop.f32.mrb[0].mxu0
      %547 = vmatprep.mubr.bf16.mxu0 0
      %548 = vmatmul.mubr.bf16.gmra.mrb[0].mxu0 %v394
      %v549 = vpop.f32.mrb[0].mxu0
      %v550 = vadd.f32 0.0, %v549
      %v551 = vpop.f32.mrb[0].mxu0
      %v552 = vpop.f32.mrb[0].mxu0
      %v553 = vadd.f32 0.0, %v552
      %v554 = vpop.f32.mrb[0].mxu0
      %555 = vmatprep.mubr.bf16.mxu0 0
      %556 = vmatmul.mubr.bf16.gmra.mrb[0].mxu0 %v397
      %v557 = vpop.f32.mrb[0].mxu0
      %v558 = vadd.f32 0.0, %v557
      %v559 = vpop.f32.mrb[0].mxu0
      %v560 = vpop.f32.mrb[0].mxu0
      %v561 = vadd.f32 0.0, %v560
      %v562 = vpop.f32.mrb[0].mxu0
      %563 = vdwg.mxu0
      %v564 = vld [vmem:[%s2] sm:$0x1]
      %v566 = vlaneseq
      %v567 = vshrl.u32 %v566, 7
      %v568 = vsub.s32 0, %v567
      %v569 = vrot.slane %v564, %v568
      %v571 = vmul.f32 %v438, %v569
      %v572 = vmul.f32 %v441, %v569
      %v573 = vmul.f32 %v446, %v569
      %v574 = vmul.f32 %v449, %v569
      %v575 = vmul.f32 %v454, %v569
      %v576 = vmul.f32 %v457, %v569
      %v577 = vmul.f32 %v462, %v569
      %v578 = vmul.f32 %v465, %v569
      %v579 = vmul.f32 %v470, %v569
      %v580 = vmul.f32 %v473, %v569
      %v581 = vmul.f32 %v478, %v569
      %v582 = vmul.f32 %v481, %v569
      %v583 = vmul.f32 %v486, %v569
      %v584 = vmul.f32 %v489, %v569
      %v585 = vmul.f32 %v494, %v569
      %v586 = vmul.f32 %v497, %v569
      %v587 = vmul.f32 %v502, %v569
      %v588 = vmul.f32 %v505, %v569
      %v589 = vmul.f32 %v510, %v569
      %v590 = vmul.f32 %v513, %v569
      %v591 = vmul.f32 %v518, %v569
      %v592 = vmul.f32 %v521, %v569
      %v593 = vmul.f32 %v526, %v569
      %v594 = vmul.f32 %v529, %v569
      %v595 = vmul.f32 %v534, %v569
      %v596 = vmul.f32 %v537, %v569
      %v597 = vmul.f32 %v542, %v569
      %v598 = vmul.f32 %v545, %v569
      %v599 = vmul.f32 %v550, %v569
      %v600 = vmul.f32 %v553, %v569
      %v601 = vmul.f32 %v558, %v569
      %v602 = vmul.f32 %v561, %v569
      %v603 = vld [vmem:[%s3] sm:$0x1]
      %v605 = vlaneseq
      %v606 = vshrl.u32 %v605, 7
      %v607 = vsub.s32 0, %v606
      %v608 = vrot.slane %v603, %v607
      %v610 = vadd.f32 %v571, %v608
      %v611 = vadd.f32 %v572, %v608
      %v612 = vadd.f32 %v573, %v608
      %v613 = vadd.f32 %v574, %v608
      %v614 = vadd.f32 %v575, %v608
      %v615 = vadd.f32 %v576, %v608
      %v616 = vadd.f32 %v577, %v608
      %v617 = vadd.f32 %v578, %v608
      %v618 = vadd.f32 %v579, %v608
      %v619 = vadd.f32 %v580, %v608
      %v620 = vadd.f32 %v581, %v608
      %v621 = vadd.f32 %v582, %v608
      %v622 = vadd.f32 %v583, %v608
      %v623 = vadd.f32 %v584, %v608
      %v624 = vadd.f32 %v585, %v608
      %v625 = vadd.f32 %v586, %v608
      %v626 = vadd.f32 %v587, %v608
      %v627 = vadd.f32 %v588, %v608
      %v628 = vadd.f32 %v589, %v608
      %v629 = vadd.f32 %v590, %v608
      %v630 = vadd.f32 %v591, %v608
      %v631 = vadd.f32 %v592, %v608
      %v632 = vadd.f32 %v593, %v608
      %v633 = vadd.f32 %v594, %v608
      %v634 = vadd.f32 %v595, %v608
      %v635 = vadd.f32 %v596, %v608
      %v636 = vadd.f32 %v597, %v608
      %v637 = vadd.f32 %v598, %v608
      %v638 = vadd.f32 %v599, %v608
      %v639 = vadd.f32 %v600, %v608
      %v640 = vadd.f32 %v601, %v608
      %v641 = vadd.f32 %v602, %v608
      %v642 = vmax.f32 %v610, 0.0
      %v643 = vmax.f32 %v611, 0.0
      %v644 = vmax.f32 %v612, 0.0
      %v645 = vmax.f32 %v613, 0.0
      %v646 = vmax.f32 %v614, 0.0
      %v647 = vmax.f32 %v615, 0.0
      %v648 = vmax.f32 %v616, 0.0
      %v649 = vmax.f32 %v617, 0.0
      %v650 = vmax.f32 %v618, 0.0
      %v651 = vmax.f32 %v619, 0.0
      %v652 = vmax.f32 %v620, 0.0
      %v653 = vmax.f32 %v621, 0.0
      %v654 = vmax.f32 %v622, 0.0
      %v655 = vmax.f32 %v623, 0.0
      %v656 = vmax.f32 %v624, 0.0
      %v657 = vmax.f32 %v625, 0.0
      %v658 = vmax.f32 %v626, 0.0
      %v659 = vmax.f32 %v627, 0.0
      %v660 = vmax.f32 %v628, 0.0
      %v661 = vmax.f32 %v629, 0.0
      %v662 = vmax.f32 %v630, 0.0
      %v663 = vmax.f32 %v631, 0.0
      %v664 = vmax.f32 %v632, 0.0
      %v665 = vmax.f32 %v633, 0.0
      %v666 = vmax.f32 %v634, 0.0
      %v667 = vmax.f32 %v635, 0.0
      %v668 = vmax.f32 %v636, 0.0
      %v669 = vmax.f32 %v637, 0.0
      %v670 = vmax.f32 %v638, 0.0
      %v671 = vmax.f32 %v639, 0.0
      %v672 = vmax.f32 %v640, 0.0
      %v673 = vmax.f32 %v641, 0.0
      %vm674 = vcmask 130048
      %675 = vst.msk [vmem:[%s199] sm:$0xff] %vm674, %v642
      %676 = vst.msk [vmem:[%s199 + $0x8] sm:$0xff] %vm674, %v643
      %677 = vst.msk [vmem:[%s199 + $0x10] sm:$0xff] %vm674, %v644
      %678 = vst.msk [vmem:[%s199 + $0x18] sm:$0xff] %vm674, %v645
      %679 = vst.msk [vmem:[%s199 + $0x20] sm:$0xff] %vm674, %v646
      %680 = vst.msk [vmem:[%s199 + $0x28] sm:$0xff] %vm674, %v647
      %681 = vst.msk [vmem:[%s199 + $0x30] sm:$0xff] %vm674, %v648
      %682 = vst.msk [vmem:[%s199 + $0x38] sm:$0xff] %vm674, %v649
      %683 = vst.msk [vmem:[%s199 + $0x40] sm:$0xff] %vm674, %v650
      %684 = vst.msk [vmem:[%s199 + $0x48] sm:$0xff] %vm674, %v651
      %685 = vst.msk [vmem:[%s199 + $0x50] sm:$0xff] %vm674, %v652
      %686 = vst.msk [vmem:[%s199 + $0x58] sm:$0xff] %vm674, %v653
      %687 = vst.msk [vmem:[%s199 + $0x60] sm:$0xff] %vm674, %v654
      %688 = vst.msk [vmem:[%s199 + $0x68] sm:$0xff] %vm674, %v655
      %689 = vst.msk [vmem:[%s199 + $0x70] sm:$0xff] %vm674, %v656
      %690 = vst.msk [vmem:[%s199 + $0x78] sm:$0xff] %vm674, %v657
      %691 = vst.msk [vmem:[%s199 + $0x80] sm:$0xff] %vm674, %v658
      %692 = vst.msk [vmem:[%s199 + $0x88] sm:$0xff] %vm674, %v659
      %693 = vst.msk [vmem:[%s199 + $0x90] sm:$0xff] %vm674, %v660
      %694 = vst.msk [vmem:[%s199 + $0x98] sm:$0xff] %vm674, %v661
      %695 = vst.msk [vmem:[%s199 + $0xa0] sm:$0xff] %vm674, %v662
      %696 = vst.msk [vmem:[%s199 + $0xa8] sm:$0xff] %vm674, %v663
      %697 = vst.msk [vmem:[%s199 + $0xb0] sm:$0xff] %vm674, %v664
      %698 = vst.msk [vmem:[%s199 + $0xb8] sm:$0xff] %vm674, %v665
      %699 = vst.msk [vmem:[%s199 + $0xc0] sm:$0xff] %vm674, %v666
      %700 = vst.msk [vmem:[%s199 + $0xc8] sm:$0xff] %vm674, %v667
      %701 = vst.msk [vmem:[%s199 + $0xd0] sm:$0xff] %vm674, %v668
      %702 = vst.msk [vmem:[%s199 + $0xd8] sm:$0xff] %vm674, %v669
      %703 = vst.msk [vmem:[%s199 + $0xe0] sm:$0xff] %vm674, %v670
      %704 = vst.msk [vmem:[%s199 + $0xe8] sm:$0xff] %vm674, %v671
      %705 = vst.msk [vmem:[%s199 + $0xf0] sm:$0xff] %vm674, %v672
      %706 = vst.msk [vmem:[%s199 + $0xf8] sm:$0xff] %vm674, %v673
      %s707 = smul.u32 32, %s15
      %p708 = scmp.lt.s32.totalorder %s707, 63
      %s709 = scalar_select %p708, %s707, 63
      %s710 = smul.addr %s709, 8
      %s711 = scalar_lea.vmem %s4, %s710
      // Predicated region
      $region37: #{model_conv_unet_forward.15} parent=35 // pred_check
        %p712 = pneg %p122
      $region38: #{model_conv_unet_forward.15} parent=35 // pred_check_branch
        %714 = sbr.rel (%p712) target = $region40
      $region39: #{model_conv_unet_forward.15} parent=35 // pred_region
        %s715 = smul.u32 32, %s15
      $region40: #{model_conv_unet_forward.15} parent=35 // pred_fallthru
        _
    $region36: #{model_conv_unet_forward.15} parent=5 // pred_fallthru
      _
    %p716 = scmp.le.s32.totalorder 2, %s10
    // Predicated region
    $region41: #{model_conv_unet_forward.15} parent=5 // pred_check
      %p717 = pneg %p716
    $region42: #{model_conv_unet_forward.15} parent=5 // pred_check_branch
      %719 = sbr.rel (%p717) target = $region44
    $region43: #{model_conv_unet_forward.15} parent=5 // pred_region
      %s720 = ssub.s32 %s10, 2
      // Predicated region
      $region45: #{model_conv_unet_forward.15} parent=43 // pred_check
        %p721 = pneg %p128
      $region46: #{model_conv_unet_forward.15} parent=43 // pred_check_branch
        %723 = sbr.rel (%p721) target = $region48
      $region47: #{model_conv_unet_forward.15} parent=43 // pred_region
        %s724 = smul.u32 32, %s16
        %p725 = scmp.lt.s32.totalorder %s724, 63
        %s726 = scalar_select %p725, %s724, 63
        %s727 = smul.addr %s726, 8
        %s728 = scalar_lea.vmem %s4, %s727
      $region48: #{model_conv_unet_forward.15} parent=43 // pred_fallthru
        _
    $region44: #{model_conv_unet_forward.15} parent=5 // pred_fallthru
      _
  $region6: #{model_conv_unet_forward.15} parent=0 // loop_footer
    %s14 = sadd.s32 1, %s10
  $region7: #{model_conv_unet_forward.15} parent=0 // loop_footer_branch
    %9 = sbr.rel target = $region3
  $region8: #{model_conv_unet_forward.15} parent=0 // loop_exit
    _

// kernel: model_conv_unet_forward.16
$region0: #{model_conv_unet_forward.16}
  #allocation0 [shape = 'u32[]', space=smem, size = 0x4, offset = 0x4, fixed_abs, tag = 'smem constant byte address 0x4 - core index']
  #allocation1 [shape = 'u32[144,128]{1,0:T(1,128)}', space=vmem, size = 0x12000, scoped, tag = 'internal scratch']
  %s0 = inlined_call_operand.vmem [shape: bf16[128,144], index: 0, kind: input, shape index: {}]
  %s1 = inlined_call_operand.vmem [shape: bf16[144,16], index: 1, kind: input, shape index: {}]
  %s2 = inlined_call_operand.vmem [shape: f32[1,16], index: 2, kind: input, shape index: {}]
  %s3 = inlined_call_operand.vmem [shape: f32[1,16], index: 3, kind: input, shape index: {}]
  %s4 = inlined_call_operand.vmem [shape: f32[128,16], index: 4, kind: output, shape index: {}]
  %s5 = sld [smem:[#allocation0]]
  $region26: #{model_conv_unet_forward.16} parent=0
    _
  %s7 = ssub.s32 1, %s5
  %s8 = scalar_select 0, %s7, %s5
  // Predicated region
  $region2: #{model_conv_unet_forward.16} parent=0 // pred_check
    _
  $region3: #{model_conv_unet_forward.16} parent=0 // pred_check_branch
    %10 = sbr.rel (0) target = $region5
  $region4: #{model_conv_unet_forward.16} parent=0 // pred_region
    _
  $region5: #{model_conv_unet_forward.16} parent=0 // pred_fallthru
    _
  // Predicated region
  $region6: #{model_conv_unet_forward.16} parent=0 // pred_check
    _
  $region7: #{model_conv_unet_forward.16} parent=0 // pred_check_branch
    %12 = sbr.rel (0) target = $region9
  $region8: #{model_conv_unet_forward.16} parent=0 // pred_region
    _
  $region9: #{model_conv_unet_forward.16} parent=0 // pred_fallthru
    _
  // Predicated region
  $region10: #{model_conv_unet_forward.16} parent=0 // pred_check
    _
  $region11: #{model_conv_unet_forward.16} parent=0 // pred_check_branch
    %14 = sbr.rel (0) target = $region13
  $region12: #{model_conv_unet_forward.16} parent=0 // pred_region
    _
  $region13: #{model_conv_unet_forward.16} parent=0 // pred_fallthru
    _
  // Predicated region
  $region14: #{model_conv_unet_forward.16} parent=0 // pred_check
    _
  $region15: #{model_conv_unet_forward.16} parent=0 // pred_check_branch
    %16 = sbr.rel (0) target = $region17
  $region16: #{model_conv_unet_forward.16} parent=0 // pred_region
    _
  $region17: #{model_conv_unet_forward.16} parent=0 // pred_fallthru
    _
  %v18 = vld [vmem:[%s0] sm:$0xff]
  %v19 = vld [vmem:[%s0 + $0x8] sm:$0xff]
  %v20 = vld [vmem:[%s0 + $0x10] sm:$0xff]
  %v21 = vld [vmem:[%s0 + $0x18] sm:$0xff]
  %v22 = vld [vmem:[%s0 + $0x20] sm:$0xff]
  %v23 = vld [vmem:[%s0 + $0x28] sm:$0xff]
  %v24 = vld [vmem:[%s0 + $0x30] sm:$0xff]
  %v25 = vld [vmem:[%s0 + $0x38] sm:$0xff]
  %v26 = vld [vmem:[%s0 + $0x40] sm:$0xff]
  %v27 = vld [vmem:[%s0 + $0x48] sm:$0xff]
  %v28 = vld [vmem:[%s0 + $0x50] sm:$0xff]
  %v29 = vld [vmem:[%s0 + $0x58] sm:$0xff]
  %v30 = vld [vmem:[%s0 + $0x60] sm:$0xff]
  %v31 = vld [vmem:[%s0 + $0x68] sm:$0xff]
  %v32 = vld [vmem:[%s0 + $0x70] sm:$0xff]
  %v33 = vld [vmem:[%s0 + $0x78] sm:$0xff]
  %v34 = vld [vmem:[%s1] sm:$0xf]
  %v35 = vld [vmem:[%s1 + $0x4] sm:$0xf]
  %v36 = vld [vmem:[%s1 + $0x8] sm:$0xf]
  %v37 = vld [vmem:[%s1 + $0xc] sm:$0xf]
  %v38 = vld [vmem:[%s1 + $0x10] sm:$0xf]
  %v39 = vld [vmem:[%s1 + $0x14] sm:$0xf]
  %v40 = vld [vmem:[%s1 + $0x18] sm:$0xf]
  %v41 = vld [vmem:[%s1 + $0x1c] sm:$0xf]
  %v42 = vld [vmem:[%s1 + $0x20] sm:$0xf]
  %v43 = vld [vmem:[%s1 + $0x24] sm:$0xf]
  %v44 = vld [vmem:[%s1 + $0x28] sm:$0xf]
  %v45 = vld [vmem:[%s1 + $0x2c] sm:$0xf]
  %v46 = vld [vmem:[%s1 + $0x30] sm:$0xf]
  %v47 = vld [vmem:[%s1 + $0x34] sm:$0xf]
  %v48 = vld [vmem:[%s1 + $0x38] sm:$0xf]
  %v49 = vld [vmem:[%s1 + $0x3c] sm:$0xf]
  %v50 = vld [vmem:[%s1 + $0x40] sm:$0xf]
  %v51 = vld [vmem:[%s1 + $0x44] sm:$0xf]
  %v68 = vunpack.c.l.b16 %v18
  %v69 = vunpack.c.h.b16 %v18
  %v70 = vunpack.c.l.b16 %v19
  %v71 = vunpack.c.h.b16 %v19
  %v72 = vunpack.c.l.b16 %v20
  %v73 = vunpack.c.h.b16 %v20
  %v74 = vunpack.c.l.b16 %v21
  %v75 = vunpack.c.h.b16 %v21
  %v76 = vunpack.c.l.b16 %v22
  %v77 = vunpack.c.h.b16 %v22
  %v78 = vunpack.c.l.b16 %v23
  %v79 = vunpack.c.h.b16 %v23
  %v80 = vunpack.c.l.b16 %v24
  %v81 = vunpack.c.h.b16 %v24
  %v82 = vunpack.c.l.b16 %v25
  %v83 = vunpack.c.h.b16 %v25
  %v84 = vunpack.c.l.b16 %v26
  %v85 = vunpack.c.h.b16 %v26
  %v86 = vunpack.c.l.b16 %v27
  %v87 = vunpack.c.h.b16 %v27
  %v88 = vunpack.c.l.b16 %v28
  %v89 = vunpack.c.h.b16 %v28
  %v90 = vunpack.c.l.b16 %v29
  %v91 = vunpack.c.h.b16 %v29
  %v92 = vunpack.c.l.b16 %v30
  %v93 = vunpack.c.h.b16 %v30
  %v94 = vunpack.c.l.b16 %v31
  %v95 = vunpack.c.h.b16 %v31
  %v96 = vunpack.c.l.b16 %v32
  %v97 = vunpack.c.h.b16 %v32
  %v98 = vunpack.c.l.b16 %v33
  %v99 = vunpack.c.h.b16 %v33
  %v100 = vpack.c.b16 %v70, %v68
  %v101 = vpack.c.b16 %v71, %v69
  %v102 = vpack.c.b16 %v74, %v72
  %v103 = vpack.c.b16 %v75, %v73
  %v104 = vpack.c.b16 %v78, %v76
  %v105 = vpack.c.b16 %v79, %v77
  %v106 = vpack.c.b16 %v82, %v80
  %v107 = vpack.c.b16 %v83, %v81
  %v108 = vpack.c.b16 %v86, %v84
  %v109 = vpack.c.b16 %v87, %v85
  %v110 = vpack.c.b16 %v90, %v88
  %v111 = vpack.c.b16 %v91, %v89
  %v112 = vpack.c.b16 %v94, %v92
  %v113 = vpack.c.b16 %v95, %v93
  %v114 = vpack.c.b16 %v98, %v96
  %v115 = vpack.c.b16 %v99, %v97
  %v142 = vunpack.c.l.b16 %v34
  %v143 = vunpack.c.l.b16 %v35
  %v144 = vunpack.c.l.b16 %v36
  %v145 = vunpack.c.l.b16 %v37
  %v146 = vunpack.c.l.b16 %v38
  %v147 = vunpack.c.l.b16 %v39
  %v148 = vunpack.c.l.b16 %v40
  %v149 = vunpack.c.l.b16 %v41
  %v150 = vunpack.c.l.b16 %v42
  %v151 = vunpack.c.l.b16 %v43
  %v152 = vunpack.c.l.b16 %v44
  %v153 = vunpack.c.l.b16 %v45
  %v154 = vunpack.c.l.b16 %v46
  %v155 = vunpack.c.l.b16 %v47
  %v156 = vunpack.c.l.b16 %v48
  %v157 = vunpack.c.l.b16 %v49
  %v158 = vunpack.c.l.b16 %v50
  %v159 = vunpack.c.l.b16 %v51
  %v160 = vpack.c.b16 %v143, %v142
  %v161 = vpack.c.b16 %v145, %v144
  %v162 = vpack.c.b16 %v147, %v146
  %v163 = vpack.c.b16 %v149, %v148
  %v164 = vpack.c.b16 %v151, %v150
  %v165 = vpack.c.b16 %v153, %v152
  %v166 = vpack.c.b16 %v155, %v154
  %v167 = vpack.c.b16 %v157, %v156
  %v168 = vpack.c.b16 %v159, %v158
  %vm178 = vcmask 130048
  %v180 = vsel %vm178, %v101, 0
  %v183 = vsel %vm178, %v103, 0
  %v186 = vsel %vm178, %v105, 0
  %v189 = vsel %vm178, %v107, 0
  %v192 = vsel %vm178, %v109, 0
  %v195 = vsel %vm178, %v111, 0
  %v198 = vsel %vm178, %v113, 0
  %v201 = vsel %vm178, %v115, 0
  %203 = vmatprep.subr.bf16.mxu0 0
  %204 = vmatpush1.bf16.msra.mxu0 %v160
  %205 = vmatprep.subr.bf16.mxu0 0
  %206 = vmatpush1.bf16.msra.mxu0 %v161
  %207 = vmatprep.subr.bf16.mxu0 0
  %208 = vmatpush1.bf16.msra.mxu0 %v162
  %209 = vmatprep.subr.bf16.mxu0 0
  %210 = vmatpush1.bf16.msra.mxu0 %v163
  %211 = vmatprep.subr.bf16.mxu0 0
  %212 = vmatpush1.bf16.msra.mxu0 %v164
  %213 = vmatprep.subr.bf16.mxu0 0
  %214 = vmatpush1.bf16.msra.mxu0 %v165
  %215 = vmatprep.subr.bf16.mxu0 0
  %216 = vmatpush1.bf16.msra.mxu0 %v166
  %217 = vmatprep.subr.bf16.mxu0 0
  %218 = vmatpush1.bf16.msra.mxu0 %v167
  %219 = vmatprep.subr.bf16.mxu0 0
  %220 = vmatpush1.bf16.msra.mxu0 %v168
  %221 = vmatprep.subr.bf16.mxu0 0
  %222 = vmatpush1.bf16.msra.mxu0 0
  %223 = vmatprep.subr.bf16.mxu0 0
  %224 = vmatpush1.bf16.msra.mxu0 0
  %225 = vmatprep.subr.bf16.mxu0 0
  %226 = vmatpush1.bf16.msra.mxu0 0
  %227 = vmatprep.subr.bf16.mxu0 0
  %228 = vmatpush1.bf16.msra.mxu0 0
  %229 = vmatprep.subr.bf16.mxu0 0
  %230 = vmatpush1.bf16.msra.mxu0 0
  %231 = vmatprep.subr.bf16.mxu0 0
  %232 = vmatpush1.bf16.msra.mxu0 0
  %233 = vmatprep.subr.bf16.mxu0 0
  %234 = vmatpush1.bf16.msra.mxu0 0
  %235 = vmatprep.mubr.bf16.mxu0 %v180
  %236 = vmatmul.mubr.bf16.gmra.mrb[0].mxu0 %v100
  %v237 = vpop.f32.mrb[0].mxu0
  %v238 = vadd.f32 0.0, %v237
  %v239 = vpop.f32.mrb[0].mxu0
  %v240 = vpop.f32.mrb[0].mxu0
  %v241 = vadd.f32 0.0, %v240
  %v242 = vpop.f32.mrb[0].mxu0
  %243 = vmatprep.mubr.bf16.mxu0 %v183
  %244 = vmatmul.mubr.bf16.gmra.mrb[0].mxu0 %v102
  %v245 = vpop.f32.mrb[0].mxu0
  %v246 = vadd.f32 0.0, %v245
  %v247 = vpop.f32.mrb[0].mxu0
  %v248 = vpop.f32.mrb[0].mxu0
  %v249 = vadd.f32 0.0, %v248
  %v250 = vpop.f32.mrb[0].mxu0
  %251 = vmatprep.mubr.bf16.mxu0 %v186
  %252 = vmatmul.mubr.bf16.gmra.mrb[0].mxu0 %v104
  %v253 = vpop.f32.mrb[0].mxu0
  %v254 = vadd.f32 0.0, %v253
  %v255 = vpop.f32.mrb[0].mxu0
  %v256 = vpop.f32.mrb[0].mxu0
  %v257 = vadd.f32 0.0, %v256
  %v258 = vpop.f32.mrb[0].mxu0
  %259 = vmatprep.mubr.bf16.mxu0 %v189
  %260 = vmatmul.mubr.bf16.gmra.mrb[0].mxu0 %v106
  %v261 = vpop.f32.mrb[0].mxu0
  %v262 = vadd.f32 0.0, %v261
  %v263 = vpop.f32.mrb[0].mxu0
  %v264 = vpop.f32.mrb[0].mxu0
  %v265 = vadd.f32 0.0, %v264
  %v266 = vpop.f32.mrb[0].mxu0
  %267 = vmatprep.mubr.bf16.mxu0 %v192
  %268 = vmatmul.mubr.bf16.gmra.mrb[0].mxu0 %v108
  %v269 = vpop.f32.mrb[0].mxu0
  %v270 = vadd.f32 0.0, %v269
  %v271 = vpop.f32.mrb[0].mxu0
  %v272 = vpop.f32.mrb[0].mxu0
  %v273 = vadd.f32 0.0, %v272
  %v274 = vpop.f32.mrb[0].mxu0
  %275 = vmatprep.mubr.bf16.mxu0 %v195
  %276 = vmatmul.mubr.bf16.gmra.mrb[0].mxu0 %v110
  %v277 = vpop.f32.mrb[0].mxu0
  %v278 = vadd.f32 0.0, %v277
  %v279 = vpop.f32.mrb[0].mxu0
  %v280 = vpop.f32.mrb[0].mxu0
  %v281 = vadd.f32 0.0, %v280
  %v282 = vpop.f32.mrb[0].mxu0
  %283 = vmatprep.mubr.bf16.mxu0 %v198
  %284 = vmatmul.mubr.bf16.gmra.mrb[0].mxu0 %v112
  %v285 = vpop.f32.mrb[0].mxu0
  %v286 = vadd.f32 0.0, %v285
  %v287 = vpop.f32.mrb[0].mxu0
  %v288 = vpop.f32.mrb[0].mxu0
  %v289 = vadd.f32 0.0, %v288
  %v290 = vpop.f32.mrb[0].mxu0
  %291 = vmatprep.mubr.bf16.mxu0 %v201
  %292 = vmatmul.mubr.bf16.gmra.mrb[0].mxu0 %v114
  %v293 = vpop.f32.mrb[0].mxu0
  %v294 = vadd.f32 0.0, %v293
  %v295 = vpop.f32.mrb[0].mxu0
  %v296 = vpop.f32.mrb[0].mxu0
  %v297 = vadd.f32 0.0, %v296
  %v298 = vpop.f32.mrb[0].mxu0
  %299 = vdwg.mxu0
  %v300 = vld [vmem:[%s2] sm:$0x1]
  %v302 = vlaneseq
  %v303 = vshrl.u32 %v302, 7
  %v304 = vsub.s32 0, %v303
  %v305 = vrot.slane %v300, %v304
  %v307 = vmul.f32 %v238, %v305
  %v308 = vmul.f32 %v241, %v305
  %v309 = vmul.f32 %v246, %v305
  %v310 = vmul.f32 %v249, %v305
  %v311 = vmul.f32 %v254, %v305
  %v312 = vmul.f32 %v257, %v305
  %v313 = vmul.f32 %v262, %v305
  %v314 = vmul.f32 %v265, %v305
  %v315 = vmul.f32 %v270, %v305
  %v316 = vmul.f32 %v273, %v305
  %v317 = vmul.f32 %v278, %v305
  %v318 = vmul.f32 %v281, %v305
  %v319 = vmul.f32 %v286, %v305
  %v320 = vmul.f32 %v289, %v305
  %v321 = vmul.f32 %v294, %v305
  %v322 = vmul.f32 %v297, %v305
  %v323 = vld [vmem:[%s3] sm:$0x1]
  %v325 = vlaneseq
  %v326 = vshrl.u32 %v325, 7
  %v327 = vsub.s32 0, %v326
  %v328 = vrot.slane %v323, %v327
  %v330 = vadd.f32 %v307, %v328
  %v331 = vadd.f32 %v308, %v328
  %v332 = vadd.f32 %v309, %v328
  %v333 = vadd.f32 %v310, %v328
  %v334 = vadd.f32 %v311, %v328
  %v335 = vadd.f32 %v312, %v328
  %v336 = vadd.f32 %v313, %v328
  %v337 = vadd.f32 %v314, %v328
  %v338 = vadd.f32 %v315, %v328
  %v339 = vadd.f32 %v316, %v328
  %v340 = vadd.f32 %v317, %v328
  %v341 = vadd.f32 %v318, %v328
  %v342 = vadd.f32 %v319, %v328
  %v343 = vadd.f32 %v320, %v328
  %v344 = vadd.f32 %v321, %v328
  %v345 = vadd.f32 %v322, %v328
  %v346 = vmax.f32 %v330, 0.0
  %v347 = vmax.f32 %v331, 0.0
  %v348 = vmax.f32 %v332, 0.0
  %v349 = vmax.f32 %v333, 0.0
  %v350 = vmax.f32 %v334, 0.0
  %v351 = vmax.f32 %v335, 0.0
  %v352 = vmax.f32 %v336, 0.0
  %v353 = vmax.f32 %v337, 0.0
  %v354 = vmax.f32 %v338, 0.0
  %v355 = vmax.f32 %v339, 0.0
  %v356 = vmax.f32 %v340, 0.0
  %v357 = vmax.f32 %v341, 0.0
  %v358 = vmax.f32 %v342, 0.0
  %v359 = vmax.f32 %v343, 0.0
  %v360 = vmax.f32 %v344, 0.0
  %v361 = vmax.f32 %v345, 0.0
  %362 = vst.msk [vmem:[%s4] sm:$0xff] %vm178, %v346
  %363 = vst.msk [vmem:[%s4 + $0x8] sm:$0xff] %vm178, %v347
  %364 = vst.msk [vmem:[%s4 + $0x10] sm:$0xff] %vm178, %v348
  %365 = vst.msk [vmem:[%s4 + $0x18] sm:$0xff] %vm178, %v349
  %366 = vst.msk [vmem:[%s4 + $0x20] sm:$0xff] %vm178, %v350
  %367 = vst.msk [vmem:[%s4 + $0x28] sm:$0xff] %vm178, %v351
  %368 = vst.msk [vmem:[%s4 + $0x30] sm:$0xff] %vm178, %v352
  %369 = vst.msk [vmem:[%s4 + $0x38] sm:$0xff] %vm178, %v353
  %370 = vst.msk [vmem:[%s4 + $0x40] sm:$0xff] %vm178, %v354
  %371 = vst.msk [vmem:[%s4 + $0x48] sm:$0xff] %vm178, %v355
  %372 = vst.msk [vmem:[%s4 + $0x50] sm:$0xff] %vm178, %v356
  %373 = vst.msk [vmem:[%s4 + $0x58] sm:$0xff] %vm178, %v357
  %374 = vst.msk [vmem:[%s4 + $0x60] sm:$0xff] %vm178, %v358
  %375 = vst.msk [vmem:[%s4 + $0x68] sm:$0xff] %vm178, %v359
  %376 = vst.msk [vmem:[%s4 + $0x70] sm:$0xff] %vm178, %v360
  %377 = vst.msk [vmem:[%s4 + $0x78] sm:$0xff] %vm178, %v361
  // Predicated region
  $region18: #{model_conv_unet_forward.16} parent=0 // pred_check
    _
  $region19: #{model_conv_unet_forward.16} parent=0 // pred_check_branch
    %379 = sbr.rel (0) target = $region21
  $region20: #{model_conv_unet_forward.16} parent=0 // pred_region
    _
  $region21: #{model_conv_unet_forward.16} parent=0 // pred_fallthru
    _
  // Predicated region
  $region22: #{model_conv_unet_forward.16} parent=0 // pred_check
    _
  $region23: #{model_conv_unet_forward.16} parent=0 // pred_check_branch
    %381 = sbr.rel (0) target = $region25
  $region24: #{model_conv_unet_forward.16} parent=0 // pred_region
    _
  $region25: #{model_conv_unet_forward.16} parent=0 // pred_fallthru
    _

// kernel: model_conv_unet_forward.17
$region0: #{model_conv_unet_forward.17}
  #allocation0 [shape = 'u32[]', space=smem, size = 0x4, offset = 0x4, fixed_abs, tag = 'smem constant byte address 0x4 - core index']
  #allocation1 [shape = 'u32[144,128]{1,0:T(1,128)}', space=vmem, size = 0x12000, scoped, tag = 'internal scratch']
  %s0 = inlined_call_operand.vmem [shape: bf16[128,144], index: 0, kind: input, shape index: {}]
  %s1 = inlined_call_operand.vmem [shape: bf16[144,32], index: 1, kind: input, shape index: {}]
  %s2 = inlined_call_operand.vmem [shape: f32[1,32], index: 2, kind: input, shape index: {}]
  %s3 = inlined_call_operand.vmem [shape: f32[1,32], index: 3, kind: input, shape index: {}]
  %s4 = inlined_call_operand.vmem [shape: f32[128,32], index: 4, kind: output, shape index: {}]
  %s5 = sld [smem:[#allocation0]]
  $region26: #{model_conv_unet_forward.17} parent=0
    _
  %s7 = ssub.s32 1, %s5
  %s8 = scalar_select 0, %s7, %s5
  // Predicated region
  $region2: #{model_conv_unet_forward.17} parent=0 // pred_check
    _
  $region3: #{model_conv_unet_forward.17} parent=0 // pred_check_branch
    %10 = sbr.rel (0) target = $region5
  $region4: #{model_conv_unet_forward.17} parent=0 // pred_region
    _
  $region5: #{model_conv_unet_forward.17} parent=0 // pred_fallthru
    _
  // Predicated region
  $region6: #{model_conv_unet_forward.17} parent=0 // pred_check
    _
  $region7: #{model_conv_unet_forward.17} parent=0 // pred_check_branch
    %12 = sbr.rel (0) target = $region9
  $region8: #{model_conv_unet_forward.17} parent=0 // pred_region
    _
  $region9: #{model_conv_unet_forward.17} parent=0 // pred_fallthru
    _
  // Predicated region
  $region10: #{model_conv_unet_forward.17} parent=0 // pred_check
    _
  $region11: #{model_conv_unet_forward.17} parent=0 // pred_check_branch
    %14 = sbr.rel (0) target = $region13
  $region12: #{model_conv_unet_forward.17} parent=0 // pred_region
    _
  $region13: #{model_conv_unet_forward.17} parent=0 // pred_fallthru
    _
  // Predicated region
  $region14: #{model_conv_unet_forward.17} parent=0 // pred_check
    _
  $region15: #{model_conv_unet_forward.17} parent=0 // pred_check_branch
    %16 = sbr.rel (0) target = $region17
  $region16: #{model_conv_unet_forward.17} parent=0 // pred_region
    _
  $region17: #{model_conv_unet_forward.17} parent=0 // pred_fallthru
    _
  %v18 = vld [vmem:[%s0] sm:$0xff]
  %v19 = vld [vmem:[%s0 + $0x8] sm:$0xff]
  %v20 = vld [vmem:[%s0 + $0x10] sm:$0xff]
  %v21 = vld [vmem:[%s0 + $0x18] sm:$0xff]
  %v22 = vld [vmem:[%s0 + $0x20] sm:$0xff]
  %v23 = vld [vmem:[%s0 + $0x28] sm:$0xff]
  %v24 = vld [vmem:[%s0 + $0x30] sm:$0xff]
  %v25 = vld [vmem:[%s0 + $0x38] sm:$0xff]
  %v26 = vld [vmem:[%s0 + $0x40] sm:$0xff]
  %v27 = vld [vmem:[%s0 + $0x48] sm:$0xff]
  %v28 = vld [vmem:[%s0 + $0x50] sm:$0xff]
  %v29 = vld [vmem:[%s0 + $0x58] sm:$0xff]
  %v30 = vld [vmem:[%s0 + $0x60] sm:$0xff]
  %v31 = vld [vmem:[%s0 + $0x68] sm:$0xff]
  %v32 = vld [vmem:[%s0 + $0x70] sm:$0xff]
  %v33 = vld [vmem:[%s0 + $0x78] sm:$0xff]
  %v34 = vld [vmem:[%s1] sm:$0xf]
  %v35 = vld [vmem:[%s1 + $0x4] sm:$0xf]
  %v36 = vld [vmem:[%s1 + $0x8] sm:$0xf]
  %v37 = vld [vmem:[%s1 + $0xc] sm:$0xf]
  %v38 = vld [vmem:[%s1 + $0x10] sm:$0xf]
  %v39 = vld [vmem:[%s1 + $0x14] sm:$0xf]
  %v40 = vld [vmem:[%s1 + $0x18] sm:$0xf]
  %v41 = vld [vmem:[%s1 + $0x1c] sm:$0xf]
  %v42 = vld [vmem:[%s1 + $0x20] sm:$0xf]
  %v43 = vld [vmem:[%s1 + $0x24] sm:$0xf]
  %v44 = vld [vmem:[%s1 + $0x28] sm:$0xf]
  %v45 = vld [vmem:[%s1 + $0x2c] sm:$0xf]
  %v46 = vld [vmem:[%s1 + $0x30] sm:$0xf]
  %v47 = vld [vmem:[%s1 + $0x34] sm:$0xf]
  %v48 = vld [vmem:[%s1 + $0x38] sm:$0xf]
  %v49 = vld [vmem:[%s1 + $0x3c] sm:$0xf]
  %v50 = vld [vmem:[%s1 + $0x40] sm:$0xf]
  %v51 = vld [vmem:[%s1 + $0x44] sm:$0xf]
  %v68 = vunpack.c.l.b16 %v18
  %v69 = vunpack.c.h.b16 %v18
  %v70 = vunpack.c.l.b16 %v19
  %v71 = vunpack.c.h.b16 %v19
  %v72 = vunpack.c.l.b16 %v20
  %v73 = vunpack.c.h.b16 %v20
  %v74 = vunpack.c.l.b16 %v21
  %v75 = vunpack.c.h.b16 %v21
  %v76 = vunpack.c.l.b16 %v22
  %v77 = vunpack.c.h.b16 %v22
  %v78 = vunpack.c.l.b16 %v23
  %v79 = vunpack.c.h.b16 %v23
  %v80 = vunpack.c.l.b16 %v24
  %v81 = vunpack.c.h.b16 %v24
  %v82 = vunpack.c.l.b16 %v25
  %v83 = vunpack.c.h.b16 %v25
  %v84 = vunpack.c.l.b16 %v26
  %v85 = vunpack.c.h.b16 %v26
  %v86 = vunpack.c.l.b16 %v27
  %v87 = vunpack.c.h.b16 %v27
  %v88 = vunpack.c.l.b16 %v28
  %v89 = vunpack.c.h.b16 %v28
  %v90 = vunpack.c.l.b16 %v29
  %v91 = vunpack.c.h.b16 %v29
  %v92 = vunpack.c.l.b16 %v30
  %v93 = vunpack.c.h.b16 %v30
  %v94 = vunpack.c.l.b16 %v31
  %v95 = vunpack.c.h.b16 %v31
  %v96 = vunpack.c.l.b16 %v32
  %v97 = vunpack.c.h.b16 %v32
  %v98 = vunpack.c.l.b16 %v33
  %v99 = vunpack.c.h.b16 %v33
  %v100 = vpack.c.b16 %v70, %v68
  %v101 = vpack.c.b16 %v71, %v69
  %v102 = vpack.c.b16 %v74, %v72
  %v103 = vpack.c.b16 %v75, %v73
  %v104 = vpack.c.b16 %v78, %v76
  %v105 = vpack.c.b16 %v79, %v77
  %v106 = vpack.c.b16 %v82, %v80
  %v107 = vpack.c.b16 %v83, %v81
  %v108 = vpack.c.b16 %v86, %v84
  %v109 = vpack.c.b16 %v87, %v85
  %v110 = vpack.c.b16 %v90, %v88
  %v111 = vpack.c.b16 %v91, %v89
  %v112 = vpack.c.b16 %v94, %v92
  %v113 = vpack.c.b16 %v95, %v93
  %v114 = vpack.c.b16 %v98, %v96
  %v115 = vpack.c.b16 %v99, %v97
  %v142 = vunpack.c.l.b16 %v34
  %v143 = vunpack.c.l.b16 %v35
  %v144 = vunpack.c.l.b16 %v36
  %v145 = vunpack.c.l.b16 %v37
  %v146 = vunpack.c.l.b16 %v38
  %v147 = vunpack.c.l.b16 %v39
  %v148 = vunpack.c.l.b16 %v40
  %v149 = vunpack.c.l.b16 %v41
  %v150 = vunpack.c.l.b16 %v42
  %v151 = vunpack.c.l.b16 %v43
  %v152 = vunpack.c.l.b16 %v44
  %v153 = vunpack.c.l.b16 %v45
  %v154 = vunpack.c.l.b16 %v46
  %v155 = vunpack.c.l.b16 %v47
  %v156 = vunpack.c.l.b16 %v48
  %v157 = vunpack.c.l.b16 %v49
  %v158 = vunpack.c.l.b16 %v50
  %v159 = vunpack.c.l.b16 %v51
  %v160 = vpack.c.b16 %v143, %v142
  %v161 = vpack.c.b16 %v145, %v144
  %v162 = vpack.c.b16 %v147, %v146
  %v163 = vpack.c.b16 %v149, %v148
  %v164 = vpack.c.b16 %v151, %v150
  %v165 = vpack.c.b16 %v153, %v152
  %v166 = vpack.c.b16 %v155, %v154
  %v167 = vpack.c.b16 %v157, %v156
  %v168 = vpack.c.b16 %v159, %v158
  %vm178 = vcmask 130048
  %v180 = vsel %vm178, %v101, 0
  %v183 = vsel %vm178, %v103, 0
  %v186 = vsel %vm178, %v105, 0
  %v189 = vsel %vm178, %v107, 0
  %v192 = vsel %vm178, %v109, 0
  %v195 = vsel %vm178, %v111, 0
  %v198 = vsel %vm178, %v113, 0
  %v201 = vsel %vm178, %v115, 0
  %203 = vmatprep.subr.bf16.mxu0 0
  %204 = vmatpush1.bf16.msra.mxu0 %v160
  %205 = vmatprep.subr.bf16.mxu0 0
  %206 = vmatpush1.bf16.msra.mxu0 %v161
  %207 = vmatprep.subr.bf16.mxu0 0
  %208 = vmatpush1.bf16.msra.mxu0 %v162
  %209 = vmatprep.subr.bf16.mxu0 0
  %210 = vmatpush1.bf16.msra.mxu0 %v163
  %211 = vmatprep.subr.bf16.mxu0 0
  %212 = vmatpush1.bf16.msra.mxu0 %v164
  %213 = vmatprep.subr.bf16.mxu0 0
  %214 = vmatpush1.bf16.msra.mxu0 %v165
  %215 = vmatprep.subr.bf16.mxu0 0
  %216 = vmatpush1.bf16.msra.mxu0 %v166
  %217 = vmatprep.subr.bf16.mxu0 0
  %218 = vmatpush1.bf16.msra.mxu0 %v167
  %219 = vmatprep.subr.bf16.mxu0 0
  %220 = vmatpush1.bf16.msra.mxu0 %v168
  %221 = vmatprep.subr.bf16.mxu0 0
  %222 = vmatpush1.bf16.msra.mxu0 0
  %223 = vmatprep.subr.bf16.mxu0 0
  %224 = vmatpush1.bf16.msra.mxu0 0
  %225 = vmatprep.subr.bf16.mxu0 0
  %226 = vmatpush1.bf16.msra.mxu0 0
  %227 = vmatprep.subr.bf16.mxu0 0
  %228 = vmatpush1.bf16.msra.mxu0 0
  %229 = vmatprep.subr.bf16.mxu0 0
  %230 = vmatpush1.bf16.msra.mxu0 0
  %231 = vmatprep.subr.bf16.mxu0 0
  %232 = vmatpush1.bf16.msra.mxu0 0
  %233 = vmatprep.subr.bf16.mxu0 0
  %234 = vmatpush1.bf16.msra.mxu0 0
  %235 = vmatprep.mubr.bf16.mxu0 %v180
  %236 = vmatmul.mubr.bf16.gmra.mrb[0].mxu0 %v100
  %v237 = vpop.f32.mrb[0].mxu0
  %v238 = vadd.f32 0.0, %v237
  %v239 = vpop.f32.mrb[0].mxu0
  %v240 = vpop.f32.mrb[0].mxu0
  %v241 = vadd.f32 0.0, %v240
  %v242 = vpop.f32.mrb[0].mxu0
  %243 = vmatprep.mubr.bf16.mxu0 %v183
  %244 = vmatmul.mubr.bf16.gmra.mrb[0].mxu0 %v102
  %v245 = vpop.f32.mrb[0].mxu0
  %v246 = vadd.f32 0.0, %v245
  %v247 = vpop.f32.mrb[0].mxu0
  %v248 = vpop.f32.mrb[0].mxu0
  %v249 = vadd.f32 0.0, %v248
  %v250 = vpop.f32.mrb[0].mxu0
  %251 = vmatprep.mubr.bf16.mxu0 %v186
  %252 = vmatmul.mubr.bf16.gmra.mrb[0].mxu0 %v104
  %v253 = vpop.f32.mrb[0].mxu0
  %v254 = vadd.f32 0.0, %v253
  %v255 = vpop.f32.mrb[0].mxu0
  %v256 = vpop.f32.mrb[0].mxu0
  %v257 = vadd.f32 0.0, %v256
  %v258 = vpop.f32.mrb[0].mxu0
  %259 = vmatprep.mubr.bf16.mxu0 %v189
  %260 = vmatmul.mubr.bf16.gmra.mrb[0].mxu0 %v106
  %v261 = vpop.f32.mrb[0].mxu0
  %v262 = vadd.f32 0.0, %v261
  %v263 = vpop.f32.mrb[0].mxu0
  %v264 = vpop.f32.mrb[0].mxu0
  %v265 = vadd.f32 0.0, %v264
  %v266 = vpop.f32.mrb[0].mxu0
  %267 = vmatprep.mubr.bf16.mxu0 %v192
  %268 = vmatmul.mubr.bf16.gmra.mrb[0].mxu0 %v108
  %v269 = vpop.f32.mrb[0].mxu0
  %v270 = vadd.f32 0.0, %v269
  %v271 = vpop.f32.mrb[0].mxu0
  %v272 = vpop.f32.mrb[0].mxu0
  %v273 = vadd.f32 0.0, %v272
  %v274 = vpop.f32.mrb[0].mxu0
  %275 = vmatprep.mubr.bf16.mxu0 %v195
  %276 = vmatmul.mubr.bf16.gmra.mrb[0].mxu0 %v110
  %v277 = vpop.f32.mrb[0].mxu0
  %v278 = vadd.f32 0.0, %v277
  %v279 = vpop.f32.mrb[0].mxu0
  %v280 = vpop.f32.mrb[0].mxu0
  %v281 = vadd.f32 0.0, %v280
  %v282 = vpop.f32.mrb[0].mxu0
  %283 = vmatprep.mubr.bf16.mxu0 %v198
  %284 = vmatmul.mubr.bf16.gmra.mrb[0].mxu0 %v112
  %v285 = vpop.f32.mrb[0].mxu0
  %v286 = vadd.f32 0.0, %v285
  %v287 = vpop.f32.mrb[0].mxu0
  %v288 = vpop.f32.mrb[0].mxu0
  %v289 = vadd.f32 0.0, %v288
  %v290 = vpop.f32.mrb[0].mxu0
  %291 = vmatprep.mubr.bf16.mxu0 %v201
  %292 = vmatmul.mubr.bf16.gmra.mrb[0].mxu0 %v114
  %v293 = vpop.f32.mrb[0].mxu0
  %v294 = vadd.f32 0.0, %v293
  %v295 = vpop.f32.mrb[0].mxu0
  %v296 = vpop.f32.mrb[0].mxu0
  %v297 = vadd.f32 0.0, %v296
  %v298 = vpop.f32.mrb[0].mxu0
  %299 = vdwg.mxu0
  %v300 = vld [vmem:[%s2] sm:$0x1]
  %v302 = vlaneseq
  %v303 = vshrl.u32 %v302, 7
  %v304 = vsub.s32 0, %v303
  %v305 = vrot.slane %v300, %v304
  %v307 = vmul.f32 %v238, %v305
  %v308 = vmul.f32 %v241, %v305
  %v309 = vmul.f32 %v246, %v305
  %v310 = vmul.f32 %v249, %v305
  %v311 = vmul.f32 %v254, %v305
  %v312 = vmul.f32 %v257, %v305
  %v313 = vmul.f32 %v262, %v305
  %v314 = vmul.f32 %v265, %v305
  %v315 = vmul.f32 %v270, %v305
  %v316 = vmul.f32 %v273, %v305
  %v317 = vmul.f32 %v278, %v305
  %v318 = vmul.f32 %v281, %v305
  %v319 = vmul.f32 %v286, %v305
  %v320 = vmul.f32 %v289, %v305
  %v321 = vmul.f32 %v294, %v305
  %v322 = vmul.f32 %v297, %v305
  %v323 = vld [vmem:[%s3] sm:$0x1]
  %v325 = vlaneseq
  %v326 = vshrl.u32 %v325, 7
  %v327 = vsub.s32 0, %v326
  %v328 = vrot.slane %v323, %v327
  %v330 = vadd.f32 %v307, %v328
  %v331 = vadd.f32 %v308, %v328
  %v332 = vadd.f32 %v309, %v328
  %v333 = vadd.f32 %v310, %v328
  %v334 = vadd.f32 %v311, %v328
  %v335 = vadd.f32 %v312, %v328
  %v336 = vadd.f32 %v313, %v328
  %v337 = vadd.f32 %v314, %v328
  %v338 = vadd.f32 %v315, %v328
  %v339 = vadd.f32 %v316, %v328
  %v340 = vadd.f32 %v317, %v328
  %v341 = vadd.f32 %v318, %v328
  %v342 = vadd.f32 %v319, %v328
  %v343 = vadd.f32 %v320, %v328
  %v344 = vadd.f32 %v321, %v328
  %v345 = vadd.f32 %v322, %v328
  %v346 = vmax.f32 %v330, 0.0
  %v347 = vmax.f32 %v331, 0.0
  %v348 = vmax.f32 %v332, 0.0
  %v349 = vmax.f32 %v333, 0.0
  %v350 = vmax.f32 %v334, 0.0
  %v351 = vmax.f32 %v335, 0.0
  %v352 = vmax.f32 %v336, 0.0
  %v353 = vmax.f32 %v337, 0.0
  %v354 = vmax.f32 %v338, 0.0
  %v355 = vmax.f32 %v339, 0.0
  %v356 = vmax.f32 %v340, 0.0
  %v357 = vmax.f32 %v341, 0.0
  %v358 = vmax.f32 %v342, 0.0
  %v359 = vmax.f32 %v343, 0.0
  %v360 = vmax.f32 %v344, 0.0
  %v361 = vmax.f32 %v345, 0.0
  %vm362 = vcmask 261120
  %363 = vst.msk [vmem:[%s4] sm:$0xff] %vm362, %v346
  %364 = vst.msk [vmem:[%s4 + $0x8] sm:$0xff] %vm362, %v347
  %365 = vst.msk [vmem:[%s4 + $0x10] sm:$0xff] %vm362, %v348
  %366 = vst.msk [vmem:[%s4 + $0x18] sm:$0xff] %vm362, %v349
  %367 = vst.msk [vmem:[%s4 + $0x20] sm:$0xff] %vm362, %v350
  %368 = vst.msk [vmem:[%s4 + $0x28] sm:$0xff] %vm362, %v351
  %369 = vst.msk [vmem:[%s4 + $0x30] sm:$0xff] %vm362, %v352
  %370 = vst.msk [vmem:[%s4 + $0x38] sm:$0xff] %vm362, %v353
  %371 = vst.msk [vmem:[%s4 + $0x40] sm:$0xff] %vm362, %v354
  %372 = vst.msk [vmem:[%s4 + $0x48] sm:$0xff] %vm362, %v355
  %373 = vst.msk [vmem:[%s4 + $0x50] sm:$0xff] %vm362, %v356
  %374 = vst.msk [vmem:[%s4 + $0x58] sm:$0xff] %vm362, %v357
  %375 = vst.msk [vmem:[%s4 + $0x60] sm:$0xff] %vm362, %v358
  %376 = vst.msk [vmem:[%s4 + $0x68] sm:$0xff] %vm362, %v359
  %377 = vst.msk [vmem:[%s4 + $0x70] sm:$0xff] %vm362, %v360
  %378 = vst.msk [vmem:[%s4 + $0x78] sm:$0xff] %vm362, %v361
  // Predicated region
  $region18: #{model_conv_unet_forward.17} parent=0 // pred_check
    _
  $region19: #{model_conv_unet_forward.17} parent=0 // pred_check_branch
    %380 = sbr.rel (0) target = $region21
  $region20: #{model_conv_unet_forward.17} parent=0 // pred_region
    _
  $region21: #{model_conv_unet_forward.17} parent=0 // pred_fallthru
    _
  // Predicated region
  $region22: #{model_conv_unet_forward.17} parent=0 // pred_check
    _
  $region23: #{model_conv_unet_forward.17} parent=0 // pred_check_branch
    %382 = sbr.rel (0) target = $region25
  $region24: #{model_conv_unet_forward.17} parent=0 // pred_region
    _
  $region25: #{model_conv_unet_forward.17} parent=0 // pred_fallthru
    _

// kernel: model_conv_unet_forward.18
$region0: #{model_conv_unet_forward.18}
  #allocation0 [shape = 'u32[]', space=smem, size = 0x4, offset = 0x4, fixed_abs, tag = 'smem constant byte address 0x4 - core index']
  #allocation1 [shape = 'u32[144,128]{1,0:T(1,128)}', space=vmem, size = 0x12000, scoped, tag = 'internal scratch']
  %s0 = inlined_call_operand.vmem [shape: bf16[32,288], index: 0, kind: input, shape index: {}]
  %s1 = inlined_call_operand.vmem [shape: bf16[288,32], index: 1, kind: input, shape index: {}]
  %s2 = inlined_call_operand.vmem [shape: f32[1,32], index: 2, kind: input, shape index: {}]
  %s3 = inlined_call_operand.vmem [shape: f32[1,32], index: 3, kind: input, shape index: {}]
  %s4 = inlined_call_operand.vmem [shape: f32[32,32], index: 4, kind: output, shape index: {}]
  %s5 = sld [smem:[#allocation0]]
  $region26: #{model_conv_unet_forward.18} parent=0
    _
  %s7 = ssub.s32 1, %s5
  %s8 = scalar_select 0, %s7, %s5
  // Predicated region
  $region2: #{model_conv_unet_forward.18} parent=0 // pred_check
    _
  $region3: #{model_conv_unet_forward.18} parent=0 // pred_check_branch
    %10 = sbr.rel (0) target = $region5
  $region4: #{model_conv_unet_forward.18} parent=0 // pred_region
    _
  $region5: #{model_conv_unet_forward.18} parent=0 // pred_fallthru
    _
  // Predicated region
  $region6: #{model_conv_unet_forward.18} parent=0 // pred_check
    _
  $region7: #{model_conv_unet_forward.18} parent=0 // pred_check_branch
    %12 = sbr.rel (0) target = $region9
  $region8: #{model_conv_unet_forward.18} parent=0 // pred_region
    _
  $region9: #{model_conv_unet_forward.18} parent=0 // pred_fallthru
    _
  // Predicated region
  $region10: #{model_conv_unet_forward.18} parent=0 // pred_check
    _
  $region11: #{model_conv_unet_forward.18} parent=0 // pred_check_branch
    %14 = sbr.rel (0) target = $region13
  $region12: #{model_conv_unet_forward.18} parent=0 // pred_region
    _
  $region13: #{model_conv_unet_forward.18} parent=0 // pred_fallthru
    _
  // Predicated region
  $region14: #{model_conv_unet_forward.18} parent=0 // pred_check
    _
  $region15: #{model_conv_unet_forward.18} parent=0 // pred_check_branch
    %16 = sbr.rel (0) target = $region17
  $region16: #{model_conv_unet_forward.18} parent=0 // pred_region
    _
  $region17: #{model_conv_unet_forward.18} parent=0 // pred_fallthru
    _
  %v18 = vld [vmem:[%s0] sm:$0xff]
  %v19 = vld [vmem:[%s0 + $0x8] sm:$0xf]
  %v20 = vld [vmem:[%s0 + $0xc] sm:$0xff]
  %v21 = vld [vmem:[%s0 + $0x14] sm:$0xf]
  %v22 = vld [vmem:[%s0 + $0x18] sm:$0xff]
  %v23 = vld [vmem:[%s0 + $0x20] sm:$0xf]
  %v24 = vld [vmem:[%s0 + $0x24] sm:$0xff]
  %v25 = vld [vmem:[%s0 + $0x2c] sm:$0xf]
  %v26 = vld [vmem:[%s1] sm:$0xf]
  %v27 = vld [vmem:[%s1 + $0x4] sm:$0xf]
  %v28 = vld [vmem:[%s1 + $0x8] sm:$0xf]
  %v29 = vld [vmem:[%s1 + $0xc] sm:$0xf]
  %v30 = vld [vmem:[%s1 + $0x10] sm:$0xf]
  %v31 = vld [vmem:[%s1 + $0x14] sm:$0xf]
  %v32 = vld [vmem:[%s1 + $0x18] sm:$0xf]
  %v33 = vld [vmem:[%s1 + $0x1c] sm:$0xf]
  %v34 = vld [vmem:[%s1 + $0x20] sm:$0xf]
  %v35 = vld [vmem:[%s1 + $0x24] sm:$0xf]
  %v36 = vld [vmem:[%s1 + $0x28] sm:$0xf]
  %v37 = vld [vmem:[%s1 + $0x2c] sm:$0xf]
  %v38 = vld [vmem:[%s1 + $0x30] sm:$0xf]
  %v39 = vld [vmem:[%s1 + $0x34] sm:$0xf]
  %v40 = vld [vmem:[%s1 + $0x38] sm:$0xf]
  %v41 = vld [vmem:[%s1 + $0x3c] sm:$0xf]
  %v42 = vld [vmem:[%s1 + $0x40] sm:$0xf]
  %v43 = vld [vmem:[%s1 + $0x44] sm:$0xf]
  %v44 = vld [vmem:[%s1 + $0x48] sm:$0xf]
  %v45 = vld [vmem:[%s1 + $0x4c] sm:$0xf]
  %v46 = vld [vmem:[%s1 + $0x50] sm:$0xf]
  %v47 = vld [vmem:[%s1 + $0x54] sm:$0xf]
  %v48 = vld [vmem:[%s1 + $0x58] sm:$0xf]
  %v49 = vld [vmem:[%s1 + $0x5c] sm:$0xf]
  %v50 = vld [vmem:[%s1 + $0x60] sm:$0xf]
  %v51 = vld [vmem:[%s1 + $0x64] sm:$0xf]
  %v52 = vld [vmem:[%s1 + $0x68] sm:$0xf]
  %v53 = vld [vmem:[%s1 + $0x6c] sm:$0xf]
  %v54 = vld [vmem:[%s1 + $0x70] sm:$0xf]
  %v55 = vld [vmem:[%s1 + $0x74] sm:$0xf]
  %v56 = vld [vmem:[%s1 + $0x78] sm:$0xf]
  %v57 = vld [vmem:[%s1 + $0x7c] sm:$0xf]
  %v58 = vld [vmem:[%s1 + $0x80] sm:$0xf]
  %v59 = vld [vmem:[%s1 + $0x84] sm:$0xf]
  %v60 = vld [vmem:[%s1 + $0x88] sm:$0xf]
  %v61 = vld [vmem:[%s1 + $0x8c] sm:$0xf]
  %v70 = vunpack.c.l.b16 %v18
  %v71 = vunpack.c.h.b16 %v18
  %v72 = vunpack.c.l.b16 %v19
  %v73 = vunpack.c.l.b16 %v20
  %v74 = vunpack.c.h.b16 %v20
  %v75 = vunpack.c.l.b16 %v21
  %v76 = vunpack.c.l.b16 %v22
  %v77 = vunpack.c.h.b16 %v22
  %v78 = vunpack.c.l.b16 %v23
  %v79 = vunpack.c.l.b16 %v24
  %v80 = vunpack.c.h.b16 %v24
  %v81 = vunpack.c.l.b16 %v25
  %v82 = vpack.c.b16 %v73, %v70
  %v83 = vpack.c.b16 %v74, %v71
  %v84 = vpack.c.b16 %v75, %v72
  %v85 = vpack.c.b16 %v79, %v76
  %v86 = vpack.c.b16 %v80, %v77
  %v87 = vpack.c.b16 %v81, %v78
  %v128 = vunpack.c.l.b16 %v26
  %v129 = vunpack.c.l.b16 %v27
  %v130 = vunpack.c.l.b16 %v28
  %v131 = vunpack.c.l.b16 %v29
  %v132 = vunpack.c.l.b16 %v30
  %v133 = vunpack.c.l.b16 %v31
  %v134 = vunpack.c.l.b16 %v32
  %v135 = vunpack.c.l.b16 %v33
  %v136 = vunpack.c.l.b16 %v34
  %v137 = vunpack.c.l.b16 %v35
  %v138 = vunpack.c.l.b16 %v36
  %v139 = vunpack.c.l.b16 %v37
  %v140 = vunpack.c.l.b16 %v38
  %v141 = vunpack.c.l.b16 %v39
  %v142 = vunpack.c.l.b16 %v40
  %v143 = vunpack.c.l.b16 %v41
  %v144 = vunpack.c.l.b16 %v42
  %v145 = vunpack.c.l.b16 %v43
  %v146 = vunpack.c.l.b16 %v44
  %v147 = vunpack.c.l.b16 %v45
  %v148 = vunpack.c.l.b16 %v46
  %v149 = vunpack.c.l.b16 %v47
  %v150 = vunpack.c.l.b16 %v48
  %v151 = vunpack.c.l.b16 %v49
  %v152 = vunpack.c.l.b16 %v50
  %v153 = vunpack.c.l.b16 %v51
  %v154 = vunpack.c.l.b16 %v52
  %v155 = vunpack.c.l.b16 %v53
  %v156 = vunpack.c.l.b16 %v54
  %v157 = vunpack.c.l.b16 %v55
  %v158 = vunpack.c.l.b16 %v56
  %v159 = vunpack.c.l.b16 %v57
  %v160 = vunpack.c.l.b16 %v58
  %v161 = vunpack.c.l.b16 %v59
  %v162 = vunpack.c.l.b16 %v60
  %v163 = vunpack.c.l.b16 %v61
  %v164 = vpack.c.b16 %v129, %v128
  %v165 = vpack.c.b16 %v131, %v130
  %v166 = vpack.c.b16 %v133, %v132
  %v167 = vpack.c.b16 %v135, %v134
  %v168 = vpack.c.b16 %v137, %v136
  %v169 = vpack.c.b16 %v139, %v138
  %v170 = vpack.c.b16 %v141, %v140
  %v171 = vpack.c.b16 %v143, %v142
  %v172 = vpack.c.b16 %v145, %v144
  %v173 = vpack.c.b16 %v147, %v146
  %v174 = vpack.c.b16 %v149, %v148
  %v175 = vpack.c.b16 %v151, %v150
  %v176 = vpack.c.b16 %v153, %v152
  %v177 = vpack.c.b16 %v155, %v154
  %v178 = vpack.c.b16 %v157, %v156
  %v179 = vpack.c.b16 %v159, %v158
  %v180 = vpack.c.b16 %v161, %v160
  %v181 = vpack.c.b16 %v163, %v162
  %vm200 = vcmask 261120
  %v202 = vsel %vm200, %v84, 0
  %v205 = vsel %vm200, %v87, 0
  %207 = vmatprep.subr.bf16.mxu0 0
  %208 = vmatpush1.bf16.msra.mxu0 %v164
  %209 = vmatprep.subr.bf16.mxu0 0
  %210 = vmatpush1.bf16.msra.mxu0 %v165
  %211 = vmatprep.subr.bf16.mxu0 0
  %212 = vmatpush1.bf16.msra.mxu0 %v166
  %213 = vmatprep.subr.bf16.mxu0 0
  %214 = vmatpush1.bf16.msra.mxu0 %v167
  %215 = vmatprep.subr.bf16.mxu0 0
  %216 = vmatpush1.bf16.msra.mxu0 %v168
  %217 = vmatprep.subr.bf16.mxu0 0
  %218 = vmatpush1.bf16.msra.mxu0 %v169
  %219 = vmatprep.subr.bf16.mxu0 0
  %220 = vmatpush1.bf16.msra.mxu0 %v170
  %221 = vmatprep.subr.bf16.mxu0 0
  %222 = vmatpush1.bf16.msra.mxu0 %v171
  %223 = vmatprep.subr.bf16.mxu0 0
  %224 = vmatpush1.bf16.msra.mxu0 %v172
  %225 = vmatprep.subr.bf16.mxu0 0
  %226 = vmatpush1.bf16.msra.mxu0 %v173
  %227 = vmatprep.subr.bf16.mxu0 0
  %228 = vmatpush1.bf16.msra.mxu0 %v174
  %229 = vmatprep.subr.bf16.mxu0 0
  %230 = vmatpush1.bf16.msra.mxu0 %v175
  %231 = vmatprep.subr.bf16.mxu0 0
  %232 = vmatpush1.bf16.msra.mxu0 %v176
  %233 = vmatprep.subr.bf16.mxu0 0
  %234 = vmatpush1.bf16.msra.mxu0 %v177
  %235 = vmatprep.subr.bf16.mxu0 0
  %236 = vmatpush1.bf16.msra.mxu0 %v178
  %237 = vmatprep.subr.bf16.mxu0 0
  %238 = vmatpush1.bf16.msra.mxu0 %v179
  %239 = vmatprep.mubr.bf16.mxu0 %v83
  %240 = vmatmul.mubr.bf16.gmra.mrb[0].mxu0 %v82
  %v241 = vpop.f32.mrb[0].mxu0
  %v242 = vadd.f32 0.0, %v241
  %v243 = vpop.f32.mrb[0].mxu0
  %v244 = vpop.f32.mrb[0].mxu0
  %v245 = vadd.f32 0.0, %v244
  %v246 = vpop.f32.mrb[0].mxu0
  %247 = vmatprep.mubr.bf16.mxu0 %v86
  %248 = vmatmul.mubr.bf16.gmra.mrb[0].mxu0 %v85
  %v249 = vpop.f32.mrb[0].mxu0
  %v250 = vadd.f32 0.0, %v249
  %v251 = vpop.f32.mrb[0].mxu0
  %v252 = vpop.f32.mrb[0].mxu0
  %v253 = vadd.f32 0.0, %v252
  %v254 = vpop.f32.mrb[0].mxu0
  %255 = vdwg.mxu0
  %256 = vmatprep.subr.bf16.mxu0 0
  %257 = vmatpush1.bf16.msra.mxu0 %v180
  %258 = vmatprep.subr.bf16.mxu0 0
  %259 = vmatpush1.bf16.msra.mxu0 %v181
  %260 = vmatprep.subr.bf16.mxu0 0
  %261 = vmatpush1.bf16.msra.mxu0 0
  %262 = vmatprep.subr.bf16.mxu0 0
  %263 = vmatpush1.bf16.msra.mxu0 0
  %264 = vmatprep.subr.bf16.mxu0 0
  %265 = vmatpush1.bf16.msra.mxu0 0
  %266 = vmatprep.subr.bf16.mxu0 0
  %267 = vmatpush1.bf16.msra.mxu0 0
  %268 = vmatprep.subr.bf16.mxu0 0
  %269 = vmatpush1.bf16.msra.mxu0 0
  %270 = vmatprep.subr.bf16.mxu0 0
  %271 = vmatpush1.bf16.msra.mxu0 0
  %272 = vmatprep.subr.bf16.mxu0 0
  %273 = vmatpush1.bf16.msra.mxu0 0
  %274 = vmatprep.subr.bf16.mxu0 0
  %275 = vmatpush1.bf16.msra.mxu0 0
  %276 = vmatprep.subr.bf16.mxu0 0
  %277 = vmatpush1.bf16.msra.mxu0 0
  %278 = vmatprep.subr.bf16.mxu0 0
  %279 = vmatpush1.bf16.msra.mxu0 0
  %280 = vmatprep.subr.bf16.mxu0 0
  %281 = vmatpush1.bf16.msra.mxu0 0
  %282 = vmatprep.subr.bf16.mxu0 0
  %283 = vmatpush1.bf16.msra.mxu0 0
  %284 = vmatprep.subr.bf16.mxu0 0
  %285 = vmatpush1.bf16.msra.mxu0 0
  %286 = vmatprep.subr.bf16.mxu0 0
  %287 = vmatpush1.bf16.msra.mxu0 0
  %288 = vmatprep.mubr.bf16.mxu0 0
  %289 = vmatmul.mubr.bf16.gmra.mrb[0].mxu0 %v202
  %v290 = vpop.f32.mrb[0].mxu0
  %v291 = vadd.f32 %v242, %v290
  %v292 = vpop.f32.mrb[0].mxu0
  %v293 = vpop.f32.mrb[0].mxu0
  %v294 = vadd.f32 %v245, %v293
  %v295 = vpop.f32.mrb[0].mxu0
  %296 = vmatprep.mubr.bf16.mxu0 0
  %297 = vmatmul.mubr.bf16.gmra.mrb[0].mxu0 %v205
  %v298 = vpop.f32.mrb[0].mxu0
  %v299 = vadd.f32 %v250, %v298
  %v300 = vpop.f32.mrb[0].mxu0
  %v301 = vpop.f32.mrb[0].mxu0
  %v302 = vadd.f32 %v253, %v301
  %v303 = vpop.f32.mrb[0].mxu0
  %304 = vdwg.mxu0
  %v305 = vld [vmem:[%s2] sm:$0x1]
  %v307 = vlaneseq
  %v308 = vshrl.u32 %v307, 7
  %v309 = vsub.s32 0, %v308
  %v310 = vrot.slane %v305, %v309
  %v312 = vmul.f32 %v291, %v310
  %v313 = vmul.f32 %v294, %v310
  %v314 = vmul.f32 %v299, %v310
  %v315 = vmul.f32 %v302, %v310
  %v316 = vld [vmem:[%s3] sm:$0x1]
  %v318 = vlaneseq
  %v319 = vshrl.u32 %v318, 7
  %v320 = vsub.s32 0, %v319
  %v321 = vrot.slane %v316, %v320
  %v323 = vadd.f32 %v312, %v321
  %v324 = vadd.f32 %v313, %v321
  %v325 = vadd.f32 %v314, %v321
  %v326 = vadd.f32 %v315, %v321
  %v327 = vmax.f32 %v323, 0.0
  %v328 = vmax.f32 %v324, 0.0
  %v329 = vmax.f32 %v325, 0.0
  %v330 = vmax.f32 %v326, 0.0
  %331 = vst.msk [vmem:[%s4] sm:$0xff] %vm200, %v327
  %332 = vst.msk [vmem:[%s4 + $0x8] sm:$0xff] %vm200, %v328
  %333 = vst.msk [vmem:[%s4 + $0x10] sm:$0xff] %vm200, %v329
  %334 = vst.msk [vmem:[%s4 + $0x18] sm:$0xff] %vm200, %v330
  // Predicated region
  $region18: #{model_conv_unet_forward.18} parent=0 // pred_check
    _
  $region19: #{model_conv_unet_forward.18} parent=0 // pred_check_branch
    %336 = sbr.rel (0) target = $region21
  $region20: #{model_conv_unet_forward.18} parent=0 // pred_region
    _
  $region21: #{model_conv_unet_forward.18} parent=0 // pred_fallthru
    _
  // Predicated region
  $region22: #{model_conv_unet_forward.18} parent=0 // pred_check
    _
  $region23: #{model_conv_unet_forward.18} parent=0 // pred_check_branch
    %338 = sbr.rel (0) target = $region25
  $region24: #{model_conv_unet_forward.18} parent=0 // pred_region
    _
  $region25: #{model_conv_unet_forward.18} parent=0 // pred_fallthru
    _

// kernel: model_conv_unet_forward.19
$region0: #{model_conv_unet_forward.19}
  #allocation0 [shape = 'u32[]', space=smem, size = 0x4, offset = 0x4, fixed_abs, tag = 'smem constant byte address 0x4 - core index']
  #allocation1 [shape = 'u32[144,128]{1,0:T(1,128)}', space=vmem, size = 0x12000, scoped, tag = 'internal scratch']
  %s0 = inlined_call_operand.vmem [shape: bf16[32,288], index: 0, kind: input, shape index: {}]
  %s1 = inlined_call_operand.vmem [shape: bf16[288,64], index: 1, kind: input, shape index: {}]
  %s2 = inlined_call_operand.vmem [shape: f32[1,64], index: 2, kind: input, shape index: {}]
  %s3 = inlined_call_operand.vmem [shape: f32[1,64], index: 3, kind: input, shape index: {}]
  %s4 = inlined_call_operand.vmem [shape: f32[32,64], index: 4, kind: output, shape index: {}]
  %s5 = sld [smem:[#allocation0]]
  $region26: #{model_conv_unet_forward.19} parent=0
    _
  %s7 = ssub.s32 1, %s5
  %s8 = scalar_select 0, %s7, %s5
  // Predicated region
  $region2: #{model_conv_unet_forward.19} parent=0 // pred_check
    _
  $region3: #{model_conv_unet_forward.19} parent=0 // pred_check_branch
    %10 = sbr.rel (0) target = $region5
  $region4: #{model_conv_unet_forward.19} parent=0 // pred_region
    _
  $region5: #{model_conv_unet_forward.19} parent=0 // pred_fallthru
    _
  // Predicated region
  $region6: #{model_conv_unet_forward.19} parent=0 // pred_check
    _
  $region7: #{model_conv_unet_forward.19} parent=0 // pred_check_branch
    %12 = sbr.rel (0) target = $region9
  $region8: #{model_conv_unet_forward.19} parent=0 // pred_region
    _
  $region9: #{model_conv_unet_forward.19} parent=0 // pred_fallthru
    _
  // Predicated region
  $region10: #{model_conv_unet_forward.19} parent=0 // pred_check
    _
  $region11: #{model_conv_unet_forward.19} parent=0 // pred_check_branch
    %14 = sbr.rel (0) target = $region13
  $region12: #{model_conv_unet_forward.19} parent=0 // pred_region
    _
  $region13: #{model_conv_unet_forward.19} parent=0 // pred_fallthru
    _
  // Predicated region
  $region14: #{model_conv_unet_forward.19} parent=0 // pred_check
    _
  $region15: #{model_conv_unet_forward.19} parent=0 // pred_check_branch
    %16 = sbr.rel (0) target = $region17
  $region16: #{model_conv_unet_forward.19} parent=0 // pred_region
    _
  $region17: #{model_conv_unet_forward.19} parent=0 // pred_fallthru
    _
  %v18 = vld [vmem:[%s0] sm:$0xff]
  %v19 = vld [vmem:[%s0 + $0x8] sm:$0xf]
  %v20 = vld [vmem:[%s0 + $0xc] sm:$0xff]
  %v21 = vld [vmem:[%s0 + $0x14] sm:$0xf]
  %v22 = vld [vmem:[%s0 + $0x18] sm:$0xff]
  %v23 = vld [vmem:[%s0 + $0x20] sm:$0xf]
  %v24 = vld [vmem:[%s0 + $0x24] sm:$0xff]
  %v25 = vld [vmem:[%s0 + $0x2c] sm:$0xf]
  %v26 = vld [vmem:[%s1] sm:$0xf]
  %v27 = vld [vmem:[%s1 + $0x4] sm:$0xf]
  %v28 = vld [vmem:[%s1 + $0x8] sm:$0xf]
  %v29 = vld [vmem:[%s1 + $0xc] sm:$0xf]
  %v30 = vld [vmem:[%s1 + $0x10] sm:$0xf]
  %v31 = vld [vmem:[%s1 + $0x14] sm:$0xf]
  %v32 = vld [vmem:[%s1 + $0x18] sm:$0xf]
  %v33 = vld [vmem:[%s1 + $0x1c] sm:$0xf]
  %v34 = vld [vmem:[%s1 + $0x20] sm:$0xf]
  %v35 = vld [vmem:[%s1 + $0x24] sm:$0xf]
  %v36 = vld [vmem:[%s1 + $0x28] sm:$0xf]
  %v37 = vld [vmem:[%s1 + $0x2c] sm:$0xf]
  %v38 = vld [vmem:[%s1 + $0x30] sm:$0xf]
  %v39 = vld [vmem:[%s1 + $0x34] sm:$0xf]
  %v40 = vld [vmem:[%s1 + $0x38] sm:$0xf]
  %v41 = vld [vmem:[%s1 + $0x3c] sm:$0xf]
  %v42 = vld [vmem:[%s1 + $0x40] sm:$0xf]
  %v43 = vld [vmem:[%s1 + $0x44] sm:$0xf]
  %v44 = vld [vmem:[%s1 + $0x48] sm:$0xf]
  %v45 = vld [vmem:[%s1 + $0x4c] sm:$0xf]
  %v46 = vld [vmem:[%s1 + $0x50] sm:$0xf]
  %v47 = vld [vmem:[%s1 + $0x54] sm:$0xf]
  %v48 = vld [vmem:[%s1 + $0x58] sm:$0xf]
  %v49 = vld [vmem:[%s1 + $0x5c] sm:$0xf]
  %v50 = vld [vmem:[%s1 + $0x60] sm:$0xf]
  %v51 = vld [vmem:[%s1 + $0x64] sm:$0xf]
  %v52 = vld [vmem:[%s1 + $0x68] sm:$0xf]
  %v53 = vld [vmem:[%s1 + $0x6c] sm:$0xf]
  %v54 = vld [vmem:[%s1 + $0x70] sm:$0xf]
  %v55 = vld [vmem:[%s1 + $0x74] sm:$0xf]
  %v56 = vld [vmem:[%s1 + $0x78] sm:$0xf]
  %v57 = vld [vmem:[%s1 + $0x7c] sm:$0xf]
  %v58 = vld [vmem:[%s1 + $0x80] sm:$0xf]
  %v59 = vld [vmem:[%s1 + $0x84] sm:$0xf]
  %v60 = vld [vmem:[%s1 + $0x88] sm:$0xf]
  %v61 = vld [vmem:[%s1 + $0x8c] sm:$0xf]
  %v70 = vunpack.c.l.b16 %v18
  %v71 = vunpack.c.h.b16 %v18
  %v72 = vunpack.c.l.b16 %v19
  %v73 = vunpack.c.l.b16 %v20
  %v74 = vunpack.c.h.b16 %v20
  %v75 = vunpack.c.l.b16 %v21
  %v76 = vunpack.c.l.b16 %v22
  %v77 = vunpack.c.h.b16 %v22
  %v78 = vunpack.c.l.b16 %v23
  %v79 = vunpack.c.l.b16 %v24
  %v80 = vunpack.c.h.b16 %v24
  %v81 = vunpack.c.l.b16 %v25
  %v82 = vpack.c.b16 %v73, %v70
  %v83 = vpack.c.b16 %v74, %v71
  %v84 = vpack.c.b16 %v75, %v72
  %v85 = vpack.c.b16 %v79, %v76
  %v86 = vpack.c.b16 %v80, %v77
  %v87 = vpack.c.b16 %v81, %v78
  %v128 = vunpack.c.l.b16 %v26
  %v129 = vunpack.c.l.b16 %v27
  %v130 = vunpack.c.l.b16 %v28
  %v131 = vunpack.c.l.b16 %v29
  %v132 = vunpack.c.l.b16 %v30
  %v133 = vunpack.c.l.b16 %v31
  %v134 = vunpack.c.l.b16 %v32
  %v135 = vunpack.c.l.b16 %v33
  %v136 = vunpack.c.l.b16 %v34
  %v137 = vunpack.c.l.b16 %v35
  %v138 = vunpack.c.l.b16 %v36
  %v139 = vunpack.c.l.b16 %v37
  %v140 = vunpack.c.l.b16 %v38
  %v141 = vunpack.c.l.b16 %v39
  %v142 = vunpack.c.l.b16 %v40
  %v143 = vunpack.c.l.b16 %v41
  %v144 = vunpack.c.l.b16 %v42
  %v145 = vunpack.c.l.b16 %v43
  %v146 = vunpack.c.l.b16 %v44
  %v147 = vunpack.c.l.b16 %v45
  %v148 = vunpack.c.l.b16 %v46
  %v149 = vunpack.c.l.b16 %v47
  %v150 = vunpack.c.l.b16 %v48
  %v151 = vunpack.c.l.b16 %v49
  %v152 = vunpack.c.l.b16 %v50
  %v153 = vunpack.c.l.b16 %v51
  %v154 = vunpack.c.l.b16 %v52
  %v155 = vunpack.c.l.b16 %v53
  %v156 = vunpack.c.l.b16 %v54
  %v157 = vunpack.c.l.b16 %v55
  %v158 = vunpack.c.l.b16 %v56
  %v159 = vunpack.c.l.b16 %v57
  %v160 = vunpack.c.l.b16 %v58
  %v161 = vunpack.c.l.b16 %v59
  %v162 = vunpack.c.l.b16 %v60
  %v163 = vunpack.c.l.b16 %v61
  %v164 = vpack.c.b16 %v129, %v128
  %v165 = vpack.c.b16 %v131, %v130
  %v166 = vpack.c.b16 %v133, %v132
  %v167 = vpack.c.b16 %v135, %v134
  %v168 = vpack.c.b16 %v137, %v136
  %v169 = vpack.c.b16 %v139, %v138
  %v170 = vpack.c.b16 %v141, %v140
  %v171 = vpack.c.b16 %v143, %v142
  %v172 = vpack.c.b16 %v145, %v144
  %v173 = vpack.c.b16 %v147, %v146
  %v174 = vpack.c.b16 %v149, %v148
  %v175 = vpack.c.b16 %v151, %v150
  %v176 = vpack.c.b16 %v153, %v152
  %v177 = vpack.c.b16 %v155, %v154
  %v178 = vpack.c.b16 %v157, %v156
  %v179 = vpack.c.b16 %v159, %v158
  %v180 = vpack.c.b16 %v161, %v160
  %v181 = vpack.c.b16 %v163, %v162
  %vm200 = vcmask 261120
  %v202 = vsel %vm200, %v84, 0
  %v205 = vsel %vm200, %v87, 0
  %207 = vmatprep.subr.bf16.mxu0 0
  %208 = vmatpush1.bf16.msra.mxu0 %v164
  %209 = vmatprep.subr.bf16.mxu0 0
  %210 = vmatpush1.bf16.msra.mxu0 %v165
  %211 = vmatprep.subr.bf16.mxu0 0
  %212 = vmatpush1.bf16.msra.mxu0 %v166
  %213 = vmatprep.subr.bf16.mxu0 0
  %214 = vmatpush1.bf16.msra.mxu0 %v167
  %215 = vmatprep.subr.bf16.mxu0 0
  %216 = vmatpush1.bf16.msra.mxu0 %v168
  %217 = vmatprep.subr.bf16.mxu0 0
  %218 = vmatpush1.bf16.msra.mxu0 %v169
  %219 = vmatprep.subr.bf16.mxu0 0
  %220 = vmatpush1.bf16.msra.mxu0 %v170
  %221 = vmatprep.subr.bf16.mxu0 0
  %222 = vmatpush1.bf16.msra.mxu0 %v171
  %223 = vmatprep.subr.bf16.mxu0 0
  %224 = vmatpush1.bf16.msra.mxu0 %v172
  %225 = vmatprep.subr.bf16.mxu0 0
  %226 = vmatpush1.bf16.msra.mxu0 %v173
  %227 = vmatprep.subr.bf16.mxu0 0
  %228 = vmatpush1.bf16.msra.mxu0 %v174
  %229 = vmatprep.subr.bf16.mxu0 0
  %230 = vmatpush1.bf16.msra.mxu0 %v175
  %231 = vmatprep.subr.bf16.mxu0 0
  %232 = vmatpush1.bf16.msra.mxu0 %v176
  %233 = vmatprep.subr.bf16.mxu0 0
  %234 = vmatpush1.bf16.msra.mxu0 %v177
  %235 = vmatprep.subr.bf16.mxu0 0
  %236 = vmatpush1.bf16.msra.mxu0 %v178
  %237 = vmatprep.subr.bf16.mxu0 0
  %238 = vmatpush1.bf16.msra.mxu0 %v179
  %239 = vmatprep.mubr.bf16.mxu0 %v83
  %240 = vmatmul.mubr.bf16.gmra.mrb[0].mxu0 %v82
  %v241 = vpop.f32.mrb[0].mxu0
  %v242 = vadd.f32 0.0, %v241
  %v243 = vpop.f32.mrb[0].mxu0
  %v244 = vpop.f32.mrb[0].mxu0
  %v245 = vadd.f32 0.0, %v244
  %v246 = vpop.f32.mrb[0].mxu0
  %247 = vmatprep.mubr.bf16.mxu0 %v86
  %248 = vmatmul.mubr.bf16.gmra.mrb[0].mxu0 %v85
  %v249 = vpop.f32.mrb[0].mxu0
  %v250 = vadd.f32 0.0, %v249
  %v251 = vpop.f32.mrb[0].mxu0
  %v252 = vpop.f32.mrb[0].mxu0
  %v253 = vadd.f32 0.0, %v252
  %v254 = vpop.f32.mrb[0].mxu0
  %255 = vdwg.mxu0
  %256 = vmatprep.subr.bf16.mxu0 0
  %257 = vmatpush1.bf16.msra.mxu0 %v180
  %258 = vmatprep.subr.bf16.mxu0 0
  %259 = vmatpush1.bf16.msra.mxu0 %v181
  %260 = vmatprep.subr.bf16.mxu0 0
  %261 = vmatpush1.bf16.msra.mxu0 0
  %262 = vmatprep.subr.bf16.mxu0 0
  %263 = vmatpush1.bf16.msra.mxu0 0
  %264 = vmatprep.subr.bf16.mxu0 0
  %265 = vmatpush1.bf16.msra.mxu0 0
  %266 = vmatprep.subr.bf16.mxu0 0
  %267 = vmatpush1.bf16.msra.mxu0 0
  %268 = vmatprep.subr.bf16.mxu0 0
  %269 = vmatpush1.bf16.msra.mxu0 0
  %270 = vmatprep.subr.bf16.mxu0 0
  %271 = vmatpush1.bf16.msra.mxu0 0
  %272 = vmatprep.subr.bf16.mxu0 0
  %273 = vmatpush1.bf16.msra.mxu0 0
  %274 = vmatprep.subr.bf16.mxu0 0
  %275 = vmatpush1.bf16.msra.mxu0 0
  %276 = vmatprep.subr.bf16.mxu0 0
  %277 = vmatpush1.bf16.msra.mxu0 0
  %278 = vmatprep.subr.bf16.mxu0 0
  %279 = vmatpush1.bf16.msra.mxu0 0
  %280 = vmatprep.subr.bf16.mxu0 0
  %281 = vmatpush1.bf16.msra.mxu0 0
  %282 = vmatprep.subr.bf16.mxu0 0
  %283 = vmatpush1.bf16.msra.mxu0 0
  %284 = vmatprep.subr.bf16.mxu0 0
  %285 = vmatpush1.bf16.msra.mxu0 0
  %286 = vmatprep.subr.bf16.mxu0 0
  %287 = vmatpush1.bf16.msra.mxu0 0
  %288 = vmatprep.mubr.bf16.mxu0 0
  %289 = vmatmul.mubr.bf16.gmra.mrb[0].mxu0 %v202
  %v290 = vpop.f32.mrb[0].mxu0
  %v291 = vadd.f32 %v242, %v290
  %v292 = vpop.f32.mrb[0].mxu0
  %v293 = vpop.f32.mrb[0].mxu0
  %v294 = vadd.f32 %v245, %v293
  %v295 = vpop.f32.mrb[0].mxu0
  %296 = vmatprep.mubr.bf16.mxu0 0
  %297 = vmatmul.mubr.bf16.gmra.mrb[0].mxu0 %v205
  %v298 = vpop.f32.mrb[0].mxu0
  %v299 = vadd.f32 %v250, %v298
  %v300 = vpop.f32.mrb[0].mxu0
  %v301 = vpop.f32.mrb[0].mxu0
  %v302 = vadd.f32 %v253, %v301
  %v303 = vpop.f32.mrb[0].mxu0
  %304 = vdwg.mxu0
  %v305 = vld [vmem:[%s2] sm:$0x1]
  %v307 = vlaneseq
  %v308 = vshrl.u32 %v307, 7
  %v309 = vsub.s32 0, %v308
  %v310 = vrot.slane %v305, %v309
  %v312 = vmul.f32 %v291, %v310
  %v313 = vmul.f32 %v294, %v310
  %v314 = vmul.f32 %v299, %v310
  %v315 = vmul.f32 %v302, %v310
  %v316 = vld [vmem:[%s3] sm:$0x1]
  %v318 = vlaneseq
  %v319 = vshrl.u32 %v318, 7
  %v320 = vsub.s32 0, %v319
  %v321 = vrot.slane %v316, %v320
  %v323 = vadd.f32 %v312, %v321
  %v324 = vadd.f32 %v313, %v321
  %v325 = vadd.f32 %v314, %v321
  %v326 = vadd.f32 %v315, %v321
  %v327 = vmax.f32 %v323, 0.0
  %v328 = vmax.f32 %v324, 0.0
  %v329 = vmax.f32 %v325, 0.0
  %v330 = vmax.f32 %v326, 0.0
  %vm331 = vcmask 523264
  %332 = vst.msk [vmem:[%s4] sm:$0xff] %vm331, %v327
  %333 = vst.msk [vmem:[%s4 + $0x8] sm:$0xff] %vm331, %v328
  %334 = vst.msk [vmem:[%s4 + $0x10] sm:$0xff] %vm331, %v329
  %335 = vst.msk [vmem:[%s4 + $0x18] sm:$0xff] %vm331, %v330
  // Predicated region
  $region18: #{model_conv_unet_forward.19} parent=0 // pred_check
    _
  $region19: #{model_conv_unet_forward.19} parent=0 // pred_check_branch
    %337 = sbr.rel (0) target = $region21
  $region20: #{model_conv_unet_forward.19} parent=0 // pred_region
    _
  $region21: #{model_conv_unet_forward.19} parent=0 // pred_fallthru
    _
  // Predicated region
  $region22: #{model_conv_unet_forward.19} parent=0 // pred_check
    _
  $region23: #{model_conv_unet_forward.19} parent=0 // pred_check_branch
    %339 = sbr.rel (0) target = $region25
  $region24: #{model_conv_unet_forward.19} parent=0 // pred_region
    _
  $region25: #{model_conv_unet_forward.19} parent=0 // pred_fallthru
    _

// kernel: model_conv_unet_forward.20
$region0: #{model_conv_unet_forward.20}
  #allocation0 [shape = 'u32[]', space=smem, size = 0x4, offset = 0x4, fixed_abs, tag = 'smem constant byte address 0x4 - core index']
  #allocation1 [shape = 'u32[144,128]{1,0:T(1,128)}', space=vmem, size = 0x12000, scoped, tag = 'internal scratch']
  %s0 = inlined_call_operand.vmem [shape: bf16[16,576], index: 0, kind: input, shape index: {}]
  %s1 = inlined_call_operand.vmem [shape: bf16[576,64], index: 1, kind: input, shape index: {}]
  %s2 = inlined_call_operand.vmem [shape: f32[1,64], index: 2, kind: input, shape index: {}]
  %s3 = inlined_call_operand.vmem [shape: f32[1,64], index: 3, kind: input, shape index: {}]
  %s4 = inlined_call_operand.vmem [shape: f32[16,64], index: 4, kind: output, shape index: {}]
  %s5 = sld [smem:[#allocation0]]
  $region26: #{model_conv_unet_forward.20} parent=0
    _
  %s7 = ssub.s32 1, %s5
  %s8 = scalar_select 0, %s7, %s5
  // Predicated region
  $region2: #{model_conv_unet_forward.20} parent=0 // pred_check
    _
  $region3: #{model_conv_unet_forward.20} parent=0 // pred_check_branch
    %10 = sbr.rel (0) target = $region5
  $region4: #{model_conv_unet_forward.20} parent=0 // pred_region
    _
  $region5: #{model_conv_unet_forward.20} parent=0 // pred_fallthru
    _
  // Predicated region
  $region6: #{model_conv_unet_forward.20} parent=0 // pred_check
    _
  $region7: #{model_conv_unet_forward.20} parent=0 // pred_check_branch
    %12 = sbr.rel (0) target = $region9
  $region8: #{model_conv_unet_forward.20} parent=0 // pred_region
    _
  $region9: #{model_conv_unet_forward.20} parent=0 // pred_fallthru
    _
  // Predicated region
  $region10: #{model_conv_unet_forward.20} parent=0 // pred_check
    _
  $region11: #{model_conv_unet_forward.20} parent=0 // pred_check_branch
    %14 = sbr.rel (0) target = $region13
  $region12: #{model_conv_unet_forward.20} parent=0 // pred_region
    _
  $region13: #{model_conv_unet_forward.20} parent=0 // pred_fallthru
    _
  // Predicated region
  $region14: #{model_conv_unet_forward.20} parent=0 // pred_check
    _
  $region15: #{model_conv_unet_forward.20} parent=0 // pred_check_branch
    %16 = sbr.rel (0) target = $region17
  $region16: #{model_conv_unet_forward.20} parent=0 // pred_region
    _
  $region17: #{model_conv_unet_forward.20} parent=0 // pred_fallthru
    _
  %v18 = vld [vmem:[%s0] sm:$0xff]
  %v19 = vld [vmem:[%s0 + $0x8] sm:$0xff]
  %v20 = vld [vmem:[%s0 + $0x10] sm:$0xf]
  %v21 = vld [vmem:[%s0 + $0x14] sm:$0xff]
  %v22 = vld [vmem:[%s0 + $0x1c] sm:$0xff]
  %v23 = vld [vmem:[%s0 + $0x24] sm:$0xf]
  %v24 = vld [vmem:[%s1] sm:$0xf]
  %v25 = vld [vmem:[%s1 + $0x4] sm:$0xf]
  %v26 = vld [vmem:[%s1 + $0x8] sm:$0xf]
  %v27 = vld [vmem:[%s1 + $0xc] sm:$0xf]
  %v28 = vld [vmem:[%s1 + $0x10] sm:$0xf]
  %v29 = vld [vmem:[%s1 + $0x14] sm:$0xf]
  %v30 = vld [vmem:[%s1 + $0x18] sm:$0xf]
  %v31 = vld [vmem:[%s1 + $0x1c] sm:$0xf]
  %v32 = vld [vmem:[%s1 + $0x20] sm:$0xf]
  %v33 = vld [vmem:[%s1 + $0x24] sm:$0xf]
  %v34 = vld [vmem:[%s1 + $0x28] sm:$0xf]
  %v35 = vld [vmem:[%s1 + $0x2c] sm:$0xf]
  %v36 = vld [vmem:[%s1 + $0x30] sm:$0xf]
  %v37 = vld [vmem:[%s1 + $0x34] sm:$0xf]
  %v38 = vld [vmem:[%s1 + $0x38] sm:$0xf]
  %v39 = vld [vmem:[%s1 + $0x3c] sm:$0xf]
  %v40 = vld [vmem:[%s1 + $0x40] sm:$0xf]
  %v41 = vld [vmem:[%s1 + $0x44] sm:$0xf]
  %v42 = vld [vmem:[%s1 + $0x48] sm:$0xf]
  %v43 = vld [vmem:[%s1 + $0x4c] sm:$0xf]
  %v44 = vld [vmem:[%s1 + $0x50] sm:$0xf]
  %v45 = vld [vmem:[%s1 + $0x54] sm:$0xf]
  %v46 = vld [vmem:[%s1 + $0x58] sm:$0xf]
  %v47 = vld [vmem:[%s1 + $0x5c] sm:$0xf]
  %v48 = vld [vmem:[%s1 + $0x60] sm:$0xf]
  %v49 = vld [vmem:[%s1 + $0x64] sm:$0xf]
  %v50 = vld [vmem:[%s1 + $0x68] sm:$0xf]
  %v51 = vld [vmem:[%s1 + $0x6c] sm:$0xf]
  %v52 = vld [vmem:[%s1 + $0x70] sm:$0xf]
  %v53 = vld [vmem:[%s1 + $0x74] sm:$0xf]
  %v54 = vld [vmem:[%s1 + $0x78] sm:$0xf]
  %v55 = vld [vmem:[%s1 + $0x7c] sm:$0xf]
  %v56 = vld [vmem:[%s1 + $0x80] sm:$0xf]
  %v57 = vld [vmem:[%s1 + $0x84] sm:$0xf]
  %v58 = vld [vmem:[%s1 + $0x88] sm:$0xf]
  %v59 = vld [vmem:[%s1 + $0x8c] sm:$0xf]
  %v60 = vld [vmem:[%s1 + $0x90] sm:$0xf]
  %v61 = vld [vmem:[%s1 + $0x94] sm:$0xf]
  %v62 = vld [vmem:[%s1 + $0x98] sm:$0xf]
  %v63 = vld [vmem:[%s1 + $0x9c] sm:$0xf]
  %v64 = vld [vmem:[%s1 + $0xa0] sm:$0xf]
  %v65 = vld [vmem:[%s1 + $0xa4] sm:$0xf]
  %v66 = vld [vmem:[%s1 + $0xa8] sm:$0xf]
  %v67 = vld [vmem:[%s1 + $0xac] sm:$0xf]
  %v68 = vld [vmem:[%s1 + $0xb0] sm:$0xf]
  %v69 = vld [vmem:[%s1 + $0xb4] sm:$0xf]
  %v70 = vld [vmem:[%s1 + $0xb8] sm:$0xf]
  %v71 = vld [vmem:[%s1 + $0xbc] sm:$0xf]
  %v72 = vld [vmem:[%s1 + $0xc0] sm:$0xf]
  %v73 = vld [vmem:[%s1 + $0xc4] sm:$0xf]
  %v74 = vld [vmem:[%s1 + $0xc8] sm:$0xf]
  %v75 = vld [vmem:[%s1 + $0xcc] sm:$0xf]
  %v76 = vld [vmem:[%s1 + $0xd0] sm:$0xf]
  %v77 = vld [vmem:[%s1 + $0xd4] sm:$0xf]
  %v78 = vld [vmem:[%s1 + $0xd8] sm:$0xf]
  %v79 = vld [vmem:[%s1 + $0xdc] sm:$0xf]
  %v80 = vld [vmem:[%s1 + $0xe0] sm:$0xf]
  %v81 = vld [vmem:[%s1 + $0xe4] sm:$0xf]
  %v82 = vld [vmem:[%s1 + $0xe8] sm:$0xf]
  %v83 = vld [vmem:[%s1 + $0xec] sm:$0xf]
  %v84 = vld [vmem:[%s1 + $0xf0] sm:$0xf]
  %v85 = vld [vmem:[%s1 + $0xf4] sm:$0xf]
  %v86 = vld [vmem:[%s1 + $0xf8] sm:$0xf]
  %v87 = vld [vmem:[%s1 + $0xfc] sm:$0xf]
  %v88 = vld [vmem:[%s1 + $0x100] sm:$0xf]
  %v89 = vld [vmem:[%s1 + $0x104] sm:$0xf]
  %v90 = vld [vmem:[%s1 + $0x108] sm:$0xf]
  %v91 = vld [vmem:[%s1 + $0x10c] sm:$0xf]
  %v92 = vld [vmem:[%s1 + $0x110] sm:$0xf]
  %v93 = vld [vmem:[%s1 + $0x114] sm:$0xf]
  %v94 = vld [vmem:[%s1 + $0x118] sm:$0xf]
  %v95 = vld [vmem:[%s1 + $0x11c] sm:$0xf]
  %v102 = vunpack.c.l.b16 %v18
  %v103 = vunpack.c.h.b16 %v18
  %v104 = vunpack.c.l.b16 %v19
  %v105 = vunpack.c.h.b16 %v19
  %v106 = vunpack.c.l.b16 %v20
  %v107 = vunpack.c.l.b16 %v21
  %v108 = vunpack.c.h.b16 %v21
  %v109 = vunpack.c.l.b16 %v22
  %v110 = vunpack.c.h.b16 %v22
  %v111 = vunpack.c.l.b16 %v23
  %v112 = vpack.c.b16 %v107, %v102
  %v113 = vpack.c.b16 %v108, %v103
  %v114 = vpack.c.b16 %v109, %v104
  %v115 = vpack.c.b16 %v110, %v105
  %v116 = vpack.c.b16 %v111, %v106
  %v193 = vunpack.c.l.b16 %v24
  %v194 = vunpack.c.l.b16 %v25
  %v195 = vunpack.c.l.b16 %v26
  %v196 = vunpack.c.l.b16 %v27
  %v197 = vunpack.c.l.b16 %v28
  %v198 = vunpack.c.l.b16 %v29
  %v199 = vunpack.c.l.b16 %v30
  %v200 = vunpack.c.l.b16 %v31
  %v201 = vunpack.c.l.b16 %v32
  %v202 = vunpack.c.l.b16 %v33
  %v203 = vunpack.c.l.b16 %v34
  %v204 = vunpack.c.l.b16 %v35
  %v205 = vunpack.c.l.b16 %v36
  %v206 = vunpack.c.l.b16 %v37
  %v207 = vunpack.c.l.b16 %v38
  %v208 = vunpack.c.l.b16 %v39
  %v209 = vunpack.c.l.b16 %v40
  %v210 = vunpack.c.l.b16 %v41
  %v211 = vunpack.c.l.b16 %v42
  %v212 = vunpack.c.l.b16 %v43
  %v213 = vunpack.c.l.b16 %v44
  %v214 = vunpack.c.l.b16 %v45
  %v215 = vunpack.c.l.b16 %v46
  %v216 = vunpack.c.l.b16 %v47
  %v217 = vunpack.c.l.b16 %v48
  %v218 = vunpack.c.l.b16 %v49
  %v219 = vunpack.c.l.b16 %v50
  %v220 = vunpack.c.l.b16 %v51
  %v221 = vunpack.c.l.b16 %v52
  %v222 = vunpack.c.l.b16 %v53
  %v223 = vunpack.c.l.b16 %v54
  %v224 = vunpack.c.l.b16 %v55
  %v225 = vunpack.c.l.b16 %v56
  %v226 = vunpack.c.l.b16 %v57
  %v227 = vunpack.c.l.b16 %v58
  %v228 = vunpack.c.l.b16 %v59
  %v229 = vunpack.c.l.b16 %v60
  %v230 = vunpack.c.l.b16 %v61
  %v231 = vunpack.c.l.b16 %v62
  %v232 = vunpack.c.l.b16 %v63
  %v233 = vunpack.c.l.b16 %v64
  %v234 = vunpack.c.l.b16 %v65
  %v235 = vunpack.c.l.b16 %v66
  %v236 = vunpack.c.l.b16 %v67
  %v237 = vunpack.c.l.b16 %v68
  %v238 = vunpack.c.l.b16 %v69
  %v239 = vunpack.c.l.b16 %v70
  %v240 = vunpack.c.l.b16 %v71
  %v241 = vunpack.c.l.b16 %v72
  %v242 = vunpack.c.l.b16 %v73
  %v243 = vunpack.c.l.b16 %v74
  %v244 = vunpack.c.l.b16 %v75
  %v245 = vunpack.c.l.b16 %v76
  %v246 = vunpack.c.l.b16 %v77
  %v247 = vunpack.c.l.b16 %v78
  %v248 = vunpack.c.l.b16 %v79
  %v249 = vunpack.c.l.b16 %v80
  %v250 = vunpack.c.l.b16 %v81
  %v251 = vunpack.c.l.b16 %v82
  %v252 = vunpack.c.l.b16 %v83
  %v253 = vunpack.c.l.b16 %v84
  %v254 = vunpack.c.l.b16 %v85
  %v255 = vunpack.c.l.b16 %v86
  %v256 = vunpack.c.l.b16 %v87
  %v257 = vunpack.c.l.b16 %v88
  %v258 = vunpack.c.l.b16 %v89
  %v259 = vunpack.c.l.b16 %v90
  %v260 = vunpack.c.l.b16 %v91
  %v261 = vunpack.c.l.b16 %v92
  %v262 = vunpack.c.l.b16 %v93
  %v263 = vunpack.c.l.b16 %v94
  %v264 = vunpack.c.l.b16 %v95
  %v265 = vpack.c.b16 %v194, %v193
  %v266 = vpack.c.b16 %v196, %v195
  %v267 = vpack.c.b16 %v198, %v197
  %v268 = vpack.c.b16 %v200, %v199
  %v269 = vpack.c.b16 %v202, %v201
  %v270 = vpack.c.b16 %v204, %v203
  %v271 = vpack.c.b16 %v206, %v205
  %v272 = vpack.c.b16 %v208, %v207
  %v273 = vpack.c.b16 %v210, %v209
  %v274 = vpack.c.b16 %v212, %v211
  %v275 = vpack.c.b16 %v214, %v213
  %v276 = vpack.c.b16 %v216, %v215
  %v277 = vpack.c.b16 %v218, %v217
  %v278 = vpack.c.b16 %v220, %v219
  %v279 = vpack.c.b16 %v222, %v221
  %v280 = vpack.c.b16 %v224, %v223
  %v281 = vpack.c.b16 %v226, %v225
  %v282 = vpack.c.b16 %v228, %v227
  %v283 = vpack.c.b16 %v230, %v229
  %v284 = vpack.c.b16 %v232, %v231
  %v285 = vpack.c.b16 %v234, %v233
  %v286 = vpack.c.b16 %v236, %v235
  %v287 = vpack.c.b16 %v238, %v237
  %v288 = vpack.c.b16 %v240, %v239
  %v289 = vpack.c.b16 %v242, %v241
  %v290 = vpack.c.b16 %v244, %v243
  %v291 = vpack.c.b16 %v246, %v245
  %v292 = vpack.c.b16 %v248, %v247
  %v293 = vpack.c.b16 %v250, %v249
  %v294 = vpack.c.b16 %v252, %v251
  %v295 = vpack.c.b16 %v254, %v253
  %v296 = vpack.c.b16 %v256, %v255
  %v297 = vpack.c.b16 %v258, %v257
  %v298 = vpack.c.b16 %v260, %v259
  %v299 = vpack.c.b16 %v262, %v261
  %v300 = vpack.c.b16 %v264, %v263
  %vm337 = vcmask 523264
  %v339 = vsel %vm337, %v116, 0
  %341 = vmatprep.subr.bf16.mxu0 0
  %342 = vmatpush1.bf16.msra.mxu0 %v265
  %343 = vmatprep.subr.bf16.mxu0 0
  %344 = vmatpush1.bf16.msra.mxu0 %v266
  %345 = vmatprep.subr.bf16.mxu0 0
  %346 = vmatpush1.bf16.msra.mxu0 %v267
  %347 = vmatprep.subr.bf16.mxu0 0
  %348 = vmatpush1.bf16.msra.mxu0 %v268
  %349 = vmatprep.subr.bf16.mxu0 0
  %350 = vmatpush1.bf16.msra.mxu0 %v269
  %351 = vmatprep.subr.bf16.mxu0 0
  %352 = vmatpush1.bf16.msra.mxu0 %v270
  %353 = vmatprep.subr.bf16.mxu0 0
  %354 = vmatpush1.bf16.msra.mxu0 %v271
  %355 = vmatprep.subr.bf16.mxu0 0
  %356 = vmatpush1.bf16.msra.mxu0 %v272
  %357 = vmatprep.subr.bf16.mxu0 0
  %358 = vmatpush1.bf16.msra.mxu0 %v273
  %359 = vmatprep.subr.bf16.mxu0 0
  %360 = vmatpush1.bf16.msra.mxu0 %v274
  %361 = vmatprep.subr.bf16.mxu0 0
  %362 = vmatpush1.bf16.msra.mxu0 %v275
  %363 = vmatprep.subr.bf16.mxu0 0
  %364 = vmatpush1.bf16.msra.mxu0 %v276
  %365 = vmatprep.subr.bf16.mxu0 0
  %366 = vmatpush1.bf16.msra.mxu0 %v277
  %367 = vmatprep.subr.bf16.mxu0 0
  %368 = vmatpush1.bf16.msra.mxu0 %v278
  %369 = vmatprep.subr.bf16.mxu0 0
  %370 = vmatpush1.bf16.msra.mxu0 %v279
  %371 = vmatprep.subr.bf16.mxu0 0
  %372 = vmatpush1.bf16.msra.mxu0 %v280
  %373 = vmatprep.mubr.bf16.mxu0 %v113
  %374 = vmatmul.mubr.bf16.gmra.mrb[0].mxu0 %v112
  %v375 = vpop.f32.mrb[0].mxu0
  %v376 = vadd.f32 0.0, %v375
  %v377 = vpop.f32.mrb[0].mxu0
  %v378 = vpop.f32.mrb[0].mxu0
  %v379 = vadd.f32 0.0, %v378
  %v380 = vpop.f32.mrb[0].mxu0
  %381 = vdwg.mxu0
  %382 = vmatprep.subr.bf16.mxu0 0
  %383 = vmatpush1.bf16.msra.mxu0 %v281
  %384 = vmatprep.subr.bf16.mxu0 0
  %385 = vmatpush1.bf16.msra.mxu0 %v282
  %386 = vmatprep.subr.bf16.mxu0 0
  %387 = vmatpush1.bf16.msra.mxu0 %v283
  %388 = vmatprep.subr.bf16.mxu0 0
  %389 = vmatpush1.bf16.msra.mxu0 %v284
  %390 = vmatprep.subr.bf16.mxu0 0
  %391 = vmatpush1.bf16.msra.mxu0 %v285
  %392 = vmatprep.subr.bf16.mxu0 0
  %393 = vmatpush1.bf16.msra.mxu0 %v286
  %394 = vmatprep.subr.bf16.mxu0 0
  %395 = vmatpush1.bf16.msra.mxu0 %v287
  %396 = vmatprep.subr.bf16.mxu0 0
  %397 = vmatpush1.bf16.msra.mxu0 %v288
  %398 = vmatprep.subr.bf16.mxu0 0
  %399 = vmatpush1.bf16.msra.mxu0 %v289
  %400 = vmatprep.subr.bf16.mxu0 0
  %401 = vmatpush1.bf16.msra.mxu0 %v290
  %402 = vmatprep.subr.bf16.mxu0 0
  %403 = vmatpush1.bf16.msra.mxu0 %v291
  %404 = vmatprep.subr.bf16.mxu0 0
  %405 = vmatpush1.bf16.msra.mxu0 %v292
  %406 = vmatprep.subr.bf16.mxu0 0
  %407 = vmatpush1.bf16.msra.mxu0 %v293
  %408 = vmatprep.subr.bf16.mxu0 0
  %409 = vmatpush1.bf16.msra.mxu0 %v294
  %410 = vmatprep.subr.bf16.mxu0 0
  %411 = vmatpush1.bf16.msra.mxu0 %v295
  %412 = vmatprep.subr.bf16.mxu0 0
  %413 = vmatpush1.bf16.msra.mxu0 %v296
  %414 = vmatprep.mubr.bf16.mxu0 %v115
  %415 = vmatmul.mubr.bf16.gmra.mrb[0].mxu0 %v114
  %v416 = vpop.f32.mrb[0].mxu0
  %v417 = vadd.f32 %v376, %v416
  %v418 = vpop.f32.mrb[0].mxu0
  %v419 = vpop.f32.mrb[0].mxu0
  %v420 = vadd.f32 %v379, %v419
  %v421 = vpop.f32.mrb[0].mxu0
  %422 = vdwg.mxu0
  %423 = vmatprep.subr.bf16.mxu0 0
  %424 = vmatpush1.bf16.msra.mxu0 %v297
  %425 = vmatprep.subr.bf16.mxu0 0
  %426 = vmatpush1.bf16.msra.mxu0 %v298
  %427 = vmatprep.subr.bf16.mxu0 0
  %428 = vmatpush1.bf16.msra.mxu0 %v299
  %429 = vmatprep.subr.bf16.mxu0 0
  %430 = vmatpush1.bf16.msra.mxu0 %v300
  %431 = vmatprep.subr.bf16.mxu0 0
  %432 = vmatpush1.bf16.msra.mxu0 0
  %433 = vmatprep.subr.bf16.mxu0 0
  %434 = vmatpush1.bf16.msra.mxu0 0
  %435 = vmatprep.subr.bf16.mxu0 0
  %436 = vmatpush1.bf16.msra.mxu0 0
  %437 = vmatprep.subr.bf16.mxu0 0
  %438 = vmatpush1.bf16.msra.mxu0 0
  %439 = vmatprep.subr.bf16.mxu0 0
  %440 = vmatpush1.bf16.msra.mxu0 0
  %441 = vmatprep.subr.bf16.mxu0 0
  %442 = vmatpush1.bf16.msra.mxu0 0
  %443 = vmatprep.subr.bf16.mxu0 0
  %444 = vmatpush1.bf16.msra.mxu0 0
  %445 = vmatprep.subr.bf16.mxu0 0
  %446 = vmatpush1.bf16.msra.mxu0 0
  %447 = vmatprep.subr.bf16.mxu0 0
  %448 = vmatpush1.bf16.msra.mxu0 0
  %449 = vmatprep.subr.bf16.mxu0 0
  %450 = vmatpush1.bf16.msra.mxu0 0
  %451 = vmatprep.subr.bf16.mxu0 0
  %452 = vmatpush1.bf16.msra.mxu0 0
  %453 = vmatprep.subr.bf16.mxu0 0
  %454 = vmatpush1.bf16.msra.mxu0 0
  %455 = vmatprep.mubr.bf16.mxu0 0
  %456 = vmatmul.mubr.bf16.gmra.mrb[0].mxu0 %v339
  %v457 = vpop.f32.mrb[0].mxu0
  %v458 = vadd.f32 %v417, %v457
  %v459 = vpop.f32.mrb[0].mxu0
  %v460 = vpop.f32.mrb[0].mxu0
  %v461 = vadd.f32 %v420, %v460
  %v462 = vpop.f32.mrb[0].mxu0
  %463 = vdwg.mxu0
  %v464 = vld [vmem:[%s2] sm:$0x1]
  %v466 = vlaneseq
  %v467 = vshrl.u32 %v466, 7
  %v468 = vsub.s32 0, %v467
  %v469 = vrot.slane %v464, %v468
  %v471 = vmul.f32 %v458, %v469
  %v472 = vmul.f32 %v461, %v469
  %v473 = vld [vmem:[%s3] sm:$0x1]
  %v475 = vlaneseq
  %v476 = vshrl.u32 %v475, 7
  %v477 = vsub.s32 0, %v476
  %v478 = vrot.slane %v473, %v477
  %v480 = vadd.f32 %v471, %v478
  %v481 = vadd.f32 %v472, %v478
  %v482 = vmax.f32 %v480, 0.0
  %v483 = vmax.f32 %v481, 0.0
  %484 = vst.msk [vmem:[%s4] sm:$0xff] %vm337, %v482
  %485 = vst.msk [vmem:[%s4 + $0x8] sm:$0xff] %vm337, %v483
  // Predicated region
  $region18: #{model_conv_unet_forward.20} parent=0 // pred_check
    _
  $region19: #{model_conv_unet_forward.20} parent=0 // pred_check_branch
    %487 = sbr.rel (0) target = $region21
  $region20: #{model_conv_unet_forward.20} parent=0 // pred_region
    _
  $region21: #{model_conv_unet_forward.20} parent=0 // pred_fallthru
    _
  // Predicated region
  $region22: #{model_conv_unet_forward.20} parent=0 // pred_check
    _
  $region23: #{model_conv_unet_forward.20} parent=0 // pred_check_branch
    %489 = sbr.rel (0) target = $region25
  $region24: #{model_conv_unet_forward.20} parent=0 // pred_region
    _
  $region25: #{model_conv_unet_forward.20} parent=0 // pred_fallthru
    _

// kernel: model_conv_unet_forward.22
$region0: #{model_conv_unet_forward.22}
  #allocation0 [shape = 'u32[]', space=smem, size = 0x4, offset = 0x4, fixed_abs, tag = 'smem constant byte address 0x4 - core index']
  #allocation1 [shape = 'u32[144,128]{1,0:T(1,128)}', space=vmem, size = 0x12000, scoped, tag = 'internal scratch']
  %s0 = inlined_call_operand.vmem [shape: bf16[32,576], index: 0, kind: input, shape index: {}]
  %s1 = inlined_call_operand.vmem [shape: bf16[576,32], index: 1, kind: input, shape index: {}]
  %s2 = inlined_call_operand.vmem [shape: f32[1,32], index: 2, kind: input, shape index: {}]
  %s3 = inlined_call_operand.vmem [shape: f32[1,32], index: 3, kind: input, shape index: {}]
  %s4 = inlined_call_operand.vmem [shape: f32[32,32], index: 4, kind: output, shape index: {}]
  %s5 = sld [smem:[#allocation0]]
  $region26: #{model_conv_unet_forward.22} parent=0
    _
  %s7 = ssub.s32 1, %s5
  %s8 = scalar_select 0, %s7, %s5
  // Predicated region
  $region2: #{model_conv_unet_forward.22} parent=0 // pred_check
    _
  $region3: #{model_conv_unet_forward.22} parent=0 // pred_check_branch
    %10 = sbr.rel (0) target = $region5
  $region4: #{model_conv_unet_forward.22} parent=0 // pred_region
    _
  $region5: #{model_conv_unet_forward.22} parent=0 // pred_fallthru
    _
  // Predicated region
  $region6: #{model_conv_unet_forward.22} parent=0 // pred_check
    _
  $region7: #{model_conv_unet_forward.22} parent=0 // pred_check_branch
    %12 = sbr.rel (0) target = $region9
  $region8: #{model_conv_unet_forward.22} parent=0 // pred_region
    _
  $region9: #{model_conv_unet_forward.22} parent=0 // pred_fallthru
    _
  // Predicated region
  $region10: #{model_conv_unet_forward.22} parent=0 // pred_check
    _
  $region11: #{model_conv_unet_forward.22} parent=0 // pred_check_branch
    %14 = sbr.rel (0) target = $region13
  $region12: #{model_conv_unet_forward.22} parent=0 // pred_region
    _
  $region13: #{model_conv_unet_forward.22} parent=0 // pred_fallthru
    _
  // Predicated region
  $region14: #{model_conv_unet_forward.22} parent=0 // pred_check
    _
  $region15: #{model_conv_unet_forward.22} parent=0 // pred_check_branch
    %16 = sbr.rel (0) target = $region17
  $region16: #{model_conv_unet_forward.22} parent=0 // pred_region
    _
  $region17: #{model_conv_unet_forward.22} parent=0 // pred_fallthru
    _
  %v18 = vld [vmem:[%s0] sm:$0xff]
  %v19 = vld [vmem:[%s0 + $0x8] sm:$0xff]
  %v20 = vld [vmem:[%s0 + $0x10] sm:$0xf]
  %v21 = vld [vmem:[%s0 + $0x14] sm:$0xff]
  %v22 = vld [vmem:[%s0 + $0x1c] sm:$0xff]
  %v23 = vld [vmem:[%s0 + $0x24] sm:$0xf]
  %v24 = vld [vmem:[%s0 + $0x28] sm:$0xff]
  %v25 = vld [vmem:[%s0 + $0x30] sm:$0xff]
  %v26 = vld [vmem:[%s0 + $0x38] sm:$0xf]
  %v27 = vld [vmem:[%s0 + $0x3c] sm:$0xff]
  %v28 = vld [vmem:[%s0 + $0x44] sm:$0xff]
  %v29 = vld [vmem:[%s0 + $0x4c] sm:$0xf]
  %v30 = vld [vmem:[%s1] sm:$0xf]
  %v31 = vld [vmem:[%s1 + $0x4] sm:$0xf]
  %v32 = vld [vmem:[%s1 + $0x8] sm:$0xf]
  %v33 = vld [vmem:[%s1 + $0xc] sm:$0xf]
  %v34 = vld [vmem:[%s1 + $0x10] sm:$0xf]
  %v35 = vld [vmem:[%s1 + $0x14] sm:$0xf]
  %v36 = vld [vmem:[%s1 + $0x18] sm:$0xf]
  %v37 = vld [vmem:[%s1 + $0x1c] sm:$0xf]
  %v38 = vld [vmem:[%s1 + $0x20] sm:$0xf]
  %v39 = vld [vmem:[%s1 + $0x24] sm:$0xf]
  %v40 = vld [vmem:[%s1 + $0x28] sm:$0xf]
  %v41 = vld [vmem:[%s1 + $0x2c] sm:$0xf]
  %v42 = vld [vmem:[%s1 + $0x30] sm:$0xf]
  %v43 = vld [vmem:[%s1 + $0x34] sm:$0xf]
  %v44 = vld [vmem:[%s1 + $0x38] sm:$0xf]
  %v45 = vld [vmem:[%s1 + $0x3c] sm:$0xf]
  %v46 = vld [vmem:[%s1 + $0x40] sm:$0xf]
  %v47 = vld [vmem:[%s1 + $0x44] sm:$0xf]
  %v48 = vld [vmem:[%s1 + $0x48] sm:$0xf]
  %v49 = vld [vmem:[%s1 + $0x4c] sm:$0xf]
  %v50 = vld [vmem:[%s1 + $0x50] sm:$0xf]
  %v51 = vld [vmem:[%s1 + $0x54] sm:$0xf]
  %v52 = vld [vmem:[%s1 + $0x58] sm:$0xf]
  %v53 = vld [vmem:[%s1 + $0x5c] sm:$0xf]
  %v54 = vld [vmem:[%s1 + $0x60] sm:$0xf]
  %v55 = vld [vmem:[%s1 + $0x64] sm:$0xf]
  %v56 = vld [vmem:[%s1 + $0x68] sm:$0xf]
  %v57 = vld [vmem:[%s1 + $0x6c] sm:$0xf]
  %v58 = vld [vmem:[%s1 + $0x70] sm:$0xf]
  %v59 = vld [vmem:[%s1 + $0x74] sm:$0xf]
  %v60 = vld [vmem:[%s1 + $0x78] sm:$0xf]
  %v61 = vld [vmem:[%s1 + $0x7c] sm:$0xf]
  %v62 = vld [vmem:[%s1 + $0x80] sm:$0xf]
  %v63 = vld [vmem:[%s1 + $0x84] sm:$0xf]
  %v64 = vld [vmem:[%s1 + $0x88] sm:$0xf]
  %v65 = vld [vmem:[%s1 + $0x8c] sm:$0xf]
  %v66 = vld [vmem:[%s1 + $0x90] sm:$0xf]
  %v67 = vld [vmem:[%s1 + $0x94] sm:$0xf]
  %v68 = vld [vmem:[%s1 + $0x98] sm:$0xf]
  %v69 = vld [vmem:[%s1 + $0x9c] sm:$0xf]
  %v70 = vld [vmem:[%s1 + $0xa0] sm:$0xf]
  %v71 = vld [vmem:[%s1 + $0xa4] sm:$0xf]
  %v72 = vld [vmem:[%s1 + $0xa8] sm:$0xf]
  %v73 = vld [vmem:[%s1 + $0xac] sm:$0xf]
  %v74 = vld [vmem:[%s1 + $0xb0] sm:$0xf]
  %v75 = vld [vmem:[%s1 + $0xb4] sm:$0xf]
  %v76 = vld [vmem:[%s1 + $0xb8] sm:$0xf]
  %v77 = vld [vmem:[%s1 + $0xbc] sm:$0xf]
  %v78 = vld [vmem:[%s1 + $0xc0] sm:$0xf]
  %v79 = vld [vmem:[%s1 + $0xc4] sm:$0xf]
  %v80 = vld [vmem:[%s1 + $0xc8] sm:$0xf]
  %v81 = vld [vmem:[%s1 + $0xcc] sm:$0xf]
  %v82 = vld [vmem:[%s1 + $0xd0] sm:$0xf]
  %v83 = vld [vmem:[%s1 + $0xd4] sm:$0xf]
  %v84 = vld [vmem:[%s1 + $0xd8] sm:$0xf]
  %v85 = vld [vmem:[%s1 + $0xdc] sm:$0xf]
  %v86 = vld [vmem:[%s1 + $0xe0] sm:$0xf]
  %v87 = vld [vmem:[%s1 + $0xe4] sm:$0xf]
  %v88 = vld [vmem:[%s1 + $0xe8] sm:$0xf]
  %v89 = vld [vmem:[%s1 + $0xec] sm:$0xf]
  %v90 = vld [vmem:[%s1 + $0xf0] sm:$0xf]
  %v91 = vld [vmem:[%s1 + $0xf4] sm:$0xf]
  %v92 = vld [vmem:[%s1 + $0xf8] sm:$0xf]
  %v93 = vld [vmem:[%s1 + $0xfc] sm:$0xf]
  %v94 = vld [vmem:[%s1 + $0x100] sm:$0xf]
  %v95 = vld [vmem:[%s1 + $0x104] sm:$0xf]
  %v96 = vld [vmem:[%s1 + $0x108] sm:$0xf]
  %v97 = vld [vmem:[%s1 + $0x10c] sm:$0xf]
  %v98 = vld [vmem:[%s1 + $0x110] sm:$0xf]
  %v99 = vld [vmem:[%s1 + $0x114] sm:$0xf]
  %v100 = vld [vmem:[%s1 + $0x118] sm:$0xf]
  %v101 = vld [vmem:[%s1 + $0x11c] sm:$0xf]
  %v114 = vunpack.c.l.b16 %v18
  %v115 = vunpack.c.h.b16 %v18
  %v116 = vunpack.c.l.b16 %v19
  %v117 = vunpack.c.h.b16 %v19
  %v118 = vunpack.c.l.b16 %v20
  %v119 = vunpack.c.l.b16 %v21
  %v120 = vunpack.c.h.b16 %v21
  %v121 = vunpack.c.l.b16 %v22
  %v122 = vunpack.c.h.b16 %v22
  %v123 = vunpack.c.l.b16 %v23
  %v124 = vunpack.c.l.b16 %v24
  %v125 = vunpack.c.h.b16 %v24
  %v126 = vunpack.c.l.b16 %v25
  %v127 = vunpack.c.h.b16 %v25
  %v128 = vunpack.c.l.b16 %v26
  %v129 = vunpack.c.l.b16 %v27
  %v130 = vunpack.c.h.b16 %v27
  %v131 = vunpack.c.l.b16 %v28
  %v132 = vunpack.c.h.b16 %v28
  %v133 = vunpack.c.l.b16 %v29
  %v134 = vpack.c.b16 %v119, %v114
  %v135 = vpack.c.b16 %v120, %v115
  %v136 = vpack.c.b16 %v121, %v116
  %v137 = vpack.c.b16 %v122, %v117
  %v138 = vpack.c.b16 %v123, %v118
  %v139 = vpack.c.b16 %v129, %v124
  %v140 = vpack.c.b16 %v130, %v125
  %v141 = vpack.c.b16 %v131, %v126
  %v142 = vpack.c.b16 %v132, %v127
  %v143 = vpack.c.b16 %v133, %v128
  %v224 = vunpack.c.l.b16 %v30
  %v225 = vunpack.c.l.b16 %v31
  %v226 = vunpack.c.l.b16 %v32
  %v227 = vunpack.c.l.b16 %v33
  %v228 = vunpack.c.l.b16 %v34
  %v229 = vunpack.c.l.b16 %v35
  %v230 = vunpack.c.l.b16 %v36
  %v231 = vunpack.c.l.b16 %v37
  %v232 = vunpack.c.l.b16 %v38
  %v233 = vunpack.c.l.b16 %v39
  %v234 = vunpack.c.l.b16 %v40
  %v235 = vunpack.c.l.b16 %v41
  %v236 = vunpack.c.l.b16 %v42
  %v237 = vunpack.c.l.b16 %v43
  %v238 = vunpack.c.l.b16 %v44
  %v239 = vunpack.c.l.b16 %v45
  %v240 = vunpack.c.l.b16 %v46
  %v241 = vunpack.c.l.b16 %v47
  %v242 = vunpack.c.l.b16 %v48
  %v243 = vunpack.c.l.b16 %v49
  %v244 = vunpack.c.l.b16 %v50
  %v245 = vunpack.c.l.b16 %v51
  %v246 = vunpack.c.l.b16 %v52
  %v247 = vunpack.c.l.b16 %v53
  %v248 = vunpack.c.l.b16 %v54
  %v249 = vunpack.c.l.b16 %v55
  %v250 = vunpack.c.l.b16 %v56
  %v251 = vunpack.c.l.b16 %v57
  %v252 = vunpack.c.l.b16 %v58
  %v253 = vunpack.c.l.b16 %v59
  %v254 = vunpack.c.l.b16 %v60
  %v255 = vunpack.c.l.b16 %v61
  %v256 = vunpack.c.l.b16 %v62
  %v257 = vunpack.c.l.b16 %v63
  %v258 = vunpack.c.l.b16 %v64
  %v259 = vunpack.c.l.b16 %v65
  %v260 = vunpack.c.l.b16 %v66
  %v261 = vunpack.c.l.b16 %v67
  %v262 = vunpack.c.l.b16 %v68
  %v263 = vunpack.c.l.b16 %v69
  %v264 = vunpack.c.l.b16 %v70
  %v265 = vunpack.c.l.b16 %v71
  %v266 = vunpack.c.l.b16 %v72
  %v267 = vunpack.c.l.b16 %v73
  %v268 = vunpack.c.l.b16 %v74
  %v269 = vunpack.c.l.b16 %v75
  %v270 = vunpack.c.l.b16 %v76
  %v271 = vunpack.c.l.b16 %v77
  %v272 = vunpack.c.l.b16 %v78
  %v273 = vunpack.c.l.b16 %v79
  %v274 = vunpack.c.l.b16 %v80
  %v275 = vunpack.c.l.b16 %v81
  %v276 = vunpack.c.l.b16 %v82
  %v277 = vunpack.c.l.b16 %v83
  %v278 = vunpack.c.l.b16 %v84
  %v279 = vunpack.c.l.b16 %v85
  %v280 = vunpack.c.l.b16 %v86
  %v281 = vunpack.c.l.b16 %v87
  %v282 = vunpack.c.l.b16 %v88
  %v283 = vunpack.c.l.b16 %v89
  %v284 = vunpack.c.l.b16 %v90
  %v285 = vunpack.c.l.b16 %v91
  %v286 = vunpack.c.l.b16 %v92
  %v287 = vunpack.c.l.b16 %v93
  %v288 = vunpack.c.l.b16 %v94
  %v289 = vunpack.c.l.b16 %v95
  %v290 = vunpack.c.l.b16 %v96
  %v291 = vunpack.c.l.b16 %v97
  %v292 = vunpack.c.l.b16 %v98
  %v293 = vunpack.c.l.b16 %v99
  %v294 = vunpack.c.l.b16 %v100
  %v295 = vunpack.c.l.b16 %v101
  %v296 = vpack.c.b16 %v225, %v224
  %v297 = vpack.c.b16 %v227, %v226
  %v298 = vpack.c.b16 %v229, %v228
  %v299 = vpack.c.b16 %v231, %v230
  %v300 = vpack.c.b16 %v233, %v232
  %v301 = vpack.c.b16 %v235, %v234
  %v302 = vpack.c.b16 %v237, %v236
  %v303 = vpack.c.b16 %v239, %v238
  %v304 = vpack.c.b16 %v241, %v240
  %v305 = vpack.c.b16 %v243, %v242
  %v306 = vpack.c.b16 %v245, %v244
  %v307 = vpack.c.b16 %v247, %v246
  %v308 = vpack.c.b16 %v249, %v248
  %v309 = vpack.c.b16 %v251, %v250
  %v310 = vpack.c.b16 %v253, %v252
  %v311 = vpack.c.b16 %v255, %v254
  %v312 = vpack.c.b16 %v257, %v256
  %v313 = vpack.c.b16 %v259, %v258
  %v314 = vpack.c.b16 %v261, %v260
  %v315 = vpack.c.b16 %v263, %v262
  %v316 = vpack.c.b16 %v265, %v264
  %v317 = vpack.c.b16 %v267, %v266
  %v318 = vpack.c.b16 %v269, %v268
  %v319 = vpack.c.b16 %v271, %v270
  %v320 = vpack.c.b16 %v273, %v272
  %v321 = vpack.c.b16 %v275, %v274
  %v322 = vpack.c.b16 %v277, %v276
  %v323 = vpack.c.b16 %v279, %v278
  %v324 = vpack.c.b16 %v281, %v280
  %v325 = vpack.c.b16 %v283, %v282
  %v326 = vpack.c.b16 %v285, %v284
  %v327 = vpack.c.b16 %v287, %v286
  %v328 = vpack.c.b16 %v289, %v288
  %v329 = vpack.c.b16 %v291, %v290
  %v330 = vpack.c.b16 %v293, %v292
  %v331 = vpack.c.b16 %v295, %v294
  %vm368 = vcmask 523264
  %v370 = vsel %vm368, %v138, 0
  %v373 = vsel %vm368, %v143, 0
  %375 = vmatprep.subr.bf16.mxu0 0
  %376 = vmatpush1.bf16.msra.mxu0 %v296
  %377 = vmatprep.subr.bf16.mxu0 0
  %378 = vmatpush1.bf16.msra.mxu0 %v297
  %379 = vmatprep.subr.bf16.mxu0 0
  %380 = vmatpush1.bf16.msra.mxu0 %v298
  %381 = vmatprep.subr.bf16.mxu0 0
  %382 = vmatpush1.bf16.msra.mxu0 %v299
  %383 = vmatprep.subr.bf16.mxu0 0
  %384 = vmatpush1.bf16.msra.mxu0 %v300
  %385 = vmatprep.subr.bf16.mxu0 0
  %386 = vmatpush1.bf16.msra.mxu0 %v301
  %387 = vmatprep.subr.bf16.mxu0 0
  %388 = vmatpush1.bf16.msra.mxu0 %v302
  %389 = vmatprep.subr.bf16.mxu0 0
  %390 = vmatpush1.bf16.msra.mxu0 %v303
  %391 = vmatprep.subr.bf16.mxu0 0
  %392 = vmatpush1.bf16.msra.mxu0 %v304
  %393 = vmatprep.subr.bf16.mxu0 0
  %394 = vmatpush1.bf16.msra.mxu0 %v305
  %395 = vmatprep.subr.bf16.mxu0 0
  %396 = vmatpush1.bf16.msra.mxu0 %v306
  %397 = vmatprep.subr.bf16.mxu0 0
  %398 = vmatpush1.bf16.msra.mxu0 %v307
  %399 = vmatprep.subr.bf16.mxu0 0
  %400 = vmatpush1.bf16.msra.mxu0 %v308
  %401 = vmatprep.subr.bf16.mxu0 0
  %402 = vmatpush1.bf16.msra.mxu0 %v309
  %403 = vmatprep.subr.bf16.mxu0 0
  %404 = vmatpush1.bf16.msra.mxu0 %v310
  %405 = vmatprep.subr.bf16.mxu0 0
  %406 = vmatpush1.bf16.msra.mxu0 %v311
  %407 = vmatprep.mubr.bf16.mxu0 %v135
  %408 = vmatmul.mubr.bf16.gmra.mrb[0].mxu0 %v134
  %v409 = vpop.f32.mrb[0].mxu0
  %v410 = vadd.f32 0.0, %v409
  %v411 = vpop.f32.mrb[0].mxu0
  %v412 = vpop.f32.mrb[0].mxu0
  %v413 = vadd.f32 0.0, %v412
  %v414 = vpop.f32.mrb[0].mxu0
  %415 = vmatprep.mubr.bf16.mxu0 %v140
  %416 = vmatmul.mubr.bf16.gmra.mrb[0].mxu0 %v139
  %v417 = vpop.f32.mrb[0].mxu0
  %v418 = vadd.f32 0.0, %v417
  %v419 = vpop.f32.mrb[0].mxu0
  %v420 = vpop.f32.mrb[0].mxu0
  %v421 = vadd.f32 0.0, %v420
  %v422 = vpop.f32.mrb[0].mxu0
  %423 = vdwg.mxu0
  %424 = vmatprep.subr.bf16.mxu0 0
  %425 = vmatpush1.bf16.msra.mxu0 %v312
  %426 = vmatprep.subr.bf16.mxu0 0
  %427 = vmatpush1.bf16.msra.mxu0 %v313
  %428 = vmatprep.subr.bf16.mxu0 0
  %429 = vmatpush1.bf16.msra.mxu0 %v314
  %430 = vmatprep.subr.bf16.mxu0 0
  %431 = vmatpush1.bf16.msra.mxu0 %v315
  %432 = vmatprep.subr.bf16.mxu0 0
  %433 = vmatpush1.bf16.msra.mxu0 %v316
  %434 = vmatprep.subr.bf16.mxu0 0
  %435 = vmatpush1.bf16.msra.mxu0 %v317
  %436 = vmatprep.subr.bf16.mxu0 0
  %437 = vmatpush1.bf16.msra.mxu0 %v318
  %438 = vmatprep.subr.bf16.mxu0 0
  %439 = vmatpush1.bf16.msra.mxu0 %v319
  %440 = vmatprep.subr.bf16.mxu0 0
  %441 = vmatpush1.bf16.msra.mxu0 %v320
  %442 = vmatprep.subr.bf16.mxu0 0
  %443 = vmatpush1.bf16.msra.mxu0 %v321
  %444 = vmatprep.subr.bf16.mxu0 0
  %445 = vmatpush1.bf16.msra.mxu0 %v322
  %446 = vmatprep.subr.bf16.mxu0 0
  %447 = vmatpush1.bf16.msra.mxu0 %v323
  %448 = vmatprep.subr.bf16.mxu0 0
  %449 = vmatpush1.bf16.msra.mxu0 %v324
  %450 = vmatprep.subr.bf16.mxu0 0
  %451 = vmatpush1.bf16.msra.mxu0 %v325
  %452 = vmatprep.subr.bf16.mxu0 0
  %453 = vmatpush1.bf16.msra.mxu0 %v326
  %454 = vmatprep.subr.bf16.mxu0 0
  %455 = vmatpush1.bf16.msra.mxu0 %v327
  %456 = vmatprep.mubr.bf16.mxu0 %v137
  %457 = vmatmul.mubr.bf16.gmra.mrb[0].mxu0 %v136
  %v458 = vpop.f32.mrb[0].mxu0
  %v459 = vadd.f32 %v410, %v458
  %v460 = vpop.f32.mrb[0].mxu0
  %v461 = vpop.f32.mrb[0].mxu0
  %v462 = vadd.f32 %v413, %v461
  %v463 = vpop.f32.mrb[0].mxu0
  %464 = vmatprep.mubr.bf16.mxu0 %v142
  %465 = vmatmul.mubr.bf16.gmra.mrb[0].mxu0 %v141
  %v466 = vpop.f32.mrb[0].mxu0
  %v467 = vadd.f32 %v418, %v466
  %v468 = vpop.f32.mrb[0].mxu0
  %v469 = vpop.f32.mrb[0].mxu0
  %v470 = vadd.f32 %v421, %v469
  %v471 = vpop.f32.mrb[0].mxu0
  %472 = vdwg.mxu0
  %473 = vmatprep.subr.bf16.mxu0 0
  %474 = vmatpush1.bf16.msra.mxu0 %v328
  %475 = vmatprep.subr.bf16.mxu0 0
  %476 = vmatpush1.bf16.msra.mxu0 %v329
  %477 = vmatprep.subr.bf16.mxu0 0
  %478 = vmatpush1.bf16.msra.mxu0 %v330
  %479 = vmatprep.subr.bf16.mxu0 0
  %480 = vmatpush1.bf16.msra.mxu0 %v331
  %481 = vmatprep.subr.bf16.mxu0 0
  %482 = vmatpush1.bf16.msra.mxu0 0
  %483 = vmatprep.subr.bf16.mxu0 0
  %484 = vmatpush1.bf16.msra.mxu0 0
  %485 = vmatprep.subr.bf16.mxu0 0
  %486 = vmatpush1.bf16.msra.mxu0 0
  %487 = vmatprep.subr.bf16.mxu0 0
  %488 = vmatpush1.bf16.msra.mxu0 0
  %489 = vmatprep.subr.bf16.mxu0 0
  %490 = vmatpush1.bf16.msra.mxu0 0
  %491 = vmatprep.subr.bf16.mxu0 0
  %492 = vmatpush1.bf16.msra.mxu0 0
  %493 = vmatprep.subr.bf16.mxu0 0
  %494 = vmatpush1.bf16.msra.mxu0 0
  %495 = vmatprep.subr.bf16.mxu0 0
  %496 = vmatpush1.bf16.msra.mxu0 0
  %497 = vmatprep.subr.bf16.mxu0 0
  %498 = vmatpush1.bf16.msra.mxu0 0
  %499 = vmatprep.subr.bf16.mxu0 0
  %500 = vmatpush1.bf16.msra.mxu0 0
  %501 = vmatprep.subr.bf16.mxu0 0
  %502 = vmatpush1.bf16.msra.mxu0 0
  %503 = vmatprep.subr.bf16.mxu0 0
  %504 = vmatpush1.bf16.msra.mxu0 0
  %505 = vmatprep.mubr.bf16.mxu0 0
  %506 = vmatmul.mubr.bf16.gmra.mrb[0].mxu0 %v370
  %v507 = vpop.f32.mrb[0].mxu0
  %v508 = vadd.f32 %v459, %v507
  %v509 = vpop.f32.mrb[0].mxu0
  %v510 = vpop.f32.mrb[0].mxu0
  %v511 = vadd.f32 %v462, %v510
  %v512 = vpop.f32.mrb[0].mxu0
  %513 = vmatprep.mubr.bf16.mxu0 0
  %514 = vmatmul.mubr.bf16.gmra.mrb[0].mxu0 %v373
  %v515 = vpop.f32.mrb[0].mxu0
  %v516 = vadd.f32 %v467, %v515
  %v517 = vpop.f32.mrb[0].mxu0
  %v518 = vpop.f32.mrb[0].mxu0
  %v519 = vadd.f32 %v470, %v518
  %v520 = vpop.f32.mrb[0].mxu0
  %521 = vdwg.mxu0
  %v522 = vld [vmem:[%s2] sm:$0x1]
  %v524 = vlaneseq
  %v525 = vshrl.u32 %v524, 7
  %v526 = vsub.s32 0, %v525
  %v527 = vrot.slane %v522, %v526
  %v529 = vmul.f32 %v508, %v527
  %v530 = vmul.f32 %v511, %v527
  %v531 = vmul.f32 %v516, %v527
  %v532 = vmul.f32 %v519, %v527
  %v533 = vld [vmem:[%s3] sm:$0x1]
  %v535 = vlaneseq
  %v536 = vshrl.u32 %v535, 7
  %v537 = vsub.s32 0, %v536
  %v538 = vrot.slane %v533, %v537
  %v540 = vadd.f32 %v529, %v538
  %v541 = vadd.f32 %v530, %v538
  %v542 = vadd.f32 %v531, %v538
  %v543 = vadd.f32 %v532, %v538
  %v544 = vmax.f32 %v540, 0.0
  %v545 = vmax.f32 %v541, 0.0
  %v546 = vmax.f32 %v542, 0.0
  %v547 = vmax.f32 %v543, 0.0
  %vm548 = vcmask 261120
  %549 = vst.msk [vmem:[%s4] sm:$0xff] %vm548, %v544
  %550 = vst.msk [vmem:[%s4 + $0x8] sm:$0xff] %vm548, %v545
  %551 = vst.msk [vmem:[%s4 + $0x10] sm:$0xff] %vm548, %v546
  %552 = vst.msk [vmem:[%s4 + $0x18] sm:$0xff] %vm548, %v547
  // Predicated region
  $region18: #{model_conv_unet_forward.22} parent=0 // pred_check
    _
  $region19: #{model_conv_unet_forward.22} parent=0 // pred_check_branch
    %554 = sbr.rel (0) target = $region21
  $region20: #{model_conv_unet_forward.22} parent=0 // pred_region
    _
  $region21: #{model_conv_unet_forward.22} parent=0 // pred_fallthru
    _
  // Predicated region
  $region22: #{model_conv_unet_forward.22} parent=0 // pred_check
    _
  $region23: #{model_conv_unet_forward.22} parent=0 // pred_check_branch
    %556 = sbr.rel (0) target = $region25
  $region24: #{model_conv_unet_forward.22} parent=0 // pred_region
    _
  $region25: #{model_conv_unet_forward.22} parent=0 // pred_fallthru
    _

// kernel: model_conv_unet_forward.23
$region0: #{model_conv_unet_forward.23}
  #allocation0 [shape = 'u32[]', space=smem, size = 0x4, offset = 0x4, fixed_abs, tag = 'smem constant byte address 0x4 - core index']
  #allocation1 [shape = 'u32[144,128]{1,0:T(1,128)}', space=vmem, size = 0x12000, scoped, tag = 'internal scratch']
  %s0 = inlined_call_operand.vmem [shape: bf16[128,576], index: 0, kind: input, shape index: {}]
  %s1 = inlined_call_operand.vmem [shape: bf16[576,16], index: 1, kind: input, shape index: {}]
  %s2 = inlined_call_operand.vmem [shape: f32[1,16], index: 2, kind: input, shape index: {}]
  %s3 = inlined_call_operand.vmem [shape: f32[1,16], index: 3, kind: input, shape index: {}]
  %s4 = inlined_call_operand.vmem [shape: f32[128,16], index: 4, kind: output, shape index: {}]
  %s5 = sld [smem:[#allocation0]]
  $region26: #{model_conv_unet_forward.23} parent=0
    _
  %s7 = ssub.s32 1, %s5
  %s8 = scalar_select 0, %s7, %s5
  // Predicated region
  $region2: #{model_conv_unet_forward.23} parent=0 // pred_check
    _
  $region3: #{model_conv_unet_forward.23} parent=0 // pred_check_branch
    %10 = sbr.rel (0) target = $region5
  $region4: #{model_conv_unet_forward.23} parent=0 // pred_region
    _
  $region5: #{model_conv_unet_forward.23} parent=0 // pred_fallthru
    _
  // Predicated region
  $region6: #{model_conv_unet_forward.23} parent=0 // pred_check
    _
  $region7: #{model_conv_unet_forward.23} parent=0 // pred_check_branch
    %12 = sbr.rel (0) target = $region9
  $region8: #{model_conv_unet_forward.23} parent=0 // pred_region
    _
  $region9: #{model_conv_unet_forward.23} parent=0 // pred_fallthru
    _
  // Predicated region
  $region10: #{model_conv_unet_forward.23} parent=0 // pred_check
    _
  $region11: #{model_conv_unet_forward.23} parent=0 // pred_check_branch
    %14 = sbr.rel (0) target = $region13
  $region12: #{model_conv_unet_forward.23} parent=0 // pred_region
    _
  $region13: #{model_conv_unet_forward.23} parent=0 // pred_fallthru
    _
  // Predicated region
  $region14: #{model_conv_unet_forward.23} parent=0 // pred_check
    _
  $region15: #{model_conv_unet_forward.23} parent=0 // pred_check_branch
    %16 = sbr.rel (0) target = $region17
  $region16: #{model_conv_unet_forward.23} parent=0 // pred_region
    _
  $region17: #{model_conv_unet_forward.23} parent=0 // pred_fallthru
    _
  %v18 = vld [vmem:[%s0] sm:$0xff]
  %v19 = vld [vmem:[%s0 + $0x8] sm:$0xff]
  %v20 = vld [vmem:[%s0 + $0x10] sm:$0xf]
  %v21 = vld [vmem:[%s0 + $0x14] sm:$0xff]
  %v22 = vld [vmem:[%s0 + $0x1c] sm:$0xff]
  %v23 = vld [vmem:[%s0 + $0x24] sm:$0xf]
  %v24 = vld [vmem:[%s0 + $0x28] sm:$0xff]
  %v25 = vld [vmem:[%s0 + $0x30] sm:$0xff]
  %v26 = vld [vmem:[%s0 + $0x38] sm:$0xf]
  %v27 = vld [vmem:[%s0 + $0x3c] sm:$0xff]
  %v28 = vld [vmem:[%s0 + $0x44] sm:$0xff]
  %v29 = vld [vmem:[%s0 + $0x4c] sm:$0xf]
  %v30 = vld [vmem:[%s0 + $0x50] sm:$0xff]
  %v31 = vld [vmem:[%s0 + $0x58] sm:$0xff]
  %v32 = vld [vmem:[%s0 + $0x60] sm:$0xf]
  %v33 = vld [vmem:[%s0 + $0x64] sm:$0xff]
  %v34 = vld [vmem:[%s0 + $0x6c] sm:$0xff]
  %v35 = vld [vmem:[%s0 + $0x74] sm:$0xf]
  %v36 = vld [vmem:[%s0 + $0x78] sm:$0xff]
  %v37 = vld [vmem:[%s0 + $0x80] sm:$0xff]
  %v38 = vld [vmem:[%s0 + $0x88] sm:$0xf]
  %v39 = vld [vmem:[%s0 + $0x8c] sm:$0xff]
  %v40 = vld [vmem:[%s0 + $0x94] sm:$0xff]
  %v41 = vld [vmem:[%s0 + $0x9c] sm:$0xf]
  %v42 = vld [vmem:[%s0 + $0xa0] sm:$0xff]
  %v43 = vld [vmem:[%s0 + $0xa8] sm:$0xff]
  %v44 = vld [vmem:[%s0 + $0xb0] sm:$0xf]
  %v45 = vld [vmem:[%s0 + $0xb4] sm:$0xff]
  %v46 = vld [vmem:[%s0 + $0xbc] sm:$0xff]
  %v47 = vld [vmem:[%s0 + $0xc4] sm:$0xf]
  %v48 = vld [vmem:[%s0 + $0xc8] sm:$0xff]
  %v49 = vld [vmem:[%s0 + $0xd0] sm:$0xff]
  %v50 = vld [vmem:[%s0 + $0xd8] sm:$0xf]
  %v51 = vld [vmem:[%s0 + $0xdc] sm:$0xff]
  %v52 = vld [vmem:[%s0 + $0xe4] sm:$0xff]
  %v53 = vld [vmem:[%s0 + $0xec] sm:$0xf]
  %v54 = vld [vmem:[%s0 + $0xf0] sm:$0xff]
  %v55 = vld [vmem:[%s0 + $0xf8] sm:$0xff]
  %v56 = vld [vmem:[%s0 + $0x100] sm:$0xf]
  %v57 = vld [vmem:[%s0 + $0x104] sm:$0xff]
  %v58 = vld [vmem:[%s0 + $0x10c] sm:$0xff]
  %v59 = vld [vmem:[%s0 + $0x114] sm:$0xf]
  %v60 = vld [vmem:[%s0 + $0x118] sm:$0xff]
  %v61 = vld [vmem:[%s0 + $0x120] sm:$0xff]
  %v62 = vld [vmem:[%s0 + $0x128] sm:$0xf]
  %v63 = vld [vmem:[%s0 + $0x12c] sm:$0xff]
  %v64 = vld [vmem:[%s0 + $0x134] sm:$0xff]
  %v65 = vld [vmem:[%s0 + $0x13c] sm:$0xf]
  %v66 = vld [vmem:[%s1] sm:$0xf]
  %v67 = vld [vmem:[%s1 + $0x4] sm:$0xf]
  %v68 = vld [vmem:[%s1 + $0x8] sm:$0xf]
  %v69 = vld [vmem:[%s1 + $0xc] sm:$0xf]
  %v70 = vld [vmem:[%s1 + $0x10] sm:$0xf]
  %v71 = vld [vmem:[%s1 + $0x14] sm:$0xf]
  %v72 = vld [vmem:[%s1 + $0x18] sm:$0xf]
  %v73 = vld [vmem:[%s1 + $0x1c] sm:$0xf]
  %v74 = vld [vmem:[%s1 + $0x20] sm:$0xf]
  %v75 = vld [vmem:[%s1 + $0x24] sm:$0xf]
  %v76 = vld [vmem:[%s1 + $0x28] sm:$0xf]
  %v77 = vld [vmem:[%s1 + $0x2c] sm:$0xf]
  %v78 = vld [vmem:[%s1 + $0x30] sm:$0xf]
  %v79 = vld [vmem:[%s1 + $0x34] sm:$0xf]
  %v80 = vld [vmem:[%s1 + $0x38] sm:$0xf]
  %v81 = vld [vmem:[%s1 + $0x3c] sm:$0xf]
  %v82 = vld [vmem:[%s1 + $0x40] sm:$0xf]
  %v83 = vld [vmem:[%s1 + $0x44] sm:$0xf]
  %v84 = vld [vmem:[%s1 + $0x48] sm:$0xf]
  %v85 = vld [vmem:[%s1 + $0x4c] sm:$0xf]
  %v86 = vld [vmem:[%s1 + $0x50] sm:$0xf]
  %v87 = vld [vmem:[%s1 + $0x54] sm:$0xf]
  %v88 = vld [vmem:[%s1 + $0x58] sm:$0xf]
  %v89 = vld [vmem:[%s1 + $0x5c] sm:$0xf]
  %v90 = vld [vmem:[%s1 + $0x60] sm:$0xf]
  %v91 = vld [vmem:[%s1 + $0x64] sm:$0xf]
  %v92 = vld [vmem:[%s1 + $0x68] sm:$0xf]
  %v93 = vld [vmem:[%s1 + $0x6c] sm:$0xf]
  %v94 = vld [vmem:[%s1 + $0x70] sm:$0xf]
  %v95 = vld [vmem:[%s1 + $0x74] sm:$0xf]
  %v96 = vld [vmem:[%s1 + $0x78] sm:$0xf]
  %v97 = vld [vmem:[%s1 + $0x7c] sm:$0xf]
  %v98 = vld [vmem:[%s1 + $0x80] sm:$0xf]
  %v99 = vld [vmem:[%s1 + $0x84] sm:$0xf]
  %v100 = vld [vmem:[%s1 + $0x88] sm:$0xf]
  %v101 = vld [vmem:[%s1 + $0x8c] sm:$0xf]
  %v102 = vld [vmem:[%s1 + $0x90] sm:$0xf]
  %v103 = vld [vmem:[%s1 + $0x94] sm:$0xf]
  %v104 = vld [vmem:[%s1 + $0x98] sm:$0xf]
  %v105 = vld [vmem:[%s1 + $0x9c] sm:$0xf]
  %v106 = vld [vmem:[%s1 + $0xa0] sm:$0xf]
  %v107 = vld [vmem:[%s1 + $0xa4] sm:$0xf]
  %v108 = vld [vmem:[%s1 + $0xa8] sm:$0xf]
  %v109 = vld [vmem:[%s1 + $0xac] sm:$0xf]
  %v110 = vld [vmem:[%s1 + $0xb0] sm:$0xf]
  %v111 = vld [vmem:[%s1 + $0xb4] sm:$0xf]
  %v112 = vld [vmem:[%s1 + $0xb8] sm:$0xf]
  %v113 = vld [vmem:[%s1 + $0xbc] sm:$0xf]
  %v114 = vld [vmem:[%s1 + $0xc0] sm:$0xf]
  %v115 = vld [vmem:[%s1 + $0xc4] sm:$0xf]
  %v116 = vld [vmem:[%s1 + $0xc8] sm:$0xf]
  %v117 = vld [vmem:[%s1 + $0xcc] sm:$0xf]
  %v118 = vld [vmem:[%s1 + $0xd0] sm:$0xf]
  %v119 = vld [vmem:[%s1 + $0xd4] sm:$0xf]
  %v120 = vld [vmem:[%s1 + $0xd8] sm:$0xf]
  %v121 = vld [vmem:[%s1 + $0xdc] sm:$0xf]
  %v122 = vld [vmem:[%s1 + $0xe0] sm:$0xf]
  %v123 = vld [vmem:[%s1 + $0xe4] sm:$0xf]
  %v124 = vld [vmem:[%s1 + $0xe8] sm:$0xf]
  %v125 = vld [vmem:[%s1 + $0xec] sm:$0xf]
  %v126 = vld [vmem:[%s1 + $0xf0] sm:$0xf]
  %v127 = vld [vmem:[%s1 + $0xf4] sm:$0xf]
  %v128 = vld [vmem:[%s1 + $0xf8] sm:$0xf]
  %v129 = vld [vmem:[%s1 + $0xfc] sm:$0xf]
  %v130 = vld [vmem:[%s1 + $0x100] sm:$0xf]
  %v131 = vld [vmem:[%s1 + $0x104] sm:$0xf]
  %v132 = vld [vmem:[%s1 + $0x108] sm:$0xf]
  %v133 = vld [vmem:[%s1 + $0x10c] sm:$0xf]
  %v134 = vld [vmem:[%s1 + $0x110] sm:$0xf]
  %v135 = vld [vmem:[%s1 + $0x114] sm:$0xf]
  %v136 = vld [vmem:[%s1 + $0x118] sm:$0xf]
  %v137 = vld [vmem:[%s1 + $0x11c] sm:$0xf]
  %v186 = vunpack.c.l.b16 %v18
  %v187 = vunpack.c.h.b16 %v18
  %v188 = vunpack.c.l.b16 %v19
  %v189 = vunpack.c.h.b16 %v19
  %v190 = vunpack.c.l.b16 %v20
  %v191 = vunpack.c.l.b16 %v21
  %v192 = vunpack.c.h.b16 %v21
  %v193 = vunpack.c.l.b16 %v22
  %v194 = vunpack.c.h.b16 %v22
  %v195 = vunpack.c.l.b16 %v23
  %v196 = vunpack.c.l.b16 %v24
  %v197 = vunpack.c.h.b16 %v24
  %v198 = vunpack.c.l.b16 %v25
  %v199 = vunpack.c.h.b16 %v25
  %v200 = vunpack.c.l.b16 %v26
  %v201 = vunpack.c.l.b16 %v27
  %v202 = vunpack.c.h.b16 %v27
  %v203 = vunpack.c.l.b16 %v28
  %v204 = vunpack.c.h.b16 %v28
  %v205 = vunpack.c.l.b16 %v29
  %v206 = vunpack.c.l.b16 %v30
  %v207 = vunpack.c.h.b16 %v30
  %v208 = vunpack.c.l.b16 %v31
  %v209 = vunpack.c.h.b16 %v31
  %v210 = vunpack.c.l.b16 %v32
  %v211 = vunpack.c.l.b16 %v33
  %v212 = vunpack.c.h.b16 %v33
  %v213 = vunpack.c.l.b16 %v34
  %v214 = vunpack.c.h.b16 %v34
  %v215 = vunpack.c.l.b16 %v35
  %v216 = vunpack.c.l.b16 %v36
  %v217 = vunpack.c.h.b16 %v36
  %v218 = vunpack.c.l.b16 %v37
  %v219 = vunpack.c.h.b16 %v37
  %v220 = vunpack.c.l.b16 %v38
  %v221 = vunpack.c.l.b16 %v39
  %v222 = vunpack.c.h.b16 %v39
  %v223 = vunpack.c.l.b16 %v40
  %v224 = vunpack.c.h.b16 %v40
  %v225 = vunpack.c.l.b16 %v41
  %v226 = vunpack.c.l.b16 %v42
  %v227 = vunpack.c.h.b16 %v42
  %v228 = vunpack.c.l.b16 %v43
  %v229 = vunpack.c.h.b16 %v43
  %v230 = vunpack.c.l.b16 %v44
  %v231 = vunpack.c.l.b16 %v45
  %v232 = vunpack.c.h.b16 %v45
  %v233 = vunpack.c.l.b16 %v46
  %v234 = vunpack.c.h.b16 %v46
  %v235 = vunpack.c.l.b16 %v47
  %v236 = vunpack.c.l.b16 %v48
  %v237 = vunpack.c.h.b16 %v48
  %v238 = vunpack.c.l.b16 %v49
  %v239 = vunpack.c.h.b16 %v49
  %v240 = vunpack.c.l.b16 %v50
  %v241 = vunpack.c.l.b16 %v51
  %v242 = vunpack.c.h.b16 %v51
  %v243 = vunpack.c.l.b16 %v52
  %v244 = vunpack.c.h.b16 %v52
  %v245 = vunpack.c.l.b16 %v53
  %v246 = vunpack.c.l.b16 %v54
  %v247 = vunpack.c.h.b16 %v54
  %v248 = vunpack.c.l.b16 %v55
  %v249 = vunpack.c.h.b16 %v55
  %v250 = vunpack.c.l.b16 %v56
  %v251 = vunpack.c.l.b16 %v57
  %v252 = vunpack.c.h.b16 %v57
  %v253 = vunpack.c.l.b16 %v58
  %v254 = vunpack.c.h.b16 %v58
  %v255 = vunpack.c.l.b16 %v59
  %v256 = vunpack.c.l.b16 %v60
  %v257 = vunpack.c.h.b16 %v60
  %v258 = vunpack.c.l.b16 %v61
  %v259 = vunpack.c.h.b16 %v61
  %v260 = vunpack.c.l.b16 %v62
  %v261 = vunpack.c.l.b16 %v63
  %v262 = vunpack.c.h.b16 %v63
  %v263 = vunpack.c.l.b16 %v64
  %v264 = vunpack.c.h.b16 %v64
  %v265 = vunpack.c.l.b16 %v65
  %v266 = vpack.c.b16 %v191, %v186
  %v267 = vpack.c.b16 %v192, %v187
  %v268 = vpack.c.b16 %v193, %v188
  %v269 = vpack.c.b16 %v194, %v189
  %v270 = vpack.c.b16 %v195, %v190
  %v271 = vpack.c.b16 %v201, %v196
  %v272 = vpack.c.b16 %v202, %v197
  %v273 = vpack.c.b16 %v203, %v198
  %v274 = vpack.c.b16 %v204, %v199
  %v275 = vpack.c.b16 %v205, %v200
  %v276 = vpack.c.b16 %v211, %v206
  %v277 = vpack.c.b16 %v212, %v207
  %v278 = vpack.c.b16 %v213, %v208
  %v279 = vpack.c.b16 %v214, %v209
  %v280 = vpack.c.b16 %v215, %v210
  %v281 = vpack.c.b16 %v221, %v216
  %v282 = vpack.c.b16 %v222, %v217
  %v283 = vpack.c.b16 %v223, %v218
  %v284 = vpack.c.b16 %v224, %v219
  %v285 = vpack.c.b16 %v225, %v220
  %v286 = vpack.c.b16 %v231, %v226
  %v287 = vpack.c.b16 %v232, %v227
  %v288 = vpack.c.b16 %v233, %v228
  %v289 = vpack.c.b16 %v234, %v229
  %v290 = vpack.c.b16 %v235, %v230
  %v291 = vpack.c.b16 %v241, %v236
  %v292 = vpack.c.b16 %v242, %v237
  %v293 = vpack.c.b16 %v243, %v238
  %v294 = vpack.c.b16 %v244, %v239
  %v295 = vpack.c.b16 %v245, %v240
  %v296 = vpack.c.b16 %v251, %v246
  %v297 = vpack.c.b16 %v252, %v247
  %v298 = vpack.c.b16 %v253, %v248
  %v299 = vpack.c.b16 %v254, %v249
  %v300 = vpack.c.b16 %v255, %v250
  %v301 = vpack.c.b16 %v261, %v256
  %v302 = vpack.c.b16 %v262, %v257
  %v303 = vpack.c.b16 %v263, %v258
  %v304 = vpack.c.b16 %v264, %v259
  %v305 = vpack.c.b16 %v265, %v260
  %v410 = vunpack.c.l.b16 %v66
  %v411 = vunpack.c.l.b16 %v67
  %v412 = vunpack.c.l.b16 %v68
  %v413 = vunpack.c.l.b16 %v69
  %v414 = vunpack.c.l.b16 %v70
  %v415 = vunpack.c.l.b16 %v71
  %v416 = vunpack.c.l.b16 %v72
  %v417 = vunpack.c.l.b16 %v73
  %v418 = vunpack.c.l.b16 %v74
  %v419 = vunpack.c.l.b16 %v75
  %v420 = vunpack.c.l.b16 %v76
  %v421 = vunpack.c.l.b16 %v77
  %v422 = vunpack.c.l.b16 %v78
  %v423 = vunpack.c.l.b16 %v79
  %v424 = vunpack.c.l.b16 %v80
  %v425 = vunpack.c.l.b16 %v81
  %v426 = vunpack.c.l.b16 %v82
  %v427 = vunpack.c.l.b16 %v83
  %v428 = vunpack.c.l.b16 %v84
  %v429 = vunpack.c.l.b16 %v85
  %v430 = vunpack.c.l.b16 %v86
  %v431 = vunpack.c.l.b16 %v87
  %v432 = vunpack.c.l.b16 %v88
  %v433 = vunpack.c.l.b16 %v89
  %v434 = vunpack.c.l.b16 %v90
  %v435 = vunpack.c.l.b16 %v91
  %v436 = vunpack.c.l.b16 %v92
  %v437 = vunpack.c.l.b16 %v93
  %v438 = vunpack.c.l.b16 %v94
  %v439 = vunpack.c.l.b16 %v95
  %v440 = vunpack.c.l.b16 %v96
  %v441 = vunpack.c.l.b16 %v97
  %v442 = vunpack.c.l.b16 %v98
  %v443 = vunpack.c.l.b16 %v99
  %v444 = vunpack.c.l.b16 %v100
  %v445 = vunpack.c.l.b16 %v101
  %v446 = vunpack.c.l.b16 %v102
  %v447 = vunpack.c.l.b16 %v103
  %v448 = vunpack.c.l.b16 %v104
  %v449 = vunpack.c.l.b16 %v105
  %v450 = vunpack.c.l.b16 %v106
  %v451 = vunpack.c.l.b16 %v107
  %v452 = vunpack.c.l.b16 %v108
  %v453 = vunpack.c.l.b16 %v109
  %v454 = vunpack.c.l.b16 %v110
  %v455 = vunpack.c.l.b16 %v111
  %v456 = vunpack.c.l.b16 %v112
  %v457 = vunpack.c.l.b16 %v113
  %v458 = vunpack.c.l.b16 %v114
  %v459 = vunpack.c.l.b16 %v115
  %v460 = vunpack.c.l.b16 %v116
  %v461 = vunpack.c.l.b16 %v117
  %v462 = vunpack.c.l.b16 %v118
  %v463 = vunpack.c.l.b16 %v119
  %v464 = vunpack.c.l.b16 %v120
  %v465 = vunpack.c.l.b16 %v121
  %v466 = vunpack.c.l.b16 %v122
  %v467 = vunpack.c.l.b16 %v123
  %v468 = vunpack.c.l.b16 %v124
  %v469 = vunpack.c.l.b16 %v125
  %v470 = vunpack.c.l.b16 %v126
  %v471 = vunpack.c.l.b16 %v127
  %v472 = vunpack.c.l.b16 %v128
  %v473 = vunpack.c.l.b16 %v129
  %v474 = vunpack.c.l.b16 %v130
  %v475 = vunpack.c.l.b16 %v131
  %v476 = vunpack.c.l.b16 %v132
  %v477 = vunpack.c.l.b16 %v133
  %v478 = vunpack.c.l.b16 %v134
  %v479 = vunpack.c.l.b16 %v135
  %v480 = vunpack.c.l.b16 %v136
  %v481 = vunpack.c.l.b16 %v137
  %v482 = vpack.c.b16 %v411, %v410
  %v483 = vpack.c.b16 %v413, %v412
  %v484 = vpack.c.b16 %v415, %v414
  %v485 = vpack.c.b16 %v417, %v416
  %v486 = vpack.c.b16 %v419, %v418
  %v487 = vpack.c.b16 %v421, %v420
  %v488 = vpack.c.b16 %v423, %v422
  %v489 = vpack.c.b16 %v425, %v424
  %v490 = vpack.c.b16 %v427, %v426
  %v491 = vpack.c.b16 %v429, %v428
  %v492 = vpack.c.b16 %v431, %v430
  %v493 = vpack.c.b16 %v433, %v432
  %v494 = vpack.c.b16 %v435, %v434
  %v495 = vpack.c.b16 %v437, %v436
  %v496 = vpack.c.b16 %v439, %v438
  %v497 = vpack.c.b16 %v441, %v440
  %v498 = vpack.c.b16 %v443, %v442
  %v499 = vpack.c.b16 %v445, %v444
  %v500 = vpack.c.b16 %v447, %v446
  %v501 = vpack.c.b16 %v449, %v448
  %v502 = vpack.c.b16 %v451, %v450
  %v503 = vpack.c.b16 %v453, %v452
  %v504 = vpack.c.b16 %v455, %v454
  %v505 = vpack.c.b16 %v457, %v456
  %v506 = vpack.c.b16 %v459, %v458
  %v507 = vpack.c.b16 %v461, %v460
  %v508 = vpack.c.b16 %v463, %v462
  %v509 = vpack.c.b16 %v465, %v464
  %v510 = vpack.c.b16 %v467, %v466
  %v511 = vpack.c.b16 %v469, %v468
  %v512 = vpack.c.b16 %v471, %v470
  %v513 = vpack.c.b16 %v473, %v472
  %v514 = vpack.c.b16 %v475, %v474
  %v515 = vpack.c.b16 %v477, %v476
  %v516 = vpack.c.b16 %v479, %v478
  %v517 = vpack.c.b16 %v481, %v480
  %vm554 = vcmask 523264
  %v556 = vsel %vm554, %v270, 0
  %v559 = vsel %vm554, %v275, 0
  %v562 = vsel %vm554, %v280, 0
  %v565 = vsel %vm554, %v285, 0
  %v568 = vsel %vm554, %v290, 0
  %v571 = vsel %vm554, %v295, 0
  %v574 = vsel %vm554, %v300, 0
  %v577 = vsel %vm554, %v305, 0
  %579 = vmatprep.subr.bf16.mxu0 0
  %580 = vmatpush1.bf16.msra.mxu0 %v482
  %581 = vmatprep.subr.bf16.mxu0 0
  %582 = vmatpush1.bf16.msra.mxu0 %v483
  %583 = vmatprep.subr.bf16.mxu0 0
  %584 = vmatpush1.bf16.msra.mxu0 %v484
  %585 = vmatprep.subr.bf16.mxu0 0
  %586 = vmatpush1.bf16.msra.mxu0 %v485
  %587 = vmatprep.subr.bf16.mxu0 0
  %588 = vmatpush1.bf16.msra.mxu0 %v486
  %589 = vmatprep.subr.bf16.mxu0 0
  %590 = vmatpush1.bf16.msra.mxu0 %v487
  %591 = vmatprep.subr.bf16.mxu0 0
  %592 = vmatpush1.bf16.msra.mxu0 %v488
  %593 = vmatprep.subr.bf16.mxu0 0
  %594 = vmatpush1.bf16.msra.mxu0 %v489
  %595 = vmatprep.subr.bf16.mxu0 0
  %596 = vmatpush1.bf16.msra.mxu0 %v490
  %597 = vmatprep.subr.bf16.mxu0 0
  %598 = vmatpush1.bf16.msra.mxu0 %v491
  %599 = vmatprep.subr.bf16.mxu0 0
  %600 = vmatpush1.bf16.msra.mxu0 %v492
  %601 = vmatprep.subr.bf16.mxu0 0
  %602 = vmatpush1.bf16.msra.mxu0 %v493
  %603 = vmatprep.subr.bf16.mxu0 0
  %604 = vmatpush1.bf16.msra.mxu0 %v494
  %605 = vmatprep.subr.bf16.mxu0 0
  %606 = vmatpush1.bf16.msra.mxu0 %v495
  %607 = vmatprep.subr.bf16.mxu0 0
  %608 = vmatpush1.bf16.msra.mxu0 %v496
  %609 = vmatprep.subr.bf16.mxu0 0
  %610 = vmatpush1.bf16.msra.mxu0 %v497
  %611 = vmatprep.mubr.bf16.mxu0 %v267
  %612 = vmatmul.mubr.bf16.gmra.mrb[0].mxu0 %v266
  %v613 = vpop.f32.mrb[0].mxu0
  %v614 = vadd.f32 0.0, %v613
  %v615 = vpop.f32.mrb[0].mxu0
  %v616 = vpop.f32.mrb[0].mxu0
  %v617 = vadd.f32 0.0, %v616
  %v618 = vpop.f32.mrb[0].mxu0
  %619 = vmatprep.mubr.bf16.mxu0 %v272
  %620 = vmatmul.mubr.bf16.gmra.mrb[0].mxu0 %v271
  %v621 = vpop.f32.mrb[0].mxu0
  %v622 = vadd.f32 0.0, %v621
  %v623 = vpop.f32.mrb[0].mxu0
  %v624 = vpop.f32.mrb[0].mxu0
  %v625 = vadd.f32 0.0, %v624
  %v626 = vpop.f32.mrb[0].mxu0
  %627 = vmatprep.mubr.bf16.mxu0 %v277
  %628 = vmatmul.mubr.bf16.gmra.mrb[0].mxu0 %v276
  %v629 = vpop.f32.mrb[0].mxu0
  %v630 = vadd.f32 0.0, %v629
  %v631 = vpop.f32.mrb[0].mxu0
  %v632 = vpop.f32.mrb[0].mxu0
  %v633 = vadd.f32 0.0, %v632
  %v634 = vpop.f32.mrb[0].mxu0
  %635 = vmatprep.mubr.bf16.mxu0 %v282
  %636 = vmatmul.mubr.bf16.gmra.mrb[0].mxu0 %v281
  %v637 = vpop.f32.mrb[0].mxu0
  %v638 = vadd.f32 0.0, %v637
  %v639 = vpop.f32.mrb[0].mxu0
  %v640 = vpop.f32.mrb[0].mxu0
  %v641 = vadd.f32 0.0, %v640
  %v642 = vpop.f32.mrb[0].mxu0
  %643 = vmatprep.mubr.bf16.mxu0 %v287
  %644 = vmatmul.mubr.bf16.gmra.mrb[0].mxu0 %v286
  %v645 = vpop.f32.mrb[0].mxu0
  %v646 = vadd.f32 0.0, %v645
  %v647 = vpop.f32.mrb[0].mxu0
  %v648 = vpop.f32.mrb[0].mxu0
  %v649 = vadd.f32 0.0, %v648
  %v650 = vpop.f32.mrb[0].mxu0
  %651 = vmatprep.mubr.bf16.mxu0 %v292
  %652 = vmatmul.mubr.bf16.gmra.mrb[0].mxu0 %v291
  %v653 = vpop.f32.mrb[0].mxu0
  %v654 = vadd.f32 0.0, %v653
  %v655 = vpop.f32.mrb[0].mxu0
  %v656 = vpop.f32.mrb[0].mxu0
  %v657 = vadd.f32 0.0, %v656
  %v658 = vpop.f32.mrb[0].mxu0
  %659 = vmatprep.mubr.bf16.mxu0 %v297
  %660 = vmatmul.mubr.bf16.gmra.mrb[0].mxu0 %v296
  %v661 = vpop.f32.mrb[0].mxu0
  %v662 = vadd.f32 0.0, %v661
  %v663 = vpop.f32.mrb[0].mxu0
  %v664 = vpop.f32.mrb[0].mxu0
  %v665 = vadd.f32 0.0, %v664
  %v666 = vpop.f32.mrb[0].mxu0
  %667 = vmatprep.mubr.bf16.mxu0 %v302
  %668 = vmatmul.mubr.bf16.gmra.mrb[0].mxu0 %v301
  %v669 = vpop.f32.mrb[0].mxu0
  %v670 = vadd.f32 0.0, %v669
  %v671 = vpop.f32.mrb[0].mxu0
  %v672 = vpop.f32.mrb[0].mxu0
  %v673 = vadd.f32 0.0, %v672
  %v674 = vpop.f32.mrb[0].mxu0
  %675 = vdwg.mxu0
  %676 = vmatprep.subr.bf16.mxu0 0
  %677 = vmatpush1.bf16.msra.mxu0 %v498
  %678 = vmatprep.subr.bf16.mxu0 0
  %679 = vmatpush1.bf16.msra.mxu0 %v499
  %680 = vmatprep.subr.bf16.mxu0 0
  %681 = vmatpush1.bf16.msra.mxu0 %v500
  %682 = vmatprep.subr.bf16.mxu0 0
  %683 = vmatpush1.bf16.msra.mxu0 %v501
  %684 = vmatprep.subr.bf16.mxu0 0
  %685 = vmatpush1.bf16.msra.mxu0 %v502
  %686 = vmatprep.subr.bf16.mxu0 0
  %687 = vmatpush1.bf16.msra.mxu0 %v503
  %688 = vmatprep.subr.bf16.mxu0 0
  %689 = vmatpush1.bf16.msra.mxu0 %v504
  %690 = vmatprep.subr.bf16.mxu0 0
  %691 = vmatpush1.bf16.msra.mxu0 %v505
  %692 = vmatprep.subr.bf16.mxu0 0
  %693 = vmatpush1.bf16.msra.mxu0 %v506
  %694 = vmatprep.subr.bf16.mxu0 0
  %695 = vmatpush1.bf16.msra.mxu0 %v507
  %696 = vmatprep.subr.bf16.mxu0 0
  %697 = vmatpush1.bf16.msra.mxu0 %v508
  %698 = vmatprep.subr.bf16.mxu0 0
  %699 = vmatpush1.bf16.msra.mxu0 %v509
  %700 = vmatprep.subr.bf16.mxu0 0
  %701 = vmatpush1.bf16.msra.mxu0 %v510
  %702 = vmatprep.subr.bf16.mxu0 0
  %703 = vmatpush1.bf16.msra.mxu0 %v511
  %704 = vmatprep.subr.bf16.mxu0 0
  %705 = vmatpush1.bf16.msra.mxu0 %v512
  %706 = vmatprep.subr.bf16.mxu0 0
  %707 = vmatpush1.bf16.msra.mxu0 %v513
  %708 = vmatprep.mubr.bf16.mxu0 %v269
  %709 = vmatmul.mubr.bf16.gmra.mrb[0].mxu0 %v268
  %v710 = vpop.f32.mrb[0].mxu0
  %v711 = vadd.f32 %v614, %v710
  %v712 = vpop.f32.mrb[0].mxu0
  %v713 = vpop.f32.mrb[0].mxu0
  %v714 = vadd.f32 %v617, %v713
  %v715 = vpop.f32.mrb[0].mxu0
  %716 = vmatprep.mubr.bf16.mxu0 %v274
  %717 = vmatmul.mubr.bf16.gmra.mrb[0].mxu0 %v273
  %v718 = vpop.f32.mrb[0].mxu0
  %v719 = vadd.f32 %v622, %v718
  %v720 = vpop.f32.mrb[0].mxu0
  %v721 = vpop.f32.mrb[0].mxu0
  %v722 = vadd.f32 %v625, %v721
  %v723 = vpop.f32.mrb[0].mxu0
  %724 = vmatprep.mubr.bf16.mxu0 %v279
  %725 = vmatmul.mubr.bf16.gmra.mrb[0].mxu0 %v278
  %v726 = vpop.f32.mrb[0].mxu0
  %v727 = vadd.f32 %v630, %v726
  %v728 = vpop.f32.mrb[0].mxu0
  %v729 = vpop.f32.mrb[0].mxu0
  %v730 = vadd.f32 %v633, %v729
  %v731 = vpop.f32.mrb[0].mxu0
  %732 = vmatprep.mubr.bf16.mxu0 %v284
  %733 = vmatmul.mubr.bf16.gmra.mrb[0].mxu0 %v283
  %v734 = vpop.f32.mrb[0].mxu0
  %v735 = vadd.f32 %v638, %v734
  %v736 = vpop.f32.mrb[0].mxu0
  %v737 = vpop.f32.mrb[0].mxu0
  %v738 = vadd.f32 %v641, %v737
  %v739 = vpop.f32.mrb[0].mxu0
  %740 = vmatprep.mubr.bf16.mxu0 %v289
  %741 = vmatmul.mubr.bf16.gmra.mrb[0].mxu0 %v288
  %v742 = vpop.f32.mrb[0].mxu0
  %v743 = vadd.f32 %v646, %v742
  %v744 = vpop.f32.mrb[0].mxu0
  %v745 = vpop.f32.mrb[0].mxu0
  %v746 = vadd.f32 %v649, %v745
  %v747 = vpop.f32.mrb[0].mxu0
  %748 = vmatprep.mubr.bf16.mxu0 %v294
  %749 = vmatmul.mubr.bf16.gmra.mrb[0].mxu0 %v293
  %v750 = vpop.f32.mrb[0].mxu0
  %v751 = vadd.f32 %v654, %v750
  %v752 = vpop.f32.mrb[0].mxu0
  %v753 = vpop.f32.mrb[0].mxu0
  %v754 = vadd.f32 %v657, %v753
  %v755 = vpop.f32.mrb[0].mxu0
  %756 = vmatprep.mubr.bf16.mxu0 %v299
  %757 = vmatmul.mubr.bf16.gmra.mrb[0].mxu0 %v298
  %v758 = vpop.f32.mrb[0].mxu0
  %v759 = vadd.f32 %v662, %v758
  %v760 = vpop.f32.mrb[0].mxu0
  %v761 = vpop.f32.mrb[0].mxu0
  %v762 = vadd.f32 %v665, %v761
  %v763 = vpop.f32.mrb[0].mxu0
  %764 = vmatprep.mubr.bf16.mxu0 %v304
  %765 = vmatmul.mubr.bf16.gmra.mrb[0].mxu0 %v303
  %v766 = vpop.f32.mrb[0].mxu0
  %v767 = vadd.f32 %v670, %v766
  %v768 = vpop.f32.mrb[0].mxu0
  %v769 = vpop.f32.mrb[0].mxu0
  %v770 = vadd.f32 %v673, %v769
  %v771 = vpop.f32.mrb[0].mxu0
  %772 = vdwg.mxu0
  %773 = vmatprep.subr.bf16.mxu0 0
  %774 = vmatpush1.bf16.msra.mxu0 %v514
  %775 = vmatprep.subr.bf16.mxu0 0
  %776 = vmatpush1.bf16.msra.mxu0 %v515
  %777 = vmatprep.subr.bf16.mxu0 0
  %778 = vmatpush1.bf16.msra.mxu0 %v516
  %779 = vmatprep.subr.bf16.mxu0 0
  %780 = vmatpush1.bf16.msra.mxu0 %v517
  %781 = vmatprep.subr.bf16.mxu0 0
  %782 = vmatpush1.bf16.msra.mxu0 0
  %783 = vmatprep.subr.bf16.mxu0 0
  %784 = vmatpush1.bf16.msra.mxu0 0
  %785 = vmatprep.subr.bf16.mxu0 0
  %786 = vmatpush1.bf16.msra.mxu0 0
  %787 = vmatprep.subr.bf16.mxu0 0
  %788 = vmatpush1.bf16.msra.mxu0 0
  %789 = vmatprep.subr.bf16.mxu0 0
  %790 = vmatpush1.bf16.msra.mxu0 0
  %791 = vmatprep.subr.bf16.mxu0 0
  %792 = vmatpush1.bf16.msra.mxu0 0
  %793 = vmatprep.subr.bf16.mxu0 0
  %794 = vmatpush1.bf16.msra.mxu0 0
  %795 = vmatprep.subr.bf16.mxu0 0
  %796 = vmatpush1.bf16.msra.mxu0 0
  %797 = vmatprep.subr.bf16.mxu0 0
  %798 = vmatpush1.bf16.msra.mxu0 0
  %799 = vmatprep.subr.bf16.mxu0 0
  %800 = vmatpush1.bf16.msra.mxu0 0
  %801 = vmatprep.subr.bf16.mxu0 0
  %802 = vmatpush1.bf16.msra.mxu0 0
  %803 = vmatprep.subr.bf16.mxu0 0
  %804 = vmatpush1.bf16.msra.mxu0 0
  %805 = vmatprep.mubr.bf16.mxu0 0
  %806 = vmatmul.mubr.bf16.gmra.mrb[0].mxu0 %v556
  %v807 = vpop.f32.mrb[0].mxu0
  %v808 = vadd.f32 %v711, %v807
  %v809 = vpop.f32.mrb[0].mxu0
  %v810 = vpop.f32.mrb[0].mxu0
  %v811 = vadd.f32 %v714, %v810
  %v812 = vpop.f32.mrb[0].mxu0
  %813 = vmatprep.mubr.bf16.mxu0 0
  %814 = vmatmul.mubr.bf16.gmra.mrb[0].mxu0 %v559
  %v815 = vpop.f32.mrb[0].mxu0
  %v816 = vadd.f32 %v719, %v815
  %v817 = vpop.f32.mrb[0].mxu0
  %v818 = vpop.f32.mrb[0].mxu0
  %v819 = vadd.f32 %v722, %v818
  %v820 = vpop.f32.mrb[0].mxu0
  %821 = vmatprep.mubr.bf16.mxu0 0
  %822 = vmatmul.mubr.bf16.gmra.mrb[0].mxu0 %v562
  %v823 = vpop.f32.mrb[0].mxu0
  %v824 = vadd.f32 %v727, %v823
  %v825 = vpop.f32.mrb[0].mxu0
  %v826 = vpop.f32.mrb[0].mxu0
  %v827 = vadd.f32 %v730, %v826
  %v828 = vpop.f32.mrb[0].mxu0
  %829 = vmatprep.mubr.bf16.mxu0 0
  %830 = vmatmul.mubr.bf16.gmra.mrb[0].mxu0 %v565
  %v831 = vpop.f32.mrb[0].mxu0
  %v832 = vadd.f32 %v735, %v831
  %v833 = vpop.f32.mrb[0].mxu0
  %v834 = vpop.f32.mrb[0].mxu0
  %v835 = vadd.f32 %v738, %v834
  %v836 = vpop.f32.mrb[0].mxu0
  %837 = vmatprep.mubr.bf16.mxu0 0
  %838 = vmatmul.mubr.bf16.gmra.mrb[0].mxu0 %v568
  %v839 = vpop.f32.mrb[0].mxu0
  %v840 = vadd.f32 %v743, %v839
  %v841 = vpop.f32.mrb[0].mxu0
  %v842 = vpop.f32.mrb[0].mxu0
  %v843 = vadd.f32 %v746, %v842
  %v844 = vpop.f32.mrb[0].mxu0
  %845 = vmatprep.mubr.bf16.mxu0 0
  %846 = vmatmul.mubr.bf16.gmra.mrb[0].mxu0 %v571
  %v847 = vpop.f32.mrb[0].mxu0
  %v848 = vadd.f32 %v751, %v847
  %v849 = vpop.f32.mrb[0].mxu0
  %v850 = vpop.f32.mrb[0].mxu0
  %v851 = vadd.f32 %v754, %v850
  %v852 = vpop.f32.mrb[0].mxu0
  %853 = vmatprep.mubr.bf16.mxu0 0
  %854 = vmatmul.mubr.bf16.gmra.mrb[0].mxu0 %v574
  %v855 = vpop.f32.mrb[0].mxu0
  %v856 = vadd.f32 %v759, %v855
  %v857 = vpop.f32.mrb[0].mxu0
  %v858 = vpop.f32.mrb[0].mxu0
  %v859 = vadd.f32 %v762, %v858
  %v860 = vpop.f32.mrb[0].mxu0
  %861 = vmatprep.mubr.bf16.mxu0 0
  %862 = vmatmul.mubr.bf16.gmra.mrb[0].mxu0 %v577
  %v863 = vpop.f32.mrb[0].mxu0
  %v864 = vadd.f32 %v767, %v863
  %v865 = vpop.f32.mrb[0].mxu0
  %v866 = vpop.f32.mrb[0].mxu0
  %v867 = vadd.f32 %v770, %v866
  %v868 = vpop.f32.mrb[0].mxu0
  %869 = vdwg.mxu0
  %v870 = vld [vmem:[%s2] sm:$0x1]
  %v872 = vlaneseq
  %v873 = vshrl.u32 %v872, 7
  %v874 = vsub.s32 0, %v873
  %v875 = vrot.slane %v870, %v874
  %v877 = vmul.f32 %v808, %v875
  %v878 = vmul.f32 %v811, %v875
  %v879 = vmul.f32 %v816, %v875
  %v880 = vmul.f32 %v819, %v875
  %v881 = vmul.f32 %v824, %v875
  %v882 = vmul.f32 %v827, %v875
  %v883 = vmul.f32 %v832, %v875
  %v884 = vmul.f32 %v835, %v875
  %v885 = vmul.f32 %v840, %v875
  %v886 = vmul.f32 %v843, %v875
  %v887 = vmul.f32 %v848, %v875
  %v888 = vmul.f32 %v851, %v875
  %v889 = vmul.f32 %v856, %v875
  %v890 = vmul.f32 %v859, %v875
  %v891 = vmul.f32 %v864, %v875
  %v892 = vmul.f32 %v867, %v875
  %v893 = vld [vmem:[%s3] sm:$0x1]
  %v895 = vlaneseq
  %v896 = vshrl.u32 %v895, 7
  %v897 = vsub.s32 0, %v896
  %v898 = vrot.slane %v893, %v897
  %v900 = vadd.f32 %v877, %v898
  %v901 = vadd.f32 %v878, %v898
  %v902 = vadd.f32 %v879, %v898
  %v903 = vadd.f32 %v880, %v898
  %v904 = vadd.f32 %v881, %v898
  %v905 = vadd.f32 %v882, %v898
  %v906 = vadd.f32 %v883, %v898
  %v907 = vadd.f32 %v884, %v898
  %v908 = vadd.f32 %v885, %v898
  %v909 = vadd.f32 %v886, %v898
  %v910 = vadd.f32 %v887, %v898
  %v911 = vadd.f32 %v888, %v898
  %v912 = vadd.f32 %v889, %v898
  %v913 = vadd.f32 %v890, %v898
  %v914 = vadd.f32 %v891, %v898
  %v915 = vadd.f32 %v892, %v898
  %v916 = vmax.f32 %v900, 0.0
  %v917 = vmax.f32 %v901, 0.0
  %v918 = vmax.f32 %v902, 0.0
  %v919 = vmax.f32 %v903, 0.0
  %v920 = vmax.f32 %v904, 0.0
  %v921 = vmax.f32 %v905, 0.0
  %v922 = vmax.f32 %v906, 0.0
  %v923 = vmax.f32 %v907, 0.0
  %v924 = vmax.f32 %v908, 0.0
  %v925 = vmax.f32 %v909, 0.0
  %v926 = vmax.f32 %v910, 0.0
  %v927 = vmax.f32 %v911, 0.0
  %v928 = vmax.f32 %v912, 0.0
  %v929 = vmax.f32 %v913, 0.0
  %v930 = vmax.f32 %v914, 0.0
  %v931 = vmax.f32 %v915, 0.0
  %vm932 = vcmask 130048
  %933 = vst.msk [vmem:[%s4] sm:$0xff] %vm932, %v916
  %934 = vst.msk [vmem:[%s4 + $0x8] sm:$0xff] %vm932, %v917
  %935 = vst.msk [vmem:[%s4 + $0x10] sm:$0xff] %vm932, %v918
  %936 = vst.msk [vmem:[%s4 + $0x18] sm:$0xff] %vm932, %v919
  %937 = vst.msk [vmem:[%s4 + $0x20] sm:$0xff] %vm932, %v920
  %938 = vst.msk [vmem:[%s4 + $0x28] sm:$0xff] %vm932, %v921
  %939 = vst.msk [vmem:[%s4 + $0x30] sm:$0xff] %vm932, %v922
  %940 = vst.msk [vmem:[%s4 + $0x38] sm:$0xff] %vm932, %v923
  %941 = vst.msk [vmem:[%s4 + $0x40] sm:$0xff] %vm932, %v924
  %942 = vst.msk [vmem:[%s4 + $0x48] sm:$0xff] %vm932, %v925
  %943 = vst.msk [vmem:[%s4 + $0x50] sm:$0xff] %vm932, %v926
  %944 = vst.msk [vmem:[%s4 + $0x58] sm:$0xff] %vm932, %v927
  %945 = vst.msk [vmem:[%s4 + $0x60] sm:$0xff] %vm932, %v928
  %946 = vst.msk [vmem:[%s4 + $0x68] sm:$0xff] %vm932, %v929
  %947 = vst.msk [vmem:[%s4 + $0x70] sm:$0xff] %vm932, %v930
  %948 = vst.msk [vmem:[%s4 + $0x78] sm:$0xff] %vm932, %v931
  // Predicated region
  $region18: #{model_conv_unet_forward.23} parent=0 // pred_check
    _
  $region19: #{model_conv_unet_forward.23} parent=0 // pred_check_branch
    %950 = sbr.rel (0) target = $region21
  $region20: #{model_conv_unet_forward.23} parent=0 // pred_region
    _
  $region21: #{model_conv_unet_forward.23} parent=0 // pred_fallthru
    _
  // Predicated region
  $region22: #{model_conv_unet_forward.23} parent=0 // pred_check
    _
  $region23: #{model_conv_unet_forward.23} parent=0 // pred_check_branch
    %952 = sbr.rel (0) target = $region25
  $region24: #{model_conv_unet_forward.23} parent=0 // pred_region
    _
  $region25: #{model_conv_unet_forward.23} parent=0 // pred_fallthru
    _

// kernel: model_conv_unet_forward.24
$region0: #{model_conv_unet_forward.24}
  #allocation0 [shape = 'u32[]', space=smem, size = 0x4, offset = 0x4, fixed_abs, tag = 'smem constant byte address 0x4 - core index']
  #allocation1 [shape = 'u32[144,128]{1,0:T(1,128)}', space=vmem, size = 0x12000, scoped, tag = 'internal scratch']
  %s0 = inlined_call_operand.vmem [shape: bf16[512,288], index: 0, kind: input, shape index: {}]
  %s1 = inlined_call_operand.vmem [shape: bf16[288,8], index: 1, kind: input, shape index: {}]
  %s2 = inlined_call_operand.vmem [shape: f32[1,8], index: 2, kind: input, shape index: {}]
  %s3 = inlined_call_operand.vmem [shape: f32[1,8], index: 3, kind: input, shape index: {}]
  %s4 = inlined_call_operand.vmem [shape: f32[512,8], index: 4, kind: output, shape index: {}]
  %s5 = sld [smem:[#allocation0]]
  $region49: #{model_conv_unet_forward.24} parent=0
    _
  %s7 = ssub.s32 1, %s5
  %s8 = scalar_select 0, %s7, %s5
  loop: start=0, step=1, limit=4
  $region2: #{model_conv_unet_forward.24} parent=0 // loop_pre_header
    _
  $region3: #{model_conv_unet_forward.24} parent=0 // loop_header
    %s10 = sphi 0, %s14
    %p11 = scmp.ge.s32.totalorder %s10, 4
    %s20 = sphi 0, %s22
    %s23 = sphi 0, %s20
    %s24 = sphi 0, %s23
    %s40 = sphi 0, %s24
    %s44 = sphi 0, %s44
    %s46 = sphi 0, %s44
    %s47 = sphi 0, %s46
    %s61 = sphi 0, %s47
    %s65 = sphi 0, %s65
    %s67 = sphi 0, %s65
    %s68 = sphi 0, %s67
    %s82 = sphi 0, %s68
    %s86 = sphi 0, %s86
    %s88 = sphi 0, %s86
    %s89 = sphi 0, %s88
    %s103 = sphi 0, %s89
    %s109 = sphi 0, %s111
    %s112 = sphi 0, %s109
    %s113 = sphi 0, %s112
    %s129 = sphi 0, %s113
  $region4: #{model_conv_unet_forward.24} parent=0 // loop_header_branch
    %13 = sbr.rel (%p11) target = $region8
  $region5: #{model_conv_unet_forward.24} parent=0 // loop_body
    %s15 = ssub.s32 %s10, 1
    %s16 = ssub.s32 %s10, 2
    %s17 = sadd.s32 %s10, 1
    %s18 = ssub.s32 %s10, %s17
    %p19 = scmp.eq.s32.totalorder %s18, 0
    %s21 = sadd.s32 %s20, 1
    %s22 = scalar_select %p19, %s20, %s21
    %p25 = pneg %p19
    %p26 = scmp.eq.s32.totalorder %s10, 1
    %p27 = por %p25, %p26
    %p28 = scmp.ne.s32.totalorder %s20, %s23
    %p29 = scmp.eq.s32.totalorder %s10, 0
    %p30 = por %p28, %p29
    %p31 = scmp.ne.s32.totalorder %s20, %s23
    %p32 = scmp.eq.s32.totalorder %s15, 1
    %p33 = por %p31, %p32
    %p34 = scmp.ne.s32.totalorder %s23, %s24
    %p35 = scmp.eq.s32.totalorder %s15, 0
    %p36 = por %p34, %p35
    %p37 = scmp.ne.s32.totalorder %s23, %s24
    %p38 = scmp.eq.s32.totalorder %s16, 1
    %p39 = por %p37, %p38
    %p41 = scmp.ne.s32.totalorder %s24, %s40
    %p42 = scmp.eq.s32.totalorder %s16, 0
    %p43 = por %p41, %p42
    %s45 = sadd.s32 %s44, 1
    %p48 = scmp.eq.s32.totalorder %s10, 1
    %p49 = scmp.ne.s32.totalorder %s44, %s46
    %p50 = scmp.eq.s32.totalorder %s10, 0
    %p51 = por %p49, %p50
    %p52 = scmp.ne.s32.totalorder %s44, %s46
    %p53 = scmp.eq.s32.totalorder %s15, 1
    %p54 = por %p52, %p53
    %p55 = scmp.ne.s32.totalorder %s46, %s47
    %p56 = scmp.eq.s32.totalorder %s15, 0
    %p57 = por %p55, %p56
    %p58 = scmp.ne.s32.totalorder %s46, %s47
    %p59 = scmp.eq.s32.totalorder %s16, 1
    %p60 = por %p58, %p59
    %p62 = scmp.ne.s32.totalorder %s47, %s61
    %p63 = scmp.eq.s32.totalorder %s16, 0
    %p64 = por %p62, %p63
    %s66 = sadd.s32 %s65, 1
    %p69 = scmp.eq.s32.totalorder %s10, 1
    %p70 = scmp.ne.s32.totalorder %s65, %s67
    %p71 = scmp.eq.s32.totalorder %s10, 0
    %p72 = por %p70, %p71
    %p73 = scmp.ne.s32.totalorder %s65, %s67
    %p74 = scmp.eq.s32.totalorder %s15, 1
    %p75 = por %p73, %p74
    %p76 = scmp.ne.s32.totalorder %s67, %s68
    %p77 = scmp.eq.s32.totalorder %s15, 0
    %p78 = por %p76, %p77
    %p79 = scmp.ne.s32.totalorder %s67, %s68
    %p80 = scmp.eq.s32.totalorder %s16, 1
    %p81 = por %p79, %p80
    %p83 = scmp.ne.s32.totalorder %s68, %s82
    %p84 = scmp.eq.s32.totalorder %s16, 0
    %p85 = por %p83, %p84
    %s87 = sadd.s32 %s86, 1
    %p90 = scmp.eq.s32.totalorder %s10, 1
    %p91 = scmp.ne.s32.totalorder %s86, %s88
    %p92 = scmp.eq.s32.totalorder %s10, 0
    %p93 = por %p91, %p92
    %p94 = scmp.ne.s32.totalorder %s86, %s88
    %p95 = scmp.eq.s32.totalorder %s15, 1
    %p96 = por %p94, %p95
    %p97 = scmp.ne.s32.totalorder %s88, %s89
    %p98 = scmp.eq.s32.totalorder %s15, 0
    %p99 = por %p97, %p98
    %p100 = scmp.ne.s32.totalorder %s88, %s89
    %p101 = scmp.eq.s32.totalorder %s16, 1
    %p102 = por %p100, %p101
    %p104 = scmp.ne.s32.totalorder %s89, %s103
    %p105 = scmp.eq.s32.totalorder %s16, 0
    %p106 = por %p104, %p105
    %s107 = ssub.s32 %s10, %s17
    %p108 = scmp.eq.s32.totalorder %s107, 0
    %s110 = sadd.s32 %s109, 1
    %s111 = scalar_select %p108, %s109, %s110
    %p114 = pneg %p108
    %p115 = scmp.eq.s32.totalorder %s10, 1
    %p116 = por %p114, %p115
    %p117 = scmp.ne.s32.totalorder %s109, %s112
    %p118 = scmp.eq.s32.totalorder %s10, 0
    %p119 = por %p117, %p118
    %p120 = scmp.ne.s32.totalorder %s109, %s112
    %p121 = scmp.eq.s32.totalorder %s15, 1
    %p122 = por %p120, %p121
    %p123 = scmp.ne.s32.totalorder %s112, %s113
    %p124 = scmp.eq.s32.totalorder %s15, 0
    %p125 = por %p123, %p124
    %p126 = scmp.ne.s32.totalorder %s112, %s113
    %p127 = scmp.eq.s32.totalorder %s16, 1
    %p128 = por %p126, %p127
    %p130 = scmp.ne.s32.totalorder %s113, %s129
    %p131 = scmp.eq.s32.totalorder %s16, 0
    %p132 = por %p130, %p131
    %p133 = scmp.le.s32.totalorder 1, %s10
    %p134 = scmp.lt.s32.totalorder %s10, 3
    %p135 = pnand %p133, %p134
    %p136 = pneg %p135
    // Predicated region
    $region9: #{model_conv_unet_forward.24} parent=5 // pred_check
      _
    $region10: #{model_conv_unet_forward.24} parent=5 // pred_check_branch
      %138 = sbr.rel (%p135) target = $region12
    $region11: #{model_conv_unet_forward.24} parent=5 // pred_region
      %s139 = ssub.s32 %s10, 1
      // Predicated region
      $region13: #{model_conv_unet_forward.24} parent=11 // pred_check
        %p140 = pneg %p57
      $region14: #{model_conv_unet_forward.24} parent=11 // pred_check_branch
        %142 = sbr.rel (%p140) target = $region16
      $region15: #{model_conv_unet_forward.24} parent=11 // pred_region
        _
      $region16: #{model_conv_unet_forward.24} parent=11 // pred_fallthru
        _
      // Predicated region
      $region17: #{model_conv_unet_forward.24} parent=11 // pred_check
        %p143 = pneg %p78
      $region18: #{model_conv_unet_forward.24} parent=11 // pred_check_branch
        %145 = sbr.rel (%p143) target = $region20
      $region19: #{model_conv_unet_forward.24} parent=11 // pred_region
        _
      $region20: #{model_conv_unet_forward.24} parent=11 // pred_fallthru
        _
      // Predicated region
      $region21: #{model_conv_unet_forward.24} parent=11 // pred_check
        %p146 = pneg %p99
      $region22: #{model_conv_unet_forward.24} parent=11 // pred_check_branch
        %148 = sbr.rel (%p146) target = $region24
      $region23: #{model_conv_unet_forward.24} parent=11 // pred_region
        _
      $region24: #{model_conv_unet_forward.24} parent=11 // pred_fallthru
        _
    $region12: #{model_conv_unet_forward.24} parent=5 // pred_fallthru
      _
    %p149 = scmp.lt.s32.totalorder %s10, 2
    // Predicated region
    $region25: #{model_conv_unet_forward.24} parent=5 // pred_check
      %p150 = pneg %p149
    $region26: #{model_conv_unet_forward.24} parent=5 // pred_check_branch
      %152 = sbr.rel (%p150) target = $region28
    $region27: #{model_conv_unet_forward.24} parent=5 // pred_region
      // Predicated region
      $region29: #{model_conv_unet_forward.24} parent=27 // pred_check
        %p153 = pneg %p30
      $region30: #{model_conv_unet_forward.24} parent=27 // pred_check_branch
        %155 = sbr.rel (%p153) target = $region32
      $region31: #{model_conv_unet_forward.24} parent=27 // pred_region
        %s156 = smul.u32 32, %s10
        %p157 = scmp.lt.s32.totalorder %s156, 63
        %s158 = scalar_select %p157, %s156, 63
        %s159 = smul.addr %s158, 3
        %s160 = smul.addr %s159, 4
        %s161 = scalar_lea.vmem %s0, %s160
        %s162 = smul.u32 32, %s10
      $region32: #{model_conv_unet_forward.24} parent=27 // pred_fallthru
        _
    $region28: #{model_conv_unet_forward.24} parent=5 // pred_fallthru
      _
    %p163 = scmp.le.s32.totalorder 1, %s10
    %p164 = scmp.lt.s32.totalorder %s10, 3
    %p165 = pnand %p163, %p164
    %p166 = pneg %p165
    // Predicated region
    $region33: #{model_conv_unet_forward.24} parent=5 // pred_check
      _
    $region34: #{model_conv_unet_forward.24} parent=5 // pred_check_branch
      %168 = sbr.rel (%p165) target = $region36
    $region35: #{model_conv_unet_forward.24} parent=5 // pred_region
      %s169 = ssub.s32 %s10, 1
      %s170 = smul.u32 32, %s15
      %p171 = scmp.lt.s32.totalorder %s170, 63
      %s172 = scalar_select %p171, %s170, 63
      %s173 = smul.addr %s172, 3
      %s174 = smul.addr %s173, 4
      %s175 = scalar_lea.vmem %s0, %s174
      %p176 = pneg %p36
      %p177 = pneg %p33
      %p178 = pneg %p57
      %p179 = pneg %p54
      %p180 = pneg %p78
      %p181 = pneg %p75
      %p182 = pneg %p99
      %p183 = pneg %p96
      %p184 = pneg %p125
      %p185 = pneg %p122
      %s186 = smul.u32 32, %s15
      %p187 = scmp.lt.s32.totalorder %s186, 63
      %s188 = scalar_select %p187, %s186, 63
      %s189 = smul.addr %s188, 8
      %s190 = scalar_lea.vmem %s4, %s189
      %s191 = smul.u32 32, %s15
      %p192 = scmp.lt.s32.totalorder %s191, 63
      %s193 = scalar_select %p192, %s191, 63
      %s194 = smul.addr %s193, 3
      %s195 = smul.addr %s194, 4
      %s196 = scalar_lea.vmem %s0, %s195
      %s197 = smul.u32 32, %s15
      %s198 = smul.u32 32, %s15
      %p199 = scmp.lt.s32.totalorder %s198, 63
      %s200 = scalar_select %p199, %s198, 63
      %s201 = smul.addr %s200, 8
      %s202 = scalar_lea.vmem %s4, %s201
      %s203 = smul.u32 32, %s15
      %v205 = vld [vmem:[%s196] sm:$0xff]
      %v206 = vld [vmem:[%s196 + $0x8] sm:$0xf]
      %v207 = vld [vmem:[%s196 + $0xc] sm:$0xff]
      %v208 = vld [vmem:[%s196 + $0x14] sm:$0xf]
      %v209 = vld [vmem:[%s196 + $0x18] sm:$0xff]
      %v210 = vld [vmem:[%s196 + $0x20] sm:$0xf]
      %v211 = vld [vmem:[%s196 + $0x24] sm:$0xff]
      %v212 = vld [vmem:[%s196 + $0x2c] sm:$0xf]
      %v213 = vld [vmem:[%s196 + $0x30] sm:$0xff]
      %v214 = vld [vmem:[%s196 + $0x38] sm:$0xf]
      %v215 = vld [vmem:[%s196 + $0x3c] sm:$0xff]
      %v216 = vld [vmem:[%s196 + $0x44] sm:$0xf]
      %v217 = vld [vmem:[%s196 + $0x48] sm:$0xff]
      %v218 = vld [vmem:[%s196 + $0x50] sm:$0xf]
      %v219 = vld [vmem:[%s196 + $0x54] sm:$0xff]
      %v220 = vld [vmem:[%s196 + $0x5c] sm:$0xf]
      %v221 = vld [vmem:[%s196 + $0x60] sm:$0xff]
      %v222 = vld [vmem:[%s196 + $0x68] sm:$0xf]
      %v223 = vld [vmem:[%s196 + $0x6c] sm:$0xff]
      %v224 = vld [vmem:[%s196 + $0x74] sm:$0xf]
      %v225 = vld [vmem:[%s196 + $0x78] sm:$0xff]
      %v226 = vld [vmem:[%s196 + $0x80] sm:$0xf]
      %v227 = vld [vmem:[%s196 + $0x84] sm:$0xff]
      %v228 = vld [vmem:[%s196 + $0x8c] sm:$0xf]
      %v229 = vld [vmem:[%s196 + $0x90] sm:$0xff]
      %v230 = vld [vmem:[%s196 + $0x98] sm:$0xf]
      %v231 = vld [vmem:[%s196 + $0x9c] sm:$0xff]
      %v232 = vld [vmem:[%s196 + $0xa4] sm:$0xf]
      %v233 = vld [vmem:[%s196 + $0xa8] sm:$0xff]
      %v234 = vld [vmem:[%s196 + $0xb0] sm:$0xf]
      %v235 = vld [vmem:[%s196 + $0xb4] sm:$0xff]
      %v236 = vld [vmem:[%s196 + $0xbc] sm:$0xf]
      %v237 = vld [vmem:[%s196 + $0xc0] sm:$0xff]
      %v238 = vld [vmem:[%s196 + $0xc8] sm:$0xf]
      %v239 = vld [vmem:[%s196 + $0xcc] sm:$0xff]
      %v240 = vld [vmem:[%s196 + $0xd4] sm:$0xf]
      %v241 = vld [vmem:[%s196 + $0xd8] sm:$0xff]
      %v242 = vld [vmem:[%s196 + $0xe0] sm:$0xf]
      %v243 = vld [vmem:[%s196 + $0xe4] sm:$0xff]
      %v244 = vld [vmem:[%s196 + $0xec] sm:$0xf]
      %v245 = vld [vmem:[%s196 + $0xf0] sm:$0xff]
      %v246 = vld [vmem:[%s196 + $0xf8] sm:$0xf]
      %v247 = vld [vmem:[%s196 + $0xfc] sm:$0xff]
      %v248 = vld [vmem:[%s196 + $0x104] sm:$0xf]
      %v249 = vld [vmem:[%s196 + $0x108] sm:$0xff]
      %v250 = vld [vmem:[%s196 + $0x110] sm:$0xf]
      %v251 = vld [vmem:[%s196 + $0x114] sm:$0xff]
      %v252 = vld [vmem:[%s196 + $0x11c] sm:$0xf]
      %v253 = vld [vmem:[%s196 + $0x120] sm:$0xff]
      %v254 = vld [vmem:[%s196 + $0x128] sm:$0xf]
      %v255 = vld [vmem:[%s196 + $0x12c] sm:$0xff]
      %v256 = vld [vmem:[%s196 + $0x134] sm:$0xf]
      %v257 = vld [vmem:[%s196 + $0x138] sm:$0xff]
      %v258 = vld [vmem:[%s196 + $0x140] sm:$0xf]
      %v259 = vld [vmem:[%s196 + $0x144] sm:$0xff]
      %v260 = vld [vmem:[%s196 + $0x14c] sm:$0xf]
      %v261 = vld [vmem:[%s196 + $0x150] sm:$0xff]
      %v262 = vld [vmem:[%s196 + $0x158] sm:$0xf]
      %v263 = vld [vmem:[%s196 + $0x15c] sm:$0xff]
      %v264 = vld [vmem:[%s196 + $0x164] sm:$0xf]
      %v265 = vld [vmem:[%s196 + $0x168] sm:$0xff]
      %v266 = vld [vmem:[%s196 + $0x170] sm:$0xf]
      %v267 = vld [vmem:[%s196 + $0x174] sm:$0xff]
      %v268 = vld [vmem:[%s196 + $0x17c] sm:$0xf]
      %v269 = vld [vmem:[%s1] sm:$0xf]
      %v270 = vld [vmem:[%s1 + $0x4] sm:$0xf]
      %v271 = vld [vmem:[%s1 + $0x8] sm:$0xf]
      %v272 = vld [vmem:[%s1 + $0xc] sm:$0xf]
      %v273 = vld [vmem:[%s1 + $0x10] sm:$0xf]
      %v274 = vld [vmem:[%s1 + $0x14] sm:$0xf]
      %v275 = vld [vmem:[%s1 + $0x18] sm:$0xf]
      %v276 = vld [vmem:[%s1 + $0x1c] sm:$0xf]
      %v277 = vld [vmem:[%s1 + $0x20] sm:$0xf]
      %v278 = vld [vmem:[%s1 + $0x24] sm:$0xf]
      %v279 = vld [vmem:[%s1 + $0x28] sm:$0xf]
      %v280 = vld [vmem:[%s1 + $0x2c] sm:$0xf]
      %v281 = vld [vmem:[%s1 + $0x30] sm:$0xf]
      %v282 = vld [vmem:[%s1 + $0x34] sm:$0xf]
      %v283 = vld [vmem:[%s1 + $0x38] sm:$0xf]
      %v284 = vld [vmem:[%s1 + $0x3c] sm:$0xf]
      %v285 = vld [vmem:[%s1 + $0x40] sm:$0xf]
      %v286 = vld [vmem:[%s1 + $0x44] sm:$0xf]
      %v287 = vld [vmem:[%s1 + $0x48] sm:$0xf]
      %v288 = vld [vmem:[%s1 + $0x4c] sm:$0xf]
      %v289 = vld [vmem:[%s1 + $0x50] sm:$0xf]
      %v290 = vld [vmem:[%s1 + $0x54] sm:$0xf]
      %v291 = vld [vmem:[%s1 + $0x58] sm:$0xf]
      %v292 = vld [vmem:[%s1 + $0x5c] sm:$0xf]
      %v293 = vld [vmem:[%s1 + $0x60] sm:$0xf]
      %v294 = vld [vmem:[%s1 + $0x64] sm:$0xf]
      %v295 = vld [vmem:[%s1 + $0x68] sm:$0xf]
      %v296 = vld [vmem:[%s1 + $0x6c] sm:$0xf]
      %v297 = vld [vmem:[%s1 + $0x70] sm:$0xf]
      %v298 = vld [vmem:[%s1 + $0x74] sm:$0xf]
      %v299 = vld [vmem:[%s1 + $0x78] sm:$0xf]
      %v300 = vld [vmem:[%s1 + $0x7c] sm:$0xf]
      %v301 = vld [vmem:[%s1 + $0x80] sm:$0xf]
      %v302 = vld [vmem:[%s1 + $0x84] sm:$0xf]
      %v303 = vld [vmem:[%s1 + $0x88] sm:$0xf]
      %v304 = vld [vmem:[%s1 + $0x8c] sm:$0xf]
      %v369 = vunpack.c.l.b16 %v205
      %v370 = vunpack.c.h.b16 %v205
      %v371 = vunpack.c.l.b16 %v206
      %v372 = vunpack.c.l.b16 %v207
      %v373 = vunpack.c.h.b16 %v207
      %v374 = vunpack.c.l.b16 %v208
      %v375 = vunpack.c.l.b16 %v209
      %v376 = vunpack.c.h.b16 %v209
      %v377 = vunpack.c.l.b16 %v210
      %v378 = vunpack.c.l.b16 %v211
      %v379 = vunpack.c.h.b16 %v211
      %v380 = vunpack.c.l.b16 %v212
      %v381 = vunpack.c.l.b16 %v213
      %v382 = vunpack.c.h.b16 %v213
      %v383 = vunpack.c.l.b16 %v214
      %v384 = vunpack.c.l.b16 %v215
      %v385 = vunpack.c.h.b16 %v215
      %v386 = vunpack.c.l.b16 %v216
      %v387 = vunpack.c.l.b16 %v217
      %v388 = vunpack.c.h.b16 %v217
      %v389 = vunpack.c.l.b16 %v218
      %v390 = vunpack.c.l.b16 %v219
      %v391 = vunpack.c.h.b16 %v219
      %v392 = vunpack.c.l.b16 %v220
      %v393 = vunpack.c.l.b16 %v221
      %v394 = vunpack.c.h.b16 %v221
      %v395 = vunpack.c.l.b16 %v222
      %v396 = vunpack.c.l.b16 %v223
      %v397 = vunpack.c.h.b16 %v223
      %v398 = vunpack.c.l.b16 %v224
      %v399 = vunpack.c.l.b16 %v225
      %v400 = vunpack.c.h.b16 %v225
      %v401 = vunpack.c.l.b16 %v226
      %v402 = vunpack.c.l.b16 %v227
      %v403 = vunpack.c.h.b16 %v227
      %v404 = vunpack.c.l.b16 %v228
      %v405 = vunpack.c.l.b16 %v229
      %v406 = vunpack.c.h.b16 %v229
      %v407 = vunpack.c.l.b16 %v230
      %v408 = vunpack.c.l.b16 %v231
      %v409 = vunpack.c.h.b16 %v231
      %v410 = vunpack.c.l.b16 %v232
      %v411 = vunpack.c.l.b16 %v233
      %v412 = vunpack.c.h.b16 %v233
      %v413 = vunpack.c.l.b16 %v234
      %v414 = vunpack.c.l.b16 %v235
      %v415 = vunpack.c.h.b16 %v235
      %v416 = vunpack.c.l.b16 %v236
      %v417 = vunpack.c.l.b16 %v237
      %v418 = vunpack.c.h.b16 %v237
      %v419 = vunpack.c.l.b16 %v238
      %v420 = vunpack.c.l.b16 %v239
      %v421 = vunpack.c.h.b16 %v239
      %v422 = vunpack.c.l.b16 %v240
      %v423 = vunpack.c.l.b16 %v241
      %v424 = vunpack.c.h.b16 %v241
      %v425 = vunpack.c.l.b16 %v242
      %v426 = vunpack.c.l.b16 %v243
      %v427 = vunpack.c.h.b16 %v243
      %v428 = vunpack.c.l.b16 %v244
      %v429 = vunpack.c.l.b16 %v245
      %v430 = vunpack.c.h.b16 %v245
      %v431 = vunpack.c.l.b16 %v246
      %v432 = vunpack.c.l.b16 %v247
      %v433 = vunpack.c.h.b16 %v247
      %v434 = vunpack.c.l.b16 %v248
      %v435 = vunpack.c.l.b16 %v249
      %v436 = vunpack.c.h.b16 %v249
      %v437 = vunpack.c.l.b16 %v250
      %v438 = vunpack.c.l.b16 %v251
      %v439 = vunpack.c.h.b16 %v251
      %v440 = vunpack.c.l.b16 %v252
      %v441 = vunpack.c.l.b16 %v253
      %v442 = vunpack.c.h.b16 %v253
      %v443 = vunpack.c.l.b16 %v254
      %v444 = vunpack.c.l.b16 %v255
      %v445 = vunpack.c.h.b16 %v255
      %v446 = vunpack.c.l.b16 %v256
      %v447 = vunpack.c.l.b16 %v257
      %v448 = vunpack.c.h.b16 %v257
      %v449 = vunpack.c.l.b16 %v258
      %v450 = vunpack.c.l.b16 %v259
      %v451 = vunpack.c.h.b16 %v259
      %v452 = vunpack.c.l.b16 %v260
      %v453 = vunpack.c.l.b16 %v261
      %v454 = vunpack.c.h.b16 %v261
      %v455 = vunpack.c.l.b16 %v262
      %v456 = vunpack.c.l.b16 %v263
      %v457 = vunpack.c.h.b16 %v263
      %v458 = vunpack.c.l.b16 %v264
      %v459 = vunpack.c.l.b16 %v265
      %v460 = vunpack.c.h.b16 %v265
      %v461 = vunpack.c.l.b16 %v266
      %v462 = vunpack.c.l.b16 %v267
      %v463 = vunpack.c.h.b16 %v267
      %v464 = vunpack.c.l.b16 %v268
      %v465 = vpack.c.b16 %v372, %v369
      %v466 = vpack.c.b16 %v373, %v370
      %v467 = vpack.c.b16 %v374, %v371
      %v468 = vpack.c.b16 %v378, %v375
      %v469 = vpack.c.b16 %v379, %v376
      %v470 = vpack.c.b16 %v380, %v377
      %v471 = vpack.c.b16 %v384, %v381
      %v472 = vpack.c.b16 %v385, %v382
      %v473 = vpack.c.b16 %v386, %v383
      %v474 = vpack.c.b16 %v390, %v387
      %v475 = vpack.c.b16 %v391, %v388
      %v476 = vpack.c.b16 %v392, %v389
      %v477 = vpack.c.b16 %v396, %v393
      %v478 = vpack.c.b16 %v397, %v394
      %v479 = vpack.c.b16 %v398, %v395
      %v480 = vpack.c.b16 %v402, %v399
      %v481 = vpack.c.b16 %v403, %v400
      %v482 = vpack.c.b16 %v404, %v401
      %v483 = vpack.c.b16 %v408, %v405
      %v484 = vpack.c.b16 %v409, %v406
      %v485 = vpack.c.b16 %v410, %v407
      %v486 = vpack.c.b16 %v414, %v411
      %v487 = vpack.c.b16 %v415, %v412
      %v488 = vpack.c.b16 %v416, %v413
      %v489 = vpack.c.b16 %v420, %v417
      %v490 = vpack.c.b16 %v421, %v418
      %v491 = vpack.c.b16 %v422, %v419
      %v492 = vpack.c.b16 %v426, %v423
      %v493 = vpack.c.b16 %v427, %v424
      %v494 = vpack.c.b16 %v428, %v425
      %v495 = vpack.c.b16 %v432, %v429
      %v496 = vpack.c.b16 %v433, %v430
      %v497 = vpack.c.b16 %v434, %v431
      %v498 = vpack.c.b16 %v438, %v435
      %v499 = vpack.c.b16 %v439, %v436
      %v500 = vpack.c.b16 %v440, %v437
      %v501 = vpack.c.b16 %v444, %v441
      %v502 = vpack.c.b16 %v445, %v442
      %v503 = vpack.c.b16 %v446, %v443
      %v504 = vpack.c.b16 %v450, %v447
      %v505 = vpack.c.b16 %v451, %v448
      %v506 = vpack.c.b16 %v452, %v449
      %v507 = vpack.c.b16 %v456, %v453
      %v508 = vpack.c.b16 %v457, %v454
      %v509 = vpack.c.b16 %v458, %v455
      %v510 = vpack.c.b16 %v462, %v459
      %v511 = vpack.c.b16 %v463, %v460
      %v512 = vpack.c.b16 %v464, %v461
      %v581 = vunpack.c.l.b16 %v269
      %v582 = vunpack.c.l.b16 %v270
      %v583 = vunpack.c.l.b16 %v271
      %v584 = vunpack.c.l.b16 %v272
      %v585 = vunpack.c.l.b16 %v273
      %v586 = vunpack.c.l.b16 %v274
      %v587 = vunpack.c.l.b16 %v275
      %v588 = vunpack.c.l.b16 %v276
      %v589 = vunpack.c.l.b16 %v277
      %v590 = vunpack.c.l.b16 %v278
      %v591 = vunpack.c.l.b16 %v279
      %v592 = vunpack.c.l.b16 %v280
      %v593 = vunpack.c.l.b16 %v281
      %v594 = vunpack.c.l.b16 %v282
      %v595 = vunpack.c.l.b16 %v283
      %v596 = vunpack.c.l.b16 %v284
      %v597 = vunpack.c.l.b16 %v285
      %v598 = vunpack.c.l.b16 %v286
      %v599 = vunpack.c.l.b16 %v287
      %v600 = vunpack.c.l.b16 %v288
      %v601 = vunpack.c.l.b16 %v289
      %v602 = vunpack.c.l.b16 %v290
      %v603 = vunpack.c.l.b16 %v291
      %v604 = vunpack.c.l.b16 %v292
      %v605 = vunpack.c.l.b16 %v293
      %v606 = vunpack.c.l.b16 %v294
      %v607 = vunpack.c.l.b16 %v295
      %v608 = vunpack.c.l.b16 %v296
      %v609 = vunpack.c.l.b16 %v297
      %v610 = vunpack.c.l.b16 %v298
      %v611 = vunpack.c.l.b16 %v299
      %v612 = vunpack.c.l.b16 %v300
      %v613 = vunpack.c.l.b16 %v301
      %v614 = vunpack.c.l.b16 %v302
      %v615 = vunpack.c.l.b16 %v303
      %v616 = vunpack.c.l.b16 %v304
      %v617 = vpack.c.b16 %v582, %v581
      %v618 = vpack.c.b16 %v584, %v583
      %v619 = vpack.c.b16 %v586, %v585
      %v620 = vpack.c.b16 %v588, %v587
      %v621 = vpack.c.b16 %v590, %v589
      %v622 = vpack.c.b16 %v592, %v591
      %v623 = vpack.c.b16 %v594, %v593
      %v624 = vpack.c.b16 %v596, %v595
      %v625 = vpack.c.b16 %v598, %v597
      %v626 = vpack.c.b16 %v600, %v599
      %v627 = vpack.c.b16 %v602, %v601
      %v628 = vpack.c.b16 %v604, %v603
      %v629 = vpack.c.b16 %v606, %v605
      %v630 = vpack.c.b16 %v608, %v607
      %v631 = vpack.c.b16 %v610, %v609
      %v632 = vpack.c.b16 %v612, %v611
      %v633 = vpack.c.b16 %v614, %v613
      %v634 = vpack.c.b16 %v616, %v615
      %vm653 = vcmask 261120
      %v655 = vsel %vm653, %v467, 0
      %v658 = vsel %vm653, %v470, 0
      %v661 = vsel %vm653, %v473, 0
      %v664 = vsel %vm653, %v476, 0
      %v667 = vsel %vm653, %v479, 0
      %v670 = vsel %vm653, %v482, 0
      %v673 = vsel %vm653, %v485, 0
      %v676 = vsel %vm653, %v488, 0
      %v679 = vsel %vm653, %v491, 0
      %v682 = vsel %vm653, %v494, 0
      %v685 = vsel %vm653, %v497, 0
      %v688 = vsel %vm653, %v500, 0
      %v691 = vsel %vm653, %v503, 0
      %v694 = vsel %vm653, %v506, 0
      %v697 = vsel %vm653, %v509, 0
      %v700 = vsel %vm653, %v512, 0
      %702 = vmatprep.subr.bf16.mxu0 0
      %703 = vmatpush1.bf16.msra.mxu0 %v617
      %704 = vmatprep.subr.bf16.mxu0 0
      %705 = vmatpush1.bf16.msra.mxu0 %v618
      %706 = vmatprep.subr.bf16.mxu0 0
      %707 = vmatpush1.bf16.msra.mxu0 %v619
      %708 = vmatprep.subr.bf16.mxu0 0
      %709 = vmatpush1.bf16.msra.mxu0 %v620
      %710 = vmatprep.subr.bf16.mxu0 0
      %711 = vmatpush1.bf16.msra.mxu0 %v621
      %712 = vmatprep.subr.bf16.mxu0 0
      %713 = vmatpush1.bf16.msra.mxu0 %v622
      %714 = vmatprep.subr.bf16.mxu0 0
      %715 = vmatpush1.bf16.msra.mxu0 %v623
      %716 = vmatprep.subr.bf16.mxu0 0
      %717 = vmatpush1.bf16.msra.mxu0 %v624
      %718 = vmatprep.subr.bf16.mxu0 0
      %719 = vmatpush1.bf16.msra.mxu0 %v625
      %720 = vmatprep.subr.bf16.mxu0 0
      %721 = vmatpush1.bf16.msra.mxu0 %v626
      %722 = vmatprep.subr.bf16.mxu0 0
      %723 = vmatpush1.bf16.msra.mxu0 %v627
      %724 = vmatprep.subr.bf16.mxu0 0
      %725 = vmatpush1.bf16.msra.mxu0 %v628
      %726 = vmatprep.subr.bf16.mxu0 0
      %727 = vmatpush1.bf16.msra.mxu0 %v629
      %728 = vmatprep.subr.bf16.mxu0 0
      %729 = vmatpush1.bf16.msra.mxu0 %v630
      %730 = vmatprep.subr.bf16.mxu0 0
      %731 = vmatpush1.bf16.msra.mxu0 %v631
      %732 = vmatprep.subr.bf16.mxu0 0
      %733 = vmatpush1.bf16.msra.mxu0 %v632
      %734 = vmatprep.mubr.bf16.mxu0 %v466
      %735 = vmatmul.mubr.bf16.gmra.mrb[0].mxu0 %v465
      %v736 = vpop.f32.mrb[0].mxu0
      %v737 = vadd.f32 0.0, %v736
      %v738 = vpop.f32.mrb[0].mxu0
      %v739 = vpop.f32.mrb[0].mxu0
      %v740 = vadd.f32 0.0, %v739
      %v741 = vpop.f32.mrb[0].mxu0
      %742 = vmatprep.mubr.bf16.mxu0 %v469
      %743 = vmatmul.mubr.bf16.gmra.mrb[0].mxu0 %v468
      %v744 = vpop.f32.mrb[0].mxu0
      %v745 = vadd.f32 0.0, %v744
      %v746 = vpop.f32.mrb[0].mxu0
      %v747 = vpop.f32.mrb[0].mxu0
      %v748 = vadd.f32 0.0, %v747
      %v749 = vpop.f32.mrb[0].mxu0
      %750 = vmatprep.mubr.bf16.mxu0 %v472
      %751 = vmatmul.mubr.bf16.gmra.mrb[0].mxu0 %v471
      %v752 = vpop.f32.mrb[0].mxu0
      %v753 = vadd.f32 0.0, %v752
      %v754 = vpop.f32.mrb[0].mxu0
      %v755 = vpop.f32.mrb[0].mxu0
      %v756 = vadd.f32 0.0, %v755
      %v757 = vpop.f32.mrb[0].mxu0
      %758 = vmatprep.mubr.bf16.mxu0 %v475
      %759 = vmatmul.mubr.bf16.gmra.mrb[0].mxu0 %v474
      %v760 = vpop.f32.mrb[0].mxu0
      %v761 = vadd.f32 0.0, %v760
      %v762 = vpop.f32.mrb[0].mxu0
      %v763 = vpop.f32.mrb[0].mxu0
      %v764 = vadd.f32 0.0, %v763
      %v765 = vpop.f32.mrb[0].mxu0
      %766 = vmatprep.mubr.bf16.mxu0 %v478
      %767 = vmatmul.mubr.bf16.gmra.mrb[0].mxu0 %v477
      %v768 = vpop.f32.mrb[0].mxu0
      %v769 = vadd.f32 0.0, %v768
      %v770 = vpop.f32.mrb[0].mxu0
      %v771 = vpop.f32.mrb[0].mxu0
      %v772 = vadd.f32 0.0, %v771
      %v773 = vpop.f32.mrb[0].mxu0
      %774 = vmatprep.mubr.bf16.mxu0 %v481
      %775 = vmatmul.mubr.bf16.gmra.mrb[0].mxu0 %v480
      %v776 = vpop.f32.mrb[0].mxu0
      %v777 = vadd.f32 0.0, %v776
      %v778 = vpop.f32.mrb[0].mxu0
      %v779 = vpop.f32.mrb[0].mxu0
      %v780 = vadd.f32 0.0, %v779
      %v781 = vpop.f32.mrb[0].mxu0
      %782 = vmatprep.mubr.bf16.mxu0 %v484
      %783 = vmatmul.mubr.bf16.gmra.mrb[0].mxu0 %v483
      %v784 = vpop.f32.mrb[0].mxu0
      %v785 = vadd.f32 0.0, %v784
      %v786 = vpop.f32.mrb[0].mxu0
      %v787 = vpop.f32.mrb[0].mxu0
      %v788 = vadd.f32 0.0, %v787
      %v789 = vpop.f32.mrb[0].mxu0
      %790 = vmatprep.mubr.bf16.mxu0 %v487
      %791 = vmatmul.mubr.bf16.gmra.mrb[0].mxu0 %v486
      %v792 = vpop.f32.mrb[0].mxu0
      %v793 = vadd.f32 0.0, %v792
      %v794 = vpop.f32.mrb[0].mxu0
      %v795 = vpop.f32.mrb[0].mxu0
      %v796 = vadd.f32 0.0, %v795
      %v797 = vpop.f32.mrb[0].mxu0
      %798 = vmatprep.mubr.bf16.mxu0 %v490
      %799 = vmatmul.mubr.bf16.gmra.mrb[0].mxu0 %v489
      %v800 = vpop.f32.mrb[0].mxu0
      %v801 = vadd.f32 0.0, %v800
      %v802 = vpop.f32.mrb[0].mxu0
      %v803 = vpop.f32.mrb[0].mxu0
      %v804 = vadd.f32 0.0, %v803
      %v805 = vpop.f32.mrb[0].mxu0
      %806 = vmatprep.mubr.bf16.mxu0 %v493
      %807 = vmatmul.mubr.bf16.gmra.mrb[0].mxu0 %v492
      %v808 = vpop.f32.mrb[0].mxu0
      %v809 = vadd.f32 0.0, %v808
      %v810 = vpop.f32.mrb[0].mxu0
      %v811 = vpop.f32.mrb[0].mxu0
      %v812 = vadd.f32 0.0, %v811
      %v813 = vpop.f32.mrb[0].mxu0
      %814 = vmatprep.mubr.bf16.mxu0 %v496
      %815 = vmatmul.mubr.bf16.gmra.mrb[0].mxu0 %v495
      %v816 = vpop.f32.mrb[0].mxu0
      %v817 = vadd.f32 0.0, %v816
      %v818 = vpop.f32.mrb[0].mxu0
      %v819 = vpop.f32.mrb[0].mxu0
      %v820 = vadd.f32 0.0, %v819
      %v821 = vpop.f32.mrb[0].mxu0
      %822 = vmatprep.mubr.bf16.mxu0 %v499
      %823 = vmatmul.mubr.bf16.gmra.mrb[0].mxu0 %v498
      %v824 = vpop.f32.mrb[0].mxu0
      %v825 = vadd.f32 0.0, %v824
      %v826 = vpop.f32.mrb[0].mxu0
      %v827 = vpop.f32.mrb[0].mxu0
      %v828 = vadd.f32 0.0, %v827
      %v829 = vpop.f32.mrb[0].mxu0
      %830 = vmatprep.mubr.bf16.mxu0 %v502
      %831 = vmatmul.mubr.bf16.gmra.mrb[0].mxu0 %v501
      %v832 = vpop.f32.mrb[0].mxu0
      %v833 = vadd.f32 0.0, %v832
      %v834 = vpop.f32.mrb[0].mxu0
      %v835 = vpop.f32.mrb[0].mxu0
      %v836 = vadd.f32 0.0, %v835
      %v837 = vpop.f32.mrb[0].mxu0
      %838 = vmatprep.mubr.bf16.mxu0 %v505
      %839 = vmatmul.mubr.bf16.gmra.mrb[0].mxu0 %v504
      %v840 = vpop.f32.mrb[0].mxu0
      %v841 = vadd.f32 0.0, %v840
      %v842 = vpop.f32.mrb[0].mxu0
      %v843 = vpop.f32.mrb[0].mxu0
      %v844 = vadd.f32 0.0, %v843
      %v845 = vpop.f32.mrb[0].mxu0
      %846 = vmatprep.mubr.bf16.mxu0 %v508
      %847 = vmatmul.mubr.bf16.gmra.mrb[0].mxu0 %v507
      %v848 = vpop.f32.mrb[0].mxu0
      %v849 = vadd.f32 0.0, %v848
      %v850 = vpop.f32.mrb[0].mxu0
      %v851 = vpop.f32.mrb[0].mxu0
      %v852 = vadd.f32 0.0, %v851
      %v853 = vpop.f32.mrb[0].mxu0
      %854 = vmatprep.mubr.bf16.mxu0 %v511
      %855 = vmatmul.mubr.bf16.gmra.mrb[0].mxu0 %v510
      %v856 = vpop.f32.mrb[0].mxu0
      %v857 = vadd.f32 0.0, %v856
      %v858 = vpop.f32.mrb[0].mxu0
      %v859 = vpop.f32.mrb[0].mxu0
      %v860 = vadd.f32 0.0, %v859
      %v861 = vpop.f32.mrb[0].mxu0
      %862 = vdwg.mxu0
      %863 = vmatprep.subr.bf16.mxu0 0
      %864 = vmatpush1.bf16.msra.mxu0 %v633
      %865 = vmatprep.subr.bf16.mxu0 0
      %866 = vmatpush1.bf16.msra.mxu0 %v634
      %867 = vmatprep.subr.bf16.mxu0 0
      %868 = vmatpush1.bf16.msra.mxu0 0
      %869 = vmatprep.subr.bf16.mxu0 0
      %870 = vmatpush1.bf16.msra.mxu0 0
      %871 = vmatprep.subr.bf16.mxu0 0
      %872 = vmatpush1.bf16.msra.mxu0 0
      %873 = vmatprep.subr.bf16.mxu0 0
      %874 = vmatpush1.bf16.msra.mxu0 0
      %875 = vmatprep.subr.bf16.mxu0 0
      %876 = vmatpush1.bf16.msra.mxu0 0
      %877 = vmatprep.subr.bf16.mxu0 0
      %878 = vmatpush1.bf16.msra.mxu0 0
      %879 = vmatprep.subr.bf16.mxu0 0
      %880 = vmatpush1.bf16.msra.mxu0 0
      %881 = vmatprep.subr.bf16.mxu0 0
      %882 = vmatpush1.bf16.msra.mxu0 0
      %883 = vmatprep.subr.bf16.mxu0 0
      %884 = vmatpush1.bf16.msra.mxu0 0
      %885 = vmatprep.subr.bf16.mxu0 0
      %886 = vmatpush1.bf16.msra.mxu0 0
      %887 = vmatprep.subr.bf16.mxu0 0
      %888 = vmatpush1.bf16.msra.mxu0 0
      %889 = vmatprep.subr.bf16.mxu0 0
      %890 = vmatpush1.bf16.msra.mxu0 0
      %891 = vmatprep.subr.bf16.mxu0 0
      %892 = vmatpush1.bf16.msra.mxu0 0
      %893 = vmatprep.subr.bf16.mxu0 0
      %894 = vmatpush1.bf16.msra.mxu0 0
      %895 = vmatprep.mubr.bf16.mxu0 0
      %896 = vmatmul.mubr.bf16.gmra.mrb[0].mxu0 %v655
      %v897 = vpop.f32.mrb[0].mxu0
      %v898 = vadd.f32 %v737, %v897
      %v899 = vpop.f32.mrb[0].mxu0
      %v900 = vpop.f32.mrb[0].mxu0
      %v901 = vadd.f32 %v740, %v900
      %v902 = vpop.f32.mrb[0].mxu0
      %903 = vmatprep.mubr.bf16.mxu0 0
      %904 = vmatmul.mubr.bf16.gmra.mrb[0].mxu0 %v658
      %v905 = vpop.f32.mrb[0].mxu0
      %v906 = vadd.f32 %v745, %v905
      %v907 = vpop.f32.mrb[0].mxu0
      %v908 = vpop.f32.mrb[0].mxu0
      %v909 = vadd.f32 %v748, %v908
      %v910 = vpop.f32.mrb[0].mxu0
      %911 = vmatprep.mubr.bf16.mxu0 0
      %912 = vmatmul.mubr.bf16.gmra.mrb[0].mxu0 %v661
      %v913 = vpop.f32.mrb[0].mxu0
      %v914 = vadd.f32 %v753, %v913
      %v915 = vpop.f32.mrb[0].mxu0
      %v916 = vpop.f32.mrb[0].mxu0
      %v917 = vadd.f32 %v756, %v916
      %v918 = vpop.f32.mrb[0].mxu0
      %919 = vmatprep.mubr.bf16.mxu0 0
      %920 = vmatmul.mubr.bf16.gmra.mrb[0].mxu0 %v664
      %v921 = vpop.f32.mrb[0].mxu0
      %v922 = vadd.f32 %v761, %v921
      %v923 = vpop.f32.mrb[0].mxu0
      %v924 = vpop.f32.mrb[0].mxu0
      %v925 = vadd.f32 %v764, %v924
      %v926 = vpop.f32.mrb[0].mxu0
      %927 = vmatprep.mubr.bf16.mxu0 0
      %928 = vmatmul.mubr.bf16.gmra.mrb[0].mxu0 %v667
      %v929 = vpop.f32.mrb[0].mxu0
      %v930 = vadd.f32 %v769, %v929
      %v931 = vpop.f32.mrb[0].mxu0
      %v932 = vpop.f32.mrb[0].mxu0
      %v933 = vadd.f32 %v772, %v932
      %v934 = vpop.f32.mrb[0].mxu0
      %935 = vmatprep.mubr.bf16.mxu0 0
      %936 = vmatmul.mubr.bf16.gmra.mrb[0].mxu0 %v670
      %v937 = vpop.f32.mrb[0].mxu0
      %v938 = vadd.f32 %v777, %v937
      %v939 = vpop.f32.mrb[0].mxu0
      %v940 = vpop.f32.mrb[0].mxu0
      %v941 = vadd.f32 %v780, %v940
      %v942 = vpop.f32.mrb[0].mxu0
      %943 = vmatprep.mubr.bf16.mxu0 0
      %944 = vmatmul.mubr.bf16.gmra.mrb[0].mxu0 %v673
      %v945 = vpop.f32.mrb[0].mxu0
      %v946 = vadd.f32 %v785, %v945
      %v947 = vpop.f32.mrb[0].mxu0
      %v948 = vpop.f32.mrb[0].mxu0
      %v949 = vadd.f32 %v788, %v948
      %v950 = vpop.f32.mrb[0].mxu0
      %951 = vmatprep.mubr.bf16.mxu0 0
      %952 = vmatmul.mubr.bf16.gmra.mrb[0].mxu0 %v676
      %v953 = vpop.f32.mrb[0].mxu0
      %v954 = vadd.f32 %v793, %v953
      %v955 = vpop.f32.mrb[0].mxu0
      %v956 = vpop.f32.mrb[0].mxu0
      %v957 = vadd.f32 %v796, %v956
      %v958 = vpop.f32.mrb[0].mxu0
      %959 = vmatprep.mubr.bf16.mxu0 0
      %960 = vmatmul.mubr.bf16.gmra.mrb[0].mxu0 %v679
      %v961 = vpop.f32.mrb[0].mxu0
      %v962 = vadd.f32 %v801, %v961
      %v963 = vpop.f32.mrb[0].mxu0
      %v964 = vpop.f32.mrb[0].mxu0
      %v965 = vadd.f32 %v804, %v964
      %v966 = vpop.f32.mrb[0].mxu0
      %967 = vmatprep.mubr.bf16.mxu0 0
      %968 = vmatmul.mubr.bf16.gmra.mrb[0].mxu0 %v682
      %v969 = vpop.f32.mrb[0].mxu0
      %v970 = vadd.f32 %v809, %v969
      %v971 = vpop.f32.mrb[0].mxu0
      %v972 = vpop.f32.mrb[0].mxu0
      %v973 = vadd.f32 %v812, %v972
      %v974 = vpop.f32.mrb[0].mxu0
      %975 = vmatprep.mubr.bf16.mxu0 0
      %976 = vmatmul.mubr.bf16.gmra.mrb[0].mxu0 %v685
      %v977 = vpop.f32.mrb[0].mxu0
      %v978 = vadd.f32 %v817, %v977
      %v979 = vpop.f32.mrb[0].mxu0
      %v980 = vpop.f32.mrb[0].mxu0
      %v981 = vadd.f32 %v820, %v980
      %v982 = vpop.f32.mrb[0].mxu0
      %983 = vmatprep.mubr.bf16.mxu0 0
      %984 = vmatmul.mubr.bf16.gmra.mrb[0].mxu0 %v688
      %v985 = vpop.f32.mrb[0].mxu0
      %v986 = vadd.f32 %v825, %v985
      %v987 = vpop.f32.mrb[0].mxu0
      %v988 = vpop.f32.mrb[0].mxu0
      %v989 = vadd.f32 %v828, %v988
      %v990 = vpop.f32.mrb[0].mxu0
      %991 = vmatprep.mubr.bf16.mxu0 0
      %992 = vmatmul.mubr.bf16.gmra.mrb[0].mxu0 %v691
      %v993 = vpop.f32.mrb[0].mxu0
      %v994 = vadd.f32 %v833, %v993
      %v995 = vpop.f32.mrb[0].mxu0
      %v996 = vpop.f32.mrb[0].mxu0
      %v997 = vadd.f32 %v836, %v996
      %v998 = vpop.f32.mrb[0].mxu0
      %999 = vmatprep.mubr.bf16.mxu0 0
      %1000 = vmatmul.mubr.bf16.gmra.mrb[0].mxu0 %v694
      %v1001 = vpop.f32.mrb[0].mxu0
      %v1002 = vadd.f32 %v841, %v1001
      %v1003 = vpop.f32.mrb[0].mxu0
      %v1004 = vpop.f32.mrb[0].mxu0
      %v1005 = vadd.f32 %v844, %v1004
      %v1006 = vpop.f32.mrb[0].mxu0
      %1007 = vmatprep.mubr.bf16.mxu0 0
      %1008 = vmatmul.mubr.bf16.gmra.mrb[0].mxu0 %v697
      %v1009 = vpop.f32.mrb[0].mxu0
      %v1010 = vadd.f32 %v849, %v1009
      %v1011 = vpop.f32.mrb[0].mxu0
      %v1012 = vpop.f32.mrb[0].mxu0
      %v1013 = vadd.f32 %v852, %v1012
      %v1014 = vpop.f32.mrb[0].mxu0
      %1015 = vmatprep.mubr.bf16.mxu0 0
      %1016 = vmatmul.mubr.bf16.gmra.mrb[0].mxu0 %v700
      %v1017 = vpop.f32.mrb[0].mxu0
      %v1018 = vadd.f32 %v857, %v1017
      %v1019 = vpop.f32.mrb[0].mxu0
      %v1020 = vpop.f32.mrb[0].mxu0
      %v1021 = vadd.f32 %v860, %v1020
      %v1022 = vpop.f32.mrb[0].mxu0
      %1023 = vdwg.mxu0
      %v1024 = vld [vmem:[%s2] sm:$0x1]
      %v1026 = vlaneseq
      %v1027 = vshrl.u32 %v1026, 7
      %v1028 = vsub.s32 0, %v1027
      %v1029 = vrot.slane %v1024, %v1028
      %v1031 = vmul.f32 %v898, %v1029
      %v1032 = vmul.f32 %v901, %v1029
      %v1033 = vmul.f32 %v906, %v1029
      %v1034 = vmul.f32 %v909, %v1029
      %v1035 = vmul.f32 %v914, %v1029
      %v1036 = vmul.f32 %v917, %v1029
      %v1037 = vmul.f32 %v922, %v1029
      %v1038 = vmul.f32 %v925, %v1029
      %v1039 = vmul.f32 %v930, %v1029
      %v1040 = vmul.f32 %v933, %v1029
      %v1041 = vmul.f32 %v938, %v1029
      %v1042 = vmul.f32 %v941, %v1029
      %v1043 = vmul.f32 %v946, %v1029
      %v1044 = vmul.f32 %v949, %v1029
      %v1045 = vmul.f32 %v954, %v1029
      %v1046 = vmul.f32 %v957, %v1029
      %v1047 = vmul.f32 %v962, %v1029
      %v1048 = vmul.f32 %v965, %v1029
      %v1049 = vmul.f32 %v970, %v1029
      %v1050 = vmul.f32 %v973, %v1029
      %v1051 = vmul.f32 %v978, %v1029
      %v1052 = vmul.f32 %v981, %v1029
      %v1053 = vmul.f32 %v986, %v1029
      %v1054 = vmul.f32 %v989, %v1029
      %v1055 = vmul.f32 %v994, %v1029
      %v1056 = vmul.f32 %v997, %v1029
      %v1057 = vmul.f32 %v1002, %v1029
      %v1058 = vmul.f32 %v1005, %v1029
      %v1059 = vmul.f32 %v1010, %v1029
      %v1060 = vmul.f32 %v1013, %v1029
      %v1061 = vmul.f32 %v1018, %v1029
      %v1062 = vmul.f32 %v1021, %v1029
      %v1063 = vld [vmem:[%s3] sm:$0x1]
      %v1065 = vlaneseq
      %v1066 = vshrl.u32 %v1065, 7
      %v1067 = vsub.s32 0, %v1066
      %v1068 = vrot.slane %v1063, %v1067
      %v1070 = vadd.f32 %v1031, %v1068
      %v1071 = vadd.f32 %v1032, %v1068
      %v1072 = vadd.f32 %v1033, %v1068
      %v1073 = vadd.f32 %v1034, %v1068
      %v1074 = vadd.f32 %v1035, %v1068
      %v1075 = vadd.f32 %v1036, %v1068
      %v1076 = vadd.f32 %v1037, %v1068
      %v1077 = vadd.f32 %v1038, %v1068
      %v1078 = vadd.f32 %v1039, %v1068
      %v1079 = vadd.f32 %v1040, %v1068
      %v1080 = vadd.f32 %v1041, %v1068
      %v1081 = vadd.f32 %v1042, %v1068
      %v1082 = vadd.f32 %v1043, %v1068
      %v1083 = vadd.f32 %v1044, %v1068
      %v1084 = vadd.f32 %v1045, %v1068
      %v1085 = vadd.f32 %v1046, %v1068
      %v1086 = vadd.f32 %v1047, %v1068
      %v1087 = vadd.f32 %v1048, %v1068
      %v1088 = vadd.f32 %v1049, %v1068
      %v1089 = vadd.f32 %v1050, %v1068
      %v1090 = vadd.f32 %v1051, %v1068
      %v1091 = vadd.f32 %v1052, %v1068
      %v1092 = vadd.f32 %v1053, %v1068
      %v1093 = vadd.f32 %v1054, %v1068
      %v1094 = vadd.f32 %v1055, %v1068
      %v1095 = vadd.f32 %v1056, %v1068
      %v1096 = vadd.f32 %v1057, %v1068
      %v1097 = vadd.f32 %v1058, %v1068
      %v1098 = vadd.f32 %v1059, %v1068
      %v1099 = vadd.f32 %v1060, %v1068
      %v1100 = vadd.f32 %v1061, %v1068
      %v1101 = vadd.f32 %v1062, %v1068
      %v1102 = vmax.f32 %v1070, 0.0
      %v1103 = vmax.f32 %v1071, 0.0
      %v1104 = vmax.f32 %v1072, 0.0
      %v1105 = vmax.f32 %v1073, 0.0
      %v1106 = vmax.f32 %v1074, 0.0
      %v1107 = vmax.f32 %v1075, 0.0
      %v1108 = vmax.f32 %v1076, 0.0
      %v1109 = vmax.f32 %v1077, 0.0
      %v1110 = vmax.f32 %v1078, 0.0
      %v1111 = vmax.f32 %v1079, 0.0
      %v1112 = vmax.f32 %v1080, 0.0
      %v1113 = vmax.f32 %v1081, 0.0
      %v1114 = vmax.f32 %v1082, 0.0
      %v1115 = vmax.f32 %v1083, 0.0
      %v1116 = vmax.f32 %v1084, 0.0
      %v1117 = vmax.f32 %v1085, 0.0
      %v1118 = vmax.f32 %v1086, 0.0
      %v1119 = vmax.f32 %v1087, 0.0
      %v1120 = vmax.f32 %v1088, 0.0
      %v1121 = vmax.f32 %v1089, 0.0
      %v1122 = vmax.f32 %v1090, 0.0
      %v1123 = vmax.f32 %v1091, 0.0
      %v1124 = vmax.f32 %v1092, 0.0
      %v1125 = vmax.f32 %v1093, 0.0
      %v1126 = vmax.f32 %v1094, 0.0
      %v1127 = vmax.f32 %v1095, 0.0
      %v1128 = vmax.f32 %v1096, 0.0
      %v1129 = vmax.f32 %v1097, 0.0
      %v1130 = vmax.f32 %v1098, 0.0
      %v1131 = vmax.f32 %v1099, 0.0
      %v1132 = vmax.f32 %v1100, 0.0
      %v1133 = vmax.f32 %v1101, 0.0
      %vm1134 = vcmask 64512
      %1135 = vst.msk [vmem:[%s202] sm:$0xff] %vm1134, %v1102
      %1136 = vst.msk [vmem:[%s202 + $0x8] sm:$0xff] %vm1134, %v1103
      %1137 = vst.msk [vmem:[%s202 + $0x10] sm:$0xff] %vm1134, %v1104
      %1138 = vst.msk [vmem:[%s202 + $0x18] sm:$0xff] %vm1134, %v1105
      %1139 = vst.msk [vmem:[%s202 + $0x20] sm:$0xff] %vm1134, %v1106
      %1140 = vst.msk [vmem:[%s202 + $0x28] sm:$0xff] %vm1134, %v1107
      %1141 = vst.msk [vmem:[%s202 + $0x30] sm:$0xff] %vm1134, %v1108
      %1142 = vst.msk [vmem:[%s202 + $0x38] sm:$0xff] %vm1134, %v1109
      %1143 = vst.msk [vmem:[%s202 + $0x40] sm:$0xff] %vm1134, %v1110
      %1144 = vst.msk [vmem:[%s202 + $0x48] sm:$0xff] %vm1134, %v1111
      %1145 = vst.msk [vmem:[%s202 + $0x50] sm:$0xff] %vm1134, %v1112
      %1146 = vst.msk [vmem:[%s202 + $0x58] sm:$0xff] %vm1134, %v1113
      %1147 = vst.msk [vmem:[%s202 + $0x60] sm:$0xff] %vm1134, %v1114
      %1148 = vst.msk [vmem:[%s202 + $0x68] sm:$0xff] %vm1134, %v1115
      %1149 = vst.msk [vmem:[%s202 + $0x70] sm:$0xff] %vm1134, %v1116
      %1150 = vst.msk [vmem:[%s202 + $0x78] sm:$0xff] %vm1134, %v1117
      %1151 = vst.msk [vmem:[%s202 + $0x80] sm:$0xff] %vm1134, %v1118
      %1152 = vst.msk [vmem:[%s202 + $0x88] sm:$0xff] %vm1134, %v1119
      %1153 = vst.msk [vmem:[%s202 + $0x90] sm:$0xff] %vm1134, %v1120
      %1154 = vst.msk [vmem:[%s202 + $0x98] sm:$0xff] %vm1134, %v1121
      %1155 = vst.msk [vmem:[%s202 + $0xa0] sm:$0xff] %vm1134, %v1122
      %1156 = vst.msk [vmem:[%s202 + $0xa8] sm:$0xff] %vm1134, %v1123
      %1157 = vst.msk [vmem:[%s202 + $0xb0] sm:$0xff] %vm1134, %v1124
      %1158 = vst.msk [vmem:[%s202 + $0xb8] sm:$0xff] %vm1134, %v1125
      %1159 = vst.msk [vmem:[%s202 + $0xc0] sm:$0xff] %vm1134, %v1126
      %1160 = vst.msk [vmem:[%s202 + $0xc8] sm:$0xff] %vm1134, %v1127
      %1161 = vst.msk [vmem:[%s202 + $0xd0] sm:$0xff] %vm1134, %v1128
      %1162 = vst.msk [vmem:[%s202 + $0xd8] sm:$0xff] %vm1134, %v1129
      %1163 = vst.msk [vmem:[%s202 + $0xe0] sm:$0xff] %vm1134, %v1130
      %1164 = vst.msk [vmem:[%s202 + $0xe8] sm:$0xff] %vm1134, %v1131
      %1165 = vst.msk [vmem:[%s202 + $0xf0] sm:$0xff] %vm1134, %v1132
      %1166 = vst.msk [vmem:[%s202 + $0xf8] sm:$0xff] %vm1134, %v1133
      %s1167 = smul.u32 32, %s15
      %p1168 = scmp.lt.s32.totalorder %s1167, 63
      %s1169 = scalar_select %p1168, %s1167, 63
      %s1170 = smul.addr %s1169, 8
      %s1171 = scalar_lea.vmem %s4, %s1170
      // Predicated region
      $region37: #{model_conv_unet_forward.24} parent=35 // pred_check
        %p1172 = pneg %p122
      $region38: #{model_conv_unet_forward.24} parent=35 // pred_check_branch
        %1174 = sbr.rel (%p1172) target = $region40
      $region39: #{model_conv_unet_forward.24} parent=35 // pred_region
        %s1175 = smul.u32 32, %s15
      $region40: #{model_conv_unet_forward.24} parent=35 // pred_fallthru
        _
    $region36: #{model_conv_unet_forward.24} parent=5 // pred_fallthru
      _
    %p1176 = scmp.le.s32.totalorder 2, %s10
    // Predicated region
    $region41: #{model_conv_unet_forward.24} parent=5 // pred_check
      %p1177 = pneg %p1176
    $region42: #{model_conv_unet_forward.24} parent=5 // pred_check_branch
      %1179 = sbr.rel (%p1177) target = $region44
    $region43: #{model_conv_unet_forward.24} parent=5 // pred_region
      %s1180 = ssub.s32 %s10, 2
      // Predicated region
      $region45: #{model_conv_unet_forward.24} parent=43 // pred_check
        %p1181 = pneg %p128
      $region46: #{model_conv_unet_forward.24} parent=43 // pred_check_branch
        %1183 = sbr.rel (%p1181) target = $region48
      $region47: #{model_conv_unet_forward.24} parent=43 // pred_region
        %s1184 = smul.u32 32, %s16
        %p1185 = scmp.lt.s32.totalorder %s1184, 63
        %s1186 = scalar_select %p1185, %s1184, 63
        %s1187 = smul.addr %s1186, 8
        %s1188 = scalar_lea.vmem %s4, %s1187
      $region48: #{model_conv_unet_forward.24} parent=43 // pred_fallthru
        _
    $region44: #{model_conv_unet_forward.24} parent=5 // pred_fallthru
      _
  $region6: #{model_conv_unet_forward.24} parent=0 // loop_footer
    %s14 = sadd.s32 1, %s10
  $region7: #{model_conv_unet_forward.24} parent=0 // loop_footer_branch
    %9 = sbr.rel target = $region3
  $region8: #{model_conv_unet_forward.24} parent=0 // loop_exit
    _

// kernel: model_conv_unet_forward.25
$region0: #{model_conv_unet_forward.25}
  #allocation0 [shape = 'u32[]', space=smem, size = 0x4, offset = 0x4, fixed_abs, tag = 'smem constant byte address 0x4 - core index']
  #allocation1 [shape = 'u32[144,128]{1,0:T(1,128)}', space=vmem, size = 0x12000, scoped, tag = 'internal scratch']
  %s0 = inlined_call_operand.vmem [shape: bf16[512,144], index: 0, kind: input, shape index: {}]
  %s1 = inlined_call_operand.vmem [shape: bf16[144,4], index: 1, kind: input, shape index: {}]
  %s2 = inlined_call_operand.vmem [shape: f32[1,4], index: 2, kind: input, shape index: {}]
  %s3 = inlined_call_operand.vmem [shape: f32[1,4], index: 3, kind: input, shape index: {}]
  %s4 = inlined_call_operand.vmem [shape: f32[512,4], index: 4, kind: output, shape index: {}]
  %s5 = sld [smem:[#allocation0]]
  $region49: #{model_conv_unet_forward.25} parent=0
    _
  %s7 = ssub.s32 1, %s5
  %s8 = scalar_select 0, %s7, %s5
  loop: start=0, step=1, limit=4
  $region2: #{model_conv_unet_forward.25} parent=0 // loop_pre_header
    _
  $region3: #{model_conv_unet_forward.25} parent=0 // loop_header
    %s10 = sphi 0, %s14
    %p11 = scmp.ge.s32.totalorder %s10, 4
    %s20 = sphi 0, %s22
    %s23 = sphi 0, %s20
    %s24 = sphi 0, %s23
    %s40 = sphi 0, %s24
    %s44 = sphi 0, %s44
    %s46 = sphi 0, %s44
    %s47 = sphi 0, %s46
    %s61 = sphi 0, %s47
    %s65 = sphi 0, %s65
    %s67 = sphi 0, %s65
    %s68 = sphi 0, %s67
    %s82 = sphi 0, %s68
    %s86 = sphi 0, %s86
    %s88 = sphi 0, %s86
    %s89 = sphi 0, %s88
    %s103 = sphi 0, %s89
    %s109 = sphi 0, %s111
    %s112 = sphi 0, %s109
    %s113 = sphi 0, %s112
    %s129 = sphi 0, %s113
  $region4: #{model_conv_unet_forward.25} parent=0 // loop_header_branch
    %13 = sbr.rel (%p11) target = $region8
  $region5: #{model_conv_unet_forward.25} parent=0 // loop_body
    %s15 = ssub.s32 %s10, 1
    %s16 = ssub.s32 %s10, 2
    %s17 = sadd.s32 %s10, 1
    %s18 = ssub.s32 %s10, %s17
    %p19 = scmp.eq.s32.totalorder %s18, 0
    %s21 = sadd.s32 %s20, 1
    %s22 = scalar_select %p19, %s20, %s21
    %p25 = pneg %p19
    %p26 = scmp.eq.s32.totalorder %s10, 1
    %p27 = por %p25, %p26
    %p28 = scmp.ne.s32.totalorder %s20, %s23
    %p29 = scmp.eq.s32.totalorder %s10, 0
    %p30 = por %p28, %p29
    %p31 = scmp.ne.s32.totalorder %s20, %s23
    %p32 = scmp.eq.s32.totalorder %s15, 1
    %p33 = por %p31, %p32
    %p34 = scmp.ne.s32.totalorder %s23, %s24
    %p35 = scmp.eq.s32.totalorder %s15, 0
    %p36 = por %p34, %p35
    %p37 = scmp.ne.s32.totalorder %s23, %s24
    %p38 = scmp.eq.s32.totalorder %s16, 1
    %p39 = por %p37, %p38
    %p41 = scmp.ne.s32.totalorder %s24, %s40
    %p42 = scmp.eq.s32.totalorder %s16, 0
    %p43 = por %p41, %p42
    %s45 = sadd.s32 %s44, 1
    %p48 = scmp.eq.s32.totalorder %s10, 1
    %p49 = scmp.ne.s32.totalorder %s44, %s46
    %p50 = scmp.eq.s32.totalorder %s10, 0
    %p51 = por %p49, %p50
    %p52 = scmp.ne.s32.totalorder %s44, %s46
    %p53 = scmp.eq.s32.totalorder %s15, 1
    %p54 = por %p52, %p53
    %p55 = scmp.ne.s32.totalorder %s46, %s47
    %p56 = scmp.eq.s32.totalorder %s15, 0
    %p57 = por %p55, %p56
    %p58 = scmp.ne.s32.totalorder %s46, %s47
    %p59 = scmp.eq.s32.totalorder %s16, 1
    %p60 = por %p58, %p59
    %p62 = scmp.ne.s32.totalorder %s47, %s61
    %p63 = scmp.eq.s32.totalorder %s16, 0
    %p64 = por %p62, %p63
    %s66 = sadd.s32 %s65, 1
    %p69 = scmp.eq.s32.totalorder %s10, 1
    %p70 = scmp.ne.s32.totalorder %s65, %s67
    %p71 = scmp.eq.s32.totalorder %s10, 0
    %p72 = por %p70, %p71
    %p73 = scmp.ne.s32.totalorder %s65, %s67
    %p74 = scmp.eq.s32.totalorder %s15, 1
    %p75 = por %p73, %p74
    %p76 = scmp.ne.s32.totalorder %s67, %s68
    %p77 = scmp.eq.s32.totalorder %s15, 0
    %p78 = por %p76, %p77
    %p79 = scmp.ne.s32.totalorder %s67, %s68
    %p80 = scmp.eq.s32.totalorder %s16, 1
    %p81 = por %p79, %p80
    %p83 = scmp.ne.s32.totalorder %s68, %s82
    %p84 = scmp.eq.s32.totalorder %s16, 0
    %p85 = por %p83, %p84
    %s87 = sadd.s32 %s86, 1
    %p90 = scmp.eq.s32.totalorder %s10, 1
    %p91 = scmp.ne.s32.totalorder %s86, %s88
    %p92 = scmp.eq.s32.totalorder %s10, 0
    %p93 = por %p91, %p92
    %p94 = scmp.ne.s32.totalorder %s86, %s88
    %p95 = scmp.eq.s32.totalorder %s15, 1
    %p96 = por %p94, %p95
    %p97 = scmp.ne.s32.totalorder %s88, %s89
    %p98 = scmp.eq.s32.totalorder %s15, 0
    %p99 = por %p97, %p98
    %p100 = scmp.ne.s32.totalorder %s88, %s89
    %p101 = scmp.eq.s32.totalorder %s16, 1
    %p102 = por %p100, %p101
    %p104 = scmp.ne.s32.totalorder %s89, %s103
    %p105 = scmp.eq.s32.totalorder %s16, 0
    %p106 = por %p104, %p105
    %s107 = ssub.s32 %s10, %s17
    %p108 = scmp.eq.s32.totalorder %s107, 0
    %s110 = sadd.s32 %s109, 1
    %s111 = scalar_select %p108, %s109, %s110
    %p114 = pneg %p108
    %p115 = scmp.eq.s32.totalorder %s10, 1
    %p116 = por %p114, %p115
    %p117 = scmp.ne.s32.totalorder %s109, %s112
    %p118 = scmp.eq.s32.totalorder %s10, 0
    %p119 = por %p117, %p118
    %p120 = scmp.ne.s32.totalorder %s109, %s112
    %p121 = scmp.eq.s32.totalorder %s15, 1
    %p122 = por %p120, %p121
    %p123 = scmp.ne.s32.totalorder %s112, %s113
    %p124 = scmp.eq.s32.totalorder %s15, 0
    %p125 = por %p123, %p124
    %p126 = scmp.ne.s32.totalorder %s112, %s113
    %p127 = scmp.eq.s32.totalorder %s16, 1
    %p128 = por %p126, %p127
    %p130 = scmp.ne.s32.totalorder %s113, %s129
    %p131 = scmp.eq.s32.totalorder %s16, 0
    %p132 = por %p130, %p131
    %p133 = scmp.le.s32.totalorder 1, %s10
    %p134 = scmp.lt.s32.totalorder %s10, 3
    %p135 = pnand %p133, %p134
    %p136 = pneg %p135
    // Predicated region
    $region9: #{model_conv_unet_forward.25} parent=5 // pred_check
      _
    $region10: #{model_conv_unet_forward.25} parent=5 // pred_check_branch
      %138 = sbr.rel (%p135) target = $region12
    $region11: #{model_conv_unet_forward.25} parent=5 // pred_region
      %s139 = ssub.s32 %s10, 1
      // Predicated region
      $region13: #{model_conv_unet_forward.25} parent=11 // pred_check
        %p140 = pneg %p57
      $region14: #{model_conv_unet_forward.25} parent=11 // pred_check_branch
        %142 = sbr.rel (%p140) target = $region16
      $region15: #{model_conv_unet_forward.25} parent=11 // pred_region
        _
      $region16: #{model_conv_unet_forward.25} parent=11 // pred_fallthru
        _
      // Predicated region
      $region17: #{model_conv_unet_forward.25} parent=11 // pred_check
        %p143 = pneg %p78
      $region18: #{model_conv_unet_forward.25} parent=11 // pred_check_branch
        %145 = sbr.rel (%p143) target = $region20
      $region19: #{model_conv_unet_forward.25} parent=11 // pred_region
        _
      $region20: #{model_conv_unet_forward.25} parent=11 // pred_fallthru
        _
      // Predicated region
      $region21: #{model_conv_unet_forward.25} parent=11 // pred_check
        %p146 = pneg %p99
      $region22: #{model_conv_unet_forward.25} parent=11 // pred_check_branch
        %148 = sbr.rel (%p146) target = $region24
      $region23: #{model_conv_unet_forward.25} parent=11 // pred_region
        _
      $region24: #{model_conv_unet_forward.25} parent=11 // pred_fallthru
        _
    $region12: #{model_conv_unet_forward.25} parent=5 // pred_fallthru
      _
    %p149 = scmp.lt.s32.totalorder %s10, 2
    // Predicated region
    $region25: #{model_conv_unet_forward.25} parent=5 // pred_check
      %p150 = pneg %p149
    $region26: #{model_conv_unet_forward.25} parent=5 // pred_check_branch
      %152 = sbr.rel (%p150) target = $region28
    $region27: #{model_conv_unet_forward.25} parent=5 // pred_region
      // Predicated region
      $region29: #{model_conv_unet_forward.25} parent=27 // pred_check
        %p153 = pneg %p30
      $region30: #{model_conv_unet_forward.25} parent=27 // pred_check_branch
        %155 = sbr.rel (%p153) target = $region32
      $region31: #{model_conv_unet_forward.25} parent=27 // pred_region
        %s156 = smul.u32 32, %s10
        %p157 = scmp.lt.s32.totalorder %s156, 63
        %s158 = scalar_select %p157, %s156, 63
        %s159 = smul.addr %s158, 2
        %s160 = smul.addr %s159, 4
        %s161 = scalar_lea.vmem %s0, %s160
        %s162 = smul.u32 32, %s10
      $region32: #{model_conv_unet_forward.25} parent=27 // pred_fallthru
        _
    $region28: #{model_conv_unet_forward.25} parent=5 // pred_fallthru
      _
    %p163 = scmp.le.s32.totalorder 1, %s10
    %p164 = scmp.lt.s32.totalorder %s10, 3
    %p165 = pnand %p163, %p164
    %p166 = pneg %p165
    // Predicated region
    $region33: #{model_conv_unet_forward.25} parent=5 // pred_check
      _
    $region34: #{model_conv_unet_forward.25} parent=5 // pred_check_branch
      %168 = sbr.rel (%p165) target = $region36
    $region35: #{model_conv_unet_forward.25} parent=5 // pred_region
      %s169 = ssub.s32 %s10, 1
      %s170 = smul.u32 32, %s15
      %p171 = scmp.lt.s32.totalorder %s170, 63
      %s172 = scalar_select %p171, %s170, 63
      %s173 = smul.addr %s172, 2
      %s174 = smul.addr %s173, 4
      %s175 = scalar_lea.vmem %s0, %s174
      %p176 = pneg %p36
      %p177 = pneg %p33
      %p178 = pneg %p57
      %p179 = pneg %p54
      %p180 = pneg %p78
      %p181 = pneg %p75
      %p182 = pneg %p99
      %p183 = pneg %p96
      %p184 = pneg %p125
      %p185 = pneg %p122
      %s186 = smul.u32 32, %s15
      %p187 = scmp.lt.s32.totalorder %s186, 63
      %s188 = scalar_select %p187, %s186, 63
      %s189 = smul.addr %s188, 8
      %s190 = scalar_lea.vmem %s4, %s189
      %s191 = smul.u32 32, %s15
      %p192 = scmp.lt.s32.totalorder %s191, 63
      %s193 = scalar_select %p192, %s191, 63
      %s194 = smul.addr %s193, 2
      %s195 = smul.addr %s194, 4
      %s196 = scalar_lea.vmem %s0, %s195
      %s197 = smul.u32 32, %s15
      %s198 = smul.u32 32, %s15
      %p199 = scmp.lt.s32.totalorder %s198, 63
      %s200 = scalar_select %p199, %s198, 63
      %s201 = smul.addr %s200, 8
      %s202 = scalar_lea.vmem %s4, %s201
      %s203 = smul.u32 32, %s15
      %v205 = vld [vmem:[%s196] sm:$0xff]
      %v206 = vld [vmem:[%s196 + $0x8] sm:$0xff]
      %v207 = vld [vmem:[%s196 + $0x10] sm:$0xff]
      %v208 = vld [vmem:[%s196 + $0x18] sm:$0xff]
      %v209 = vld [vmem:[%s196 + $0x20] sm:$0xff]
      %v210 = vld [vmem:[%s196 + $0x28] sm:$0xff]
      %v211 = vld [vmem:[%s196 + $0x30] sm:$0xff]
      %v212 = vld [vmem:[%s196 + $0x38] sm:$0xff]
      %v213 = vld [vmem:[%s196 + $0x40] sm:$0xff]
      %v214 = vld [vmem:[%s196 + $0x48] sm:$0xff]
      %v215 = vld [vmem:[%s196 + $0x50] sm:$0xff]
      %v216 = vld [vmem:[%s196 + $0x58] sm:$0xff]
      %v217 = vld [vmem:[%s196 + $0x60] sm:$0xff]
      %v218 = vld [vmem:[%s196 + $0x68] sm:$0xff]
      %v219 = vld [vmem:[%s196 + $0x70] sm:$0xff]
      %v220 = vld [vmem:[%s196 + $0x78] sm:$0xff]
      %v221 = vld [vmem:[%s196 + $0x80] sm:$0xff]
      %v222 = vld [vmem:[%s196 + $0x88] sm:$0xff]
      %v223 = vld [vmem:[%s196 + $0x90] sm:$0xff]
      %v224 = vld [vmem:[%s196 + $0x98] sm:$0xff]
      %v225 = vld [vmem:[%s196 + $0xa0] sm:$0xff]
      %v226 = vld [vmem:[%s196 + $0xa8] sm:$0xff]
      %v227 = vld [vmem:[%s196 + $0xb0] sm:$0xff]
      %v228 = vld [vmem:[%s196 + $0xb8] sm:$0xff]
      %v229 = vld [vmem:[%s196 + $0xc0] sm:$0xff]
      %v230 = vld [vmem:[%s196 + $0xc8] sm:$0xff]
      %v231 = vld [vmem:[%s196 + $0xd0] sm:$0xff]
      %v232 = vld [vmem:[%s196 + $0xd8] sm:$0xff]
      %v233 = vld [vmem:[%s196 + $0xe0] sm:$0xff]
      %v234 = vld [vmem:[%s196 + $0xe8] sm:$0xff]
      %v235 = vld [vmem:[%s196 + $0xf0] sm:$0xff]
      %v236 = vld [vmem:[%s196 + $0xf8] sm:$0xff]
      %v237 = vld [vmem:[%s1] sm:$0xf]
      %v238 = vld [vmem:[%s1 + $0x4] sm:$0xf]
      %v239 = vld [vmem:[%s1 + $0x8] sm:$0xf]
      %v240 = vld [vmem:[%s1 + $0xc] sm:$0xf]
      %v241 = vld [vmem:[%s1 + $0x10] sm:$0xf]
      %v242 = vld [vmem:[%s1 + $0x14] sm:$0xf]
      %v243 = vld [vmem:[%s1 + $0x18] sm:$0xf]
      %v244 = vld [vmem:[%s1 + $0x1c] sm:$0xf]
      %v245 = vld [vmem:[%s1 + $0x20] sm:$0xf]
      %v246 = vld [vmem:[%s1 + $0x24] sm:$0xf]
      %v247 = vld [vmem:[%s1 + $0x28] sm:$0xf]
      %v248 = vld [vmem:[%s1 + $0x2c] sm:$0xf]
      %v249 = vld [vmem:[%s1 + $0x30] sm:$0xf]
      %v250 = vld [vmem:[%s1 + $0x34] sm:$0xf]
      %v251 = vld [vmem:[%s1 + $0x38] sm:$0xf]
      %v252 = vld [vmem:[%s1 + $0x3c] sm:$0xf]
      %v253 = vld [vmem:[%s1 + $0x40] sm:$0xf]
      %v254 = vld [vmem:[%s1 + $0x44] sm:$0xf]
      %v287 = vunpack.c.l.b16 %v205
      %v288 = vunpack.c.h.b16 %v205
      %v289 = vunpack.c.l.b16 %v206
      %v290 = vunpack.c.h.b16 %v206
      %v291 = vunpack.c.l.b16 %v207
      %v292 = vunpack.c.h.b16 %v207
      %v293 = vunpack.c.l.b16 %v208
      %v294 = vunpack.c.h.b16 %v208
      %v295 = vunpack.c.l.b16 %v209
      %v296 = vunpack.c.h.b16 %v209
      %v297 = vunpack.c.l.b16 %v210
      %v298 = vunpack.c.h.b16 %v210
      %v299 = vunpack.c.l.b16 %v211
      %v300 = vunpack.c.h.b16 %v211
      %v301 = vunpack.c.l.b16 %v212
      %v302 = vunpack.c.h.b16 %v212
      %v303 = vunpack.c.l.b16 %v213
      %v304 = vunpack.c.h.b16 %v213
      %v305 = vunpack.c.l.b16 %v214
      %v306 = vunpack.c.h.b16 %v214
      %v307 = vunpack.c.l.b16 %v215
      %v308 = vunpack.c.h.b16 %v215
      %v309 = vunpack.c.l.b16 %v216
      %v310 = vunpack.c.h.b16 %v216
      %v311 = vunpack.c.l.b16 %v217
      %v312 = vunpack.c.h.b16 %v217
      %v313 = vunpack.c.l.b16 %v218
      %v314 = vunpack.c.h.b16 %v218
      %v315 = vunpack.c.l.b16 %v219
      %v316 = vunpack.c.h.b16 %v219
      %v317 = vunpack.c.l.b16 %v220
      %v318 = vunpack.c.h.b16 %v220
      %v319 = vunpack.c.l.b16 %v221
      %v320 = vunpack.c.h.b16 %v221
      %v321 = vunpack.c.l.b16 %v222
      %v322 = vunpack.c.h.b16 %v222
      %v323 = vunpack.c.l.b16 %v223
      %v324 = vunpack.c.h.b16 %v223
      %v325 = vunpack.c.l.b16 %v224
      %v326 = vunpack.c.h.b16 %v224
      %v327 = vunpack.c.l.b16 %v225
      %v328 = vunpack.c.h.b16 %v225
      %v329 = vunpack.c.l.b16 %v226
      %v330 = vunpack.c.h.b16 %v226
      %v331 = vunpack.c.l.b16 %v227
      %v332 = vunpack.c.h.b16 %v227
      %v333 = vunpack.c.l.b16 %v228
      %v334 = vunpack.c.h.b16 %v228
      %v335 = vunpack.c.l.b16 %v229
      %v336 = vunpack.c.h.b16 %v229
      %v337 = vunpack.c.l.b16 %v230
      %v338 = vunpack.c.h.b16 %v230
      %v339 = vunpack.c.l.b16 %v231
      %v340 = vunpack.c.h.b16 %v231
      %v341 = vunpack.c.l.b16 %v232
      %v342 = vunpack.c.h.b16 %v232
      %v343 = vunpack.c.l.b16 %v233
      %v344 = vunpack.c.h.b16 %v233
      %v345 = vunpack.c.l.b16 %v234
      %v346 = vunpack.c.h.b16 %v234
      %v347 = vunpack.c.l.b16 %v235
      %v348 = vunpack.c.h.b16 %v235
      %v349 = vunpack.c.l.b16 %v236
      %v350 = vunpack.c.h.b16 %v236
      %v351 = vpack.c.b16 %v289, %v287
      %v352 = vpack.c.b16 %v290, %v288
      %v353 = vpack.c.b16 %v293, %v291
      %v354 = vpack.c.b16 %v294, %v292
      %v355 = vpack.c.b16 %v297, %v295
      %v356 = vpack.c.b16 %v298, %v296
      %v357 = vpack.c.b16 %v301, %v299
      %v358 = vpack.c.b16 %v302, %v300
      %v359 = vpack.c.b16 %v305, %v303
      %v360 = vpack.c.b16 %v306, %v304
      %v361 = vpack.c.b16 %v309, %v307
      %v362 = vpack.c.b16 %v310, %v308
      %v363 = vpack.c.b16 %v313, %v311
      %v364 = vpack.c.b16 %v314, %v312
      %v365 = vpack.c.b16 %v317, %v315
      %v366 = vpack.c.b16 %v318, %v316
      %v367 = vpack.c.b16 %v321, %v319
      %v368 = vpack.c.b16 %v322, %v320
      %v369 = vpack.c.b16 %v325, %v323
      %v370 = vpack.c.b16 %v326, %v324
      %v371 = vpack.c.b16 %v329, %v327
      %v372 = vpack.c.b16 %v330, %v328
      %v373 = vpack.c.b16 %v333, %v331
      %v374 = vpack.c.b16 %v334, %v332
      %v375 = vpack.c.b16 %v337, %v335
      %v376 = vpack.c.b16 %v338, %v336
      %v377 = vpack.c.b16 %v341, %v339
      %v378 = vpack.c.b16 %v342, %v340
      %v379 = vpack.c.b16 %v345, %v343
      %v380 = vpack.c.b16 %v346, %v344
      %v381 = vpack.c.b16 %v349, %v347
      %v382 = vpack.c.b16 %v350, %v348
      %v417 = vunpack.c.l.b16 %v237
      %v418 = vunpack.c.l.b16 %v238
      %v419 = vunpack.c.l.b16 %v239
      %v420 = vunpack.c.l.b16 %v240
      %v421 = vunpack.c.l.b16 %v241
      %v422 = vunpack.c.l.b16 %v242
      %v423 = vunpack.c.l.b16 %v243
      %v424 = vunpack.c.l.b16 %v244
      %v425 = vunpack.c.l.b16 %v245
      %v426 = vunpack.c.l.b16 %v246
      %v427 = vunpack.c.l.b16 %v247
      %v428 = vunpack.c.l.b16 %v248
      %v429 = vunpack.c.l.b16 %v249
      %v430 = vunpack.c.l.b16 %v250
      %v431 = vunpack.c.l.b16 %v251
      %v432 = vunpack.c.l.b16 %v252
      %v433 = vunpack.c.l.b16 %v253
      %v434 = vunpack.c.l.b16 %v254
      %v435 = vpack.c.b16 %v418, %v417
      %v436 = vpack.c.b16 %v420, %v419
      %v437 = vpack.c.b16 %v422, %v421
      %v438 = vpack.c.b16 %v424, %v423
      %v439 = vpack.c.b16 %v426, %v425
      %v440 = vpack.c.b16 %v428, %v427
      %v441 = vpack.c.b16 %v430, %v429
      %v442 = vpack.c.b16 %v432, %v431
      %v443 = vpack.c.b16 %v434, %v433
      %vm453 = vcmask 130048
      %v455 = vsel %vm453, %v352, 0
      %v458 = vsel %vm453, %v354, 0
      %v461 = vsel %vm453, %v356, 0
      %v464 = vsel %vm453, %v358, 0
      %v467 = vsel %vm453, %v360, 0
      %v470 = vsel %vm453, %v362, 0
      %v473 = vsel %vm453, %v364, 0
      %v476 = vsel %vm453, %v366, 0
      %v479 = vsel %vm453, %v368, 0
      %v482 = vsel %vm453, %v370, 0
      %v485 = vsel %vm453, %v372, 0
      %v488 = vsel %vm453, %v374, 0
      %v491 = vsel %vm453, %v376, 0
      %v494 = vsel %vm453, %v378, 0
      %v497 = vsel %vm453, %v380, 0
      %v500 = vsel %vm453, %v382, 0
      %502 = vmatprep.subr.bf16.mxu0 0
      %503 = vmatpush1.bf16.msra.mxu0 %v435
      %504 = vmatprep.subr.bf16.mxu0 0
      %505 = vmatpush1.bf16.msra.mxu0 %v436
      %506 = vmatprep.subr.bf16.mxu0 0
      %507 = vmatpush1.bf16.msra.mxu0 %v437
      %508 = vmatprep.subr.bf16.mxu0 0
      %509 = vmatpush1.bf16.msra.mxu0 %v438
      %510 = vmatprep.subr.bf16.mxu0 0
      %511 = vmatpush1.bf16.msra.mxu0 %v439
      %512 = vmatprep.subr.bf16.mxu0 0
      %513 = vmatpush1.bf16.msra.mxu0 %v440
      %514 = vmatprep.subr.bf16.mxu0 0
      %515 = vmatpush1.bf16.msra.mxu0 %v441
      %516 = vmatprep.subr.bf16.mxu0 0
      %517 = vmatpush1.bf16.msra.mxu0 %v442
      %518 = vmatprep.subr.bf16.mxu0 0
      %519 = vmatpush1.bf16.msra.mxu0 %v443
      %520 = vmatprep.subr.bf16.mxu0 0
      %521 = vmatpush1.bf16.msra.mxu0 0
      %522 = vmatprep.subr.bf16.mxu0 0
      %523 = vmatpush1.bf16.msra.mxu0 0
      %524 = vmatprep.subr.bf16.mxu0 0
      %525 = vmatpush1.bf16.msra.mxu0 0
      %526 = vmatprep.subr.bf16.mxu0 0
      %527 = vmatpush1.bf16.msra.mxu0 0
      %528 = vmatprep.subr.bf16.mxu0 0
      %529 = vmatpush1.bf16.msra.mxu0 0
      %530 = vmatprep.subr.bf16.mxu0 0
      %531 = vmatpush1.bf16.msra.mxu0 0
      %532 = vmatprep.subr.bf16.mxu0 0
      %533 = vmatpush1.bf16.msra.mxu0 0
      %534 = vmatprep.mubr.bf16.mxu0 %v455
      %535 = vmatmul.mubr.bf16.gmra.mrb[0].mxu0 %v351
      %v536 = vpop.f32.mrb[0].mxu0
      %v537 = vadd.f32 0.0, %v536
      %v538 = vpop.f32.mrb[0].mxu0
      %v539 = vpop.f32.mrb[0].mxu0
      %v540 = vadd.f32 0.0, %v539
      %v541 = vpop.f32.mrb[0].mxu0
      %542 = vmatprep.mubr.bf16.mxu0 %v458
      %543 = vmatmul.mubr.bf16.gmra.mrb[0].mxu0 %v353
      %v544 = vpop.f32.mrb[0].mxu0
      %v545 = vadd.f32 0.0, %v544
      %v546 = vpop.f32.mrb[0].mxu0
      %v547 = vpop.f32.mrb[0].mxu0
      %v548 = vadd.f32 0.0, %v547
      %v549 = vpop.f32.mrb[0].mxu0
      %550 = vmatprep.mubr.bf16.mxu0 %v461
      %551 = vmatmul.mubr.bf16.gmra.mrb[0].mxu0 %v355
      %v552 = vpop.f32.mrb[0].mxu0
      %v553 = vadd.f32 0.0, %v552
      %v554 = vpop.f32.mrb[0].mxu0
      %v555 = vpop.f32.mrb[0].mxu0
      %v556 = vadd.f32 0.0, %v555
      %v557 = vpop.f32.mrb[0].mxu0
      %558 = vmatprep.mubr.bf16.mxu0 %v464
      %559 = vmatmul.mubr.bf16.gmra.mrb[0].mxu0 %v357
      %v560 = vpop.f32.mrb[0].mxu0
      %v561 = vadd.f32 0.0, %v560
      %v562 = vpop.f32.mrb[0].mxu0
      %v563 = vpop.f32.mrb[0].mxu0
      %v564 = vadd.f32 0.0, %v563
      %v565 = vpop.f32.mrb[0].mxu0
      %566 = vmatprep.mubr.bf16.mxu0 %v467
      %567 = vmatmul.mubr.bf16.gmra.mrb[0].mxu0 %v359
      %v568 = vpop.f32.mrb[0].mxu0
      %v569 = vadd.f32 0.0, %v568
      %v570 = vpop.f32.mrb[0].mxu0
      %v571 = vpop.f32.mrb[0].mxu0
      %v572 = vadd.f32 0.0, %v571
      %v573 = vpop.f32.mrb[0].mxu0
      %574 = vmatprep.mubr.bf16.mxu0 %v470
      %575 = vmatmul.mubr.bf16.gmra.mrb[0].mxu0 %v361
      %v576 = vpop.f32.mrb[0].mxu0
      %v577 = vadd.f32 0.0, %v576
      %v578 = vpop.f32.mrb[0].mxu0
      %v579 = vpop.f32.mrb[0].mxu0
      %v580 = vadd.f32 0.0, %v579
      %v581 = vpop.f32.mrb[0].mxu0
      %582 = vmatprep.mubr.bf16.mxu0 %v473
      %583 = vmatmul.mubr.bf16.gmra.mrb[0].mxu0 %v363
      %v584 = vpop.f32.mrb[0].mxu0
      %v585 = vadd.f32 0.0, %v584
      %v586 = vpop.f32.mrb[0].mxu0
      %v587 = vpop.f32.mrb[0].mxu0
      %v588 = vadd.f32 0.0, %v587
      %v589 = vpop.f32.mrb[0].mxu0
      %590 = vmatprep.mubr.bf16.mxu0 %v476
      %591 = vmatmul.mubr.bf16.gmra.mrb[0].mxu0 %v365
      %v592 = vpop.f32.mrb[0].mxu0
      %v593 = vadd.f32 0.0, %v592
      %v594 = vpop.f32.mrb[0].mxu0
      %v595 = vpop.f32.mrb[0].mxu0
      %v596 = vadd.f32 0.0, %v595
      %v597 = vpop.f32.mrb[0].mxu0
      %598 = vmatprep.mubr.bf16.mxu0 %v479
      %599 = vmatmul.mubr.bf16.gmra.mrb[0].mxu0 %v367
      %v600 = vpop.f32.mrb[0].mxu0
      %v601 = vadd.f32 0.0, %v600
      %v602 = vpop.f32.mrb[0].mxu0
      %v603 = vpop.f32.mrb[0].mxu0
      %v604 = vadd.f32 0.0, %v603
      %v605 = vpop.f32.mrb[0].mxu0
      %606 = vmatprep.mubr.bf16.mxu0 %v482
      %607 = vmatmul.mubr.bf16.gmra.mrb[0].mxu0 %v369
      %v608 = vpop.f32.mrb[0].mxu0
      %v609 = vadd.f32 0.0, %v608
      %v610 = vpop.f32.mrb[0].mxu0
      %v611 = vpop.f32.mrb[0].mxu0
      %v612 = vadd.f32 0.0, %v611
      %v613 = vpop.f32.mrb[0].mxu0
      %614 = vmatprep.mubr.bf16.mxu0 %v485
      %615 = vmatmul.mubr.bf16.gmra.mrb[0].mxu0 %v371
      %v616 = vpop.f32.mrb[0].mxu0
      %v617 = vadd.f32 0.0, %v616
      %v618 = vpop.f32.mrb[0].mxu0
      %v619 = vpop.f32.mrb[0].mxu0
      %v620 = vadd.f32 0.0, %v619
      %v621 = vpop.f32.mrb[0].mxu0
      %622 = vmatprep.mubr.bf16.mxu0 %v488
      %623 = vmatmul.mubr.bf16.gmra.mrb[0].mxu0 %v373
      %v624 = vpop.f32.mrb[0].mxu0
      %v625 = vadd.f32 0.0, %v624
      %v626 = vpop.f32.mrb[0].mxu0
      %v627 = vpop.f32.mrb[0].mxu0
      %v628 = vadd.f32 0.0, %v627
      %v629 = vpop.f32.mrb[0].mxu0
      %630 = vmatprep.mubr.bf16.mxu0 %v491
      %631 = vmatmul.mubr.bf16.gmra.mrb[0].mxu0 %v375
      %v632 = vpop.f32.mrb[0].mxu0
      %v633 = vadd.f32 0.0, %v632
      %v634 = vpop.f32.mrb[0].mxu0
      %v635 = vpop.f32.mrb[0].mxu0
      %v636 = vadd.f32 0.0, %v635
      %v637 = vpop.f32.mrb[0].mxu0
      %638 = vmatprep.mubr.bf16.mxu0 %v494
      %639 = vmatmul.mubr.bf16.gmra.mrb[0].mxu0 %v377
      %v640 = vpop.f32.mrb[0].mxu0
      %v641 = vadd.f32 0.0, %v640
      %v642 = vpop.f32.mrb[0].mxu0
      %v643 = vpop.f32.mrb[0].mxu0
      %v644 = vadd.f32 0.0, %v643
      %v645 = vpop.f32.mrb[0].mxu0
      %646 = vmatprep.mubr.bf16.mxu0 %v497
      %647 = vmatmul.mubr.bf16.gmra.mrb[0].mxu0 %v379
      %v648 = vpop.f32.mrb[0].mxu0
      %v649 = vadd.f32 0.0, %v648
      %v650 = vpop.f32.mrb[0].mxu0
      %v651 = vpop.f32.mrb[0].mxu0
      %v652 = vadd.f32 0.0, %v651
      %v653 = vpop.f32.mrb[0].mxu0
      %654 = vmatprep.mubr.bf16.mxu0 %v500
      %655 = vmatmul.mubr.bf16.gmra.mrb[0].mxu0 %v381
      %v656 = vpop.f32.mrb[0].mxu0
      %v657 = vadd.f32 0.0, %v656
      %v658 = vpop.f32.mrb[0].mxu0
      %v659 = vpop.f32.mrb[0].mxu0
      %v660 = vadd.f32 0.0, %v659
      %v661 = vpop.f32.mrb[0].mxu0
      %662 = vdwg.mxu0
      %v663 = vld [vmem:[%s2] sm:$0x1]
      %v665 = vlaneseq
      %v666 = vshrl.u32 %v665, 7
      %v667 = vsub.s32 0, %v666
      %v668 = vrot.slane %v663, %v667
      %v670 = vmul.f32 %v537, %v668
      %v671 = vmul.f32 %v540, %v668
      %v672 = vmul.f32 %v545, %v668
      %v673 = vmul.f32 %v548, %v668
      %v674 = vmul.f32 %v553, %v668
      %v675 = vmul.f32 %v556, %v668
      %v676 = vmul.f32 %v561, %v668
      %v677 = vmul.f32 %v564, %v668
      %v678 = vmul.f32 %v569, %v668
      %v679 = vmul.f32 %v572, %v668
      %v680 = vmul.f32 %v577, %v668
      %v681 = vmul.f32 %v580, %v668
      %v682 = vmul.f32 %v585, %v668
      %v683 = vmul.f32 %v588, %v668
      %v684 = vmul.f32 %v593, %v668
      %v685 = vmul.f32 %v596, %v668
      %v686 = vmul.f32 %v601, %v668
      %v687 = vmul.f32 %v604, %v668
      %v688 = vmul.f32 %v609, %v668
      %v689 = vmul.f32 %v612, %v668
      %v690 = vmul.f32 %v617, %v668
      %v691 = vmul.f32 %v620, %v668
      %v692 = vmul.f32 %v625, %v668
      %v693 = vmul.f32 %v628, %v668
      %v694 = vmul.f32 %v633, %v668
      %v695 = vmul.f32 %v636, %v668
      %v696 = vmul.f32 %v641, %v668
      %v697 = vmul.f32 %v644, %v668
      %v698 = vmul.f32 %v649, %v668
      %v699 = vmul.f32 %v652, %v668
      %v700 = vmul.f32 %v657, %v668
      %v701 = vmul.f32 %v660, %v668
      %v702 = vld [vmem:[%s3] sm:$0x1]
      %v704 = vlaneseq
      %v705 = vshrl.u32 %v704, 7
      %v706 = vsub.s32 0, %v705
      %v707 = vrot.slane %v702, %v706
      %v709 = vadd.f32 %v670, %v707
      %v710 = vadd.f32 %v671, %v707
      %v711 = vadd.f32 %v672, %v707
      %v712 = vadd.f32 %v673, %v707
      %v713 = vadd.f32 %v674, %v707
      %v714 = vadd.f32 %v675, %v707
      %v715 = vadd.f32 %v676, %v707
      %v716 = vadd.f32 %v677, %v707
      %v717 = vadd.f32 %v678, %v707
      %v718 = vadd.f32 %v679, %v707
      %v719 = vadd.f32 %v680, %v707
      %v720 = vadd.f32 %v681, %v707
      %v721 = vadd.f32 %v682, %v707
      %v722 = vadd.f32 %v683, %v707
      %v723 = vadd.f32 %v684, %v707
      %v724 = vadd.f32 %v685, %v707
      %v725 = vadd.f32 %v686, %v707
      %v726 = vadd.f32 %v687, %v707
      %v727 = vadd.f32 %v688, %v707
      %v728 = vadd.f32 %v689, %v707
      %v729 = vadd.f32 %v690, %v707
      %v730 = vadd.f32 %v691, %v707
      %v731 = vadd.f32 %v692, %v707
      %v732 = vadd.f32 %v693, %v707
      %v733 = vadd.f32 %v694, %v707
      %v734 = vadd.f32 %v695, %v707
      %v735 = vadd.f32 %v696, %v707
      %v736 = vadd.f32 %v697, %v707
      %v737 = vadd.f32 %v698, %v707
      %v738 = vadd.f32 %v699, %v707
      %v739 = vadd.f32 %v700, %v707
      %v740 = vadd.f32 %v701, %v707
      %v741 = vtanh.pop %v709
      %v742 = vtanh.pop %v710
      %v743 = vtanh.pop %v711
      %v744 = vtanh.pop %v712
      %v745 = vtanh.pop %v713
      %v746 = vtanh.pop %v714
      %v747 = vtanh.pop %v715
      %v748 = vtanh.pop %v716
      %v749 = vtanh.pop %v717
      %v750 = vtanh.pop %v718
      %v751 = vtanh.pop %v719
      %v752 = vtanh.pop %v720
      %v753 = vtanh.pop %v721
      %v754 = vtanh.pop %v722
      %v755 = vtanh.pop %v723
      %v756 = vtanh.pop %v724
      %v757 = vtanh.pop %v725
      %v758 = vtanh.pop %v726
      %v759 = vtanh.pop %v727
      %v760 = vtanh.pop %v728
      %v761 = vtanh.pop %v729
      %v762 = vtanh.pop %v730
      %v763 = vtanh.pop %v731
      %v764 = vtanh.pop %v732
      %v765 = vtanh.pop %v733
      %v766 = vtanh.pop %v734
      %v767 = vtanh.pop %v735
      %v768 = vtanh.pop %v736
      %v769 = vtanh.pop %v737
      %v770 = vtanh.pop %v738
      %v771 = vtanh.pop %v739
      %v772 = vtanh.pop %v740
      %vm773 = vcmask 31744
      %774 = vst.msk [vmem:[%s202] sm:$0xff] %vm773, %v741
      %775 = vst.msk [vmem:[%s202 + $0x8] sm:$0xff] %vm773, %v742
      %776 = vst.msk [vmem:[%s202 + $0x10] sm:$0xff] %vm773, %v743
      %777 = vst.msk [vmem:[%s202 + $0x18] sm:$0xff] %vm773, %v744
      %778 = vst.msk [vmem:[%s202 + $0x20] sm:$0xff] %vm773, %v745
      %779 = vst.msk [vmem:[%s202 + $0x28] sm:$0xff] %vm773, %v746
      %780 = vst.msk [vmem:[%s202 + $0x30] sm:$0xff] %vm773, %v747
      %781 = vst.msk [vmem:[%s202 + $0x38] sm:$0xff] %vm773, %v748
      %782 = vst.msk [vmem:[%s202 + $0x40] sm:$0xff] %vm773, %v749
      %783 = vst.msk [vmem:[%s202 + $0x48] sm:$0xff] %vm773, %v750
      %784 = vst.msk [vmem:[%s202 + $0x50] sm:$0xff] %vm773, %v751
      %785 = vst.msk [vmem:[%s202 + $0x58] sm:$0xff] %vm773, %v752
      %786 = vst.msk [vmem:[%s202 + $0x60] sm:$0xff] %vm773, %v753
      %787 = vst.msk [vmem:[%s202 + $0x68] sm:$0xff] %vm773, %v754
      %788 = vst.msk [vmem:[%s202 + $0x70] sm:$0xff] %vm773, %v755
      %789 = vst.msk [vmem:[%s202 + $0x78] sm:$0xff] %vm773, %v756
      %790 = vst.msk [vmem:[%s202 + $0x80] sm:$0xff] %vm773, %v757
      %791 = vst.msk [vmem:[%s202 + $0x88] sm:$0xff] %vm773, %v758
      %792 = vst.msk [vmem:[%s202 + $0x90] sm:$0xff] %vm773, %v759
      %793 = vst.msk [vmem:[%s202 + $0x98] sm:$0xff] %vm773, %v760
      %794 = vst.msk [vmem:[%s202 + $0xa0] sm:$0xff] %vm773, %v761
      %795 = vst.msk [vmem:[%s202 + $0xa8] sm:$0xff] %vm773, %v762
      %796 = vst.msk [vmem:[%s202 + $0xb0] sm:$0xff] %vm773, %v763
      %797 = vst.msk [vmem:[%s202 + $0xb8] sm:$0xff] %vm773, %v764
      %798 = vst.msk [vmem:[%s202 + $0xc0] sm:$0xff] %vm773, %v765
      %799 = vst.msk [vmem:[%s202 + $0xc8] sm:$0xff] %vm773, %v766
      %800 = vst.msk [vmem:[%s202 + $0xd0] sm:$0xff] %vm773, %v767
      %801 = vst.msk [vmem:[%s202 + $0xd8] sm:$0xff] %vm773, %v768
      %802 = vst.msk [vmem:[%s202 + $0xe0] sm:$0xff] %vm773, %v769
      %803 = vst.msk [vmem:[%s202 + $0xe8] sm:$0xff] %vm773, %v770
      %804 = vst.msk [vmem:[%s202 + $0xf0] sm:$0xff] %vm773, %v771
      %805 = vst.msk [vmem:[%s202 + $0xf8] sm:$0xff] %vm773, %v772
      %s806 = smul.u32 32, %s15
      %p807 = scmp.lt.s32.totalorder %s806, 63
      %s808 = scalar_select %p807, %s806, 63
      %s809 = smul.addr %s808, 8
      %s810 = scalar_lea.vmem %s4, %s809
      // Predicated region
      $region37: #{model_conv_unet_forward.25} parent=35 // pred_check
        %p811 = pneg %p122
      $region38: #{model_conv_unet_forward.25} parent=35 // pred_check_branch
        %813 = sbr.rel (%p811) target = $region40
      $region39: #{model_conv_unet_forward.25} parent=35 // pred_region
        %s814 = smul.u32 32, %s15
      $region40: #{model_conv_unet_forward.25} parent=35 // pred_fallthru
        _
    $region36: #{model_conv_unet_forward.25} parent=5 // pred_fallthru
      _
    %p815 = scmp.le.s32.totalorder 2, %s10
    // Predicated region
    $region41: #{model_conv_unet_forward.25} parent=5 // pred_check
      %p816 = pneg %p815
    $region42: #{model_conv_unet_forward.25} parent=5 // pred_check_branch
      %818 = sbr.rel (%p816) target = $region44
    $region43: #{model_conv_unet_forward.25} parent=5 // pred_region
      %s819 = ssub.s32 %s10, 2
      // Predicated region
      $region45: #{model_conv_unet_forward.25} parent=43 // pred_check
        %p820 = pneg %p128
      $region46: #{model_conv_unet_forward.25} parent=43 // pred_check_branch
        %822 = sbr.rel (%p820) target = $region48
      $region47: #{model_conv_unet_forward.25} parent=43 // pred_region
        %s823 = smul.u32 32, %s16
        %p824 = scmp.lt.s32.totalorder %s823, 63
        %s825 = scalar_select %p824, %s823, 63
        %s826 = smul.addr %s825, 8
        %s827 = scalar_lea.vmem %s4, %s826
      $region48: #{model_conv_unet_forward.25} parent=43 // pred_fallthru
        _
    $region44: #{model_conv_unet_forward.25} parent=5 // pred_fallthru
      _
  $region6: #{model_conv_unet_forward.25} parent=0 // loop_footer
    %s14 = sadd.s32 1, %s10
  $region7: #{model_conv_unet_forward.25} parent=0 // loop_footer_branch
    %9 = sbr.rel target = $region3
  $region8: #{model_conv_unet_forward.25} parent=0 // loop_exit
    _

</llo_original>
